<compile_context>
chip_gen: v7x
topology: tpu7x:2x2x1
jax: 0.10.0
libtpu: 0.0.40
codegen_flags: <defaults>
</compile_context>

<pallas_src>
import math
from functools import partial

import jax
import jax.numpy as jnp
from jax.experimental import pallas as pl
from jax.experimental.pallas import tpu as pltpu


def _round_up(n, m):
    return ((n + m - 1) // m) * m


def _pick_tiles(M):
    """Pad M to a sublane multiple; keep >=2 grid steps when there is enough
    work so both v7x TensorCores get a share."""
    Mp = _round_up(M, 8)
    if Mp >= 16:
        Mp = _round_up(M, 16)
        return Mp, Mp // 2          # 2 grid steps
    return Mp, Mp                   # 1 grid step


# ------------------------------------------------------------------
# Pallas kernels
# ------------------------------------------------------------------

def _mm_kernel(x_ref, w_ref, b_ref, o_ref, *, relu_in, relu_out):
    x = x_ref[...]
    if relu_in:
        x = jnp.maximum(x, 0.0)
    y = jnp.dot(x, w_ref[...], preferred_element_type=jnp.float32) + b_ref[...]
    if relu_out:
        y = jnp.maximum(y, 0.0)
    o_ref[...] = y


def pallas_matmul(x2d, w, b=None, *, relu_in=False, relu_out=False):
    """(M, K) @ (K, N) + b with optional input/output ReLU on the MXU.

    K and N stay unpadded (full-dim blocks); only M is padded to a sublane
    multiple when necessary.
    """
    M, K = x2d.shape
    N = w.shape[1]
    if b is None:
        b2 = jnp.zeros((1, N), jnp.float32)
    else:
        b2 = b.reshape(1, N).astype(jnp.float32)

    Mp, tm = _pick_tiles(M)
    xf = x2d.astype(jnp.float32)
    xp = xf if Mp == M else jnp.zeros((Mp, K), jnp.float32).at[:M].set(xf)

    out = pl.pallas_call(
        partial(_mm_kernel, relu_in=relu_in, relu_out=relu_out),
        out_shape=jax.ShapeDtypeStruct((Mp, N), jnp.float32),
        grid=(Mp // tm,),
        in_specs=[
            pl.BlockSpec((tm, K), lambda i: (i, 0)),
            pl.BlockSpec((K, N), lambda i: (0, 0)),
            pl.BlockSpec((1, N), lambda i: (0, 0)),
        ],
        out_specs=pl.BlockSpec((tm, N), lambda i: (i, 0)),
        compiler_params=pltpu.CompilerParams(
            dimension_semantics=("parallel",)),
        cost_estimate=pl.CostEstimate(
            flops=2 * Mp * K * N,
            transcendentals=0,
            bytes_accessed=4 * (Mp * K + K * N + N + Mp * N)),
    )(xp, w.astype(jnp.float32), b2)
    out = out if Mp == M else out[:M]
    return out.astype(x2d.dtype)


def matmul_last(x, w, b=None, **kw):
    """Apply (..., K) @ (K, N) (+ bias, optional ReLU) via the Pallas kernel."""
    lead = x.shape[:-1]
    K = x.shape[-1]
    y = pallas_matmul(x.reshape(-1, K), w, b, **kw)
    return y.reshape(lead + (w.shape[1],))


def _conv_lin_kernel(x_ref, wc_ref, bc_ref, wl_ref, bl_ref, o_ref):
    # im2col-matmul (conv) -> bias -> ReLU -> Linear, intermediate in VMEM.
    h = jnp.dot(x_ref[...], wc_ref[...], preferred_element_type=jnp.float32)
    h = jnp.maximum(h + bc_ref[...], 0.0)
    y = jnp.dot(h, wl_ref[...], preferred_element_type=jnp.float32) + bl_ref[...]
    o_ref[...] = y


def pallas_conv_linear(cols, wc, bc, wl, bl):
    """Fused (M, 9C) @ (9C, C) + b -> ReLU -> @ (C, C) + b."""
    M, K = cols.shape
    Cmid = wc.shape[1]
    N = wl.shape[1]
    Mp, tm = _pick_tiles(M)
    xf = cols.astype(jnp.float32)
    xp = xf if Mp == M else jnp.zeros((Mp, K), jnp.float32).at[:M].set(xf)

    out = pl.pallas_call(
        _conv_lin_kernel,
        out_shape=jax.ShapeDtypeStruct((Mp, N), jnp.float32),
        grid=(Mp // tm,),
        in_specs=[
            pl.BlockSpec((tm, K), lambda i: (i, 0)),
            pl.BlockSpec((K, Cmid), lambda i: (0, 0)),
            pl.BlockSpec((1, Cmid), lambda i: (0, 0)),
            pl.BlockSpec((Cmid, N), lambda i: (0, 0)),
            pl.BlockSpec((1, N), lambda i: (0, 0)),
        ],
        out_specs=pl.BlockSpec((tm, N), lambda i: (i, 0)),
        compiler_params=pltpu.CompilerParams(
            dimension_semantics=("parallel",)),
        cost_estimate=pl.CostEstimate(
            flops=2 * Mp * K * Cmid + 2 * Mp * Cmid * N,
            transcendentals=0,
            bytes_accessed=4 * (Mp * K + K * Cmid + Cmid * N + Cmid + N + Mp * N)),
    )(xp, wc.astype(jnp.float32), bc.reshape(1, Cmid).astype(jnp.float32),
      wl.astype(jnp.float32), bl.reshape(1, N).astype(jnp.float32))
    return out if Mp == M else out[:M]


def _packed_cmm_kernel(x_ref, w_ref, o_ref, *, pblk):
    # Per mode: [xr|xi](B,2C) @ [[wr,wi],[-wi,wr]](2C,2C) -> [real|imag](B,2C)
    for p in range(pblk):
        o_ref[p] = jnp.dot(x_ref[p], w_ref[p],
                           preferred_element_type=jnp.float32)


def pallas_complex_mul_packed(xf, w_pack):
    """torch.einsum('bixy,ioxy->boxy') for complex xf (B,C,l1,l2) using the
    precomputed packed-real weight w_pack (l1,l2,2C,2C)."""
    B, C, l1, l2 = xf.shape
    P = l1 * l2
    Bp = _round_up(B, 8)
    Pp = _round_up(P, 2)
    pblk = Pp // 2

    xr = jnp.real(xf).transpose(2, 3, 0, 1)     # (l1, l2, B, C)
    xi = jnp.imag(xf).transpose(2, 3, 0, 1)
    xpk = jnp.concatenate([xr, xi], axis=-1).reshape(P, B, 2 * C)
    xpad = jnp.zeros((Pp, Bp, 2 * C), jnp.float32).at[:P, :B].set(
        xpk.astype(jnp.float32))
    wpk = w_pack.reshape(P, 2 * C, 2 * C).astype(jnp.float32)
    wpad = wpk if Pp == P else jnp.zeros(
        (Pp, 2 * C, 2 * C), jnp.float32).at[:P].set(wpk)

    out = pl.pallas_call(
        partial(_packed_cmm_kernel, pblk=pblk),
        out_shape=jax.ShapeDtypeStruct((Pp, Bp, 2 * C), jnp.float32),
        grid=(2,),
        in_specs=[
            pl.BlockSpec((pblk, Bp, 2 * C), lambda i: (i, 0, 0)),
            pl.BlockSpec((pblk, 2 * C, 2 * C), lambda i: (i, 0, 0)),
        ],
        out_specs=pl.BlockSpec((pblk, Bp, 2 * C), lambda i: (i, 0, 0)),
        compiler_params=pltpu.CompilerParams(
            dimension_semantics=("parallel",)),
        cost_estimate=pl.CostEstimate(
            flops=2 * Pp * Bp * (2 * C) * (2 * C),
            transcendentals=0,
            bytes_accessed=4 * (2 * Pp * Bp * 2 * C + Pp * 2 * C * 2 * C)),
    )(xpad, wpad)

    out = out[:P, :B]                            # (P, B, 2C)
    oc = jax.lax.complex(out[..., :C], out[..., C:])
    return oc.reshape(l1, l2, B, C).transpose(2, 3, 0, 1)


# ------------------------------------------------------------------
# Model pieces (glue in plain JAX, compute in Pallas)
# ------------------------------------------------------------------

def deinterleave(x):
    """(B, Nx, Ny, c, ich) -> (B, Nx/2, Ny/2, c, 4*ich) with [ee|eo|oe|oo] order."""
    B, Nx, Ny, c, ich = x.shape
    xr = x.reshape(B, Nx // 2, 2, Ny // 2, 2, c, ich)
    xr = xr.transpose(0, 1, 3, 5, 2, 4, 6)       # (B, Nx/2, Ny/2, c, 2, 2, ich)
    return xr.reshape(B, Nx // 2, Ny // 2, c, 4 * ich)


def interleave(y):
    """(B, nx, ny, c, 4*kk) with [ee|eo|oe|oo] order -> (B, 2nx, 2ny, c, kk)."""
    B, nx, ny, c, four_kk = y.shape
    kk = four_kk // 4
    y = y.reshape(B, nx, ny, c, 2, 2, kk)
    y = y.transpose(0, 1, 4, 2, 5, 3, 6)          # (B, nx, 2, ny, 2, c, kk)
    return y.reshape(B, 2 * nx, 2 * ny, c, kk)


def sparse_kernel_2d(params, x):
    """sparseKernel2d: Conv2d(3x3,pad=1)+ReLU then Linear, fused in one kernel."""
    B, Nx, Ny, c, ich = x.shape
    C = c * ich
    h = x.reshape(B, Nx, Ny, C)
    xp = jnp.pad(h, ((0, 0), (1, 1), (1, 1), (0, 0)))
    patches = [xp[:, di:di + Nx, dj:dj + Ny, :]
               for di in range(3) for dj in range(3)]
    cols = jnp.concatenate(patches, axis=-1).reshape(B * Nx * Ny, 9 * C)
    y = pallas_conv_linear(cols, params["conv_w_mat"], params["conv_b"],
                           params["lo_w"], params["lo_b"])
    return y.reshape(B, Nx, Ny, c, ich)


def sparse_kernel_ft_2d(params, x, modes):
    """sparseKernelFT2d: rfft2 -> truncated spectral mixing -> irfft2 -> ReLU -> Linear."""
    B, Nx, Ny, c, ich = x.shape
    C = c * ich
    h = x.reshape(B, Nx, Ny, C).transpose(0, 3, 1, 2)        # (B, C, Nx, Ny)
    x_fft = jnp.fft.rfft2(h)                                  # (B, C, Nx, Ny//2+1)
    l1 = min(modes, Nx // 2 + 1)
    l2 = min(modes, Ny // 2 + 1)

    out_ft = jnp.zeros((B, C, Nx, Ny // 2 + 1), jnp.complex64)
    r1 = pallas_complex_mul_packed(x_fft[:, :, :l1, :l2],
                                   params["w1_pack"][:l1, :l2])
    r2 = pallas_complex_mul_packed(x_fft[:, :, Nx - l1:, :l2],
                                   params["w2_pack"][:l1, :l2])
    out_ft = out_ft.at[:, :, :l1, :l2].set(r1)
    out_ft = out_ft.at[:, :, Nx - l1:, :l2].set(r2)   # overwrites overlap, as in torch

    h = jnp.fft.irfft2(out_ft, s=(Nx, Ny)).astype(jnp.float32)   # (B,C,Nx,Ny)
    h = h.transpose(0, 2, 3, 1)                                   # (B,Nx,Ny,C)
    h = matmul_last(h, params["lo_w"], params["lo_b"], relu_in=True)
    return h.reshape(B, Nx, Ny, c, ich)


def wavelet_transform(params, x, kk):
    xa = deinterleave(x)                           # (B, nx, ny, c, 4*kk)
    ds = matmul_last(xa, params["ec_ds"])          # fused [d | s], (..., 2*kk)
    return ds[..., :kk], ds[..., kk:]


def even_odd(params, x):
    # x: (B, nx, ny, c, 2*kk); fused rc weight -> (..., 4*kk) in [ee|eo|oe|oo] order.
    y = matmul_last(x, params["rc_all"])
    return interleave(y)


def mwt_cz2d_forward(params, x, k=3, alpha=5, L=0, c=1):
    B, Nx, Ny, _, ich = x.shape
    kk = k * k
    ns = int(math.floor(math.log2(Nx)))
    Ud, Us = [], []
    for _ in range(ns - L):
        d, x = wavelet_transform(params, x, kk)
        Ud.append(sparse_kernel_ft_2d(params["A"], d, alpha)
                  + sparse_kernel_2d(params["B"], x))
        Us.append(sparse_kernel_2d(params["C"], d))
    x = matmul_last(x.reshape(B, 2 ** L, 2 ** L, c * ich),
                    params["T0_w"], params["T0_b"]
                    ).reshape(B, 2 ** L, 2 ** L, c, ich)
    for i in range(ns - 1 - L, -1, -1):
        x = x + Us[i]
        x = jnp.concatenate((x, Ud[i]), axis=-1)
        x = even_odd(params, x)
    return x


# ------------------------------------------------------------------
# Deterministic parameter initialization (synthetic, shapes per __init__).
# All fusion / packing of weights is done here, once, outside the forward.
# ------------------------------------------------------------------

def _pack_complex_weight(w):
    """Complex (Ci, Co, mx, my) -> real (mx, my, 2Ci, 2Co) = [[wr, wi], [-wi, wr]]."""
    wr = jnp.real(w).transpose(2, 3, 0, 1).astype(jnp.float32)
    wi = jnp.imag(w).transpose(2, 3, 0, 1).astype(jnp.float32)
    top = jnp.concatenate([wr, wi], axis=-1)
    bot = jnp.concatenate([-wi, wr], axis=-1)
    return jnp.concatenate([top, bot], axis=-2)


def init_params(key, k=3, alpha=5, c=1):
    kk = k * k
    C = c * kk
    keys = iter(jax.random.split(key, 64))

    def nrm(shape, scale=0.1):
        return (scale * jax.random.normal(next(keys), shape)).astype(jnp.float32)

    def sk2d():  # sparseKernel2d(k, c, c): Conv2d(c*k^2 -> c*k^2, 3x3), Linear(c*k^2 -> c*k^2)
        conv_w = nrm((3, 3, C, C))
        return dict(
            conv_w_mat=conv_w.reshape(9 * C, C),
            conv_b=nrm((C,)),
            lo_w=nrm((C, C)),
            lo_b=nrm((C,)),
        )

    # multiwavelet filter buffers (shapes: ec_* (4k^2,k^2), rc_* (2k^2,k^2)),
    # fused along the output dim: ec_ds = [ec_d | ec_s], rc_all = [ee|eo|oe|oo].
    ec_d = nrm((4 * kk, kk))
    ec_s = nrm((4 * kk, kk))
    rc_ee = nrm((2 * kk, kk))
    rc_eo = nrm((2 * kk, kk))
    rc_oe = nrm((2 * kk, kk))
    rc_oo = nrm((2 * kk, kk))

    w1 = (nrm((C, C, alpha, alpha)) + 1j * nrm((C, C, alpha, alpha))
          ).astype(jnp.complex64)
    w2 = (nrm((C, C, alpha, alpha)) + 1j * nrm((C, C, alpha, alpha))
          ).astype(jnp.complex64)

    return dict(
        ec_ds=jnp.concatenate([ec_d, ec_s], axis=1),                 # (4kk, 2kk)
        rc_all=jnp.concatenate([rc_ee, rc_eo, rc_oe, rc_oo], axis=1),  # (2kk, 4kk)
        A=dict(  # sparseKernelFT2d(k, alpha, c)
            w1_pack=_pack_complex_weight(w1),                        # (alpha,alpha,2C,2C)
            w2_pack=_pack_complex_weight(w2),
            lo_w=nrm((C, C)),
            lo_b=nrm((C,)),
        ),
        B=sk2d(),
        C=sk2d(),
        T0_w=nrm((C, C)),
        T0_b=nrm((C,)),
    )


if __name__ == "__main__":
    k, alpha, L, c = 3, 5, 0, 1
    B, Nx, Ny = 2, 16, 16

    key = jax.random.PRNGKey(0)
    pkey, xkey = jax.random.split(key)
    params = init_params(pkey, k=k, alpha=alpha, c=c)
    x = jax.random.normal(xkey, (B, Nx, Ny, c, k * k), dtype=jnp.float32)

    fwd = jax.jit(partial(mwt_cz2d_forward, k=k, alpha=alpha, L=L, c=c))
    out = fwd(params, x)
    out = jax.block_until_ready(out)
    assert out.shape == (B, Nx, Ny, c, k * k), out.shape
    assert jnp.all(jnp.isfinite(out))
    print("KERNEL_OK")
</pallas_src>

<mosaic_0001>
module attributes {stable_mosaic.version = 11 : i64} {
  func.func @_mm_kernel(%arg0: i32, %arg1: memref<64x36xf32, #tpu.memory_space<vmem>>, %arg2: memref<36x18xf32, #tpu.memory_space<vmem>>, %arg3: memref<1x18xf32, #tpu.memory_space<vmem>>, %arg4: memref<64x18xf32, #tpu.memory_space<vmem>>) attributes {dimension_semantics = [#tpu.dimension_semantics<parallel>], iteration_bounds = array<i64: 2>, scalar_prefetch = 0 : i64, scratch_operands = 0 : i64, tpu.core_type = #tpu.core_type<tc>, window_params = [{transform_indices = @transform_0, window_bounds = array<i64: 64, 36>}, {pipeline_mode = #tpu.pipeline_mode<synchronous>, transform_indices = @transform_1, window_bounds = array<i64: 36, 18>}, {pipeline_mode = #tpu.pipeline_mode<synchronous>, transform_indices = @transform_2, window_bounds = array<i64: 1, 18>}, {transform_indices = @transform_3, window_bounds = array<i64: 64, 18>}]} {
    %c0 = arith.constant 0 : index
    %c0_0 = arith.constant 0 : index
    %0 = vector.load %arg1[%c0, %c0_0] : memref<64x36xf32, #tpu.memory_space<vmem>>, vector<64x36xf32>
    %c0_1 = arith.constant 0 : index
    %c0_2 = arith.constant 0 : index
    %1 = vector.load %arg2[%c0_1, %c0_2] : memref<36x18xf32, #tpu.memory_space<vmem>>, vector<36x18xf32>
    %cst = arith.constant dense<0.000000e+00> : vector<64x18xf32>
    %2 = tpu.matmul %0, %1, %cst {dimension_numbers = #tpu.dot_dimension_numbers<[1], [0], [0], [1], [0, 0, 1, 1], [], []>} : vector<64x36xf32>, vector<36x18xf32>, vector<64x18xf32> -> vector<64x18xf32>
    %c0_3 = arith.constant 0 : index
    %c0_4 = arith.constant 0 : index
    %3 = vector.load %arg3[%c0_3, %c0_4] : memref<1x18xf32, #tpu.memory_space<vmem>>, vector<1x18xf32>
    %4 = vector.broadcast %3 : vector<1x18xf32> to vector<64x18xf32>
    %5 = arith.addf %2, %4 : vector<64x18xf32>
    %c0_5 = arith.constant 0 : index
    %c0_6 = arith.constant 0 : index
    %6 = vector.load %arg4[%c0_5, %c0_6] : memref<64x18xf32, #tpu.memory_space<vmem>>, vector<64x18xf32>
    tpu.vector_store %arg4[%c0_5, %c0_6], %5 {strides = array<i32>} : memref<64x18xf32, #tpu.memory_space<vmem>>, vector<64x18xf32>,
    return
  }
  func.func @transform_0(%arg0: i32) -> (i32, i32) {
    %c0_i32 = arith.constant 0 : i32
    %c0_i32_0 = arith.constant 0 : i32
    return %arg0, %c0_i32 : i32, i32
  }
  func.func @transform_1(%arg0: i32) -> (i32, i32) {
    %c0_i32 = arith.constant 0 : i32
    %c0_i32_0 = arith.constant 0 : i32
    %c0_i32_1 = arith.constant 0 : i32
    return %c0_i32, %c0_i32_0 : i32, i32
  }
  func.func @transform_2(%arg0: i32) -> (i32, i32) {
    %c0_i32 = arith.constant 0 : i32
    %c0_i32_0 = arith.constant 0 : i32
    %c0_i32_1 = arith.constant 0 : i32
    return %c0_i32, %c0_i32_0 : i32, i32
  }
  func.func @transform_3(%arg0: i32) -> (i32, i32) {
    %c0_i32 = arith.constant 0 : i32
    %c0_i32_0 = arith.constant 0 : i32
    return %arg0, %c0_i32 : i32, i32
  }
}

module attributes {stable_mosaic.version = 11 : i64} {
  func.func @_packed_cmm_kernel(%arg0: i32, %arg1: memref<13x8x18xf32, #tpu.memory_space<vmem>>, %arg2: memref<13x18x18xf32, #tpu.memory_space<vmem>>, %arg3: memref<13x8x18xf32, #tpu.memory_space<vmem>>) attributes {dimension_semantics = [#tpu.dimension_semantics<parallel>], iteration_bounds = array<i64: 2>, scalar_prefetch = 0 : i64, scratch_operands = 0 : i64, tpu.core_type = #tpu.core_type<tc>, window_params = [{transform_indices = @transform_0, window_bounds = array<i64: 13, 8, 18>}, {transform_indices = @transform_1, window_bounds = array<i64: 13, 18, 18>}, {transform_indices = @transform_2, window_bounds = array<i64: 13, 8, 18>}]} {
    %c0 = arith.constant 0 : index
    %c0_0 = arith.constant 0 : index
    %c0_1 = arith.constant 0 : index
    %0 = vector.load %arg1[%c0, %c0_0, %c0_1] : memref<13x8x18xf32, #tpu.memory_space<vmem>>, vector<1x8x18xf32>
    %1 = vector.shape_cast %0 : vector<1x8x18xf32> to vector<8x18xf32>
    %c0_2 = arith.constant 0 : index
    %c0_3 = arith.constant 0 : index
    %c0_4 = arith.constant 0 : index
    %2 = vector.load %arg2[%c0_2, %c0_3, %c0_4] : memref<13x18x18xf32, #tpu.memory_space<vmem>>, vector<1x18x18xf32>
    %3 = vector.shape_cast %2 : vector<1x18x18xf32> to vector<18x18xf32>
    %cst = arith.constant dense<0.000000e+00> : vector<8x18xf32>
    %4 = tpu.matmul %1, %3, %cst {dimension_numbers = #tpu.dot_dimension_numbers<[1], [0], [0], [1], [0, 0, 1, 1], [], []>} : vector<8x18xf32>, vector<18x18xf32>, vector<8x18xf32> -> vector<8x18xf32>
    %c0_5 = arith.constant 0 : index
    %c0_6 = arith.constant 0 : index
    %c0_7 = arith.constant 0 : index
    %5 = vector.load %arg3[%c0_5, %c0_6, %c0_7] : memref<13x8x18xf32, #tpu.memory_space<vmem>>, vector<1x8x18xf32>
    %6 = vector.shape_cast %5 : vector<1x8x18xf32> to vector<8x18xf32>
    %7 = vector.shape_cast %4 : vector<8x18xf32> to vector<1x8x18xf32>
    tpu.vector_store %arg3[%c0_5, %c0_6, %c0_7], %7 {strides = array<i32>} : memref<13x8x18xf32, #tpu.memory_space<vmem>>, vector<1x8x18xf32>,
    %c1 = arith.constant 1 : index
    %c0_8 = arith.constant 0 : index
    %c0_9 = arith.constant 0 : index
    %8 = vector.load %arg1[%c1, %c0_8, %c0_9] : memref<13x8x18xf32, #tpu.memory_space<vmem>>, vector<1x8x18xf32>
    %9 = vector.shape_cast %8 : vector<1x8x18xf32> to vector<8x18xf32>
    %c1_10 = arith.constant 1 : index
    %c0_11 = arith.constant 0 : index
    %c0_12 = arith.constant 0 : index
    %10 = vector.load %arg2[%c1_10, %c0_11, %c0_12] : memref<13x18x18xf32, #tpu.memory_space<vmem>>, vector<1x18x18xf32>
    %11 = vector.shape_cast %10 : vector<1x18x18xf32> to vector<18x18xf32>
    %cst_13 = arith.constant dense<0.000000e+00> : vector<8x18xf32>
    %12 = tpu.matmul %9, %11, %cst_13 {dimension_numbers = #tpu.dot_dimension_numbers<[1], [0], [0], [1], [0, 0, 1, 1], [], []>} : vector<8x18xf32>, vector<18x18xf32>, vector<8x18xf32> -> vector<8x18xf32>
    %c1_14 = arith.constant 1 : index
    %c0_15 = arith.constant 0 : index
    %c0_16 = arith.constant 0 : index
    %13 = vector.load %arg3[%c1_14, %c0_15, %c0_16] : memref<13x8x18xf32, #tpu.memory_space<vmem>>, vector<1x8x18xf32>
    %14 = vector.shape_cast %13 : vector<1x8x18xf32> to vector<8x18xf32>
    %15 = vector.shape_cast %12 : vector<8x18xf32> to vector<1x8x18xf32>
    tpu.vector_store %arg3[%c1_14, %c0_15, %c0_16], %15 {strides = array<i32>} : memref<13x8x18xf32, #tpu.memory_space<vmem>>, vector<1x8x18xf32>,
    %c2 = arith.constant 2 : index
    %c0_17 = arith.constant 0 : index
    %c0_18 = arith.constant 0 : index
    %16 = vector.load %arg1[%c2, %c0_17, %c0_18] : memref<13x8x18xf32, #tpu.memory_space<vmem>>, vector<1x8x18xf32>
    %17 = vector.shape_cast %16 : vector<1x8x18xf32> to vector<8x18xf32>
    %c2_19 = arith.constant 2 : index
    %c0_20 = arith.constant 0 : index
    %c0_21 = arith.constant 0 : index
    %18 = vector.load %arg2[%c2_19, %c0_20, %c0_21] : memref<13x18x18xf32, #tpu.memory_space<vmem>>, vector<1x18x18xf32>
    %19 = vector.shape_cast %18 : vector<1x18x18xf32> to vector<18x18xf32>
    %cst_22 = arith.constant dense<0.000000e+00> : vector<8x18xf32>
    %20 = tpu.matmul %17, %19, %cst_22 {dimension_numbers = #tpu.dot_dimension_numbers<[1], [0], [0], [1], [0, 0, 1, 1], [], []>} : vector<8x18xf32>, vector<18x18xf32>, vector<8x18xf32> -> vector<8x18xf32>
    %c2_23 = arith.constant 2 : index
    %c0_24 = arith.constant 0 : index
    %c0_25 = arith.constant 0 : index
    %21 = vector.load %arg3[%c2_23, %c0_24, %c0_25] : memref<13x8x18xf32, #tpu.memory_space<vmem>>, vector<1x8x18xf32>
    %22 = vector.shape_cast %21 : vector<1x8x18xf32> to vector<8x18xf32>
    %23 = vector.shape_cast %20 : vector<8x18xf32> to vector<1x8x18xf32>
    tpu.vector_store %arg3[%c2_23, %c0_24, %c0_25], %23 {strides = array<i32>} : memref<13x8x18xf32, #tpu.memory_space<vmem>>, vector<1x8x18xf32>,
    %c3 = arith.constant 3 : index
    %c0_26 = arith.constant 0 : index
    %c0_27 = arith.constant 0 : index
    %24 = vector.load %arg1[%c3, %c0_26, %c0_27] : memref<13x8x18xf32, #tpu.memory_space<vmem>>, vector<1x8x18xf32>
    %25 = vector.shape_cast %24 : vector<1x8x18xf32> to vector<8x18xf32>
    %c3_28 = arith.constant 3 : index
    %c0_29 = arith.constant 0 : index
    %c0_30 = arith.constant 0 : index
    %26 = vector.load %arg2[%c3_28, %c0_29, %c0_30] : memref<13x18x18xf32, #tpu.memory_space<vmem>>, vector<1x18x18xf32>
    %27 = vector.shape_cast %26 : vector<1x18x18xf32> to vector<18x18xf32>
    %cst_31 = arith.constant dense<0.000000e+00> : vector<8x18xf32>
    %28 = tpu.matmul %25, %27, %cst_31 {dimension_numbers = #tpu.dot_dimension_numbers<[1], [0], [0], [1], [0, 0, 1, 1], [], []>} : vector<8x18xf32>, vector<18x18xf32>, vector<8x18xf32> -> vector<8x18xf32>
    %c3_32 = arith.constant 3 : index
    %c0_33 = arith.constant 0 : index
    %c0_34 = arith.constant 0 : index
    %29 = vector.load %arg3[%c3_32, %c0_33, %c0_34] : memref<13x8x18xf32, #tpu.memory_space<vmem>>, vector<1x8x18xf32>
    %30 = vector.shape_cast %29 : vector<1x8x18xf32> to vector<8x18xf32>
    %31 = vector.shape_cast %28 : vector<8x18xf32> to vector<1x8x18xf32>
    tpu.vector_store %arg3[%c3_32, %c0_33, %c0_34], %31 {strides = array<i32>} : memref<13x8x18xf32, #tpu.memory_space<vmem>>, vector<1x8x18xf32>,
    %c4 = arith.constant 4 : index
    %c0_35 = arith.constant 0 : index
    %c0_36 = arith.constant 0 : index
    %32 = vector.load %arg1[%c4, %c0_35, %c0_36] : memref<13x8x18xf32, #tpu.memory_space<vmem>>, vector<1x8x18xf32>
    %33 = vector.shape_cast %32 : vector<1x8x18xf32> to vector<8x18xf32>
    %c4_37 = arith.constant 4 : index
    %c0_38 = arith.constant 0 : index
    %c0_39 = arith.constant 0 : index
    %34 = vector.load %arg2[%c4_37, %c0_38, %c0_39] : memref<13x18x18xf32, #tpu.memory_space<vmem>>, vector<1x18x18xf32>
    %35 = vector.shape_cast %34 : vector<1x18x18xf32> to vector<18x18xf32>
    %cst_40 = arith.constant dense<0.000000e+00> : vector<8x18xf32>
    %36 = tpu.matmul %33, %35, %cst_40 {dimension_numbers = #tpu.dot_dimension_numbers<[1], [0], [0], [1], [0, 0, 1, 1], [], []>} : vector<8x18xf32>, vector<18x18xf32>, vector<8x18xf32> -> vector<8x18xf32>
    %c4_41 = arith.constant 4 : index
    %c0_42 = arith.constant 0 : index
    %c0_43 = arith.constant 0 : index
    %37 = vector.load %arg3[%c4_41, %c0_42, %c0_43] : memref<13x8x18xf32, #tpu.memory_space<vmem>>, vector<1x8x18xf32>
    %38 = vector.shape_cast %37 : vector<1x8x18xf32> to vector<8x18xf32>
    %39 = vector.shape_cast %36 : vector<8x18xf32> to vector<1x8x18xf32>
    tpu.vector_store %arg3[%c4_41, %c0_42, %c0_43], %39 {strides = array<i32>} : memref<13x8x18xf32, #tpu.memory_space<vmem>>, vector<1x8x18xf32>,
    %c5 = arith.constant 5 : index
    %c0_44 = arith.constant 0 : index
    %c0_45 = arith.constant 0 : index
    %40 = vector.load %arg1[%c5, %c0_44, %c0_45] : memref<13x8x18xf32, #tpu.memory_space<vmem>>, vector<1x8x18xf32>
    %41 = vector.shape_cast %40 : vector<1x8x18xf32> to vector<8x18xf32>
    %c5_46 = arith.constant 5 : index
    %c0_47 = arith.constant 0 : index
    %c0_48 = arith.constant 0 : index
    %42 = vector.load %arg2[%c5_46, %c0_47, %c0_48] : memref<13x18x18xf32, #tpu.memory_space<vmem>>, vector<1x18x18xf32>
    %43 = vector.shape_cast %42 : vector<1x18x18xf32> to vector<18x18xf32>
    %cst_49 = arith.constant dense<0.000000e+00> : vector<8x18xf32>
    %44 = tpu.matmul %41, %43, %cst_49 {dimension_numbers = #tpu.dot_dimension_numbers<[1], [0], [0], [1], [0, 0, 1, 1], [], []>} : vector<8x18xf32>, vector<18x18xf32>, vector<8x18xf32> -> vector<8x18xf32>
    %c5_50 = arith.constant 5 : index
    %c0_51 = arith.constant 0 : index
    %c0_52 = arith.constant 0 : index
    %45 = vector.load %arg3[%c5_50, %c0_51, %c0_52] : memref<13x8x18xf32, #tpu.memory_space<vmem>>, vector<1x8x18xf32>
    %46 = vector.shape_cast %45 : vector<1x8x18xf32> to vector<8x18xf32>
    %47 = vector.shape_cast %44 : vector<8x18xf32> to vector<1x8x18xf32>
    tpu.vector_store %arg3[%c5_50, %c0_51, %c0_52], %47 {strides = array<i32>} : memref<13x8x18xf32, #tpu.memory_space<vmem>>, vector<1x8x18xf32>,
    %c6 = arith.constant 6 : index
    %c0_53 = arith.constant 0 : index
    %c0_54 = arith.constant 0 : index
    %48 = vector.load %arg1[%c6, %c0_53, %c0_54] : memref<13x8x18xf32, #tpu.memory_space<vmem>>, vector<1x8x18xf32>
    %49 = vector.shape_cast %48 : vector<1x8x18xf32> to vector<8x18xf32>
    %c6_55 = arith.constant 6 : index
    %c0_56 = arith.constant 0 : index
    %c0_57 = arith.constant 0 : index
    %50 = vector.load %arg2[%c6_55, %c0_56, %c0_57] : memref<13x18x18xf32, #tpu.memory_space<vmem>>, vector<1x18x18xf32>
    %51 = vector.shape_cast %50 : vector<1x18x18xf32> to vector<18x18xf32>
    %cst_58 = arith.constant dense<0.000000e+00> : vector<8x18xf32>
    %52 = tpu.matmul %49, %51, %cst_58 {dimension_numbers = #tpu.dot_dimension_numbers<[1], [0], [0], [1], [0, 0, 1, 1], [], []>} : vector<8x18xf32>, vector<18x18xf32>, vector<8x18xf32> -> vector<8x18xf32>
    %c6_59 = arith.constant 6 : index
    %c0_60 = arith.constant 0 : index
    %c0_61 = arith.constant 0 : index
    %53 = vector.load %arg3[%c6_59, %c0_60, %c0_61] : memref<13x8x18xf32, #tpu.memory_space<vmem>>, vector<1x8x18xf32>
    %54 = vector.shape_cast %53 : vector<1x8x18xf32> to vector<8x18xf32>
    %55 = vector.shape_cast %52 : vector<8x18xf32> to vector<1x8x18xf32>
    tpu.vector_store %arg3[%c6_59, %c0_60, %c0_61], %55 {strides = array<i32>} : memref<13x8x18xf32, #tpu.memory_space<vmem>>, vector<1x8x18xf32>,
    %c7 = arith.constant 7 : index
    %c0_62 = arith.constant 0 : index
    %c0_63 = arith.constant 0 : index
    %56 = vector.load %arg1[%c7, %c0_62, %c0_63] : memref<13x8x18xf32, #tpu.memory_space<vmem>>, vector<1x8x18xf32>
    %57 = vector.shape_cast %56 : vector<1x8x18xf32> to vector<8x18xf32>
    %c7_64 = arith.constant 7 : index
    %c0_65 = arith.constant 0 : index
    %c0_66 = arith.constant 0 : index
    %58 = vector.load %arg2[%c7_64, %c0_65, %c0_66] : memref<13x18x18xf32, #tpu.memory_space<vmem>>, vector<1x18x18xf32>
    %59 = vector.shape_cast %58 : vector<1x18x18xf32> to vector<18x18xf32>
    %cst_67 = arith.constant dense<0.000000e+00> : vector<8x18xf32>
    %60 = tpu.matmul %57, %59, %cst_67 {dimension_numbers = #tpu.dot_dimension_numbers<[1], [0], [0], [1], [0, 0, 1, 1], [], []>} : vector<8x18xf32>, vector<18x18xf32>, vector<8x18xf32> -> vector<8x18xf32>
    %c7_68 = arith.constant 7 : index
    %c0_69 = arith.constant 0 : index
    %c0_70 = arith.constant 0 : index
    %61 = vector.load %arg3[%c7_68, %c0_69, %c0_70] : memref<13x8x18xf32, #tpu.memory_space<vmem>>, vector<1x8x18xf32>
    %62 = vector.shape_cast %61 : vector<1x8x18xf32> to vector<8x18xf32>
    %63 = vector.shape_cast %60 : vector<8x18xf32> to vector<1x8x18xf32>
    tpu.vector_store %arg3[%c7_68, %c0_69, %c0_70], %63 {strides = array<i32>} : memref<13x8x18xf32, #tpu.memory_space<vmem>>, vector<1x8x18xf32>,
    %c8 = arith.constant 8 : index
    %c0_71 = arith.constant 0 : index
    %c0_72 = arith.constant 0 : index
    %64 = vector.load %arg1[%c8, %c0_71, %c0_72] : memref<13x8x18xf32, #tpu.memory_space<vmem>>, vector<1x8x18xf32>
    %65 = vector.shape_cast %64 : vector<1x8x18xf32> to vector<8x18xf32>
    %c8_73 = arith.constant 8 : index
    %c0_74 = arith.constant 0 : index
    %c0_75 = arith.constant 0 : index
    %66 = vector.load %arg2[%c8_73, %c0_74, %c0_75] : memref<13x18x18xf32, #tpu.memory_space<vmem>>, vector<1x18x18xf32>
    %67 = vector.shape_cast %66 : vector<1x18x18xf32> to vector<18x18xf32>
    %cst_76 = arith.constant dense<0.000000e+00> : vector<8x18xf32>
    %68 = tpu.matmul %65, %67, %cst_76 {dimension_numbers = #tpu.dot_dimension_numbers<[1], [0], [0], [1], [0, 0, 1, 1], [], []>} : vector<8x18xf32>, vector<18x18xf32>, vector<8x18xf32> -> vector<8x18xf32>
    %c8_77 = arith.constant 8 : index
    %c0_78 = arith.constant 0 : index
    %c0_79 = arith.constant 0 : index
    %69 = vector.load %arg3[%c8_77, %c0_78, %c0_79] : memref<13x8x18xf32, #tpu.memory_space<vmem>>, vector<1x8x18xf32>
    %70 = vector.shape_cast %69 : vector<1x8x18xf32> to vector<8x18xf32>
    %71 = vector.shape_cast %68 : vector<8x18xf32> to vector<1x8x18xf32>
    tpu.vector_store %arg3[%c8_77, %c0_78, %c0_79], %71 {strides = array<i32>} : memref<13x8x18xf32, #tpu.memory_space<vmem>>, vector<1x8x18xf32>,
    %c9 = arith.constant 9 : index
    %c0_80 = arith.constant 0 : index
    %c0_81 = arith.constant 0 : index
    %72 = vector.load %arg1[%c9, %c0_80, %c0_81] : memref<13x8x18xf32, #tpu.memory_space<vmem>>, vector<1x8x18xf32>
    %73 = vector.shape_cast %72 : vector<1x8x18xf32> to vector<8x18xf32>
    %c9_82 = arith.constant 9 : index
    %c0_83 = arith.constant 0 : index
    %c0_84 = arith.constant 0 : index
    %74 = vector.load %arg2[%c9_82, %c0_83, %c0_84] : memref<13x18x18xf32, #tpu.memory_space<vmem>>, vector<1x18x18xf32>
    %75 = vector.shape_cast %74 : vector<1x18x18xf32> to vector<18x18xf32>
    %cst_85 = arith.constant dense<0.000000e+00> : vector<8x18xf32>
    %76 = tpu.matmul %73, %75, %cst_85 {dimension_numbers = #tpu.dot_dimension_numbers<[1], [0], [0], [1], [0, 0, 1, 1], [], []>} : vector<8x18xf32>, vector<18x18xf32>, vector<8x18xf32> -> vector<8x18xf32>
    %c9_86 = arith.constant 9 : index
    %c0_87 = arith.constant 0 : index
    %c0_88 = arith.constant 0 : index
    %77 = vector.load %arg3[%c9_86, %c0_87, %c0_88] : memref<13x8x18xf32, #tpu.memory_space<vmem>>, vector<1x8x18xf32>
    %78 = vector.shape_cast %77 : vector<1x8x18xf32> to vector<8x18xf32>
    %79 = vector.shape_cast %76 : vector<8x18xf32> to vector<1x8x18xf32>
    tpu.vector_store %arg3[%c9_86, %c0_87, %c0_88], %79 {strides = array<i32>} : memref<13x8x18xf32, #tpu.memory_space<vmem>>, vector<1x8x18xf32>,
    %c10 = arith.constant 10 : index
    %c0_89 = arith.constant 0 : index
    %c0_90 = arith.constant 0 : index
    %80 = vector.load %arg1[%c10, %c0_89, %c0_90] : memref<13x8x18xf32, #tpu.memory_space<vmem>>, vector<1x8x18xf32>
    %81 = vector.shape_cast %80 : vector<1x8x18xf32> to vector<8x18xf32>
    %c10_91 = arith.constant 10 : index
    %c0_92 = arith.constant 0 : index
    %c0_93 = arith.constant 0 : index
    %82 = vector.load %arg2[%c10_91, %c0_92, %c0_93] : memref<13x18x18xf32, #tpu.memory_space<vmem>>, vector<1x18x18xf32>
    %83 = vector.shape_cast %82 : vector<1x18x18xf32> to vector<18x18xf32>
    %cst_94 = arith.constant dense<0.000000e+00> : vector<8x18xf32>
    %84 = tpu.matmul %81, %83, %cst_94 {dimension_numbers = #tpu.dot_dimension_numbers<[1], [0], [0], [1], [0, 0, 1, 1], [], []>} : vector<8x18xf32>, vector<18x18xf32>, vector<8x18xf32> -> vector<8x18xf32>
    %c10_95 = arith.constant 10 : index
    %c0_96 = arith.constant 0 : index
    %c0_97 = arith.constant 0 : index
    %85 = vector.load %arg3[%c10_95, %c0_96, %c0_97] : memref<13x8x18xf32, #tpu.memory_space<vmem>>, vector<1x8x18xf32>
    %86 = vector.shape_cast %85 : vector<1x8x18xf32> to vector<8x18xf32>
    %87 = vector.shape_cast %84 : vector<8x18xf32> to vector<1x8x18xf32>
    tpu.vector_store %arg3[%c10_95, %c0_96, %c0_97], %87 {strides = array<i32>} : memref<13x8x18xf32, #tpu.memory_space<vmem>>, vector<1x8x18xf32>,
    %c11 = arith.constant 11 : index
    %c0_98 = arith.constant 0 : index
    %c0_99 = arith.constant 0 : index
    %88 = vector.load %arg1[%c11, %c0_98, %c0_99] : memref<13x8x18xf32, #tpu.memory_space<vmem>>, vector<1x8x18xf32>
    %89 = vector.shape_cast %88 : vector<1x8x18xf32> to vector<8x18xf32>
    %c11_100 = arith.constant 11 : index
    %c0_101 = arith.constant 0 : index
    %c0_102 = arith.constant 0 : index
    %90 = vector.load %arg2[%c11_100, %c0_101, %c0_102] : memref<13x18x18xf32, #tpu.memory_space<vmem>>, vector<1x18x18xf32>
    %91 = vector.shape_cast %90 : vector<1x18x18xf32> to vector<18x18xf32>
    %cst_103 = arith.constant dense<0.000000e+00> : vector<8x18xf32>
    %92 = tpu.matmul %89, %91, %cst_103 {dimension_numbers = #tpu.dot_dimension_numbers<[1], [0], [0], [1], [0, 0, 1, 1], [], []>} : vector<8x18xf32>, vector<18x18xf32>, vector<8x18xf32> -> vector<8x18xf32>
    %c11_104 = arith.constant 11 : index
    %c0_105 = arith.constant 0 : index
    %c0_106 = arith.constant 0 : index
    %93 = vector.load %arg3[%c11_104, %c0_105, %c0_106] : memref<13x8x18xf32, #tpu.memory_space<vmem>>, vector<1x8x18xf32>
    %94 = vector.shape_cast %93 : vector<1x8x18xf32> to vector<8x18xf32>
    %95 = vector.shape_cast %92 : vector<8x18xf32> to vector<1x8x18xf32>
    tpu.vector_store %arg3[%c11_104, %c0_105, %c0_106], %95 {strides = array<i32>} : memref<13x8x18xf32, #tpu.memory_space<vmem>>, vector<1x8x18xf32>,
    %c12 = arith.constant 12 : index
    %c0_107 = arith.constant 0 : index
    %c0_108 = arith.constant 0 : index
    %96 = vector.load %arg1[%c12, %c0_107, %c0_108] : memref<13x8x18xf32, #tpu.memory_space<vmem>>, vector<1x8x18xf32>
    %97 = vector.shape_cast %96 : vector<1x8x18xf32> to vector<8x18xf32>
    %c12_109 = arith.constant 12 : index
    %c0_110 = arith.constant 0 : index
    %c0_111 = arith.constant 0 : index
    %98 = vector.load %arg2[%c12_109, %c0_110, %c0_111] : memref<13x18x18xf32, #tpu.memory_space<vmem>>, vector<1x18x18xf32>
    %99 = vector.shape_cast %98 : vector<1x18x18xf32> to vector<18x18xf32>
    %cst_112 = arith.constant dense<0.000000e+00> : vector<8x18xf32>
    %100 = tpu.matmul %97, %99, %cst_112 {dimension_numbers = #tpu.dot_dimension_numbers<[1], [0], [0], [1], [0, 0, 1, 1], [], []>} : vector<8x18xf32>, vector<18x18xf32>, vector<8x18xf32> -> vector<8x18xf32>
    %c12_113 = arith.constant 12 : index
    %c0_114 = arith.constant 0 : index
    %c0_115 = arith.constant 0 : index
    %101 = vector.load %arg3[%c12_113, %c0_114, %c0_115] : memref<13x8x18xf32, #tpu.memory_space<vmem>>, vector<1x8x18xf32>
    %102 = vector.shape_cast %101 : vector<1x8x18xf32> to vector<8x18xf32>
    %103 = vector.shape_cast %100 : vector<8x18xf32> to vector<1x8x18xf32>
    tpu.vector_store %arg3[%c12_113, %c0_114, %c0_115], %103 {strides = array<i32>} : memref<13x8x18xf32, #tpu.memory_space<vmem>>, vector<1x8x18xf32>,
    return
  }
  func.func @transform_0(%arg0: i32) -> (i32, i32, i32) {
    %c0_i32 = arith.constant 0 : i32
    %c0_i32_0 = arith.constant 0 : i32
    %c0_i32_1 = arith.constant 0 : i32
    return %arg0, %c0_i32, %c0_i32_0 : i32, i32, i32
  }
  func.func @transform_1(%arg0: i32) -> (i32, i32, i32) {
    %c0_i32 = arith.constant 0 : i32
    %c0_i32_0 = arith.constant 0 : i32
    %c0_i32_1 = arith.constant 0 : i32
    return %arg0, %c0_i32, %c0_i32_0 : i32, i32, i32
  }
  func.func @transform_2(%arg0: i32) -> (i32, i32, i32) {
    %c0_i32 = arith.constant 0 : i32
    %c0_i32_0 = arith.constant 0 : i32
    %c0_i32_1 = arith.constant 0 : i32
    return %arg0, %c0_i32, %c0_i32_0 : i32, i32, i32
  }
}

module attributes {stable_mosaic.version = 11 : i64} {
  func.func @_mm_kernel(%arg0: i32, %arg1: memref<64x9xf32, #tpu.memory_space<vmem>>, %arg2: memref<9x9xf32, #tpu.memory_space<vmem>>, %arg3: memref<1x9xf32, #tpu.memory_space<vmem>>, %arg4: memref<64x9xf32, #tpu.memory_space<vmem>>) attributes {dimension_semantics = [#tpu.dimension_semantics<parallel>], iteration_bounds = array<i64: 2>, scalar_prefetch = 0 : i64, scratch_operands = 0 : i64, tpu.core_type = #tpu.core_type<tc>, window_params = [{transform_indices = @transform_0, window_bounds = array<i64: 64, 9>}, {pipeline_mode = #tpu.pipeline_mode<synchronous>, transform_indices = @transform_1, window_bounds = array<i64: 9, 9>}, {pipeline_mode = #tpu.pipeline_mode<synchronous>, transform_indices = @transform_2, window_bounds = array<i64: 1, 9>}, {transform_indices = @transform_3, window_bounds = array<i64: 64, 9>}]} {
    %c0 = arith.constant 0 : index
    %c0_0 = arith.constant 0 : index
    %0 = vector.load %arg1[%c0, %c0_0] : memref<64x9xf32, #tpu.memory_space<vmem>>, vector<64x9xf32>
    %cst = arith.constant 0.000000e+00 : f32
    %1 = vector.broadcast %cst : f32 to vector<64x9xf32>
    %2 = arith.maximumf %0, %1 : vector<64x9xf32>
    %c0_1 = arith.constant 0 : index
    %c0_2 = arith.constant 0 : index
    %3 = vector.load %arg2[%c0_1, %c0_2] : memref<9x9xf32, #tpu.memory_space<vmem>>, vector<9x9xf32>
    %cst_3 = arith.constant dense<0.000000e+00> : vector<64x9xf32>
    %4 = tpu.matmul %2, %3, %cst_3 {dimension_numbers = #tpu.dot_dimension_numbers<[1], [0], [0], [1], [0, 0, 1, 1], [], []>} : vector<64x9xf32>, vector<9x9xf32>, vector<64x9xf32> -> vector<64x9xf32>
    %c0_4 = arith.constant 0 : index
    %c0_5 = arith.constant 0 : index
    %5 = vector.load %arg3[%c0_4, %c0_5] : memref<1x9xf32, #tpu.memory_space<vmem>>, vector<1x9xf32>
    %6 = vector.broadcast %5 : vector<1x9xf32> to vector<64x9xf32>
    %7 = arith.addf %4, %6 : vector<64x9xf32>
    %c0_6 = arith.constant 0 : index
    %c0_7 = arith.constant 0 : index
    %8 = vector.load %arg4[%c0_6, %c0_7] : memref<64x9xf32, #tpu.memory_space<vmem>>, vector<64x9xf32>
    tpu.vector_store %arg4[%c0_6, %c0_7], %7 {strides = array<i32>} : memref<64x9xf32, #tpu.memory_space<vmem>>, vector<64x9xf32>,
    return
  }
  func.func @transform_0(%arg0: i32) -> (i32, i32) {
    %c0_i32 = arith.constant 0 : i32
    %c0_i32_0 = arith.constant 0 : i32
    return %arg0, %c0_i32 : i32, i32
  }
  func.func @transform_1(%arg0: i32) -> (i32, i32) {
    %c0_i32 = arith.constant 0 : i32
    %c0_i32_0 = arith.constant 0 : i32
    %c0_i32_1 = arith.constant 0 : i32
    return %c0_i32, %c0_i32_0 : i32, i32
  }
  func.func @transform_2(%arg0: i32) -> (i32, i32) {
    %c0_i32 = arith.constant 0 : i32
    %c0_i32_0 = arith.constant 0 : i32
    %c0_i32_1 = arith.constant 0 : i32
    return %c0_i32, %c0_i32_0 : i32, i32
  }
  func.func @transform_3(%arg0: i32) -> (i32, i32) {
    %c0_i32 = arith.constant 0 : i32
    %c0_i32_0 = arith.constant 0 : i32
    return %arg0, %c0_i32 : i32, i32
  }
}

module attributes {stable_mosaic.version = 11 : i64} {
  func.func @_conv_lin_kernel(%arg0: i32, %arg1: memref<64x81xf32, #tpu.memory_space<vmem>>, %arg2: memref<81x9xf32, #tpu.memory_space<vmem>>, %arg3: memref<1x9xf32, #tpu.memory_space<vmem>>, %arg4: memref<9x9xf32, #tpu.memory_space<vmem>>, %arg5: memref<1x9xf32, #tpu.memory_space<vmem>>, %arg6: memref<64x9xf32, #tpu.memory_space<vmem>>) attributes {dimension_semantics = [#tpu.dimension_semantics<parallel>], iteration_bounds = array<i64: 2>, scalar_prefetch = 0 : i64, scratch_operands = 0 : i64, tpu.core_type = #tpu.core_type<tc>, window_params = [{transform_indices = @transform_0, window_bounds = array<i64: 64, 81>}, {pipeline_mode = #tpu.pipeline_mode<synchronous>, transform_indices = @transform_1, window_bounds = array<i64: 81, 9>}, {pipeline_mode = #tpu.pipeline_mode<synchronous>, transform_indices = @transform_2, window_bounds = array<i64: 1, 9>}, {pipeline_mode = #tpu.pipeline_mode<synchronous>, transform_indices = @transform_3, window_bounds = array<i64: 9, 9>}, {pipeline_mode = #tpu.pipeline_mode<synchronous>, transform_indices = @transform_4, window_bounds = array<i64: 1, 9>}, {transform_indices = @transform_5, window_bounds = array<i64: 64, 9>}]} {
    %c0 = arith.constant 0 : index
    %c0_0 = arith.constant 0 : index
    %0 = vector.load %arg1[%c0, %c0_0] : memref<64x81xf32, #tpu.memory_space<vmem>>, vector<64x81xf32>
    %c0_1 = arith.constant 0 : index
    %c0_2 = arith.constant 0 : index
    %1 = vector.load %arg2[%c0_1, %c0_2] : memref<81x9xf32, #tpu.memory_space<vmem>>, vector<81x9xf32>
    %cst = arith.constant dense<0.000000e+00> : vector<64x9xf32>
    %2 = tpu.matmul %0, %1, %cst {dimension_numbers = #tpu.dot_dimension_numbers<[1], [0], [0], [1], [0, 0, 1, 1], [], []>} : vector<64x81xf32>, vector<81x9xf32>, vector<64x9xf32> -> vector<64x9xf32>
    %c0_3 = arith.constant 0 : index
    %c0_4 = arith.constant 0 : index
    %3 = vector.load %arg3[%c0_3, %c0_4] : memref<1x9xf32, #tpu.memory_space<vmem>>, vector<1x9xf32>
    %4 = vector.broadcast %3 : vector<1x9xf32> to vector<64x9xf32>
    %5 = arith.addf %2, %4 : vector<64x9xf32>
    %cst_5 = arith.constant 0.000000e+00 : f32
    %6 = vector.broadcast %cst_5 : f32 to vector<64x9xf32>
    %7 = arith.maximumf %5, %6 : vector<64x9xf32>
    %c0_6 = arith.constant 0 : index
    %c0_7 = arith.constant 0 : index
    %8 = vector.load %arg4[%c0_6, %c0_7] : memref<9x9xf32, #tpu.memory_space<vmem>>, vector<9x9xf32>
    %cst_8 = arith.constant dense<0.000000e+00> : vector<64x9xf32>
    %9 = tpu.matmul %7, %8, %cst_8 {dimension_numbers = #tpu.dot_dimension_numbers<[1], [0], [0], [1], [0, 0, 1, 1], [], []>} : vector<64x9xf32>, vector<9x9xf32>, vector<64x9xf32> -> vector<64x9xf32>
    %c0_9 = arith.constant 0 : index
    %c0_10 = arith.constant 0 : index
    %10 = vector.load %arg5[%c0_9, %c0_10] : memref<1x9xf32, #tpu.memory_space<vmem>>, vector<1x9xf32>
    %11 = vector.broadcast %10 : vector<1x9xf32> to vector<64x9xf32>
    %12 = arith.addf %9, %11 : vector<64x9xf32>
    %c0_11 = arith.constant 0 : index
    %c0_12 = arith.constant 0 : index
    %13 = vector.load %arg6[%c0_11, %c0_12] : memref<64x9xf32, #tpu.memory_space<vmem>>, vector<64x9xf32>
    tpu.vector_store %arg6[%c0_11, %c0_12], %12 {strides = array<i32>} : memref<64x9xf32, #tpu.memory_space<vmem>>, vector<64x9xf32>,
    return
  }
  func.func @transform_0(%arg0: i32) -> (i32, i32) {
    %c0_i32 = arith.constant 0 : i32
    %c0_i32_0 = arith.constant 0 : i32
    return %arg0, %c0_i32 : i32, i32
  }
  func.func @transform_1(%arg0: i32) -> (i32, i32) {
    %c0_i32 = arith.constant 0 : i32
    %c0_i32_0 = arith.constant 0 : i32
    %c0_i32_1 = arith.constant 0 : i32
    return %c0_i32, %c0_i32_0 : i32, i32
  }
  func.func @transform_2(%arg0: i32) -> (i32, i32) {
    %c0_i32 = arith.constant 0 : i32
    %c0_i32_0 = arith.constant 0 : i32
    %c0_i32_1 = arith.constant 0 : i32
    return %c0_i32, %c0_i32_0 : i32, i32
  }
  func.func @transform_3(%arg0: i32) -> (i32, i32) {
    %c0_i32 = arith.constant 0 : i32
    %c0_i32_0 = arith.constant 0 : i32
    %c0_i32_1 = arith.constant 0 : i32
    return %c0_i32, %c0_i32_0 : i32, i32
  }
  func.func @transform_4(%arg0: i32) -> (i32, i32) {
    %c0_i32 = arith.constant 0 : i32
    %c0_i32_0 = arith.constant 0 : i32
    %c0_i32_1 = arith.constant 0 : i32
    return %c0_i32, %c0_i32_0 : i32, i32
  }
  func.func @transform_5(%arg0: i32) -> (i32, i32) {
    %c0_i32 = arith.constant 0 : i32
    %c0_i32_0 = arith.constant 0 : i32
    return %arg0, %c0_i32 : i32, i32
  }
}

module attributes {stable_mosaic.version = 11 : i64} {
  func.func @_mm_kernel(%arg0: i32, %arg1: memref<16x36xf32, #tpu.memory_space<vmem>>, %arg2: memref<36x18xf32, #tpu.memory_space<vmem>>, %arg3: memref<1x18xf32, #tpu.memory_space<vmem>>, %arg4: memref<16x18xf32, #tpu.memory_space<vmem>>) attributes {dimension_semantics = [#tpu.dimension_semantics<parallel>], iteration_bounds = array<i64: 2>, scalar_prefetch = 0 : i64, scratch_operands = 0 : i64, tpu.core_type = #tpu.core_type<tc>, window_params = [{transform_indices = @transform_0, window_bounds = array<i64: 16, 36>}, {pipeline_mode = #tpu.pipeline_mode<synchronous>, transform_indices = @transform_1, window_bounds = array<i64: 36, 18>}, {pipeline_mode = #tpu.pipeline_mode<synchronous>, transform_indices = @transform_2, window_bounds = array<i64: 1, 18>}, {transform_indices = @transform_3, window_bounds = array<i64: 16, 18>}]} {
    %c0 = arith.constant 0 : index
    %c0_0 = arith.constant 0 : index
    %0 = vector.load %arg1[%c0, %c0_0] : memref<16x36xf32, #tpu.memory_space<vmem>>, vector<16x36xf32>
    %c0_1 = arith.constant 0 : index
    %c0_2 = arith.constant 0 : index
    %1 = vector.load %arg2[%c0_1, %c0_2] : memref<36x18xf32, #tpu.memory_space<vmem>>, vector<36x18xf32>
    %cst = arith.constant dense<0.000000e+00> : vector<16x18xf32>
    %2 = tpu.matmul %0, %1, %cst {dimension_numbers = #tpu.dot_dimension_numbers<[1], [0], [0], [1], [0, 0, 1, 1], [], []>} : vector<16x36xf32>, vector<36x18xf32>, vector<16x18xf32> -> vector<16x18xf32>
    %c0_3 = arith.constant 0 : index
    %c0_4 = arith.constant 0 : index
    %3 = vector.load %arg3[%c0_3, %c0_4] : memref<1x18xf32, #tpu.memory_space<vmem>>, vector<1x18xf32>
    %4 = vector.broadcast %3 : vector<1x18xf32> to vector<16x18xf32>
    %5 = arith.addf %2, %4 : vector<16x18xf32>
    %c0_5 = arith.constant 0 : index
    %c0_6 = arith.constant 0 : index
    %6 = vector.load %arg4[%c0_5, %c0_6] : memref<16x18xf32, #tpu.memory_space<vmem>>, vector<16x18xf32>
    tpu.vector_store %arg4[%c0_5, %c0_6], %5 {strides = array<i32>} : memref<16x18xf32, #tpu.memory_space<vmem>>, vector<16x18xf32>,
    return
  }
  func.func @transform_0(%arg0: i32) -> (i32, i32) {
    %c0_i32 = arith.constant 0 : i32
    %c0_i32_0 = arith.constant 0 : i32
    return %arg0, %c0_i32 : i32, i32
  }
  func.func @transform_1(%arg0: i32) -> (i32, i32) {
    %c0_i32 = arith.constant 0 : i32
    %c0_i32_0 = arith.constant 0 : i32
    %c0_i32_1 = arith.constant 0 : i32
    return %c0_i32, %c0_i32_0 : i32, i32
  }
  func.func @transform_2(%arg0: i32) -> (i32, i32) {
    %c0_i32 = arith.constant 0 : i32
    %c0_i32_0 = arith.constant 0 : i32
    %c0_i32_1 = arith.constant 0 : i32
    return %c0_i32, %c0_i32_0 : i32, i32
  }
  func.func @transform_3(%arg0: i32) -> (i32, i32) {
    %c0_i32 = arith.constant 0 : i32
    %c0_i32_0 = arith.constant 0 : i32
    return %arg0, %c0_i32 : i32, i32
  }
}

module attributes {stable_mosaic.version = 11 : i64} {
  func.func @_packed_cmm_kernel(%arg0: i32, %arg1: memref<5x8x18xf32, #tpu.memory_space<vmem>>, %arg2: memref<5x18x18xf32, #tpu.memory_space<vmem>>, %arg3: memref<5x8x18xf32, #tpu.memory_space<vmem>>) attributes {dimension_semantics = [#tpu.dimension_semantics<parallel>], iteration_bounds = array<i64: 2>, scalar_prefetch = 0 : i64, scratch_operands = 0 : i64, tpu.core_type = #tpu.core_type<tc>, window_params = [{transform_indices = @transform_0, window_bounds = array<i64: 5, 8, 18>}, {transform_indices = @transform_1, window_bounds = array<i64: 5, 18, 18>}, {transform_indices = @transform_2, window_bounds = array<i64: 5, 8, 18>}]} {
    %c0 = arith.constant 0 : index
    %c0_0 = arith.constant 0 : index
    %c0_1 = arith.constant 0 : index
    %0 = vector.load %arg1[%c0, %c0_0, %c0_1] : memref<5x8x18xf32, #tpu.memory_space<vmem>>, vector<1x8x18xf32>
    %1 = vector.shape_cast %0 : vector<1x8x18xf32> to vector<8x18xf32>
    %c0_2 = arith.constant 0 : index
    %c0_3 = arith.constant 0 : index
    %c0_4 = arith.constant 0 : index
    %2 = vector.load %arg2[%c0_2, %c0_3, %c0_4] : memref<5x18x18xf32, #tpu.memory_space<vmem>>, vector<1x18x18xf32>
    %3 = vector.shape_cast %2 : vector<1x18x18xf32> to vector<18x18xf32>
    %cst = arith.constant dense<0.000000e+00> : vector<8x18xf32>
    %4 = tpu.matmul %1, %3, %cst {dimension_numbers = #tpu.dot_dimension_numbers<[1], [0], [0], [1], [0, 0, 1, 1], [], []>} : vector<8x18xf32>, vector<18x18xf32>, vector<8x18xf32> -> vector<8x18xf32>
    %c0_5 = arith.constant 0 : index
    %c0_6 = arith.constant 0 : index
    %c0_7 = arith.constant 0 : index
    %5 = vector.load %arg3[%c0_5, %c0_6, %c0_7] : memref<5x8x18xf32, #tpu.memory_space<vmem>>, vector<1x8x18xf32>
    %6 = vector.shape_cast %5 : vector<1x8x18xf32> to vector<8x18xf32>
    %7 = vector.shape_cast %4 : vector<8x18xf32> to vector<1x8x18xf32>
    tpu.vector_store %arg3[%c0_5, %c0_6, %c0_7], %7 {strides = array<i32>} : memref<5x8x18xf32, #tpu.memory_space<vmem>>, vector<1x8x18xf32>,
    %c1 = arith.constant 1 : index
    %c0_8 = arith.constant 0 : index
    %c0_9 = arith.constant 0 : index
    %8 = vector.load %arg1[%c1, %c0_8, %c0_9] : memref<5x8x18xf32, #tpu.memory_space<vmem>>, vector<1x8x18xf32>
    %9 = vector.shape_cast %8 : vector<1x8x18xf32> to vector<8x18xf32>
    %c1_10 = arith.constant 1 : index
    %c0_11 = arith.constant 0 : index
    %c0_12 = arith.constant 0 : index
    %10 = vector.load %arg2[%c1_10, %c0_11, %c0_12] : memref<5x18x18xf32, #tpu.memory_space<vmem>>, vector<1x18x18xf32>
    %11 = vector.shape_cast %10 : vector<1x18x18xf32> to vector<18x18xf32>
    %cst_13 = arith.constant dense<0.000000e+00> : vector<8x18xf32>
    %12 = tpu.matmul %9, %11, %cst_13 {dimension_numbers = #tpu.dot_dimension_numbers<[1], [0], [0], [1], [0, 0, 1, 1], [], []>} : vector<8x18xf32>, vector<18x18xf32>, vector<8x18xf32> -> vector<8x18xf32>
    %c1_14 = arith.constant 1 : index
    %c0_15 = arith.constant 0 : index
    %c0_16 = arith.constant 0 : index
    %13 = vector.load %arg3[%c1_14, %c0_15, %c0_16] : memref<5x8x18xf32, #tpu.memory_space<vmem>>, vector<1x8x18xf32>
    %14 = vector.shape_cast %13 : vector<1x8x18xf32> to vector<8x18xf32>
    %15 = vector.shape_cast %12 : vector<8x18xf32> to vector<1x8x18xf32>
    tpu.vector_store %arg3[%c1_14, %c0_15, %c0_16], %15 {strides = array<i32>} : memref<5x8x18xf32, #tpu.memory_space<vmem>>, vector<1x8x18xf32>,
    %c2 = arith.constant 2 : index
    %c0_17 = arith.constant 0 : index
    %c0_18 = arith.constant 0 : index
    %16 = vector.load %arg1[%c2, %c0_17, %c0_18] : memref<5x8x18xf32, #tpu.memory_space<vmem>>, vector<1x8x18xf32>
    %17 = vector.shape_cast %16 : vector<1x8x18xf32> to vector<8x18xf32>
    %c2_19 = arith.constant 2 : index
    %c0_20 = arith.constant 0 : index
    %c0_21 = arith.constant 0 : index
    %18 = vector.load %arg2[%c2_19, %c0_20, %c0_21] : memref<5x18x18xf32, #tpu.memory_space<vmem>>, vector<1x18x18xf32>
    %19 = vector.shape_cast %18 : vector<1x18x18xf32> to vector<18x18xf32>
    %cst_22 = arith.constant dense<0.000000e+00> : vector<8x18xf32>
    %20 = tpu.matmul %17, %19, %cst_22 {dimension_numbers = #tpu.dot_dimension_numbers<[1], [0], [0], [1], [0, 0, 1, 1], [], []>} : vector<8x18xf32>, vector<18x18xf32>, vector<8x18xf32> -> vector<8x18xf32>
    %c2_23 = arith.constant 2 : index
    %c0_24 = arith.constant 0 : index
    %c0_25 = arith.constant 0 : index
    %21 = vector.load %arg3[%c2_23, %c0_24, %c0_25] : memref<5x8x18xf32, #tpu.memory_space<vmem>>, vector<1x8x18xf32>
    %22 = vector.shape_cast %21 : vector<1x8x18xf32> to vector<8x18xf32>
    %23 = vector.shape_cast %20 : vector<8x18xf32> to vector<1x8x18xf32>
    tpu.vector_store %arg3[%c2_23, %c0_24, %c0_25], %23 {strides = array<i32>} : memref<5x8x18xf32, #tpu.memory_space<vmem>>, vector<1x8x18xf32>,
    %c3 = arith.constant 3 : index
    %c0_26 = arith.constant 0 : index
    %c0_27 = arith.constant 0 : index
    %24 = vector.load %arg1[%c3, %c0_26, %c0_27] : memref<5x8x18xf32, #tpu.memory_space<vmem>>, vector<1x8x18xf32>
    %25 = vector.shape_cast %24 : vector<1x8x18xf32> to vector<8x18xf32>
    %c3_28 = arith.constant 3 : index
    %c0_29 = arith.constant 0 : index
    %c0_30 = arith.constant 0 : index
    %26 = vector.load %arg2[%c3_28, %c0_29, %c0_30] : memref<5x18x18xf32, #tpu.memory_space<vmem>>, vector<1x18x18xf32>
    %27 = vector.shape_cast %26 : vector<1x18x18xf32> to vector<18x18xf32>
    %cst_31 = arith.constant dense<0.000000e+00> : vector<8x18xf32>
    %28 = tpu.matmul %25, %27, %cst_31 {dimension_numbers = #tpu.dot_dimension_numbers<[1], [0], [0], [1], [0, 0, 1, 1], [], []>} : vector<8x18xf32>, vector<18x18xf32>, vector<8x18xf32> -> vector<8x18xf32>
    %c3_32 = arith.constant 3 : index
    %c0_33 = arith.constant 0 : index
    %c0_34 = arith.constant 0 : index
    %29 = vector.load %arg3[%c3_32, %c0_33, %c0_34] : memref<5x8x18xf32, #tpu.memory_space<vmem>>, vector<1x8x18xf32>
    %30 = vector.shape_cast %29 : vector<1x8x18xf32> to vector<8x18xf32>
    %31 = vector.shape_cast %28 : vector<8x18xf32> to vector<1x8x18xf32>
    tpu.vector_store %arg3[%c3_32, %c0_33, %c0_34], %31 {strides = array<i32>} : memref<5x8x18xf32, #tpu.memory_space<vmem>>, vector<1x8x18xf32>,
    %c4 = arith.constant 4 : index
    %c0_35 = arith.constant 0 : index
    %c0_36 = arith.constant 0 : index
    %32 = vector.load %arg1[%c4, %c0_35, %c0_36] : memref<5x8x18xf32, #tpu.memory_space<vmem>>, vector<1x8x18xf32>
    %33 = vector.shape_cast %32 : vector<1x8x18xf32> to vector<8x18xf32>
    %c4_37 = arith.constant 4 : index
    %c0_38 = arith.constant 0 : index
    %c0_39 = arith.constant 0 : index
    %34 = vector.load %arg2[%c4_37, %c0_38, %c0_39] : memref<5x18x18xf32, #tpu.memory_space<vmem>>, vector<1x18x18xf32>
    %35 = vector.shape_cast %34 : vector<1x18x18xf32> to vector<18x18xf32>
    %cst_40 = arith.constant dense<0.000000e+00> : vector<8x18xf32>
    %36 = tpu.matmul %33, %35, %cst_40 {dimension_numbers = #tpu.dot_dimension_numbers<[1], [0], [0], [1], [0, 0, 1, 1], [], []>} : vector<8x18xf32>, vector<18x18xf32>, vector<8x18xf32> -> vector<8x18xf32>
    %c4_41 = arith.constant 4 : index
    %c0_42 = arith.constant 0 : index
    %c0_43 = arith.constant 0 : index
    %37 = vector.load %arg3[%c4_41, %c0_42, %c0_43] : memref<5x8x18xf32, #tpu.memory_space<vmem>>, vector<1x8x18xf32>
    %38 = vector.shape_cast %37 : vector<1x8x18xf32> to vector<8x18xf32>
    %39 = vector.shape_cast %36 : vector<8x18xf32> to vector<1x8x18xf32>
    tpu.vector_store %arg3[%c4_41, %c0_42, %c0_43], %39 {strides = array<i32>} : memref<5x8x18xf32, #tpu.memory_space<vmem>>, vector<1x8x18xf32>,
    return
  }
  func.func @transform_0(%arg0: i32) -> (i32, i32, i32) {
    %c0_i32 = arith.constant 0 : i32
    %c0_i32_0 = arith.constant 0 : i32
    %c0_i32_1 = arith.constant 0 : i32
    return %arg0, %c0_i32, %c0_i32_0 : i32, i32, i32
  }
  func.func @transform_1(%arg0: i32) -> (i32, i32, i32) {
    %c0_i32 = arith.constant 0 : i32
    %c0_i32_0 = arith.constant 0 : i32
    %c0_i32_1 = arith.constant 0 : i32
    return %arg0, %c0_i32, %c0_i32_0 : i32, i32, i32
  }
  func.func @transform_2(%arg0: i32) -> (i32, i32, i32) {
    %c0_i32 = arith.constant 0 : i32
    %c0_i32_0 = arith.constant 0 : i32
    %c0_i32_1 = arith.constant 0 : i32
    return %arg0, %c0_i32, %c0_i32_0 : i32, i32, i32
  }
}

module attributes {stable_mosaic.version = 11 : i64} {
  func.func @_mm_kernel(%arg0: i32, %arg1: memref<16x9xf32, #tpu.memory_space<vmem>>, %arg2: memref<9x9xf32, #tpu.memory_space<vmem>>, %arg3: memref<1x9xf32, #tpu.memory_space<vmem>>, %arg4: memref<16x9xf32, #tpu.memory_space<vmem>>) attributes {dimension_semantics = [#tpu.dimension_semantics<parallel>], iteration_bounds = array<i64: 2>, scalar_prefetch = 0 : i64, scratch_operands = 0 : i64, tpu.core_type = #tpu.core_type<tc>, window_params = [{transform_indices = @transform_0, window_bounds = array<i64: 16, 9>}, {pipeline_mode = #tpu.pipeline_mode<synchronous>, transform_indices = @transform_1, window_bounds = array<i64: 9, 9>}, {pipeline_mode = #tpu.pipeline_mode<synchronous>, transform_indices = @transform_2, window_bounds = array<i64: 1, 9>}, {transform_indices = @transform_3, window_bounds = array<i64: 16, 9>}]} {
    %c0 = arith.constant 0 : index
    %c0_0 = arith.constant 0 : index
    %0 = vector.load %arg1[%c0, %c0_0] : memref<16x9xf32, #tpu.memory_space<vmem>>, vector<16x9xf32>
    %cst = arith.constant 0.000000e+00 : f32
    %1 = vector.broadcast %cst : f32 to vector<16x9xf32>
    %2 = arith.maximumf %0, %1 : vector<16x9xf32>
    %c0_1 = arith.constant 0 : index
    %c0_2 = arith.constant 0 : index
    %3 = vector.load %arg2[%c0_1, %c0_2] : memref<9x9xf32, #tpu.memory_space<vmem>>, vector<9x9xf32>
    %cst_3 = arith.constant dense<0.000000e+00> : vector<16x9xf32>
    %4 = tpu.matmul %2, %3, %cst_3 {dimension_numbers = #tpu.dot_dimension_numbers<[1], [0], [0], [1], [0, 0, 1, 1], [], []>} : vector<16x9xf32>, vector<9x9xf32>, vector<16x9xf32> -> vector<16x9xf32>
    %c0_4 = arith.constant 0 : index
    %c0_5 = arith.constant 0 : index
    %5 = vector.load %arg3[%c0_4, %c0_5] : memref<1x9xf32, #tpu.memory_space<vmem>>, vector<1x9xf32>
    %6 = vector.broadcast %5 : vector<1x9xf32> to vector<16x9xf32>
    %7 = arith.addf %4, %6 : vector<16x9xf32>
    %c0_6 = arith.constant 0 : index
    %c0_7 = arith.constant 0 : index
    %8 = vector.load %arg4[%c0_6, %c0_7] : memref<16x9xf32, #tpu.memory_space<vmem>>, vector<16x9xf32>
    tpu.vector_store %arg4[%c0_6, %c0_7], %7 {strides = array<i32>} : memref<16x9xf32, #tpu.memory_space<vmem>>, vector<16x9xf32>,
    return
  }
  func.func @transform_0(%arg0: i32) -> (i32, i32) {
    %c0_i32 = arith.constant 0 : i32
    %c0_i32_0 = arith.constant 0 : i32
    return %arg0, %c0_i32 : i32, i32
  }
  func.func @transform_1(%arg0: i32) -> (i32, i32) {
    %c0_i32 = arith.constant 0 : i32
    %c0_i32_0 = arith.constant 0 : i32
    %c0_i32_1 = arith.constant 0 : i32
    return %c0_i32, %c0_i32_0 : i32, i32
  }
  func.func @transform_2(%arg0: i32) -> (i32, i32) {
    %c0_i32 = arith.constant 0 : i32
    %c0_i32_0 = arith.constant 0 : i32
    %c0_i32_1 = arith.constant 0 : i32
    return %c0_i32, %c0_i32_0 : i32, i32
  }
  func.func @transform_3(%arg0: i32) -> (i32, i32) {
    %c0_i32 = arith.constant 0 : i32
    %c0_i32_0 = arith.constant 0 : i32
    return %arg0, %c0_i32 : i32, i32
  }
}

module attributes {stable_mosaic.version = 11 : i64} {
  func.func @_conv_lin_kernel(%arg0: i32, %arg1: memref<16x81xf32, #tpu.memory_space<vmem>>, %arg2: memref<81x9xf32, #tpu.memory_space<vmem>>, %arg3: memref<1x9xf32, #tpu.memory_space<vmem>>, %arg4: memref<9x9xf32, #tpu.memory_space<vmem>>, %arg5: memref<1x9xf32, #tpu.memory_space<vmem>>, %arg6: memref<16x9xf32, #tpu.memory_space<vmem>>) attributes {dimension_semantics = [#tpu.dimension_semantics<parallel>], iteration_bounds = array<i64: 2>, scalar_prefetch = 0 : i64, scratch_operands = 0 : i64, tpu.core_type = #tpu.core_type<tc>, window_params = [{transform_indices = @transform_0, window_bounds = array<i64: 16, 81>}, {pipeline_mode = #tpu.pipeline_mode<synchronous>, transform_indices = @transform_1, window_bounds = array<i64: 81, 9>}, {pipeline_mode = #tpu.pipeline_mode<synchronous>, transform_indices = @transform_2, window_bounds = array<i64: 1, 9>}, {pipeline_mode = #tpu.pipeline_mode<synchronous>, transform_indices = @transform_3, window_bounds = array<i64: 9, 9>}, {pipeline_mode = #tpu.pipeline_mode<synchronous>, transform_indices = @transform_4, window_bounds = array<i64: 1, 9>}, {transform_indices = @transform_5, window_bounds = array<i64: 16, 9>}]} {
    %c0 = arith.constant 0 : index
    %c0_0 = arith.constant 0 : index
    %0 = vector.load %arg1[%c0, %c0_0] : memref<16x81xf32, #tpu.memory_space<vmem>>, vector<16x81xf32>
    %c0_1 = arith.constant 0 : index
    %c0_2 = arith.constant 0 : index
    %1 = vector.load %arg2[%c0_1, %c0_2] : memref<81x9xf32, #tpu.memory_space<vmem>>, vector<81x9xf32>
    %cst = arith.constant dense<0.000000e+00> : vector<16x9xf32>
    %2 = tpu.matmul %0, %1, %cst {dimension_numbers = #tpu.dot_dimension_numbers<[1], [0], [0], [1], [0, 0, 1, 1], [], []>} : vector<16x81xf32>, vector<81x9xf32>, vector<16x9xf32> -> vector<16x9xf32>
    %c0_3 = arith.constant 0 : index
    %c0_4 = arith.constant 0 : index
    %3 = vector.load %arg3[%c0_3, %c0_4] : memref<1x9xf32, #tpu.memory_space<vmem>>, vector<1x9xf32>
    %4 = vector.broadcast %3 : vector<1x9xf32> to vector<16x9xf32>
    %5 = arith.addf %2, %4 : vector<16x9xf32>
    %cst_5 = arith.constant 0.000000e+00 : f32
    %6 = vector.broadcast %cst_5 : f32 to vector<16x9xf32>
    %7 = arith.maximumf %5, %6 : vector<16x9xf32>
    %c0_6 = arith.constant 0 : index
    %c0_7 = arith.constant 0 : index
    %8 = vector.load %arg4[%c0_6, %c0_7] : memref<9x9xf32, #tpu.memory_space<vmem>>, vector<9x9xf32>
    %cst_8 = arith.constant dense<0.000000e+00> : vector<16x9xf32>
    %9 = tpu.matmul %7, %8, %cst_8 {dimension_numbers = #tpu.dot_dimension_numbers<[1], [0], [0], [1], [0, 0, 1, 1], [], []>} : vector<16x9xf32>, vector<9x9xf32>, vector<16x9xf32> -> vector<16x9xf32>
    %c0_9 = arith.constant 0 : index
    %c0_10 = arith.constant 0 : index
    %10 = vector.load %arg5[%c0_9, %c0_10] : memref<1x9xf32, #tpu.memory_space<vmem>>, vector<1x9xf32>
    %11 = vector.broadcast %10 : vector<1x9xf32> to vector<16x9xf32>
    %12 = arith.addf %9, %11 : vector<16x9xf32>
    %c0_11 = arith.constant 0 : index
    %c0_12 = arith.constant 0 : index
    %13 = vector.load %arg6[%c0_11, %c0_12] : memref<16x9xf32, #tpu.memory_space<vmem>>, vector<16x9xf32>
    tpu.vector_store %arg6[%c0_11, %c0_12], %12 {strides = array<i32>} : memref<16x9xf32, #tpu.memory_space<vmem>>, vector<16x9xf32>,
    return
  }
  func.func @transform_0(%arg0: i32) -> (i32, i32) {
    %c0_i32 = arith.constant 0 : i32
    %c0_i32_0 = arith.constant 0 : i32
    return %arg0, %c0_i32 : i32, i32
  }
  func.func @transform_1(%arg0: i32) -> (i32, i32) {
    %c0_i32 = arith.constant 0 : i32
    %c0_i32_0 = arith.constant 0 : i32
    %c0_i32_1 = arith.constant 0 : i32
    return %c0_i32, %c0_i32_0 : i32, i32
  }
  func.func @transform_2(%arg0: i32) -> (i32, i32) {
    %c0_i32 = arith.constant 0 : i32
    %c0_i32_0 = arith.constant 0 : i32
    %c0_i32_1 = arith.constant 0 : i32
    return %c0_i32, %c0_i32_0 : i32, i32
  }
  func.func @transform_3(%arg0: i32) -> (i32, i32) {
    %c0_i32 = arith.constant 0 : i32
    %c0_i32_0 = arith.constant 0 : i32
    %c0_i32_1 = arith.constant 0 : i32
    return %c0_i32, %c0_i32_0 : i32, i32
  }
  func.func @transform_4(%arg0: i32) -> (i32, i32) {
    %c0_i32 = arith.constant 0 : i32
    %c0_i32_0 = arith.constant 0 : i32
    %c0_i32_1 = arith.constant 0 : i32
    return %c0_i32, %c0_i32_0 : i32, i32
  }
  func.func @transform_5(%arg0: i32) -> (i32, i32) {
    %c0_i32 = arith.constant 0 : i32
    %c0_i32_0 = arith.constant 0 : i32
    return %arg0, %c0_i32 : i32, i32
  }
}

module attributes {stable_mosaic.version = 11 : i64} {
  func.func @_mm_kernel(%arg0: i32, %arg1: memref<8x36xf32, #tpu.memory_space<vmem>>, %arg2: memref<36x18xf32, #tpu.memory_space<vmem>>, %arg3: memref<1x18xf32, #tpu.memory_space<vmem>>, %arg4: memref<8x18xf32, #tpu.memory_space<vmem>>) attributes {dimension_semantics = [#tpu.dimension_semantics<parallel>], iteration_bounds = array<i64: 1>, scalar_prefetch = 0 : i64, scratch_operands = 0 : i64, tpu.core_type = #tpu.core_type<tc>, window_params = [{transform_indices = @transform_0, window_bounds = array<i64: 8, 36>}, {pipeline_mode = #tpu.pipeline_mode<synchronous>, transform_indices = @transform_1, window_bounds = array<i64: 36, 18>}, {pipeline_mode = #tpu.pipeline_mode<synchronous>, transform_indices = @transform_2, window_bounds = array<i64: 1, 18>}, {transform_indices = @transform_3, window_bounds = array<i64: 8, 18>}]} {
    %c0 = arith.constant 0 : index
    %c0_0 = arith.constant 0 : index
    %0 = vector.load %arg1[%c0, %c0_0] : memref<8x36xf32, #tpu.memory_space<vmem>>, vector<8x36xf32>
    %c0_1 = arith.constant 0 : index
    %c0_2 = arith.constant 0 : index
    %1 = vector.load %arg2[%c0_1, %c0_2] : memref<36x18xf32, #tpu.memory_space<vmem>>, vector<36x18xf32>
    %cst = arith.constant dense<0.000000e+00> : vector<8x18xf32>
    %2 = tpu.matmul %0, %1, %cst {dimension_numbers = #tpu.dot_dimension_numbers<[1], [0], [0], [1], [0, 0, 1, 1], [], []>} : vector<8x36xf32>, vector<36x18xf32>, vector<8x18xf32> -> vector<8x18xf32>
    %c0_3 = arith.constant 0 : index
    %c0_4 = arith.constant 0 : index
    %3 = vector.load %arg3[%c0_3, %c0_4] : memref<1x18xf32, #tpu.memory_space<vmem>>, vector<1x18xf32>
    %4 = vector.broadcast %3 : vector<1x18xf32> to vector<8x18xf32>
    %5 = arith.addf %2, %4 : vector<8x18xf32>
    %c0_5 = arith.constant 0 : index
    %c0_6 = arith.constant 0 : index
    %6 = vector.load %arg4[%c0_5, %c0_6] : memref<8x18xf32, #tpu.memory_space<vmem>>, vector<8x18xf32>
    tpu.vector_store %arg4[%c0_5, %c0_6], %5 {strides = array<i32>} : memref<8x18xf32, #tpu.memory_space<vmem>>, vector<8x18xf32>,
    return
  }
  func.func @transform_0(%arg0: i32) -> (i32, i32) {
    %c0_i32 = arith.constant 0 : i32
    %c0_i32_0 = arith.constant 0 : i32
    return %arg0, %c0_i32 : i32, i32
  }
  func.func @transform_1(%arg0: i32) -> (i32, i32) {
    %c0_i32 = arith.constant 0 : i32
    %c0_i32_0 = arith.constant 0 : i32
    %c0_i32_1 = arith.constant 0 : i32
    return %c0_i32, %c0_i32_0 : i32, i32
  }
  func.func @transform_2(%arg0: i32) -> (i32, i32) {
    %c0_i32 = arith.constant 0 : i32
    %c0_i32_0 = arith.constant 0 : i32
    %c0_i32_1 = arith.constant 0 : i32
    return %c0_i32, %c0_i32_0 : i32, i32
  }
  func.func @transform_3(%arg0: i32) -> (i32, i32) {
    %c0_i32 = arith.constant 0 : i32
    %c0_i32_0 = arith.constant 0 : i32
    return %arg0, %c0_i32 : i32, i32
  }
}

module attributes {stable_mosaic.version = 11 : i64} {
  func.func @_packed_cmm_kernel(%arg0: i32, %arg1: memref<2x8x18xf32, #tpu.memory_space<vmem>>, %arg2: memref<2x18x18xf32, #tpu.memory_space<vmem>>, %arg3: memref<2x8x18xf32, #tpu.memory_space<vmem>>) attributes {dimension_semantics = [#tpu.dimension_semantics<parallel>], iteration_bounds = array<i64: 2>, scalar_prefetch = 0 : i64, scratch_operands = 0 : i64, tpu.core_type = #tpu.core_type<tc>, window_params = [{transform_indices = @transform_0, window_bounds = array<i64: 2, 8, 18>}, {transform_indices = @transform_1, window_bounds = array<i64: 2, 18, 18>}, {transform_indices = @transform_2, window_bounds = array<i64: 2, 8, 18>}]} {
    %c0 = arith.constant 0 : index
    %c0_0 = arith.constant 0 : index
    %c0_1 = arith.constant 0 : index
    %0 = vector.load %arg1[%c0, %c0_0, %c0_1] : memref<2x8x18xf32, #tpu.memory_space<vmem>>, vector<1x8x18xf32>
    %1 = vector.shape_cast %0 : vector<1x8x18xf32> to vector<8x18xf32>
    %c0_2 = arith.constant 0 : index
    %c0_3 = arith.constant 0 : index
    %c0_4 = arith.constant 0 : index
    %2 = vector.load %arg2[%c0_2, %c0_3, %c0_4] : memref<2x18x18xf32, #tpu.memory_space<vmem>>, vector<1x18x18xf32>
    %3 = vector.shape_cast %2 : vector<1x18x18xf32> to vector<18x18xf32>
    %cst = arith.constant dense<0.000000e+00> : vector<8x18xf32>
    %4 = tpu.matmul %1, %3, %cst {dimension_numbers = #tpu.dot_dimension_numbers<[1], [0], [0], [1], [0, 0, 1, 1], [], []>} : vector<8x18xf32>, vector<18x18xf32>, vector<8x18xf32> -> vector<8x18xf32>
    %c0_5 = arith.constant 0 : index
    %c0_6 = arith.constant 0 : index
    %c0_7 = arith.constant 0 : index
    %5 = vector.load %arg3[%c0_5, %c0_6, %c0_7] : memref<2x8x18xf32, #tpu.memory_space<vmem>>, vector<1x8x18xf32>
    %6 = vector.shape_cast %5 : vector<1x8x18xf32> to vector<8x18xf32>
    %7 = vector.shape_cast %4 : vector<8x18xf32> to vector<1x8x18xf32>
    tpu.vector_store %arg3[%c0_5, %c0_6, %c0_7], %7 {strides = array<i32>} : memref<2x8x18xf32, #tpu.memory_space<vmem>>, vector<1x8x18xf32>,
    %c1 = arith.constant 1 : index
    %c0_8 = arith.constant 0 : index
    %c0_9 = arith.constant 0 : index
    %8 = vector.load %arg1[%c1, %c0_8, %c0_9] : memref<2x8x18xf32, #tpu.memory_space<vmem>>, vector<1x8x18xf32>
    %9 = vector.shape_cast %8 : vector<1x8x18xf32> to vector<8x18xf32>
    %c1_10 = arith.constant 1 : index
    %c0_11 = arith.constant 0 : index
    %c0_12 = arith.constant 0 : index
    %10 = vector.load %arg2[%c1_10, %c0_11, %c0_12] : memref<2x18x18xf32, #tpu.memory_space<vmem>>, vector<1x18x18xf32>
    %11 = vector.shape_cast %10 : vector<1x18x18xf32> to vector<18x18xf32>
    %cst_13 = arith.constant dense<0.000000e+00> : vector<8x18xf32>
    %12 = tpu.matmul %9, %11, %cst_13 {dimension_numbers = #tpu.dot_dimension_numbers<[1], [0], [0], [1], [0, 0, 1, 1], [], []>} : vector<8x18xf32>, vector<18x18xf32>, vector<8x18xf32> -> vector<8x18xf32>
    %c1_14 = arith.constant 1 : index
    %c0_15 = arith.constant 0 : index
    %c0_16 = arith.constant 0 : index
    %13 = vector.load %arg3[%c1_14, %c0_15, %c0_16] : memref<2x8x18xf32, #tpu.memory_space<vmem>>, vector<1x8x18xf32>
    %14 = vector.shape_cast %13 : vector<1x8x18xf32> to vector<8x18xf32>
    %15 = vector.shape_cast %12 : vector<8x18xf32> to vector<1x8x18xf32>
    tpu.vector_store %arg3[%c1_14, %c0_15, %c0_16], %15 {strides = array<i32>} : memref<2x8x18xf32, #tpu.memory_space<vmem>>, vector<1x8x18xf32>,
    return
  }
  func.func @transform_0(%arg0: i32) -> (i32, i32, i32) {
    %c0_i32 = arith.constant 0 : i32
    %c0_i32_0 = arith.constant 0 : i32
    %c0_i32_1 = arith.constant 0 : i32
    return %arg0, %c0_i32, %c0_i32_0 : i32, i32, i32
  }
  func.func @transform_1(%arg0: i32) -> (i32, i32, i32) {
    %c0_i32 = arith.constant 0 : i32
    %c0_i32_0 = arith.constant 0 : i32
    %c0_i32_1 = arith.constant 0 : i32
    return %arg0, %c0_i32, %c0_i32_0 : i32, i32, i32
  }
  func.func @transform_2(%arg0: i32) -> (i32, i32, i32) {
    %c0_i32 = arith.constant 0 : i32
    %c0_i32_0 = arith.constant 0 : i32
    %c0_i32_1 = arith.constant 0 : i32
    return %arg0, %c0_i32, %c0_i32_0 : i32, i32, i32
  }
}

module attributes {stable_mosaic.version = 11 : i64} {
  func.func @_mm_kernel(%arg0: i32, %arg1: memref<8x9xf32, #tpu.memory_space<vmem>>, %arg2: memref<9x9xf32, #tpu.memory_space<vmem>>, %arg3: memref<1x9xf32, #tpu.memory_space<vmem>>, %arg4: memref<8x9xf32, #tpu.memory_space<vmem>>) attributes {dimension_semantics = [#tpu.dimension_semantics<parallel>], iteration_bounds = array<i64: 1>, scalar_prefetch = 0 : i64, scratch_operands = 0 : i64, tpu.core_type = #tpu.core_type<tc>, window_params = [{transform_indices = @transform_0, window_bounds = array<i64: 8, 9>}, {pipeline_mode = #tpu.pipeline_mode<synchronous>, transform_indices = @transform_1, window_bounds = array<i64: 9, 9>}, {pipeline_mode = #tpu.pipeline_mode<synchronous>, transform_indices = @transform_2, window_bounds = array<i64: 1, 9>}, {transform_indices = @transform_3, window_bounds = array<i64: 8, 9>}]} {
    %c0 = arith.constant 0 : index
    %c0_0 = arith.constant 0 : index
    %0 = vector.load %arg1[%c0, %c0_0] : memref<8x9xf32, #tpu.memory_space<vmem>>, vector<8x9xf32>
    %cst = arith.constant 0.000000e+00 : f32
    %1 = vector.broadcast %cst : f32 to vector<8x9xf32>
    %2 = arith.maximumf %0, %1 : vector<8x9xf32>
    %c0_1 = arith.constant 0 : index
    %c0_2 = arith.constant 0 : index
    %3 = vector.load %arg2[%c0_1, %c0_2] : memref<9x9xf32, #tpu.memory_space<vmem>>, vector<9x9xf32>
    %cst_3 = arith.constant dense<0.000000e+00> : vector<8x9xf32>
    %4 = tpu.matmul %2, %3, %cst_3 {dimension_numbers = #tpu.dot_dimension_numbers<[1], [0], [0], [1], [0, 0, 1, 1], [], []>} : vector<8x9xf32>, vector<9x9xf32>, vector<8x9xf32> -> vector<8x9xf32>
    %c0_4 = arith.constant 0 : index
    %c0_5 = arith.constant 0 : index
    %5 = vector.load %arg3[%c0_4, %c0_5] : memref<1x9xf32, #tpu.memory_space<vmem>>, vector<1x9xf32>
    %6 = vector.broadcast %5 : vector<1x9xf32> to vector<8x9xf32>
    %7 = arith.addf %4, %6 : vector<8x9xf32>
    %c0_6 = arith.constant 0 : index
    %c0_7 = arith.constant 0 : index
    %8 = vector.load %arg4[%c0_6, %c0_7] : memref<8x9xf32, #tpu.memory_space<vmem>>, vector<8x9xf32>
    tpu.vector_store %arg4[%c0_6, %c0_7], %7 {strides = array<i32>} : memref<8x9xf32, #tpu.memory_space<vmem>>, vector<8x9xf32>,
    return
  }
  func.func @transform_0(%arg0: i32) -> (i32, i32) {
    %c0_i32 = arith.constant 0 : i32
    %c0_i32_0 = arith.constant 0 : i32
    return %arg0, %c0_i32 : i32, i32
  }
  func.func @transform_1(%arg0: i32) -> (i32, i32) {
    %c0_i32 = arith.constant 0 : i32
    %c0_i32_0 = arith.constant 0 : i32
    %c0_i32_1 = arith.constant 0 : i32
    return %c0_i32, %c0_i32_0 : i32, i32
  }
  func.func @transform_2(%arg0: i32) -> (i32, i32) {
    %c0_i32 = arith.constant 0 : i32
    %c0_i32_0 = arith.constant 0 : i32
    %c0_i32_1 = arith.constant 0 : i32
    return %c0_i32, %c0_i32_0 : i32, i32
  }
  func.func @transform_3(%arg0: i32) -> (i32, i32) {
    %c0_i32 = arith.constant 0 : i32
    %c0_i32_0 = arith.constant 0 : i32
    return %arg0, %c0_i32 : i32, i32
  }
}

module attributes {stable_mosaic.version = 11 : i64} {
  func.func @_conv_lin_kernel(%arg0: i32, %arg1: memref<8x81xf32, #tpu.memory_space<vmem>>, %arg2: memref<81x9xf32, #tpu.memory_space<vmem>>, %arg3: memref<1x9xf32, #tpu.memory_space<vmem>>, %arg4: memref<9x9xf32, #tpu.memory_space<vmem>>, %arg5: memref<1x9xf32, #tpu.memory_space<vmem>>, %arg6: memref<8x9xf32, #tpu.memory_space<vmem>>) attributes {dimension_semantics = [#tpu.dimension_semantics<parallel>], iteration_bounds = array<i64: 1>, scalar_prefetch = 0 : i64, scratch_operands = 0 : i64, tpu.core_type = #tpu.core_type<tc>, window_params = [{transform_indices = @transform_0, window_bounds = array<i64: 8, 81>}, {pipeline_mode = #tpu.pipeline_mode<synchronous>, transform_indices = @transform_1, window_bounds = array<i64: 81, 9>}, {pipeline_mode = #tpu.pipeline_mode<synchronous>, transform_indices = @transform_2, window_bounds = array<i64: 1, 9>}, {pipeline_mode = #tpu.pipeline_mode<synchronous>, transform_indices = @transform_3, window_bounds = array<i64: 9, 9>}, {pipeline_mode = #tpu.pipeline_mode<synchronous>, transform_indices = @transform_4, window_bounds = array<i64: 1, 9>}, {transform_indices = @transform_5, window_bounds = array<i64: 8, 9>}]} {
    %c0 = arith.constant 0 : index
    %c0_0 = arith.constant 0 : index
    %0 = vector.load %arg1[%c0, %c0_0] : memref<8x81xf32, #tpu.memory_space<vmem>>, vector<8x81xf32>
    %c0_1 = arith.constant 0 : index
    %c0_2 = arith.constant 0 : index
    %1 = vector.load %arg2[%c0_1, %c0_2] : memref<81x9xf32, #tpu.memory_space<vmem>>, vector<81x9xf32>
    %cst = arith.constant dense<0.000000e+00> : vector<8x9xf32>
    %2 = tpu.matmul %0, %1, %cst {dimension_numbers = #tpu.dot_dimension_numbers<[1], [0], [0], [1], [0, 0, 1, 1], [], []>} : vector<8x81xf32>, vector<81x9xf32>, vector<8x9xf32> -> vector<8x9xf32>
    %c0_3 = arith.constant 0 : index
    %c0_4 = arith.constant 0 : index
    %3 = vector.load %arg3[%c0_3, %c0_4] : memref<1x9xf32, #tpu.memory_space<vmem>>, vector<1x9xf32>
    %4 = vector.broadcast %3 : vector<1x9xf32> to vector<8x9xf32>
    %5 = arith.addf %2, %4 : vector<8x9xf32>
    %cst_5 = arith.constant 0.000000e+00 : f32
    %6 = vector.broadcast %cst_5 : f32 to vector<8x9xf32>
    %7 = arith.maximumf %5, %6 : vector<8x9xf32>
    %c0_6 = arith.constant 0 : index
    %c0_7 = arith.constant 0 : index
    %8 = vector.load %arg4[%c0_6, %c0_7] : memref<9x9xf32, #tpu.memory_space<vmem>>, vector<9x9xf32>
    %cst_8 = arith.constant dense<0.000000e+00> : vector<8x9xf32>
    %9 = tpu.matmul %7, %8, %cst_8 {dimension_numbers = #tpu.dot_dimension_numbers<[1], [0], [0], [1], [0, 0, 1, 1], [], []>} : vector<8x9xf32>, vector<9x9xf32>, vector<8x9xf32> -> vector<8x9xf32>
    %c0_9 = arith.constant 0 : index
    %c0_10 = arith.constant 0 : index
    %10 = vector.load %arg5[%c0_9, %c0_10] : memref<1x9xf32, #tpu.memory_space<vmem>>, vector<1x9xf32>
    %11 = vector.broadcast %10 : vector<1x9xf32> to vector<8x9xf32>
    %12 = arith.addf %9, %11 : vector<8x9xf32>
    %c0_11 = arith.constant 0 : index
    %c0_12 = arith.constant 0 : index
    %13 = vector.load %arg6[%c0_11, %c0_12] : memref<8x9xf32, #tpu.memory_space<vmem>>, vector<8x9xf32>
    tpu.vector_store %arg6[%c0_11, %c0_12], %12 {strides = array<i32>} : memref<8x9xf32, #tpu.memory_space<vmem>>, vector<8x9xf32>,
    return
  }
  func.func @transform_0(%arg0: i32) -> (i32, i32) {
    %c0_i32 = arith.constant 0 : i32
    %c0_i32_0 = arith.constant 0 : i32
    return %arg0, %c0_i32 : i32, i32
  }
  func.func @transform_1(%arg0: i32) -> (i32, i32) {
    %c0_i32 = arith.constant 0 : i32
    %c0_i32_0 = arith.constant 0 : i32
    %c0_i32_1 = arith.constant 0 : i32
    return %c0_i32, %c0_i32_0 : i32, i32
  }
  func.func @transform_2(%arg0: i32) -> (i32, i32) {
    %c0_i32 = arith.constant 0 : i32
    %c0_i32_0 = arith.constant 0 : i32
    %c0_i32_1 = arith.constant 0 : i32
    return %c0_i32, %c0_i32_0 : i32, i32
  }
  func.func @transform_3(%arg0: i32) -> (i32, i32) {
    %c0_i32 = arith.constant 0 : i32
    %c0_i32_0 = arith.constant 0 : i32
    %c0_i32_1 = arith.constant 0 : i32
    return %c0_i32, %c0_i32_0 : i32, i32
  }
  func.func @transform_4(%arg0: i32) -> (i32, i32) {
    %c0_i32 = arith.constant 0 : i32
    %c0_i32_0 = arith.constant 0 : i32
    %c0_i32_1 = arith.constant 0 : i32
    return %c0_i32, %c0_i32_0 : i32, i32
  }
  func.func @transform_5(%arg0: i32) -> (i32, i32) {
    %c0_i32 = arith.constant 0 : i32
    %c0_i32_0 = arith.constant 0 : i32
    return %arg0, %c0_i32 : i32, i32
  }
}

module attributes {stable_mosaic.version = 11 : i64} {
  func.func @_packed_cmm_kernel(%arg0: i32, %arg1: memref<1x8x18xf32, #tpu.memory_space<vmem>>, %arg2: memref<1x18x18xf32, #tpu.memory_space<vmem>>, %arg3: memref<1x8x18xf32, #tpu.memory_space<vmem>>) attributes {dimension_semantics = [#tpu.dimension_semantics<parallel>], iteration_bounds = array<i64: 2>, scalar_prefetch = 0 : i64, scratch_operands = 0 : i64, tpu.core_type = #tpu.core_type<tc>, window_params = [{transform_indices = @transform_0, window_bounds = array<i64: 1, 8, 18>}, {transform_indices = @transform_1, window_bounds = array<i64: 1, 18, 18>}, {transform_indices = @transform_2, window_bounds = array<i64: 1, 8, 18>}]} {
    %c0 = arith.constant 0 : index
    %c0_0 = arith.constant 0 : index
    %c0_1 = arith.constant 0 : index
    %0 = vector.load %arg1[%c0, %c0_0, %c0_1] : memref<1x8x18xf32, #tpu.memory_space<vmem>>, vector<1x8x18xf32>
    %1 = vector.shape_cast %0 : vector<1x8x18xf32> to vector<8x18xf32>
    %c0_2 = arith.constant 0 : index
    %c0_3 = arith.constant 0 : index
    %c0_4 = arith.constant 0 : index
    %2 = vector.load %arg2[%c0_2, %c0_3, %c0_4] : memref<1x18x18xf32, #tpu.memory_space<vmem>>, vector<1x18x18xf32>
    %3 = vector.shape_cast %2 : vector<1x18x18xf32> to vector<18x18xf32>
    %cst = arith.constant dense<0.000000e+00> : vector<8x18xf32>
    %4 = tpu.matmul %1, %3, %cst {dimension_numbers = #tpu.dot_dimension_numbers<[1], [0], [0], [1], [0, 0, 1, 1], [], []>} : vector<8x18xf32>, vector<18x18xf32>, vector<8x18xf32> -> vector<8x18xf32>
    %c0_5 = arith.constant 0 : index
    %c0_6 = arith.constant 0 : index
    %c0_7 = arith.constant 0 : index
    %5 = vector.load %arg3[%c0_5, %c0_6, %c0_7] : memref<1x8x18xf32, #tpu.memory_space<vmem>>, vector<1x8x18xf32>
    %6 = vector.shape_cast %5 : vector<1x8x18xf32> to vector<8x18xf32>
    %7 = vector.shape_cast %4 : vector<8x18xf32> to vector<1x8x18xf32>
    tpu.vector_store %arg3[%c0_5, %c0_6, %c0_7], %7 {strides = array<i32>} : memref<1x8x18xf32, #tpu.memory_space<vmem>>, vector<1x8x18xf32>,
    return
  }
  func.func @transform_0(%arg0: i32) -> (i32, i32, i32) {
    %c0_i32 = arith.constant 0 : i32
    %c0_i32_0 = arith.constant 0 : i32
    %c0_i32_1 = arith.constant 0 : i32
    return %arg0, %c0_i32, %c0_i32_0 : i32, i32, i32
  }
  func.func @transform_1(%arg0: i32) -> (i32, i32, i32) {
    %c0_i32 = arith.constant 0 : i32
    %c0_i32_0 = arith.constant 0 : i32
    %c0_i32_1 = arith.constant 0 : i32
    return %arg0, %c0_i32, %c0_i32_0 : i32, i32, i32
  }
  func.func @transform_2(%arg0: i32) -> (i32, i32, i32) {
    %c0_i32 = arith.constant 0 : i32
    %c0_i32_0 = arith.constant 0 : i32
    %c0_i32_1 = arith.constant 0 : i32
    return %arg0, %c0_i32, %c0_i32_0 : i32, i32, i32
  }
}

module attributes {stable_mosaic.version = 11 : i64} {
  func.func @_mm_kernel(%arg0: i32, %arg1: memref<8x9xf32, #tpu.memory_space<vmem>>, %arg2: memref<9x9xf32, #tpu.memory_space<vmem>>, %arg3: memref<1x9xf32, #tpu.memory_space<vmem>>, %arg4: memref<8x9xf32, #tpu.memory_space<vmem>>) attributes {dimension_semantics = [#tpu.dimension_semantics<parallel>], iteration_bounds = array<i64: 1>, scalar_prefetch = 0 : i64, scratch_operands = 0 : i64, tpu.core_type = #tpu.core_type<tc>, window_params = [{transform_indices = @transform_0, window_bounds = array<i64: 8, 9>}, {pipeline_mode = #tpu.pipeline_mode<synchronous>, transform_indices = @transform_1, window_bounds = array<i64: 9, 9>}, {pipeline_mode = #tpu.pipeline_mode<synchronous>, transform_indices = @transform_2, window_bounds = array<i64: 1, 9>}, {transform_indices = @transform_3, window_bounds = array<i64: 8, 9>}]} {
    %c0 = arith.constant 0 : index
    %c0_0 = arith.constant 0 : index
    %0 = vector.load %arg1[%c0, %c0_0] : memref<8x9xf32, #tpu.memory_space<vmem>>, vector<8x9xf32>
    %c0_1 = arith.constant 0 : index
    %c0_2 = arith.constant 0 : index
    %1 = vector.load %arg2[%c0_1, %c0_2] : memref<9x9xf32, #tpu.memory_space<vmem>>, vector<9x9xf32>
    %cst = arith.constant dense<0.000000e+00> : vector<8x9xf32>
    %2 = tpu.matmul %0, %1, %cst {dimension_numbers = #tpu.dot_dimension_numbers<[1], [0], [0], [1], [0, 0, 1, 1], [], []>} : vector<8x9xf32>, vector<9x9xf32>, vector<8x9xf32> -> vector<8x9xf32>
    %c0_3 = arith.constant 0 : index
    %c0_4 = arith.constant 0 : index
    %3 = vector.load %arg3[%c0_3, %c0_4] : memref<1x9xf32, #tpu.memory_space<vmem>>, vector<1x9xf32>
    %4 = vector.broadcast %3 : vector<1x9xf32> to vector<8x9xf32>
    %5 = arith.addf %2, %4 : vector<8x9xf32>
    %c0_5 = arith.constant 0 : index
    %c0_6 = arith.constant 0 : index
    %6 = vector.load %arg4[%c0_5, %c0_6] : memref<8x9xf32, #tpu.memory_space<vmem>>, vector<8x9xf32>
    tpu.vector_store %arg4[%c0_5, %c0_6], %5 {strides = array<i32>} : memref<8x9xf32, #tpu.memory_space<vmem>>, vector<8x9xf32>,
    return
  }
  func.func @transform_0(%arg0: i32) -> (i32, i32) {
    %c0_i32 = arith.constant 0 : i32
    %c0_i32_0 = arith.constant 0 : i32
    return %arg0, %c0_i32 : i32, i32
  }
  func.func @transform_1(%arg0: i32) -> (i32, i32) {
    %c0_i32 = arith.constant 0 : i32
    %c0_i32_0 = arith.constant 0 : i32
    %c0_i32_1 = arith.constant 0 : i32
    return %c0_i32, %c0_i32_0 : i32, i32
  }
  func.func @transform_2(%arg0: i32) -> (i32, i32) {
    %c0_i32 = arith.constant 0 : i32
    %c0_i32_0 = arith.constant 0 : i32
    %c0_i32_1 = arith.constant 0 : i32
    return %c0_i32, %c0_i32_0 : i32, i32
  }
  func.func @transform_3(%arg0: i32) -> (i32, i32) {
    %c0_i32 = arith.constant 0 : i32
    %c0_i32_0 = arith.constant 0 : i32
    return %arg0, %c0_i32 : i32, i32
  }
}

module attributes {stable_mosaic.version = 11 : i64} {
  func.func @_mm_kernel(%arg0: i32, %arg1: memref<8x18xf32, #tpu.memory_space<vmem>>, %arg2: memref<18x36xf32, #tpu.memory_space<vmem>>, %arg3: memref<1x36xf32, #tpu.memory_space<vmem>>, %arg4: memref<8x36xf32, #tpu.memory_space<vmem>>) attributes {dimension_semantics = [#tpu.dimension_semantics<parallel>], iteration_bounds = array<i64: 1>, scalar_prefetch = 0 : i64, scratch_operands = 0 : i64, tpu.core_type = #tpu.core_type<tc>, window_params = [{transform_indices = @transform_0, window_bounds = array<i64: 8, 18>}, {pipeline_mode = #tpu.pipeline_mode<synchronous>, transform_indices = @transform_1, window_bounds = array<i64: 18, 36>}, {pipeline_mode = #tpu.pipeline_mode<synchronous>, transform_indices = @transform_2, window_bounds = array<i64: 1, 36>}, {transform_indices = @transform_3, window_bounds = array<i64: 8, 36>}]} {
    %c0 = arith.constant 0 : index
    %c0_0 = arith.constant 0 : index
    %0 = vector.load %arg1[%c0, %c0_0] : memref<8x18xf32, #tpu.memory_space<vmem>>, vector<8x18xf32>
    %c0_1 = arith.constant 0 : index
    %c0_2 = arith.constant 0 : index
    %1 = vector.load %arg2[%c0_1, %c0_2] : memref<18x36xf32, #tpu.memory_space<vmem>>, vector<18x36xf32>
    %cst = arith.constant dense<0.000000e+00> : vector<8x36xf32>
    %2 = tpu.matmul %0, %1, %cst {dimension_numbers = #tpu.dot_dimension_numbers<[1], [0], [0], [1], [0, 0, 1, 1], [], []>} : vector<8x18xf32>, vector<18x36xf32>, vector<8x36xf32> -> vector<8x36xf32>
    %c0_3 = arith.constant 0 : index
    %c0_4 = arith.constant 0 : index
    %3 = vector.load %arg3[%c0_3, %c0_4] : memref<1x36xf32, #tpu.memory_space<vmem>>, vector<1x36xf32>
    %4 = vector.broadcast %3 : vector<1x36xf32> to vector<8x36xf32>
    %5 = arith.addf %2, %4 : vector<8x36xf32>
    %c0_5 = arith.constant 0 : index
    %c0_6 = arith.constant 0 : index
    %6 = vector.load %arg4[%c0_5, %c0_6] : memref<8x36xf32, #tpu.memory_space<vmem>>, vector<8x36xf32>
    tpu.vector_store %arg4[%c0_5, %c0_6], %5 {strides = array<i32>} : memref<8x36xf32, #tpu.memory_space<vmem>>, vector<8x36xf32>,
    return
  }
  func.func @transform_0(%arg0: i32) -> (i32, i32) {
    %c0_i32 = arith.constant 0 : i32
    %c0_i32_0 = arith.constant 0 : i32
    return %arg0, %c0_i32 : i32, i32
  }
  func.func @transform_1(%arg0: i32) -> (i32, i32) {
    %c0_i32 = arith.constant 0 : i32
    %c0_i32_0 = arith.constant 0 : i32
    %c0_i32_1 = arith.constant 0 : i32
    return %c0_i32, %c0_i32_0 : i32, i32
  }
  func.func @transform_2(%arg0: i32) -> (i32, i32) {
    %c0_i32 = arith.constant 0 : i32
    %c0_i32_0 = arith.constant 0 : i32
    %c0_i32_1 = arith.constant 0 : i32
    return %c0_i32, %c0_i32_0 : i32, i32
  }
  func.func @transform_3(%arg0: i32) -> (i32, i32) {
    %c0_i32 = arith.constant 0 : i32
    %c0_i32_0 = arith.constant 0 : i32
    return %arg0, %c0_i32 : i32, i32
  }
}

module attributes {stable_mosaic.version = 11 : i64} {
  func.func @_mm_kernel(%arg0: i32, %arg1: memref<16x18xf32, #tpu.memory_space<vmem>>, %arg2: memref<18x36xf32, #tpu.memory_space<vmem>>, %arg3: memref<1x36xf32, #tpu.memory_space<vmem>>, %arg4: memref<16x36xf32, #tpu.memory_space<vmem>>) attributes {dimension_semantics = [#tpu.dimension_semantics<parallel>], iteration_bounds = array<i64: 2>, scalar_prefetch = 0 : i64, scratch_operands = 0 : i64, tpu.core_type = #tpu.core_type<tc>, window_params = [{transform_indices = @transform_0, window_bounds = array<i64: 16, 18>}, {pipeline_mode = #tpu.pipeline_mode<synchronous>, transform_indices = @transform_1, window_bounds = array<i64: 18, 36>}, {pipeline_mode = #tpu.pipeline_mode<synchronous>, transform_indices = @transform_2, window_bounds = array<i64: 1, 36>}, {transform_indices = @transform_3, window_bounds = array<i64: 16, 36>}]} {
    %c0 = arith.constant 0 : index
    %c0_0 = arith.constant 0 : index
    %0 = vector.load %arg1[%c0, %c0_0] : memref<16x18xf32, #tpu.memory_space<vmem>>, vector<16x18xf32>
    %c0_1 = arith.constant 0 : index
    %c0_2 = arith.constant 0 : index
    %1 = vector.load %arg2[%c0_1, %c0_2] : memref<18x36xf32, #tpu.memory_space<vmem>>, vector<18x36xf32>
    %cst = arith.constant dense<0.000000e+00> : vector<16x36xf32>
    %2 = tpu.matmul %0, %1, %cst {dimension_numbers = #tpu.dot_dimension_numbers<[1], [0], [0], [1], [0, 0, 1, 1], [], []>} : vector<16x18xf32>, vector<18x36xf32>, vector<16x36xf32> -> vector<16x36xf32>
    %c0_3 = arith.constant 0 : index
    %c0_4 = arith.constant 0 : index
    %3 = vector.load %arg3[%c0_3, %c0_4] : memref<1x36xf32, #tpu.memory_space<vmem>>, vector<1x36xf32>
    %4 = vector.broadcast %3 : vector<1x36xf32> to vector<16x36xf32>
    %5 = arith.addf %2, %4 : vector<16x36xf32>
    %c0_5 = arith.constant 0 : index
    %c0_6 = arith.constant 0 : index
    %6 = vector.load %arg4[%c0_5, %c0_6] : memref<16x36xf32, #tpu.memory_space<vmem>>, vector<16x36xf32>
    tpu.vector_store %arg4[%c0_5, %c0_6], %5 {strides = array<i32>} : memref<16x36xf32, #tpu.memory_space<vmem>>, vector<16x36xf32>,
    return
  }
  func.func @transform_0(%arg0: i32) -> (i32, i32) {
    %c0_i32 = arith.constant 0 : i32
    %c0_i32_0 = arith.constant 0 : i32
    return %arg0, %c0_i32 : i32, i32
  }
  func.func @transform_1(%arg0: i32) -> (i32, i32) {
    %c0_i32 = arith.constant 0 : i32
    %c0_i32_0 = arith.constant 0 : i32
    %c0_i32_1 = arith.constant 0 : i32
    return %c0_i32, %c0_i32_0 : i32, i32
  }
  func.func @transform_2(%arg0: i32) -> (i32, i32) {
    %c0_i32 = arith.constant 0 : i32
    %c0_i32_0 = arith.constant 0 : i32
    %c0_i32_1 = arith.constant 0 : i32
    return %c0_i32, %c0_i32_0 : i32, i32
  }
  func.func @transform_3(%arg0: i32) -> (i32, i32) {
    %c0_i32 = arith.constant 0 : i32
    %c0_i32_0 = arith.constant 0 : i32
    return %arg0, %c0_i32 : i32, i32
  }
}

module attributes {stable_mosaic.version = 11 : i64} {
  func.func @_mm_kernel(%arg0: i32, %arg1: memref<64x18xf32, #tpu.memory_space<vmem>>, %arg2: memref<18x36xf32, #tpu.memory_space<vmem>>, %arg3: memref<1x36xf32, #tpu.memory_space<vmem>>, %arg4: memref<64x36xf32, #tpu.memory_space<vmem>>) attributes {dimension_semantics = [#tpu.dimension_semantics<parallel>], iteration_bounds = array<i64: 2>, scalar_prefetch = 0 : i64, scratch_operands = 0 : i64, tpu.core_type = #tpu.core_type<tc>, window_params = [{transform_indices = @transform_0, window_bounds = array<i64: 64, 18>}, {pipeline_mode = #tpu.pipeline_mode<synchronous>, transform_indices = @transform_1, window_bounds = array<i64: 18, 36>}, {pipeline_mode = #tpu.pipeline_mode<synchronous>, transform_indices = @transform_2, window_bounds = array<i64: 1, 36>}, {transform_indices = @transform_3, window_bounds = array<i64: 64, 36>}]} {
    %c0 = arith.constant 0 : index
    %c0_0 = arith.constant 0 : index
    %0 = vector.load %arg1[%c0, %c0_0] : memref<64x18xf32, #tpu.memory_space<vmem>>, vector<64x18xf32>
    %c0_1 = arith.constant 0 : index
    %c0_2 = arith.constant 0 : index
    %1 = vector.load %arg2[%c0_1, %c0_2] : memref<18x36xf32, #tpu.memory_space<vmem>>, vector<18x36xf32>
    %cst = arith.constant dense<0.000000e+00> : vector<64x36xf32>
    %2 = tpu.matmul %0, %1, %cst {dimension_numbers = #tpu.dot_dimension_numbers<[1], [0], [0], [1], [0, 0, 1, 1], [], []>} : vector<64x18xf32>, vector<18x36xf32>, vector<64x36xf32> -> vector<64x36xf32>
    %c0_3 = arith.constant 0 : index
    %c0_4 = arith.constant 0 : index
    %3 = vector.load %arg3[%c0_3, %c0_4] : memref<1x36xf32, #tpu.memory_space<vmem>>, vector<1x36xf32>
    %4 = vector.broadcast %3 : vector<1x36xf32> to vector<64x36xf32>
    %5 = arith.addf %2, %4 : vector<64x36xf32>
    %c0_5 = arith.constant 0 : index
    %c0_6 = arith.constant 0 : index
    %6 = vector.load %arg4[%c0_5, %c0_6] : memref<64x36xf32, #tpu.memory_space<vmem>>, vector<64x36xf32>
    tpu.vector_store %arg4[%c0_5, %c0_6], %5 {strides = array<i32>} : memref<64x36xf32, #tpu.memory_space<vmem>>, vector<64x36xf32>,
    return
  }
  func.func @transform_0(%arg0: i32) -> (i32, i32) {
    %c0_i32 = arith.constant 0 : i32
    %c0_i32_0 = arith.constant 0 : i32
    return %arg0, %c0_i32 : i32, i32
  }
  func.func @transform_1(%arg0: i32) -> (i32, i32) {
    %c0_i32 = arith.constant 0 : i32
    %c0_i32_0 = arith.constant 0 : i32
    %c0_i32_1 = arith.constant 0 : i32
    return %c0_i32, %c0_i32_0 : i32, i32
  }
  func.func @transform_2(%arg0: i32) -> (i32, i32) {
    %c0_i32 = arith.constant 0 : i32
    %c0_i32_0 = arith.constant 0 : i32
    %c0_i32_1 = arith.constant 0 : i32
    return %c0_i32, %c0_i32_0 : i32, i32
  }
  func.func @transform_3(%arg0: i32) -> (i32, i32) {
    %c0_i32 = arith.constant 0 : i32
    %c0_i32_0 = arith.constant 0 : i32
    return %arg0, %c0_i32 : i32, i32
  }
}

</mosaic_0001>

<llo_original>
// kernel: mwt_cz2d_forward.29
$region0: #{mwt_cz2d_forward.29}
  #allocation0 [shape = 'u32[]', space=smem, size = 0x4, offset = 0x4, fixed_abs, tag = 'smem constant byte address 0x4 - core index']
  #allocation1 [shape = 'u32[144,128]{1,0:T(1,128)}', space=vmem, size = 0x12000, scoped, tag = 'internal scratch']
  %s0 = inlined_call_operand.vmem [shape: f32[128,36], index: 0, kind: input, shape index: {}]
  %s1 = inlined_call_operand.vmem [shape: f32[36,18], index: 1, kind: input, shape index: {}]
  %s2 = inlined_call_operand.vmem [shape: f32[1,18], index: 2, kind: input, shape index: {}]
  %s3 = inlined_call_operand.vmem [shape: f32[128,18], index: 3, kind: output, shape index: {}]
  %s4 = sld [smem:[#allocation0]]
  $region45: #{mwt_cz2d_forward.29} parent=0
    _
  %s6 = ssub.s32 1, %s4
  %s7 = scalar_select 0, %s6, %s4
  loop: start=0, step=1, limit=4
  $region2: #{mwt_cz2d_forward.29} parent=0 // loop_pre_header
    _
  $region3: #{mwt_cz2d_forward.29} parent=0 // loop_header
    %s9 = sphi 0, %s13
    %p10 = scmp.ge.s32.totalorder %s9, 4
    %s19 = sphi 0, %s21
    %s22 = sphi 0, %s19
    %s23 = sphi 0, %s22
    %s39 = sphi 0, %s23
    %s43 = sphi 0, %s43
    %s45 = sphi 0, %s43
    %s46 = sphi 0, %s45
    %s60 = sphi 0, %s46
    %s64 = sphi 0, %s64
    %s66 = sphi 0, %s64
    %s67 = sphi 0, %s66
    %s81 = sphi 0, %s67
    %s87 = sphi 0, %s89
    %s90 = sphi 0, %s87
    %s91 = sphi 0, %s90
    %s107 = sphi 0, %s91
  $region4: #{mwt_cz2d_forward.29} parent=0 // loop_header_branch
    %12 = sbr.rel (%p10) target = $region8
  $region5: #{mwt_cz2d_forward.29} parent=0 // loop_body
    %s14 = ssub.s32 %s9, 1
    %s15 = ssub.s32 %s9, 2
    %s16 = sadd.s32 %s9, 1
    %s17 = ssub.s32 %s9, %s16
    %p18 = scmp.eq.s32.totalorder %s17, 0
    %s20 = sadd.s32 %s19, 1
    %s21 = scalar_select %p18, %s19, %s20
    %p24 = pneg %p18
    %p25 = scmp.eq.s32.totalorder %s9, 1
    %p26 = por %p24, %p25
    %p27 = scmp.ne.s32.totalorder %s19, %s22
    %p28 = scmp.eq.s32.totalorder %s9, 0
    %p29 = por %p27, %p28
    %p30 = scmp.ne.s32.totalorder %s19, %s22
    %p31 = scmp.eq.s32.totalorder %s14, 1
    %p32 = por %p30, %p31
    %p33 = scmp.ne.s32.totalorder %s22, %s23
    %p34 = scmp.eq.s32.totalorder %s14, 0
    %p35 = por %p33, %p34
    %p36 = scmp.ne.s32.totalorder %s22, %s23
    %p37 = scmp.eq.s32.totalorder %s15, 1
    %p38 = por %p36, %p37
    %p40 = scmp.ne.s32.totalorder %s23, %s39
    %p41 = scmp.eq.s32.totalorder %s15, 0
    %p42 = por %p40, %p41
    %s44 = sadd.s32 %s43, 1
    %p47 = scmp.eq.s32.totalorder %s9, 1
    %p48 = scmp.ne.s32.totalorder %s43, %s45
    %p49 = scmp.eq.s32.totalorder %s9, 0
    %p50 = por %p48, %p49
    %p51 = scmp.ne.s32.totalorder %s43, %s45
    %p52 = scmp.eq.s32.totalorder %s14, 1
    %p53 = por %p51, %p52
    %p54 = scmp.ne.s32.totalorder %s45, %s46
    %p55 = scmp.eq.s32.totalorder %s14, 0
    %p56 = por %p54, %p55
    %p57 = scmp.ne.s32.totalorder %s45, %s46
    %p58 = scmp.eq.s32.totalorder %s15, 1
    %p59 = por %p57, %p58
    %p61 = scmp.ne.s32.totalorder %s46, %s60
    %p62 = scmp.eq.s32.totalorder %s15, 0
    %p63 = por %p61, %p62
    %s65 = sadd.s32 %s64, 1
    %p68 = scmp.eq.s32.totalorder %s9, 1
    %p69 = scmp.ne.s32.totalorder %s64, %s66
    %p70 = scmp.eq.s32.totalorder %s9, 0
    %p71 = por %p69, %p70
    %p72 = scmp.ne.s32.totalorder %s64, %s66
    %p73 = scmp.eq.s32.totalorder %s14, 1
    %p74 = por %p72, %p73
    %p75 = scmp.ne.s32.totalorder %s66, %s67
    %p76 = scmp.eq.s32.totalorder %s14, 0
    %p77 = por %p75, %p76
    %p78 = scmp.ne.s32.totalorder %s66, %s67
    %p79 = scmp.eq.s32.totalorder %s15, 1
    %p80 = por %p78, %p79
    %p82 = scmp.ne.s32.totalorder %s67, %s81
    %p83 = scmp.eq.s32.totalorder %s15, 0
    %p84 = por %p82, %p83
    %s85 = ssub.s32 %s9, %s16
    %p86 = scmp.eq.s32.totalorder %s85, 0
    %s88 = sadd.s32 %s87, 1
    %s89 = scalar_select %p86, %s87, %s88
    %p92 = pneg %p86
    %p93 = scmp.eq.s32.totalorder %s9, 1
    %p94 = por %p92, %p93
    %p95 = scmp.ne.s32.totalorder %s87, %s90
    %p96 = scmp.eq.s32.totalorder %s9, 0
    %p97 = por %p95, %p96
    %p98 = scmp.ne.s32.totalorder %s87, %s90
    %p99 = scmp.eq.s32.totalorder %s14, 1
    %p100 = por %p98, %p99
    %p101 = scmp.ne.s32.totalorder %s90, %s91
    %p102 = scmp.eq.s32.totalorder %s14, 0
    %p103 = por %p101, %p102
    %p104 = scmp.ne.s32.totalorder %s90, %s91
    %p105 = scmp.eq.s32.totalorder %s15, 1
    %p106 = por %p104, %p105
    %p108 = scmp.ne.s32.totalorder %s91, %s107
    %p109 = scmp.eq.s32.totalorder %s15, 0
    %p110 = por %p108, %p109
    %p111 = scmp.le.s32.totalorder 1, %s9
    %p112 = scmp.lt.s32.totalorder %s9, 3
    %p113 = pnand %p111, %p112
    %p114 = pneg %p113
    // Predicated region
    $region9: #{mwt_cz2d_forward.29} parent=5 // pred_check
      _
    $region10: #{mwt_cz2d_forward.29} parent=5 // pred_check_branch
      %116 = sbr.rel (%p113) target = $region12
    $region11: #{mwt_cz2d_forward.29} parent=5 // pred_region
      %s117 = ssub.s32 %s9, 1
      // Predicated region
      $region13: #{mwt_cz2d_forward.29} parent=11 // pred_check
        %p118 = pneg %p56
      $region14: #{mwt_cz2d_forward.29} parent=11 // pred_check_branch
        %120 = sbr.rel (%p118) target = $region16
      $region15: #{mwt_cz2d_forward.29} parent=11 // pred_region
        _
      $region16: #{mwt_cz2d_forward.29} parent=11 // pred_fallthru
        _
      // Predicated region
      $region17: #{mwt_cz2d_forward.29} parent=11 // pred_check
        %p121 = pneg %p77
      $region18: #{mwt_cz2d_forward.29} parent=11 // pred_check_branch
        %123 = sbr.rel (%p121) target = $region20
      $region19: #{mwt_cz2d_forward.29} parent=11 // pred_region
        _
      $region20: #{mwt_cz2d_forward.29} parent=11 // pred_fallthru
        _
    $region12: #{mwt_cz2d_forward.29} parent=5 // pred_fallthru
      _
    %p124 = scmp.lt.s32.totalorder %s9, 2
    // Predicated region
    $region21: #{mwt_cz2d_forward.29} parent=5 // pred_check
      %p125 = pneg %p124
    $region22: #{mwt_cz2d_forward.29} parent=5 // pred_check_branch
      %127 = sbr.rel (%p125) target = $region24
    $region23: #{mwt_cz2d_forward.29} parent=5 // pred_region
      // Predicated region
      $region25: #{mwt_cz2d_forward.29} parent=23 // pred_check
        %p128 = pneg %p29
      $region26: #{mwt_cz2d_forward.29} parent=23 // pred_check_branch
        %130 = sbr.rel (%p128) target = $region28
      $region27: #{mwt_cz2d_forward.29} parent=23 // pred_region
        %s131 = smul.u32 8, %s9
        %p132 = scmp.lt.s32.totalorder %s131, 15
        %s133 = scalar_select %p132, %s131, 15
        %s134 = smul.addr %s133, 8
        %s135 = scalar_lea.vmem %s0, %s134
        %s136 = smul.u32 8, %s9
      $region28: #{mwt_cz2d_forward.29} parent=23 // pred_fallthru
        _
    $region24: #{mwt_cz2d_forward.29} parent=5 // pred_fallthru
      _
    %p137 = scmp.le.s32.totalorder 1, %s9
    %p138 = scmp.lt.s32.totalorder %s9, 3
    %p139 = pnand %p137, %p138
    %p140 = pneg %p139
    // Predicated region
    $region29: #{mwt_cz2d_forward.29} parent=5 // pred_check
      _
    $region30: #{mwt_cz2d_forward.29} parent=5 // pred_check_branch
      %142 = sbr.rel (%p139) target = $region32
    $region31: #{mwt_cz2d_forward.29} parent=5 // pred_region
      %s143 = ssub.s32 %s9, 1
      %s144 = smul.u32 8, %s14
      %p145 = scmp.lt.s32.totalorder %s144, 15
      %s146 = scalar_select %p145, %s144, 15
      %s147 = smul.addr %s146, 8
      %s148 = scalar_lea.vmem %s0, %s147
      %p149 = pneg %p35
      %p150 = pneg %p32
      %p151 = pneg %p56
      %p152 = pneg %p53
      %p153 = pneg %p77
      %p154 = pneg %p74
      %p155 = pneg %p103
      %p156 = pneg %p100
      %s157 = smul.u32 8, %s14
      %p158 = scmp.lt.s32.totalorder %s157, 15
      %s159 = scalar_select %p158, %s157, 15
      %s160 = smul.addr %s159, 8
      %s161 = scalar_lea.vmem %s3, %s160
      %s162 = smul.u32 8, %s14
      %p163 = scmp.lt.s32.totalorder %s162, 15
      %s164 = scalar_select %p163, %s162, 15
      %s165 = smul.addr %s164, 8
      %s166 = scalar_lea.vmem %s0, %s165
      %s167 = smul.u32 8, %s14
      %s168 = smul.u32 8, %s14
      %p169 = scmp.lt.s32.totalorder %s168, 15
      %s170 = scalar_select %p169, %s168, 15
      %s171 = smul.addr %s170, 8
      %s172 = scalar_lea.vmem %s3, %s171
      %s173 = smul.u32 8, %s14
      %v174 = vld [vmem:[%s166] sm:$0xff]
      %v175 = vld [vmem:[%s166 + $0x8] sm:$0xff]
      %v176 = vld [vmem:[%s166 + $0x10] sm:$0xff]
      %v177 = vld [vmem:[%s166 + $0x18] sm:$0xff]
      %v178 = vld [vmem:[%s166 + $0x20] sm:$0xff]
      %v179 = vld [vmem:[%s166 + $0x28] sm:$0xff]
      %v180 = vld [vmem:[%s166 + $0x30] sm:$0xff]
      %v181 = vld [vmem:[%s166 + $0x38] sm:$0xff]
      %v182 = vld [vmem:[%s1] sm:$0xff]
      %v183 = vld [vmem:[%s1 + $0x8] sm:$0xff]
      %v184 = vld [vmem:[%s1 + $0x10] sm:$0xff]
      %v185 = vld [vmem:[%s1 + $0x18] sm:$0xff]
      %v186 = vld [vmem:[%s1 + $0x20] sm:$0xf]
      %v187 = vld [vmem:[%s2] sm:$0x1]
      %v189 = vlaneseq
      %v190 = vshrl.u32 %v189, 7
      %v191 = vsub.s32 0, %v190
      %v192 = vrot.slane %v187, %v191
      %vm194 = vcmask 293888
      %v196 = vsel %vm194, %v174, 0
      %v199 = vsel %vm194, %v175, 0
      %v202 = vsel %vm194, %v176, 0
      %v205 = vsel %vm194, %v177, 0
      %v208 = vsel %vm194, %v178, 0
      %v211 = vsel %vm194, %v179, 0
      %v214 = vsel %vm194, %v180, 0
      %v217 = vsel %vm194, %v181, 0
      %vm219 = vcmask 1043456
      %v221 = vsel %vm219, %v186, 0
      %223 = vmatprep.subr.mxu0 0.0
      %224 = vmatpush1.msra.mxu0 %v182
      %225 = vmatprep.subr.mxu0 0.0
      %226 = vmatpush1.msra.mxu0 %v183
      %227 = vmatprep.subr.mxu0 0.0
      %228 = vmatpush1.msra.mxu0 %v184
      %229 = vmatprep.subr.mxu0 0.0
      %230 = vmatpush1.msra.mxu0 %v185
      %231 = vmatprep.subr.mxu0 0.0
      %232 = vmatpush1.msra.mxu0 %v221
      %233 = vmatprep.subr.mxu0 0.0
      %234 = vmatpush1.msra.mxu0 0.0
      %235 = vmatprep.subr.mxu0 0.0
      %236 = vmatpush1.msra.mxu0 0.0
      %237 = vmatprep.subr.mxu0 0.0
      %238 = vmatpush1.msra.mxu0 0.0
      %239 = vmatprep.subr.mxu0 0.0
      %240 = vmatpush1.msra.mxu0 0.0
      %241 = vmatprep.subr.mxu0 0.0
      %242 = vmatpush1.msra.mxu0 0.0
      %243 = vmatprep.subr.mxu0 0.0
      %244 = vmatpush1.msra.mxu0 0.0
      %245 = vmatprep.subr.mxu0 0.0
      %246 = vmatpush1.msra.mxu0 0.0
      %247 = vmatprep.subr.mxu0 0.0
      %248 = vmatpush1.msra.mxu0 0.0
      %249 = vmatprep.subr.mxu0 0.0
      %250 = vmatpush1.msra.mxu0 0.0
      %251 = vmatprep.subr.mxu0 0.0
      %252 = vmatpush1.msra.mxu0 0.0
      %253 = vmatprep.subr.mxu0 0.0
      %254 = vmatpush1.msra.mxu0 0.0
      %255 = vmatprep.subr.mxu0 0.0
      %256 = vmatpush1.msra.mxu0 0.0
      %257 = vmatprep.subr.mxu0 0.0
      %258 = vmatpush1.msra.mxu0 0.0
      %259 = vmatprep.subr.mxu0 0.0
      %260 = vmatpush1.msra.mxu0 0.0
      %261 = vmatprep.subr.mxu0 0.0
      %262 = vmatpush1.msra.mxu0 0.0
      %263 = vmatprep.subr.mxu0 0.0
      %264 = vmatpush1.msra.mxu0 0.0
      %265 = vmatprep.subr.mxu0 0.0
      %266 = vmatpush1.msra.mxu0 0.0
      %267 = vmatprep.subr.mxu0 0.0
      %268 = vmatpush1.msra.mxu0 0.0
      %269 = vmatprep.subr.mxu0 0.0
      %270 = vmatpush1.msra.mxu0 0.0
      %271 = vmatprep.subr.mxu0 0.0
      %272 = vmatpush1.msra.mxu0 0.0
      %273 = vmatprep.subr.mxu0 0.0
      %274 = vmatpush1.msra.mxu0 0.0
      %275 = vmatprep.subr.mxu0 0.0
      %276 = vmatpush1.msra.mxu0 0.0
      %277 = vmatprep.subr.mxu0 0.0
      %278 = vmatpush1.msra.mxu0 0.0
      %279 = vmatprep.subr.mxu0 0.0
      %280 = vmatpush1.msra.mxu0 0.0
      %281 = vmatprep.subr.mxu0 0.0
      %282 = vmatpush1.msra.mxu0 0.0
      %283 = vmatprep.subr.mxu0 0.0
      %284 = vmatpush1.msra.mxu0 0.0
      %285 = vmatprep.subr.mxu0 0.0
      %286 = vmatpush1.msra.mxu0 0.0
      %287 = vmatprep.mubr.f32.mxu0 0.0
      %288 = vmatmul.mubr.f32.gmra.mrb[0].mxu0 %v196
      %v289 = vpop.f32.mrb[0].mxu0
      %v290 = vadd.f32 %v192, %v289
      %v291 = vpop.f32.mrb[0].mxu0
      %292 = vmatprep.mubr.f32.mxu0 0.0
      %293 = vmatmul.mubr.f32.gmra.mrb[0].mxu0 %v199
      %v294 = vpop.f32.mrb[0].mxu0
      %v295 = vadd.f32 %v192, %v294
      %v296 = vpop.f32.mrb[0].mxu0
      %297 = vmatprep.mubr.f32.mxu0 0.0
      %298 = vmatmul.mubr.f32.gmra.mrb[0].mxu0 %v202
      %v299 = vpop.f32.mrb[0].mxu0
      %v300 = vadd.f32 %v192, %v299
      %v301 = vpop.f32.mrb[0].mxu0
      %302 = vmatprep.mubr.f32.mxu0 0.0
      %303 = vmatmul.mubr.f32.gmra.mrb[0].mxu0 %v205
      %v304 = vpop.f32.mrb[0].mxu0
      %v305 = vadd.f32 %v192, %v304
      %v306 = vpop.f32.mrb[0].mxu0
      %307 = vmatprep.mubr.f32.mxu0 0.0
      %308 = vmatmul.mubr.f32.gmra.mrb[0].mxu0 %v208
      %v309 = vpop.f32.mrb[0].mxu0
      %v310 = vadd.f32 %v192, %v309
      %v311 = vpop.f32.mrb[0].mxu0
      %312 = vmatprep.mubr.f32.mxu0 0.0
      %313 = vmatmul.mubr.f32.gmra.mrb[0].mxu0 %v211
      %v314 = vpop.f32.mrb[0].mxu0
      %v315 = vadd.f32 %v192, %v314
      %v316 = vpop.f32.mrb[0].mxu0
      %317 = vmatprep.mubr.f32.mxu0 0.0
      %318 = vmatmul.mubr.f32.gmra.mrb[0].mxu0 %v214
      %v319 = vpop.f32.mrb[0].mxu0
      %v320 = vadd.f32 %v192, %v319
      %v321 = vpop.f32.mrb[0].mxu0
      %322 = vmatprep.mubr.f32.mxu0 0.0
      %323 = vmatmul.mubr.f32.gmra.mrb[0].mxu0 %v217
      %v324 = vpop.f32.mrb[0].mxu0
      %v325 = vadd.f32 %v192, %v324
      %v326 = vpop.f32.mrb[0].mxu0
      %327 = vdwg.mxu0
      %vm328 = vcmask 146432
      %329 = vst.msk [vmem:[%s172] sm:$0xff] %vm328, %v290
      %330 = vst.msk [vmem:[%s172 + $0x8] sm:$0xff] %vm328, %v295
      %331 = vst.msk [vmem:[%s172 + $0x10] sm:$0xff] %vm328, %v300
      %332 = vst.msk [vmem:[%s172 + $0x18] sm:$0xff] %vm328, %v305
      %333 = vst.msk [vmem:[%s172 + $0x20] sm:$0xff] %vm328, %v310
      %334 = vst.msk [vmem:[%s172 + $0x28] sm:$0xff] %vm328, %v315
      %335 = vst.msk [vmem:[%s172 + $0x30] sm:$0xff] %vm328, %v320
      %336 = vst.msk [vmem:[%s172 + $0x38] sm:$0xff] %vm328, %v325
      %s337 = smul.u32 8, %s14
      %p338 = scmp.lt.s32.totalorder %s337, 15
      %s339 = scalar_select %p338, %s337, 15
      %s340 = smul.addr %s339, 8
      %s341 = scalar_lea.vmem %s3, %s340
      // Predicated region
      $region33: #{mwt_cz2d_forward.29} parent=31 // pred_check
        %p342 = pneg %p100
      $region34: #{mwt_cz2d_forward.29} parent=31 // pred_check_branch
        %344 = sbr.rel (%p342) target = $region36
      $region35: #{mwt_cz2d_forward.29} parent=31 // pred_region
        %s345 = smul.u32 8, %s14
      $region36: #{mwt_cz2d_forward.29} parent=31 // pred_fallthru
        _
    $region32: #{mwt_cz2d_forward.29} parent=5 // pred_fallthru
      _
    %p346 = scmp.le.s32.totalorder 2, %s9
    // Predicated region
    $region37: #{mwt_cz2d_forward.29} parent=5 // pred_check
      %p347 = pneg %p346
    $region38: #{mwt_cz2d_forward.29} parent=5 // pred_check_branch
      %349 = sbr.rel (%p347) target = $region40
    $region39: #{mwt_cz2d_forward.29} parent=5 // pred_region
      %s350 = ssub.s32 %s9, 2
      // Predicated region
      $region41: #{mwt_cz2d_forward.29} parent=39 // pred_check
        %p351 = pneg %p106
      $region42: #{mwt_cz2d_forward.29} parent=39 // pred_check_branch
        %353 = sbr.rel (%p351) target = $region44
      $region43: #{mwt_cz2d_forward.29} parent=39 // pred_region
        %s354 = smul.u32 8, %s15
        %p355 = scmp.lt.s32.totalorder %s354, 15
        %s356 = scalar_select %p355, %s354, 15
        %s357 = smul.addr %s356, 8
        %s358 = scalar_lea.vmem %s3, %s357
      $region44: #{mwt_cz2d_forward.29} parent=39 // pred_fallthru
        _
    $region40: #{mwt_cz2d_forward.29} parent=5 // pred_fallthru
      _
  $region6: #{mwt_cz2d_forward.29} parent=0 // loop_footer
    %s13 = sadd.s32 1, %s9
  $region7: #{mwt_cz2d_forward.29} parent=0 // loop_footer_branch
    %8 = sbr.rel target = $region3
  $region8: #{mwt_cz2d_forward.29} parent=0 // loop_exit
    _

// kernel: reverse.3
$region0: #{reverse.3}
  #allocation0 [shape = 's32[1]{0}', space=sflag, size = 0x4, scoped, tag = 'scoped memory for reverse.3']
  %s0 = inlined_call_operand.vmem [shape: f32[2,9,8,3], index: 0, kind: input, shape index: {}]
  %s1 = inlined_call_operand.vmem [shape: f32[2,9,8,3], index: 1, kind: output, shape index: {}]
  %s2 = scalar_lea.vmem %s0, 16
  %v3 = vld [vmem:[%s2] sm:$0xff]
  %4 = vst [vmem:[%s1] sm:$0xff] %v3
  %s5 = scalar_lea.vmem %s0, 40
  %v6 = vld [vmem:[%s5] sm:$0xff]
  %s7 = scalar_lea.vmem %s1, 24
  %8 = vst [vmem:[%s7] sm:$0xff] %v6
  %s9 = scalar_lea.vmem %s0, 8
  %v10 = vld [vmem:[%s9] sm:$0xff]
  %s11 = scalar_lea.vmem %s1, 8
  %12 = vst [vmem:[%s11] sm:$0xff] %v10
  %s13 = scalar_lea.vmem %s0, 32
  %v14 = vld [vmem:[%s13] sm:$0xff]
  %s15 = scalar_lea.vmem %s1, 32
  %16 = vst [vmem:[%s15] sm:$0xff] %v14
  %v17 = vld [vmem:[%s0] sm:$0xff]
  %s18 = scalar_lea.vmem %s1, 16
  %19 = vst [vmem:[%s18] sm:$0xff] %v17
  %s20 = scalar_lea.vmem %s0, 24
  %v21 = vld [vmem:[%s20] sm:$0xff]
  %s22 = scalar_lea.vmem %s1, 40
  %23 = vst [vmem:[%s22] sm:$0xff] %v21

// kernel: mwt_cz2d_forward.51
$region0: #{mwt_cz2d_forward.51}
  #allocation0 [shape = 'u32[]', space=smem, size = 0x4, offset = 0x4, fixed_abs, tag = 'smem constant byte address 0x4 - core index']
  #allocation1 [shape = 'u32[144,128]{1,0:T(1,128)}', space=vmem, size = 0x12000, scoped, tag = 'internal scratch']
  %s0 = inlined_call_operand.vmem [shape: f32[26,8,18], index: 0, kind: input, shape index: {}]
  %s1 = inlined_call_operand.vmem [shape: f32[26,18,18], index: 1, kind: input, shape index: {}]
  %s2 = inlined_call_operand.vmem [shape: f32[26,8,18], index: 2, kind: output, shape index: {}]
  %s3 = sld [smem:[#allocation0]]
  $region41: #{mwt_cz2d_forward.51} parent=0
    _
  %s5 = ssub.s32 1, %s3
  %s6 = scalar_select 0, %s5, %s3
  loop: start=0, step=1, limit=4
  $region2: #{mwt_cz2d_forward.51} parent=0 // loop_pre_header
    _
  $region3: #{mwt_cz2d_forward.51} parent=0 // loop_header
    %s8 = sphi 0, %s12
    %p9 = scmp.ge.s32.totalorder %s8, 4
    %s18 = sphi 0, %s20
    %s21 = sphi 0, %s18
    %s22 = sphi 0, %s21
    %s38 = sphi 0, %s22
    %s44 = sphi 0, %s46
    %s47 = sphi 0, %s44
    %s48 = sphi 0, %s47
    %s64 = sphi 0, %s48
    %s70 = sphi 0, %s72
    %s73 = sphi 0, %s70
    %s74 = sphi 0, %s73
    %s90 = sphi 0, %s74
  $region4: #{mwt_cz2d_forward.51} parent=0 // loop_header_branch
    %11 = sbr.rel (%p9) target = $region8
  $region5: #{mwt_cz2d_forward.51} parent=0 // loop_body
    %s13 = ssub.s32 %s8, 1
    %s14 = ssub.s32 %s8, 2
    %s15 = sadd.s32 %s8, 1
    %s16 = ssub.s32 %s8, %s15
    %p17 = scmp.eq.s32.totalorder %s16, 0
    %s19 = sadd.s32 %s18, 1
    %s20 = scalar_select %p17, %s18, %s19
    %p23 = pneg %p17
    %p24 = scmp.eq.s32.totalorder %s8, 1
    %p25 = por %p23, %p24
    %p26 = scmp.ne.s32.totalorder %s18, %s21
    %p27 = scmp.eq.s32.totalorder %s8, 0
    %p28 = por %p26, %p27
    %p29 = scmp.ne.s32.totalorder %s18, %s21
    %p30 = scmp.eq.s32.totalorder %s13, 1
    %p31 = por %p29, %p30
    %p32 = scmp.ne.s32.totalorder %s21, %s22
    %p33 = scmp.eq.s32.totalorder %s13, 0
    %p34 = por %p32, %p33
    %p35 = scmp.ne.s32.totalorder %s21, %s22
    %p36 = scmp.eq.s32.totalorder %s14, 1
    %p37 = por %p35, %p36
    %p39 = scmp.ne.s32.totalorder %s22, %s38
    %p40 = scmp.eq.s32.totalorder %s14, 0
    %p41 = por %p39, %p40
    %s42 = ssub.s32 %s8, %s15
    %p43 = scmp.eq.s32.totalorder %s42, 0
    %s45 = sadd.s32 %s44, 1
    %s46 = scalar_select %p43, %s44, %s45
    %p49 = pneg %p43
    %p50 = scmp.eq.s32.totalorder %s8, 1
    %p51 = por %p49, %p50
    %p52 = scmp.ne.s32.totalorder %s44, %s47
    %p53 = scmp.eq.s32.totalorder %s8, 0
    %p54 = por %p52, %p53
    %p55 = scmp.ne.s32.totalorder %s44, %s47
    %p56 = scmp.eq.s32.totalorder %s13, 1
    %p57 = por %p55, %p56
    %p58 = scmp.ne.s32.totalorder %s47, %s48
    %p59 = scmp.eq.s32.totalorder %s13, 0
    %p60 = por %p58, %p59
    %p61 = scmp.ne.s32.totalorder %s47, %s48
    %p62 = scmp.eq.s32.totalorder %s14, 1
    %p63 = por %p61, %p62
    %p65 = scmp.ne.s32.totalorder %s48, %s64
    %p66 = scmp.eq.s32.totalorder %s14, 0
    %p67 = por %p65, %p66
    %s68 = ssub.s32 %s8, %s15
    %p69 = scmp.eq.s32.totalorder %s68, 0
    %s71 = sadd.s32 %s70, 1
    %s72 = scalar_select %p69, %s70, %s71
    %p75 = pneg %p69
    %p76 = scmp.eq.s32.totalorder %s8, 1
    %p77 = por %p75, %p76
    %p78 = scmp.ne.s32.totalorder %s70, %s73
    %p79 = scmp.eq.s32.totalorder %s8, 0
    %p80 = por %p78, %p79
    %p81 = scmp.ne.s32.totalorder %s70, %s73
    %p82 = scmp.eq.s32.totalorder %s13, 1
    %p83 = por %p81, %p82
    %p84 = scmp.ne.s32.totalorder %s73, %s74
    %p85 = scmp.eq.s32.totalorder %s13, 0
    %p86 = por %p84, %p85
    %p87 = scmp.ne.s32.totalorder %s73, %s74
    %p88 = scmp.eq.s32.totalorder %s14, 1
    %p89 = por %p87, %p88
    %p91 = scmp.ne.s32.totalorder %s74, %s90
    %p92 = scmp.eq.s32.totalorder %s14, 0
    %p93 = por %p91, %p92
    %p94 = scmp.le.s32.totalorder 1, %s8
    %p95 = scmp.lt.s32.totalorder %s8, 3
    %p96 = pnand %p94, %p95
    %p97 = pneg %p96
    // Predicated region
    $region9: #{mwt_cz2d_forward.51} parent=5 // pred_check
      _
    $region10: #{mwt_cz2d_forward.51} parent=5 // pred_check_branch
      %99 = sbr.rel (%p96) target = $region12
    $region11: #{mwt_cz2d_forward.51} parent=5 // pred_region
      %s100 = ssub.s32 %s8, 1
    $region12: #{mwt_cz2d_forward.51} parent=5 // pred_fallthru
      _
    %p101 = scmp.lt.s32.totalorder %s8, 2
    // Predicated region
    $region13: #{mwt_cz2d_forward.51} parent=5 // pred_check
      %p102 = pneg %p101
    $region14: #{mwt_cz2d_forward.51} parent=5 // pred_check_branch
      %104 = sbr.rel (%p102) target = $region16
    $region15: #{mwt_cz2d_forward.51} parent=5 // pred_region
      // Predicated region
      $region17: #{mwt_cz2d_forward.51} parent=15 // pred_check
        %p105 = pneg %p28
      $region18: #{mwt_cz2d_forward.51} parent=15 // pred_check_branch
        %107 = sbr.rel (%p105) target = $region20
      $region19: #{mwt_cz2d_forward.51} parent=15 // pred_region
        %s108 = smul.u32 13, %s8
        %p109 = scmp.lt.s32.totalorder %s108, 25
        %s110 = scalar_select %p109, %s108, 25
        %s111 = smul.addr %s110, 8
        %s112 = scalar_lea.vmem %s0, %s111
        %s113 = smul.u32 13, %s8
      $region20: #{mwt_cz2d_forward.51} parent=15 // pred_fallthru
        _
      // Predicated region
      $region21: #{mwt_cz2d_forward.51} parent=15 // pred_check
        %p114 = pneg %p54
      $region22: #{mwt_cz2d_forward.51} parent=15 // pred_check_branch
        %116 = sbr.rel (%p114) target = $region24
      $region23: #{mwt_cz2d_forward.51} parent=15 // pred_region
        %s117 = smul.u32 13, %s8
        %p118 = scmp.lt.s32.totalorder %s117, 25
        %s119 = scalar_select %p118, %s117, 25
        %s120 = smul.addr %s119, 3
        %s121 = smul.addr %s120, 8
        %s122 = scalar_lea.vmem %s1, %s121
        %s123 = smul.u32 13, %s8
      $region24: #{mwt_cz2d_forward.51} parent=15 // pred_fallthru
        _
    $region16: #{mwt_cz2d_forward.51} parent=5 // pred_fallthru
      _
    %p124 = scmp.le.s32.totalorder 1, %s8
    %p125 = scmp.lt.s32.totalorder %s8, 3
    %p126 = pnand %p124, %p125
    %p127 = pneg %p126
    // Predicated region
    $region25: #{mwt_cz2d_forward.51} parent=5 // pred_check
      _
    $region26: #{mwt_cz2d_forward.51} parent=5 // pred_check_branch
      %129 = sbr.rel (%p126) target = $region28
    $region27: #{mwt_cz2d_forward.51} parent=5 // pred_region
      %s130 = ssub.s32 %s8, 1
      %s131 = smul.u32 13, %s13
      %p132 = scmp.lt.s32.totalorder %s131, 25
      %s133 = scalar_select %p132, %s131, 25
      %s134 = smul.addr %s133, 8
      %s135 = scalar_lea.vmem %s0, %s134
      %p136 = pneg %p34
      %p137 = pneg %p31
      %s138 = smul.u32 13, %s13
      %p139 = scmp.lt.s32.totalorder %s138, 25
      %s140 = scalar_select %p139, %s138, 25
      %s141 = smul.addr %s140, 3
      %s142 = smul.addr %s141, 8
      %s143 = scalar_lea.vmem %s1, %s142
      %p144 = pneg %p60
      %p145 = pneg %p57
      %p146 = pneg %p86
      %p147 = pneg %p83
      %s148 = smul.u32 13, %s13
      %p149 = scmp.lt.s32.totalorder %s148, 25
      %s150 = scalar_select %p149, %s148, 25
      %s151 = smul.addr %s150, 8
      %s152 = scalar_lea.vmem %s2, %s151
      %s153 = smul.u32 13, %s13
      %p154 = scmp.lt.s32.totalorder %s153, 25
      %s155 = scalar_select %p154, %s153, 25
      %s156 = smul.addr %s155, 8
      %s157 = scalar_lea.vmem %s0, %s156
      %s158 = smul.u32 13, %s13
      %s159 = smul.u32 13, %s13
      %p160 = scmp.lt.s32.totalorder %s159, 25
      %s161 = scalar_select %p160, %s159, 25
      %s162 = smul.addr %s161, 3
      %s163 = smul.addr %s162, 8
      %s164 = scalar_lea.vmem %s1, %s163
      %s165 = smul.u32 13, %s13
      %s166 = smul.u32 13, %s13
      %p167 = scmp.lt.s32.totalorder %s166, 25
      %s168 = scalar_select %p167, %s166, 25
      %s169 = smul.addr %s168, 8
      %s170 = scalar_lea.vmem %s2, %s169
      %s171 = smul.u32 13, %s13
      %v172 = vld [vmem:[%s157] sm:$0xff]
      %v173 = vld [vmem:[%s164] sm:$0xff]
      %v174 = vld [vmem:[%s164 + $0x8] sm:$0xff]
      %v175 = vld [vmem:[%s164 + $0x10] sm:$0x3]
      %vm176 = vcmask 146432
      %v178 = vsel %vm176, %v172, 0
      %vm180 = vcmask 1041408
      %v182 = vsel %vm180, %v175, 0
      %184 = vmatprep.subr.mxu0 0.0
      %185 = vmatpush1.msra.mxu0 %v173
      %186 = vmatprep.subr.mxu0 0.0
      %187 = vmatpush1.msra.mxu0 %v174
      %188 = vmatprep.subr.mxu0 0.0
      %189 = vmatpush1.msra.mxu0 %v182
      %190 = vmatprep.subr.mxu0 0.0
      %191 = vmatpush1.msra.mxu0 0.0
      %192 = vmatprep.subr.mxu0 0.0
      %193 = vmatpush1.msra.mxu0 0.0
      %194 = vmatprep.subr.mxu0 0.0
      %195 = vmatpush1.msra.mxu0 0.0
      %196 = vmatprep.subr.mxu0 0.0
      %197 = vmatpush1.msra.mxu0 0.0
      %198 = vmatprep.subr.mxu0 0.0
      %199 = vmatpush1.msra.mxu0 0.0
      %200 = vmatprep.subr.mxu0 0.0
      %201 = vmatpush1.msra.mxu0 0.0
      %202 = vmatprep.subr.mxu0 0.0
      %203 = vmatpush1.msra.mxu0 0.0
      %204 = vmatprep.subr.mxu0 0.0
      %205 = vmatpush1.msra.mxu0 0.0
      %206 = vmatprep.subr.mxu0 0.0
      %207 = vmatpush1.msra.mxu0 0.0
      %208 = vmatprep.subr.mxu0 0.0
      %209 = vmatpush1.msra.mxu0 0.0
      %210 = vmatprep.subr.mxu0 0.0
      %211 = vmatpush1.msra.mxu0 0.0
      %212 = vmatprep.subr.mxu0 0.0
      %213 = vmatpush1.msra.mxu0 0.0
      %214 = vmatprep.subr.mxu0 0.0
      %215 = vmatpush1.msra.mxu0 0.0
      %216 = vmatprep.subr.mxu0 0.0
      %217 = vmatpush1.msra.mxu0 0.0
      %218 = vmatprep.subr.mxu0 0.0
      %219 = vmatpush1.msra.mxu0 0.0
      %220 = vmatprep.subr.mxu0 0.0
      %221 = vmatpush1.msra.mxu0 0.0
      %222 = vmatprep.subr.mxu0 0.0
      %223 = vmatpush1.msra.mxu0 0.0
      %224 = vmatprep.subr.mxu0 0.0
      %225 = vmatpush1.msra.mxu0 0.0
      %226 = vmatprep.subr.mxu0 0.0
      %227 = vmatpush1.msra.mxu0 0.0
      %228 = vmatprep.subr.mxu0 0.0
      %229 = vmatpush1.msra.mxu0 0.0
      %230 = vmatprep.subr.mxu0 0.0
      %231 = vmatpush1.msra.mxu0 0.0
      %232 = vmatprep.subr.mxu0 0.0
      %233 = vmatpush1.msra.mxu0 0.0
      %234 = vmatprep.subr.mxu0 0.0
      %235 = vmatpush1.msra.mxu0 0.0
      %236 = vmatprep.subr.mxu0 0.0
      %237 = vmatpush1.msra.mxu0 0.0
      %238 = vmatprep.subr.mxu0 0.0
      %239 = vmatpush1.msra.mxu0 0.0
      %240 = vmatprep.subr.mxu0 0.0
      %241 = vmatpush1.msra.mxu0 0.0
      %242 = vmatprep.subr.mxu0 0.0
      %243 = vmatpush1.msra.mxu0 0.0
      %244 = vmatprep.subr.mxu0 0.0
      %245 = vmatpush1.msra.mxu0 0.0
      %246 = vmatprep.subr.mxu0 0.0
      %247 = vmatpush1.msra.mxu0 0.0
      %248 = vmatprep.mubr.f32.mxu0 0.0
      %249 = vmatmul.mubr.f32.gmra.mrb[0].mxu0 %v178
      %v250 = vpop.f32.mrb[0].mxu0
      %v251 = vadd.f32 0.0, %v250
      %v252 = vpop.f32.mrb[0].mxu0
      %253 = vdwg.mxu0
      %254 = vst.msk [vmem:[%s170] sm:$0xff] %vm176, %v251
      %s255 = scalar_lea.vmem %s157, 8
      %v256 = vld [vmem:[%s255] sm:$0xff]
      %s257 = scalar_lea.vmem %s164, 24
      %v258 = vld [vmem:[%s257] sm:$0xff]
      %v259 = vld [vmem:[%s257 + $0x8] sm:$0xff]
      %v260 = vld [vmem:[%s257 + $0x10] sm:$0x3]
      %v262 = vsel %vm176, %v256, 0
      %v265 = vsel %vm180, %v260, 0
      %267 = vmatprep.subr.mxu0 0.0
      %268 = vmatpush1.msra.mxu0 %v258
      %269 = vmatprep.subr.mxu0 0.0
      %270 = vmatpush1.msra.mxu0 %v259
      %271 = vmatprep.subr.mxu0 0.0
      %272 = vmatpush1.msra.mxu0 %v265
      %273 = vmatprep.subr.mxu0 0.0
      %274 = vmatpush1.msra.mxu0 0.0
      %275 = vmatprep.subr.mxu0 0.0
      %276 = vmatpush1.msra.mxu0 0.0
      %277 = vmatprep.subr.mxu0 0.0
      %278 = vmatpush1.msra.mxu0 0.0
      %279 = vmatprep.subr.mxu0 0.0
      %280 = vmatpush1.msra.mxu0 0.0
      %281 = vmatprep.subr.mxu0 0.0
      %282 = vmatpush1.msra.mxu0 0.0
      %283 = vmatprep.subr.mxu0 0.0
      %284 = vmatpush1.msra.mxu0 0.0
      %285 = vmatprep.subr.mxu0 0.0
      %286 = vmatpush1.msra.mxu0 0.0
      %287 = vmatprep.subr.mxu0 0.0
      %288 = vmatpush1.msra.mxu0 0.0
      %289 = vmatprep.subr.mxu0 0.0
      %290 = vmatpush1.msra.mxu0 0.0
      %291 = vmatprep.subr.mxu0 0.0
      %292 = vmatpush1.msra.mxu0 0.0
      %293 = vmatprep.subr.mxu0 0.0
      %294 = vmatpush1.msra.mxu0 0.0
      %295 = vmatprep.subr.mxu0 0.0
      %296 = vmatpush1.msra.mxu0 0.0
      %297 = vmatprep.subr.mxu0 0.0
      %298 = vmatpush1.msra.mxu0 0.0
      %299 = vmatprep.subr.mxu0 0.0
      %300 = vmatpush1.msra.mxu0 0.0
      %301 = vmatprep.subr.mxu0 0.0
      %302 = vmatpush1.msra.mxu0 0.0
      %303 = vmatprep.subr.mxu0 0.0
      %304 = vmatpush1.msra.mxu0 0.0
      %305 = vmatprep.subr.mxu0 0.0
      %306 = vmatpush1.msra.mxu0 0.0
      %307 = vmatprep.subr.mxu0 0.0
      %308 = vmatpush1.msra.mxu0 0.0
      %309 = vmatprep.subr.mxu0 0.0
      %310 = vmatpush1.msra.mxu0 0.0
      %311 = vmatprep.subr.mxu0 0.0
      %312 = vmatpush1.msra.mxu0 0.0
      %313 = vmatprep.subr.mxu0 0.0
      %314 = vmatpush1.msra.mxu0 0.0
      %315 = vmatprep.subr.mxu0 0.0
      %316 = vmatpush1.msra.mxu0 0.0
      %317 = vmatprep.subr.mxu0 0.0
      %318 = vmatpush1.msra.mxu0 0.0
      %319 = vmatprep.subr.mxu0 0.0
      %320 = vmatpush1.msra.mxu0 0.0
      %321 = vmatprep.subr.mxu0 0.0
      %322 = vmatpush1.msra.mxu0 0.0
      %323 = vmatprep.subr.mxu0 0.0
      %324 = vmatpush1.msra.mxu0 0.0
      %325 = vmatprep.subr.mxu0 0.0
      %326 = vmatpush1.msra.mxu0 0.0
      %327 = vmatprep.subr.mxu0 0.0
      %328 = vmatpush1.msra.mxu0 0.0
      %329 = vmatprep.subr.mxu0 0.0
      %330 = vmatpush1.msra.mxu0 0.0
      %331 = vmatprep.mubr.f32.mxu0 0.0
      %332 = vmatmul.mubr.f32.gmra.mrb[0].mxu0 %v262
      %v333 = vpop.f32.mrb[0].mxu0
      %v334 = vadd.f32 0.0, %v333
      %v335 = vpop.f32.mrb[0].mxu0
      %336 = vdwg.mxu0
      %s337 = scalar_lea.vmem %s170, 8
      %338 = vst.msk [vmem:[%s337] sm:$0xff] %vm176, %v334
      %s339 = scalar_lea.vmem %s157, 16
      %v340 = vld [vmem:[%s339] sm:$0xff]
      %s341 = scalar_lea.vmem %s164, 48
      %v342 = vld [vmem:[%s341] sm:$0xff]
      %v343 = vld [vmem:[%s341 + $0x8] sm:$0xff]
      %v344 = vld [vmem:[%s341 + $0x10] sm:$0x3]
      %v346 = vsel %vm176, %v340, 0
      %v349 = vsel %vm180, %v344, 0
      %351 = vmatprep.subr.mxu0 0.0
      %352 = vmatpush1.msra.mxu0 %v342
      %353 = vmatprep.subr.mxu0 0.0
      %354 = vmatpush1.msra.mxu0 %v343
      %355 = vmatprep.subr.mxu0 0.0
      %356 = vmatpush1.msra.mxu0 %v349
      %357 = vmatprep.subr.mxu0 0.0
      %358 = vmatpush1.msra.mxu0 0.0
      %359 = vmatprep.subr.mxu0 0.0
      %360 = vmatpush1.msra.mxu0 0.0
      %361 = vmatprep.subr.mxu0 0.0
      %362 = vmatpush1.msra.mxu0 0.0
      %363 = vmatprep.subr.mxu0 0.0
      %364 = vmatpush1.msra.mxu0 0.0
      %365 = vmatprep.subr.mxu0 0.0
      %366 = vmatpush1.msra.mxu0 0.0
      %367 = vmatprep.subr.mxu0 0.0
      %368 = vmatpush1.msra.mxu0 0.0
      %369 = vmatprep.subr.mxu0 0.0
      %370 = vmatpush1.msra.mxu0 0.0
      %371 = vmatprep.subr.mxu0 0.0
      %372 = vmatpush1.msra.mxu0 0.0
      %373 = vmatprep.subr.mxu0 0.0
      %374 = vmatpush1.msra.mxu0 0.0
      %375 = vmatprep.subr.mxu0 0.0
      %376 = vmatpush1.msra.mxu0 0.0
      %377 = vmatprep.subr.mxu0 0.0
      %378 = vmatpush1.msra.mxu0 0.0
      %379 = vmatprep.subr.mxu0 0.0
      %380 = vmatpush1.msra.mxu0 0.0
      %381 = vmatprep.subr.mxu0 0.0
      %382 = vmatpush1.msra.mxu0 0.0
      %383 = vmatprep.subr.mxu0 0.0
      %384 = vmatpush1.msra.mxu0 0.0
      %385 = vmatprep.subr.mxu0 0.0
      %386 = vmatpush1.msra.mxu0 0.0
      %387 = vmatprep.subr.mxu0 0.0
      %388 = vmatpush1.msra.mxu0 0.0
      %389 = vmatprep.subr.mxu0 0.0
      %390 = vmatpush1.msra.mxu0 0.0
      %391 = vmatprep.subr.mxu0 0.0
      %392 = vmatpush1.msra.mxu0 0.0
      %393 = vmatprep.subr.mxu0 0.0
      %394 = vmatpush1.msra.mxu0 0.0
      %395 = vmatprep.subr.mxu0 0.0
      %396 = vmatpush1.msra.mxu0 0.0
      %397 = vmatprep.subr.mxu0 0.0
      %398 = vmatpush1.msra.mxu0 0.0
      %399 = vmatprep.subr.mxu0 0.0
      %400 = vmatpush1.msra.mxu0 0.0
      %401 = vmatprep.subr.mxu0 0.0
      %402 = vmatpush1.msra.mxu0 0.0
      %403 = vmatprep.subr.mxu0 0.0
      %404 = vmatpush1.msra.mxu0 0.0
      %405 = vmatprep.subr.mxu0 0.0
      %406 = vmatpush1.msra.mxu0 0.0
      %407 = vmatprep.subr.mxu0 0.0
      %408 = vmatpush1.msra.mxu0 0.0
      %409 = vmatprep.subr.mxu0 0.0
      %410 = vmatpush1.msra.mxu0 0.0
      %411 = vmatprep.subr.mxu0 0.0
      %412 = vmatpush1.msra.mxu0 0.0
      %413 = vmatprep.subr.mxu0 0.0
      %414 = vmatpush1.msra.mxu0 0.0
      %415 = vmatprep.mubr.f32.mxu0 0.0
      %416 = vmatmul.mubr.f32.gmra.mrb[0].mxu0 %v346
      %v417 = vpop.f32.mrb[0].mxu0
      %v418 = vadd.f32 0.0, %v417
      %v419 = vpop.f32.mrb[0].mxu0
      %420 = vdwg.mxu0
      %s421 = scalar_lea.vmem %s170, 16
      %422 = vst.msk [vmem:[%s421] sm:$0xff] %vm176, %v418
      %s423 = scalar_lea.vmem %s157, 24
      %v424 = vld [vmem:[%s423] sm:$0xff]
      %s425 = scalar_lea.vmem %s164, 72
      %v426 = vld [vmem:[%s425] sm:$0xff]
      %v427 = vld [vmem:[%s425 + $0x8] sm:$0xff]
      %v428 = vld [vmem:[%s425 + $0x10] sm:$0x3]
      %v430 = vsel %vm176, %v424, 0
      %v433 = vsel %vm180, %v428, 0
      %435 = vmatprep.subr.mxu0 0.0
      %436 = vmatpush1.msra.mxu0 %v426
      %437 = vmatprep.subr.mxu0 0.0
      %438 = vmatpush1.msra.mxu0 %v427
      %439 = vmatprep.subr.mxu0 0.0
      %440 = vmatpush1.msra.mxu0 %v433
      %441 = vmatprep.subr.mxu0 0.0
      %442 = vmatpush1.msra.mxu0 0.0
      %443 = vmatprep.subr.mxu0 0.0
      %444 = vmatpush1.msra.mxu0 0.0
      %445 = vmatprep.subr.mxu0 0.0
      %446 = vmatpush1.msra.mxu0 0.0
      %447 = vmatprep.subr.mxu0 0.0
      %448 = vmatpush1.msra.mxu0 0.0
      %449 = vmatprep.subr.mxu0 0.0
      %450 = vmatpush1.msra.mxu0 0.0
      %451 = vmatprep.subr.mxu0 0.0
      %452 = vmatpush1.msra.mxu0 0.0
      %453 = vmatprep.subr.mxu0 0.0
      %454 = vmatpush1.msra.mxu0 0.0
      %455 = vmatprep.subr.mxu0 0.0
      %456 = vmatpush1.msra.mxu0 0.0
      %457 = vmatprep.subr.mxu0 0.0
      %458 = vmatpush1.msra.mxu0 0.0
      %459 = vmatprep.subr.mxu0 0.0
      %460 = vmatpush1.msra.mxu0 0.0
      %461 = vmatprep.subr.mxu0 0.0
      %462 = vmatpush1.msra.mxu0 0.0
      %463 = vmatprep.subr.mxu0 0.0
      %464 = vmatpush1.msra.mxu0 0.0
      %465 = vmatprep.subr.mxu0 0.0
      %466 = vmatpush1.msra.mxu0 0.0
      %467 = vmatprep.subr.mxu0 0.0
      %468 = vmatpush1.msra.mxu0 0.0
      %469 = vmatprep.subr.mxu0 0.0
      %470 = vmatpush1.msra.mxu0 0.0
      %471 = vmatprep.subr.mxu0 0.0
      %472 = vmatpush1.msra.mxu0 0.0
      %473 = vmatprep.subr.mxu0 0.0
      %474 = vmatpush1.msra.mxu0 0.0
      %475 = vmatprep.subr.mxu0 0.0
      %476 = vmatpush1.msra.mxu0 0.0
      %477 = vmatprep.subr.mxu0 0.0
      %478 = vmatpush1.msra.mxu0 0.0
      %479 = vmatprep.subr.mxu0 0.0
      %480 = vmatpush1.msra.mxu0 0.0
      %481 = vmatprep.subr.mxu0 0.0
      %482 = vmatpush1.msra.mxu0 0.0
      %483 = vmatprep.subr.mxu0 0.0
      %484 = vmatpush1.msra.mxu0 0.0
      %485 = vmatprep.subr.mxu0 0.0
      %486 = vmatpush1.msra.mxu0 0.0
      %487 = vmatprep.subr.mxu0 0.0
      %488 = vmatpush1.msra.mxu0 0.0
      %489 = vmatprep.subr.mxu0 0.0
      %490 = vmatpush1.msra.mxu0 0.0
      %491 = vmatprep.subr.mxu0 0.0
      %492 = vmatpush1.msra.mxu0 0.0
      %493 = vmatprep.subr.mxu0 0.0
      %494 = vmatpush1.msra.mxu0 0.0
      %495 = vmatprep.subr.mxu0 0.0
      %496 = vmatpush1.msra.mxu0 0.0
      %497 = vmatprep.subr.mxu0 0.0
      %498 = vmatpush1.msra.mxu0 0.0
      %499 = vmatprep.mubr.f32.mxu0 0.0
      %500 = vmatmul.mubr.f32.gmra.mrb[0].mxu0 %v430
      %v501 = vpop.f32.mrb[0].mxu0
      %v502 = vadd.f32 0.0, %v501
      %v503 = vpop.f32.mrb[0].mxu0
      %504 = vdwg.mxu0
      %s505 = scalar_lea.vmem %s170, 24
      %506 = vst.msk [vmem:[%s505] sm:$0xff] %vm176, %v502
      %s507 = scalar_lea.vmem %s157, 32
      %v508 = vld [vmem:[%s507] sm:$0xff]
      %s509 = scalar_lea.vmem %s164, 96
      %v510 = vld [vmem:[%s509] sm:$0xff]
      %v511 = vld [vmem:[%s509 + $0x8] sm:$0xff]
      %v512 = vld [vmem:[%s509 + $0x10] sm:$0x3]
      %v514 = vsel %vm176, %v508, 0
      %v517 = vsel %vm180, %v512, 0
      %519 = vmatprep.subr.mxu0 0.0
      %520 = vmatpush1.msra.mxu0 %v510
      %521 = vmatprep.subr.mxu0 0.0
      %522 = vmatpush1.msra.mxu0 %v511
      %523 = vmatprep.subr.mxu0 0.0
      %524 = vmatpush1.msra.mxu0 %v517
      %525 = vmatprep.subr.mxu0 0.0
      %526 = vmatpush1.msra.mxu0 0.0
      %527 = vmatprep.subr.mxu0 0.0
      %528 = vmatpush1.msra.mxu0 0.0
      %529 = vmatprep.subr.mxu0 0.0
      %530 = vmatpush1.msra.mxu0 0.0
      %531 = vmatprep.subr.mxu0 0.0
      %532 = vmatpush1.msra.mxu0 0.0
      %533 = vmatprep.subr.mxu0 0.0
      %534 = vmatpush1.msra.mxu0 0.0
      %535 = vmatprep.subr.mxu0 0.0
      %536 = vmatpush1.msra.mxu0 0.0
      %537 = vmatprep.subr.mxu0 0.0
      %538 = vmatpush1.msra.mxu0 0.0
      %539 = vmatprep.subr.mxu0 0.0
      %540 = vmatpush1.msra.mxu0 0.0
      %541 = vmatprep.subr.mxu0 0.0
      %542 = vmatpush1.msra.mxu0 0.0
      %543 = vmatprep.subr.mxu0 0.0
      %544 = vmatpush1.msra.mxu0 0.0
      %545 = vmatprep.subr.mxu0 0.0
      %546 = vmatpush1.msra.mxu0 0.0
      %547 = vmatprep.subr.mxu0 0.0
      %548 = vmatpush1.msra.mxu0 0.0
      %549 = vmatprep.subr.mxu0 0.0
      %550 = vmatpush1.msra.mxu0 0.0
      %551 = vmatprep.subr.mxu0 0.0
      %552 = vmatpush1.msra.mxu0 0.0
      %553 = vmatprep.subr.mxu0 0.0
      %554 = vmatpush1.msra.mxu0 0.0
      %555 = vmatprep.subr.mxu0 0.0
      %556 = vmatpush1.msra.mxu0 0.0
      %557 = vmatprep.subr.mxu0 0.0
      %558 = vmatpush1.msra.mxu0 0.0
      %559 = vmatprep.subr.mxu0 0.0
      %560 = vmatpush1.msra.mxu0 0.0
      %561 = vmatprep.subr.mxu0 0.0
      %562 = vmatpush1.msra.mxu0 0.0
      %563 = vmatprep.subr.mxu0 0.0
      %564 = vmatpush1.msra.mxu0 0.0
      %565 = vmatprep.subr.mxu0 0.0
      %566 = vmatpush1.msra.mxu0 0.0
      %567 = vmatprep.subr.mxu0 0.0
      %568 = vmatpush1.msra.mxu0 0.0
      %569 = vmatprep.subr.mxu0 0.0
      %570 = vmatpush1.msra.mxu0 0.0
      %571 = vmatprep.subr.mxu0 0.0
      %572 = vmatpush1.msra.mxu0 0.0
      %573 = vmatprep.subr.mxu0 0.0
      %574 = vmatpush1.msra.mxu0 0.0
      %575 = vmatprep.subr.mxu0 0.0
      %576 = vmatpush1.msra.mxu0 0.0
      %577 = vmatprep.subr.mxu0 0.0
      %578 = vmatpush1.msra.mxu0 0.0
      %579 = vmatprep.subr.mxu0 0.0
      %580 = vmatpush1.msra.mxu0 0.0
      %581 = vmatprep.subr.mxu0 0.0
      %582 = vmatpush1.msra.mxu0 0.0
      %583 = vmatprep.mubr.f32.mxu0 0.0
      %584 = vmatmul.mubr.f32.gmra.mrb[0].mxu0 %v514
      %v585 = vpop.f32.mrb[0].mxu0
      %v586 = vadd.f32 0.0, %v585
      %v587 = vpop.f32.mrb[0].mxu0
      %588 = vdwg.mxu0
      %s589 = scalar_lea.vmem %s170, 32
      %590 = vst.msk [vmem:[%s589] sm:$0xff] %vm176, %v586
      %s591 = scalar_lea.vmem %s157, 40
      %v592 = vld [vmem:[%s591] sm:$0xff]
      %s593 = scalar_lea.vmem %s164, 120
      %v594 = vld [vmem:[%s593] sm:$0xff]
      %v595 = vld [vmem:[%s593 + $0x8] sm:$0xff]
      %v596 = vld [vmem:[%s593 + $0x10] sm:$0x3]
      %v598 = vsel %vm176, %v592, 0
      %v601 = vsel %vm180, %v596, 0
      %603 = vmatprep.subr.mxu0 0.0
      %604 = vmatpush1.msra.mxu0 %v594
      %605 = vmatprep.subr.mxu0 0.0
      %606 = vmatpush1.msra.mxu0 %v595
      %607 = vmatprep.subr.mxu0 0.0
      %608 = vmatpush1.msra.mxu0 %v601
      %609 = vmatprep.subr.mxu0 0.0
      %610 = vmatpush1.msra.mxu0 0.0
      %611 = vmatprep.subr.mxu0 0.0
      %612 = vmatpush1.msra.mxu0 0.0
      %613 = vmatprep.subr.mxu0 0.0
      %614 = vmatpush1.msra.mxu0 0.0
      %615 = vmatprep.subr.mxu0 0.0
      %616 = vmatpush1.msra.mxu0 0.0
      %617 = vmatprep.subr.mxu0 0.0
      %618 = vmatpush1.msra.mxu0 0.0
      %619 = vmatprep.subr.mxu0 0.0
      %620 = vmatpush1.msra.mxu0 0.0
      %621 = vmatprep.subr.mxu0 0.0
      %622 = vmatpush1.msra.mxu0 0.0
      %623 = vmatprep.subr.mxu0 0.0
      %624 = vmatpush1.msra.mxu0 0.0
      %625 = vmatprep.subr.mxu0 0.0
      %626 = vmatpush1.msra.mxu0 0.0
      %627 = vmatprep.subr.mxu0 0.0
      %628 = vmatpush1.msra.mxu0 0.0
      %629 = vmatprep.subr.mxu0 0.0
      %630 = vmatpush1.msra.mxu0 0.0
      %631 = vmatprep.subr.mxu0 0.0
      %632 = vmatpush1.msra.mxu0 0.0
      %633 = vmatprep.subr.mxu0 0.0
      %634 = vmatpush1.msra.mxu0 0.0
      %635 = vmatprep.subr.mxu0 0.0
      %636 = vmatpush1.msra.mxu0 0.0
      %637 = vmatprep.subr.mxu0 0.0
      %638 = vmatpush1.msra.mxu0 0.0
      %639 = vmatprep.subr.mxu0 0.0
      %640 = vmatpush1.msra.mxu0 0.0
      %641 = vmatprep.subr.mxu0 0.0
      %642 = vmatpush1.msra.mxu0 0.0
      %643 = vmatprep.subr.mxu0 0.0
      %644 = vmatpush1.msra.mxu0 0.0
      %645 = vmatprep.subr.mxu0 0.0
      %646 = vmatpush1.msra.mxu0 0.0
      %647 = vmatprep.subr.mxu0 0.0
      %648 = vmatpush1.msra.mxu0 0.0
      %649 = vmatprep.subr.mxu0 0.0
      %650 = vmatpush1.msra.mxu0 0.0
      %651 = vmatprep.subr.mxu0 0.0
      %652 = vmatpush1.msra.mxu0 0.0
      %653 = vmatprep.subr.mxu0 0.0
      %654 = vmatpush1.msra.mxu0 0.0
      %655 = vmatprep.subr.mxu0 0.0
      %656 = vmatpush1.msra.mxu0 0.0
      %657 = vmatprep.subr.mxu0 0.0
      %658 = vmatpush1.msra.mxu0 0.0
      %659 = vmatprep.subr.mxu0 0.0
      %660 = vmatpush1.msra.mxu0 0.0
      %661 = vmatprep.subr.mxu0 0.0
      %662 = vmatpush1.msra.mxu0 0.0
      %663 = vmatprep.subr.mxu0 0.0
      %664 = vmatpush1.msra.mxu0 0.0
      %665 = vmatprep.subr.mxu0 0.0
      %666 = vmatpush1.msra.mxu0 0.0
      %667 = vmatprep.mubr.f32.mxu0 0.0
      %668 = vmatmul.mubr.f32.gmra.mrb[0].mxu0 %v598
      %v669 = vpop.f32.mrb[0].mxu0
      %v670 = vadd.f32 0.0, %v669
      %v671 = vpop.f32.mrb[0].mxu0
      %672 = vdwg.mxu0
      %s673 = scalar_lea.vmem %s170, 40
      %674 = vst.msk [vmem:[%s673] sm:$0xff] %vm176, %v670
      %s675 = scalar_lea.vmem %s157, 48
      %v676 = vld [vmem:[%s675] sm:$0xff]
      %s677 = scalar_lea.vmem %s164, 144
      %v678 = vld [vmem:[%s677] sm:$0xff]
      %v679 = vld [vmem:[%s677 + $0x8] sm:$0xff]
      %v680 = vld [vmem:[%s677 + $0x10] sm:$0x3]
      %v682 = vsel %vm176, %v676, 0
      %v685 = vsel %vm180, %v680, 0
      %687 = vmatprep.subr.mxu0 0.0
      %688 = vmatpush1.msra.mxu0 %v678
      %689 = vmatprep.subr.mxu0 0.0
      %690 = vmatpush1.msra.mxu0 %v679
      %691 = vmatprep.subr.mxu0 0.0
      %692 = vmatpush1.msra.mxu0 %v685
      %693 = vmatprep.subr.mxu0 0.0
      %694 = vmatpush1.msra.mxu0 0.0
      %695 = vmatprep.subr.mxu0 0.0
      %696 = vmatpush1.msra.mxu0 0.0
      %697 = vmatprep.subr.mxu0 0.0
      %698 = vmatpush1.msra.mxu0 0.0
      %699 = vmatprep.subr.mxu0 0.0
      %700 = vmatpush1.msra.mxu0 0.0
      %701 = vmatprep.subr.mxu0 0.0
      %702 = vmatpush1.msra.mxu0 0.0
      %703 = vmatprep.subr.mxu0 0.0
      %704 = vmatpush1.msra.mxu0 0.0
      %705 = vmatprep.subr.mxu0 0.0
      %706 = vmatpush1.msra.mxu0 0.0
      %707 = vmatprep.subr.mxu0 0.0
      %708 = vmatpush1.msra.mxu0 0.0
      %709 = vmatprep.subr.mxu0 0.0
      %710 = vmatpush1.msra.mxu0 0.0
      %711 = vmatprep.subr.mxu0 0.0
      %712 = vmatpush1.msra.mxu0 0.0
      %713 = vmatprep.subr.mxu0 0.0
      %714 = vmatpush1.msra.mxu0 0.0
      %715 = vmatprep.subr.mxu0 0.0
      %716 = vmatpush1.msra.mxu0 0.0
      %717 = vmatprep.subr.mxu0 0.0
      %718 = vmatpush1.msra.mxu0 0.0
      %719 = vmatprep.subr.mxu0 0.0
      %720 = vmatpush1.msra.mxu0 0.0
      %721 = vmatprep.subr.mxu0 0.0
      %722 = vmatpush1.msra.mxu0 0.0
      %723 = vmatprep.subr.mxu0 0.0
      %724 = vmatpush1.msra.mxu0 0.0
      %725 = vmatprep.subr.mxu0 0.0
      %726 = vmatpush1.msra.mxu0 0.0
      %727 = vmatprep.subr.mxu0 0.0
      %728 = vmatpush1.msra.mxu0 0.0
      %729 = vmatprep.subr.mxu0 0.0
      %730 = vmatpush1.msra.mxu0 0.0
      %731 = vmatprep.subr.mxu0 0.0
      %732 = vmatpush1.msra.mxu0 0.0
      %733 = vmatprep.subr.mxu0 0.0
      %734 = vmatpush1.msra.mxu0 0.0
      %735 = vmatprep.subr.mxu0 0.0
      %736 = vmatpush1.msra.mxu0 0.0
      %737 = vmatprep.subr.mxu0 0.0
      %738 = vmatpush1.msra.mxu0 0.0
      %739 = vmatprep.subr.mxu0 0.0
      %740 = vmatpush1.msra.mxu0 0.0
      %741 = vmatprep.subr.mxu0 0.0
      %742 = vmatpush1.msra.mxu0 0.0
      %743 = vmatprep.subr.mxu0 0.0
      %744 = vmatpush1.msra.mxu0 0.0
      %745 = vmatprep.subr.mxu0 0.0
      %746 = vmatpush1.msra.mxu0 0.0
      %747 = vmatprep.subr.mxu0 0.0
      %748 = vmatpush1.msra.mxu0 0.0
      %749 = vmatprep.subr.mxu0 0.0
      %750 = vmatpush1.msra.mxu0 0.0
      %751 = vmatprep.mubr.f32.mxu0 0.0
      %752 = vmatmul.mubr.f32.gmra.mrb[0].mxu0 %v682
      %v753 = vpop.f32.mrb[0].mxu0
      %v754 = vadd.f32 0.0, %v753
      %v755 = vpop.f32.mrb[0].mxu0
      %756 = vdwg.mxu0
      %s757 = scalar_lea.vmem %s170, 48
      %758 = vst.msk [vmem:[%s757] sm:$0xff] %vm176, %v754
      %s759 = scalar_lea.vmem %s157, 56
      %v760 = vld [vmem:[%s759] sm:$0xff]
      %s761 = scalar_lea.vmem %s164, 168
      %v762 = vld [vmem:[%s761] sm:$0xff]
      %v763 = vld [vmem:[%s761 + $0x8] sm:$0xff]
      %v764 = vld [vmem:[%s761 + $0x10] sm:$0x3]
      %v766 = vsel %vm176, %v760, 0
      %v769 = vsel %vm180, %v764, 0
      %771 = vmatprep.subr.mxu0 0.0
      %772 = vmatpush1.msra.mxu0 %v762
      %773 = vmatprep.subr.mxu0 0.0
      %774 = vmatpush1.msra.mxu0 %v763
      %775 = vmatprep.subr.mxu0 0.0
      %776 = vmatpush1.msra.mxu0 %v769
      %777 = vmatprep.subr.mxu0 0.0
      %778 = vmatpush1.msra.mxu0 0.0
      %779 = vmatprep.subr.mxu0 0.0
      %780 = vmatpush1.msra.mxu0 0.0
      %781 = vmatprep.subr.mxu0 0.0
      %782 = vmatpush1.msra.mxu0 0.0
      %783 = vmatprep.subr.mxu0 0.0
      %784 = vmatpush1.msra.mxu0 0.0
      %785 = vmatprep.subr.mxu0 0.0
      %786 = vmatpush1.msra.mxu0 0.0
      %787 = vmatprep.subr.mxu0 0.0
      %788 = vmatpush1.msra.mxu0 0.0
      %789 = vmatprep.subr.mxu0 0.0
      %790 = vmatpush1.msra.mxu0 0.0
      %791 = vmatprep.subr.mxu0 0.0
      %792 = vmatpush1.msra.mxu0 0.0
      %793 = vmatprep.subr.mxu0 0.0
      %794 = vmatpush1.msra.mxu0 0.0
      %795 = vmatprep.subr.mxu0 0.0
      %796 = vmatpush1.msra.mxu0 0.0
      %797 = vmatprep.subr.mxu0 0.0
      %798 = vmatpush1.msra.mxu0 0.0
      %799 = vmatprep.subr.mxu0 0.0
      %800 = vmatpush1.msra.mxu0 0.0
      %801 = vmatprep.subr.mxu0 0.0
      %802 = vmatpush1.msra.mxu0 0.0
      %803 = vmatprep.subr.mxu0 0.0
      %804 = vmatpush1.msra.mxu0 0.0
      %805 = vmatprep.subr.mxu0 0.0
      %806 = vmatpush1.msra.mxu0 0.0
      %807 = vmatprep.subr.mxu0 0.0
      %808 = vmatpush1.msra.mxu0 0.0
      %809 = vmatprep.subr.mxu0 0.0
      %810 = vmatpush1.msra.mxu0 0.0
      %811 = vmatprep.subr.mxu0 0.0
      %812 = vmatpush1.msra.mxu0 0.0
      %813 = vmatprep.subr.mxu0 0.0
      %814 = vmatpush1.msra.mxu0 0.0
      %815 = vmatprep.subr.mxu0 0.0
      %816 = vmatpush1.msra.mxu0 0.0
      %817 = vmatprep.subr.mxu0 0.0
      %818 = vmatpush1.msra.mxu0 0.0
      %819 = vmatprep.subr.mxu0 0.0
      %820 = vmatpush1.msra.mxu0 0.0
      %821 = vmatprep.subr.mxu0 0.0
      %822 = vmatpush1.msra.mxu0 0.0
      %823 = vmatprep.subr.mxu0 0.0
      %824 = vmatpush1.msra.mxu0 0.0
      %825 = vmatprep.subr.mxu0 0.0
      %826 = vmatpush1.msra.mxu0 0.0
      %827 = vmatprep.subr.mxu0 0.0
      %828 = vmatpush1.msra.mxu0 0.0
      %829 = vmatprep.subr.mxu0 0.0
      %830 = vmatpush1.msra.mxu0 0.0
      %831 = vmatprep.subr.mxu0 0.0
      %832 = vmatpush1.msra.mxu0 0.0
      %833 = vmatprep.subr.mxu0 0.0
      %834 = vmatpush1.msra.mxu0 0.0
      %835 = vmatprep.mubr.f32.mxu0 0.0
      %836 = vmatmul.mubr.f32.gmra.mrb[0].mxu0 %v766
      %v837 = vpop.f32.mrb[0].mxu0
      %v838 = vadd.f32 0.0, %v837
      %v839 = vpop.f32.mrb[0].mxu0
      %840 = vdwg.mxu0
      %s841 = scalar_lea.vmem %s170, 56
      %842 = vst.msk [vmem:[%s841] sm:$0xff] %vm176, %v838
      %s843 = scalar_lea.vmem %s157, 64
      %v844 = vld [vmem:[%s843] sm:$0xff]
      %s845 = scalar_lea.vmem %s164, 192
      %v846 = vld [vmem:[%s845] sm:$0xff]
      %v847 = vld [vmem:[%s845 + $0x8] sm:$0xff]
      %v848 = vld [vmem:[%s845 + $0x10] sm:$0x3]
      %v850 = vsel %vm176, %v844, 0
      %v853 = vsel %vm180, %v848, 0
      %855 = vmatprep.subr.mxu0 0.0
      %856 = vmatpush1.msra.mxu0 %v846
      %857 = vmatprep.subr.mxu0 0.0
      %858 = vmatpush1.msra.mxu0 %v847
      %859 = vmatprep.subr.mxu0 0.0
      %860 = vmatpush1.msra.mxu0 %v853
      %861 = vmatprep.subr.mxu0 0.0
      %862 = vmatpush1.msra.mxu0 0.0
      %863 = vmatprep.subr.mxu0 0.0
      %864 = vmatpush1.msra.mxu0 0.0
      %865 = vmatprep.subr.mxu0 0.0
      %866 = vmatpush1.msra.mxu0 0.0
      %867 = vmatprep.subr.mxu0 0.0
      %868 = vmatpush1.msra.mxu0 0.0
      %869 = vmatprep.subr.mxu0 0.0
      %870 = vmatpush1.msra.mxu0 0.0
      %871 = vmatprep.subr.mxu0 0.0
      %872 = vmatpush1.msra.mxu0 0.0
      %873 = vmatprep.subr.mxu0 0.0
      %874 = vmatpush1.msra.mxu0 0.0
      %875 = vmatprep.subr.mxu0 0.0
      %876 = vmatpush1.msra.mxu0 0.0
      %877 = vmatprep.subr.mxu0 0.0
      %878 = vmatpush1.msra.mxu0 0.0
      %879 = vmatprep.subr.mxu0 0.0
      %880 = vmatpush1.msra.mxu0 0.0
      %881 = vmatprep.subr.mxu0 0.0
      %882 = vmatpush1.msra.mxu0 0.0
      %883 = vmatprep.subr.mxu0 0.0
      %884 = vmatpush1.msra.mxu0 0.0
      %885 = vmatprep.subr.mxu0 0.0
      %886 = vmatpush1.msra.mxu0 0.0
      %887 = vmatprep.subr.mxu0 0.0
      %888 = vmatpush1.msra.mxu0 0.0
      %889 = vmatprep.subr.mxu0 0.0
      %890 = vmatpush1.msra.mxu0 0.0
      %891 = vmatprep.subr.mxu0 0.0
      %892 = vmatpush1.msra.mxu0 0.0
      %893 = vmatprep.subr.mxu0 0.0
      %894 = vmatpush1.msra.mxu0 0.0
      %895 = vmatprep.subr.mxu0 0.0
      %896 = vmatpush1.msra.mxu0 0.0
      %897 = vmatprep.subr.mxu0 0.0
      %898 = vmatpush1.msra.mxu0 0.0
      %899 = vmatprep.subr.mxu0 0.0
      %900 = vmatpush1.msra.mxu0 0.0
      %901 = vmatprep.subr.mxu0 0.0
      %902 = vmatpush1.msra.mxu0 0.0
      %903 = vmatprep.subr.mxu0 0.0
      %904 = vmatpush1.msra.mxu0 0.0
      %905 = vmatprep.subr.mxu0 0.0
      %906 = vmatpush1.msra.mxu0 0.0
      %907 = vmatprep.subr.mxu0 0.0
      %908 = vmatpush1.msra.mxu0 0.0
      %909 = vmatprep.subr.mxu0 0.0
      %910 = vmatpush1.msra.mxu0 0.0
      %911 = vmatprep.subr.mxu0 0.0
      %912 = vmatpush1.msra.mxu0 0.0
      %913 = vmatprep.subr.mxu0 0.0
      %914 = vmatpush1.msra.mxu0 0.0
      %915 = vmatprep.subr.mxu0 0.0
      %916 = vmatpush1.msra.mxu0 0.0
      %917 = vmatprep.subr.mxu0 0.0
      %918 = vmatpush1.msra.mxu0 0.0
      %919 = vmatprep.mubr.f32.mxu0 0.0
      %920 = vmatmul.mubr.f32.gmra.mrb[0].mxu0 %v850
      %v921 = vpop.f32.mrb[0].mxu0
      %v922 = vadd.f32 0.0, %v921
      %v923 = vpop.f32.mrb[0].mxu0
      %924 = vdwg.mxu0
      %s925 = scalar_lea.vmem %s170, 64
      %926 = vst.msk [vmem:[%s925] sm:$0xff] %vm176, %v922
      %s927 = scalar_lea.vmem %s157, 72
      %v928 = vld [vmem:[%s927] sm:$0xff]
      %s929 = scalar_lea.vmem %s164, 216
      %v930 = vld [vmem:[%s929] sm:$0xff]
      %v931 = vld [vmem:[%s929 + $0x8] sm:$0xff]
      %v932 = vld [vmem:[%s929 + $0x10] sm:$0x3]
      %v934 = vsel %vm176, %v928, 0
      %v937 = vsel %vm180, %v932, 0
      %939 = vmatprep.subr.mxu0 0.0
      %940 = vmatpush1.msra.mxu0 %v930
      %941 = vmatprep.subr.mxu0 0.0
      %942 = vmatpush1.msra.mxu0 %v931
      %943 = vmatprep.subr.mxu0 0.0
      %944 = vmatpush1.msra.mxu0 %v937
      %945 = vmatprep.subr.mxu0 0.0
      %946 = vmatpush1.msra.mxu0 0.0
      %947 = vmatprep.subr.mxu0 0.0
      %948 = vmatpush1.msra.mxu0 0.0
      %949 = vmatprep.subr.mxu0 0.0
      %950 = vmatpush1.msra.mxu0 0.0
      %951 = vmatprep.subr.mxu0 0.0
      %952 = vmatpush1.msra.mxu0 0.0
      %953 = vmatprep.subr.mxu0 0.0
      %954 = vmatpush1.msra.mxu0 0.0
      %955 = vmatprep.subr.mxu0 0.0
      %956 = vmatpush1.msra.mxu0 0.0
      %957 = vmatprep.subr.mxu0 0.0
      %958 = vmatpush1.msra.mxu0 0.0
      %959 = vmatprep.subr.mxu0 0.0
      %960 = vmatpush1.msra.mxu0 0.0
      %961 = vmatprep.subr.mxu0 0.0
      %962 = vmatpush1.msra.mxu0 0.0
      %963 = vmatprep.subr.mxu0 0.0
      %964 = vmatpush1.msra.mxu0 0.0
      %965 = vmatprep.subr.mxu0 0.0
      %966 = vmatpush1.msra.mxu0 0.0
      %967 = vmatprep.subr.mxu0 0.0
      %968 = vmatpush1.msra.mxu0 0.0
      %969 = vmatprep.subr.mxu0 0.0
      %970 = vmatpush1.msra.mxu0 0.0
      %971 = vmatprep.subr.mxu0 0.0
      %972 = vmatpush1.msra.mxu0 0.0
      %973 = vmatprep.subr.mxu0 0.0
      %974 = vmatpush1.msra.mxu0 0.0
      %975 = vmatprep.subr.mxu0 0.0
      %976 = vmatpush1.msra.mxu0 0.0
      %977 = vmatprep.subr.mxu0 0.0
      %978 = vmatpush1.msra.mxu0 0.0
      %979 = vmatprep.subr.mxu0 0.0
      %980 = vmatpush1.msra.mxu0 0.0
      %981 = vmatprep.subr.mxu0 0.0
      %982 = vmatpush1.msra.mxu0 0.0
      %983 = vmatprep.subr.mxu0 0.0
      %984 = vmatpush1.msra.mxu0 0.0
      %985 = vmatprep.subr.mxu0 0.0
      %986 = vmatpush1.msra.mxu0 0.0
      %987 = vmatprep.subr.mxu0 0.0
      %988 = vmatpush1.msra.mxu0 0.0
      %989 = vmatprep.subr.mxu0 0.0
      %990 = vmatpush1.msra.mxu0 0.0
      %991 = vmatprep.subr.mxu0 0.0
      %992 = vmatpush1.msra.mxu0 0.0
      %993 = vmatprep.subr.mxu0 0.0
      %994 = vmatpush1.msra.mxu0 0.0
      %995 = vmatprep.subr.mxu0 0.0
      %996 = vmatpush1.msra.mxu0 0.0
      %997 = vmatprep.subr.mxu0 0.0
      %998 = vmatpush1.msra.mxu0 0.0
      %999 = vmatprep.subr.mxu0 0.0
      %1000 = vmatpush1.msra.mxu0 0.0
      %1001 = vmatprep.subr.mxu0 0.0
      %1002 = vmatpush1.msra.mxu0 0.0
      %1003 = vmatprep.mubr.f32.mxu0 0.0
      %1004 = vmatmul.mubr.f32.gmra.mrb[0].mxu0 %v934
      %v1005 = vpop.f32.mrb[0].mxu0
      %v1006 = vadd.f32 0.0, %v1005
      %v1007 = vpop.f32.mrb[0].mxu0
      %1008 = vdwg.mxu0
      %s1009 = scalar_lea.vmem %s170, 72
      %1010 = vst.msk [vmem:[%s1009] sm:$0xff] %vm176, %v1006
      %s1011 = scalar_lea.vmem %s157, 80
      %v1012 = vld [vmem:[%s1011] sm:$0xff]
      %s1013 = scalar_lea.vmem %s164, 240
      %v1014 = vld [vmem:[%s1013] sm:$0xff]
      %v1015 = vld [vmem:[%s1013 + $0x8] sm:$0xff]
      %v1016 = vld [vmem:[%s1013 + $0x10] sm:$0x3]
      %v1018 = vsel %vm176, %v1012, 0
      %v1021 = vsel %vm180, %v1016, 0
      %1023 = vmatprep.subr.mxu0 0.0
      %1024 = vmatpush1.msra.mxu0 %v1014
      %1025 = vmatprep.subr.mxu0 0.0
      %1026 = vmatpush1.msra.mxu0 %v1015
      %1027 = vmatprep.subr.mxu0 0.0
      %1028 = vmatpush1.msra.mxu0 %v1021
      %1029 = vmatprep.subr.mxu0 0.0
      %1030 = vmatpush1.msra.mxu0 0.0
      %1031 = vmatprep.subr.mxu0 0.0
      %1032 = vmatpush1.msra.mxu0 0.0
      %1033 = vmatprep.subr.mxu0 0.0
      %1034 = vmatpush1.msra.mxu0 0.0
      %1035 = vmatprep.subr.mxu0 0.0
      %1036 = vmatpush1.msra.mxu0 0.0
      %1037 = vmatprep.subr.mxu0 0.0
      %1038 = vmatpush1.msra.mxu0 0.0
      %1039 = vmatprep.subr.mxu0 0.0
      %1040 = vmatpush1.msra.mxu0 0.0
      %1041 = vmatprep.subr.mxu0 0.0
      %1042 = vmatpush1.msra.mxu0 0.0
      %1043 = vmatprep.subr.mxu0 0.0
      %1044 = vmatpush1.msra.mxu0 0.0
      %1045 = vmatprep.subr.mxu0 0.0
      %1046 = vmatpush1.msra.mxu0 0.0
      %1047 = vmatprep.subr.mxu0 0.0
      %1048 = vmatpush1.msra.mxu0 0.0
      %1049 = vmatprep.subr.mxu0 0.0
      %1050 = vmatpush1.msra.mxu0 0.0
      %1051 = vmatprep.subr.mxu0 0.0
      %1052 = vmatpush1.msra.mxu0 0.0
      %1053 = vmatprep.subr.mxu0 0.0
      %1054 = vmatpush1.msra.mxu0 0.0
      %1055 = vmatprep.subr.mxu0 0.0
      %1056 = vmatpush1.msra.mxu0 0.0
      %1057 = vmatprep.subr.mxu0 0.0
      %1058 = vmatpush1.msra.mxu0 0.0
      %1059 = vmatprep.subr.mxu0 0.0
      %1060 = vmatpush1.msra.mxu0 0.0
      %1061 = vmatprep.subr.mxu0 0.0
      %1062 = vmatpush1.msra.mxu0 0.0
      %1063 = vmatprep.subr.mxu0 0.0
      %1064 = vmatpush1.msra.mxu0 0.0
      %1065 = vmatprep.subr.mxu0 0.0
      %1066 = vmatpush1.msra.mxu0 0.0
      %1067 = vmatprep.subr.mxu0 0.0
      %1068 = vmatpush1.msra.mxu0 0.0
      %1069 = vmatprep.subr.mxu0 0.0
      %1070 = vmatpush1.msra.mxu0 0.0
      %1071 = vmatprep.subr.mxu0 0.0
      %1072 = vmatpush1.msra.mxu0 0.0
      %1073 = vmatprep.subr.mxu0 0.0
      %1074 = vmatpush1.msra.mxu0 0.0
      %1075 = vmatprep.subr.mxu0 0.0
      %1076 = vmatpush1.msra.mxu0 0.0
      %1077 = vmatprep.subr.mxu0 0.0
      %1078 = vmatpush1.msra.mxu0 0.0
      %1079 = vmatprep.subr.mxu0 0.0
      %1080 = vmatpush1.msra.mxu0 0.0
      %1081 = vmatprep.subr.mxu0 0.0
      %1082 = vmatpush1.msra.mxu0 0.0
      %1083 = vmatprep.subr.mxu0 0.0
      %1084 = vmatpush1.msra.mxu0 0.0
      %1085 = vmatprep.subr.mxu0 0.0
      %1086 = vmatpush1.msra.mxu0 0.0
      %1087 = vmatprep.mubr.f32.mxu0 0.0
      %1088 = vmatmul.mubr.f32.gmra.mrb[0].mxu0 %v1018
      %v1089 = vpop.f32.mrb[0].mxu0
      %v1090 = vadd.f32 0.0, %v1089
      %v1091 = vpop.f32.mrb[0].mxu0
      %1092 = vdwg.mxu0
      %s1093 = scalar_lea.vmem %s170, 80
      %1094 = vst.msk [vmem:[%s1093] sm:$0xff] %vm176, %v1090
      %s1095 = scalar_lea.vmem %s157, 88
      %v1096 = vld [vmem:[%s1095] sm:$0xff]
      %s1097 = scalar_lea.vmem %s164, 264
      %v1098 = vld [vmem:[%s1097] sm:$0xff]
      %v1099 = vld [vmem:[%s1097 + $0x8] sm:$0xff]
      %v1100 = vld [vmem:[%s1097 + $0x10] sm:$0x3]
      %v1102 = vsel %vm176, %v1096, 0
      %v1105 = vsel %vm180, %v1100, 0
      %1107 = vmatprep.subr.mxu0 0.0
      %1108 = vmatpush1.msra.mxu0 %v1098
      %1109 = vmatprep.subr.mxu0 0.0
      %1110 = vmatpush1.msra.mxu0 %v1099
      %1111 = vmatprep.subr.mxu0 0.0
      %1112 = vmatpush1.msra.mxu0 %v1105
      %1113 = vmatprep.subr.mxu0 0.0
      %1114 = vmatpush1.msra.mxu0 0.0
      %1115 = vmatprep.subr.mxu0 0.0
      %1116 = vmatpush1.msra.mxu0 0.0
      %1117 = vmatprep.subr.mxu0 0.0
      %1118 = vmatpush1.msra.mxu0 0.0
      %1119 = vmatprep.subr.mxu0 0.0
      %1120 = vmatpush1.msra.mxu0 0.0
      %1121 = vmatprep.subr.mxu0 0.0
      %1122 = vmatpush1.msra.mxu0 0.0
      %1123 = vmatprep.subr.mxu0 0.0
      %1124 = vmatpush1.msra.mxu0 0.0
      %1125 = vmatprep.subr.mxu0 0.0
      %1126 = vmatpush1.msra.mxu0 0.0
      %1127 = vmatprep.subr.mxu0 0.0
      %1128 = vmatpush1.msra.mxu0 0.0
      %1129 = vmatprep.subr.mxu0 0.0
      %1130 = vmatpush1.msra.mxu0 0.0
      %1131 = vmatprep.subr.mxu0 0.0
      %1132 = vmatpush1.msra.mxu0 0.0
      %1133 = vmatprep.subr.mxu0 0.0
      %1134 = vmatpush1.msra.mxu0 0.0
      %1135 = vmatprep.subr.mxu0 0.0
      %1136 = vmatpush1.msra.mxu0 0.0
      %1137 = vmatprep.subr.mxu0 0.0
      %1138 = vmatpush1.msra.mxu0 0.0
      %1139 = vmatprep.subr.mxu0 0.0
      %1140 = vmatpush1.msra.mxu0 0.0
      %1141 = vmatprep.subr.mxu0 0.0
      %1142 = vmatpush1.msra.mxu0 0.0
      %1143 = vmatprep.subr.mxu0 0.0
      %1144 = vmatpush1.msra.mxu0 0.0
      %1145 = vmatprep.subr.mxu0 0.0
      %1146 = vmatpush1.msra.mxu0 0.0
      %1147 = vmatprep.subr.mxu0 0.0
      %1148 = vmatpush1.msra.mxu0 0.0
      %1149 = vmatprep.subr.mxu0 0.0
      %1150 = vmatpush1.msra.mxu0 0.0
      %1151 = vmatprep.subr.mxu0 0.0
      %1152 = vmatpush1.msra.mxu0 0.0
      %1153 = vmatprep.subr.mxu0 0.0
      %1154 = vmatpush1.msra.mxu0 0.0
      %1155 = vmatprep.subr.mxu0 0.0
      %1156 = vmatpush1.msra.mxu0 0.0
      %1157 = vmatprep.subr.mxu0 0.0
      %1158 = vmatpush1.msra.mxu0 0.0
      %1159 = vmatprep.subr.mxu0 0.0
      %1160 = vmatpush1.msra.mxu0 0.0
      %1161 = vmatprep.subr.mxu0 0.0
      %1162 = vmatpush1.msra.mxu0 0.0
      %1163 = vmatprep.subr.mxu0 0.0
      %1164 = vmatpush1.msra.mxu0 0.0
      %1165 = vmatprep.subr.mxu0 0.0
      %1166 = vmatpush1.msra.mxu0 0.0
      %1167 = vmatprep.subr.mxu0 0.0
      %1168 = vmatpush1.msra.mxu0 0.0
      %1169 = vmatprep.subr.mxu0 0.0
      %1170 = vmatpush1.msra.mxu0 0.0
      %1171 = vmatprep.mubr.f32.mxu0 0.0
      %1172 = vmatmul.mubr.f32.gmra.mrb[0].mxu0 %v1102
      %v1173 = vpop.f32.mrb[0].mxu0
      %v1174 = vadd.f32 0.0, %v1173
      %v1175 = vpop.f32.mrb[0].mxu0
      %1176 = vdwg.mxu0
      %s1177 = scalar_lea.vmem %s170, 88
      %1178 = vst.msk [vmem:[%s1177] sm:$0xff] %vm176, %v1174
      %s1179 = scalar_lea.vmem %s157, 96
      %v1180 = vld [vmem:[%s1179] sm:$0xff]
      %s1181 = scalar_lea.vmem %s164, 288
      %v1182 = vld [vmem:[%s1181] sm:$0xff]
      %v1183 = vld [vmem:[%s1181 + $0x8] sm:$0xff]
      %v1184 = vld [vmem:[%s1181 + $0x10] sm:$0x3]
      %v1186 = vsel %vm176, %v1180, 0
      %v1189 = vsel %vm180, %v1184, 0
      %1191 = vmatprep.subr.mxu0 0.0
      %1192 = vmatpush1.msra.mxu0 %v1182
      %1193 = vmatprep.subr.mxu0 0.0
      %1194 = vmatpush1.msra.mxu0 %v1183
      %1195 = vmatprep.subr.mxu0 0.0
      %1196 = vmatpush1.msra.mxu0 %v1189
      %1197 = vmatprep.subr.mxu0 0.0
      %1198 = vmatpush1.msra.mxu0 0.0
      %1199 = vmatprep.subr.mxu0 0.0
      %1200 = vmatpush1.msra.mxu0 0.0
      %1201 = vmatprep.subr.mxu0 0.0
      %1202 = vmatpush1.msra.mxu0 0.0
      %1203 = vmatprep.subr.mxu0 0.0
      %1204 = vmatpush1.msra.mxu0 0.0
      %1205 = vmatprep.subr.mxu0 0.0
      %1206 = vmatpush1.msra.mxu0 0.0
      %1207 = vmatprep.subr.mxu0 0.0
      %1208 = vmatpush1.msra.mxu0 0.0
      %1209 = vmatprep.subr.mxu0 0.0
      %1210 = vmatpush1.msra.mxu0 0.0
      %1211 = vmatprep.subr.mxu0 0.0
      %1212 = vmatpush1.msra.mxu0 0.0
      %1213 = vmatprep.subr.mxu0 0.0
      %1214 = vmatpush1.msra.mxu0 0.0
      %1215 = vmatprep.subr.mxu0 0.0
      %1216 = vmatpush1.msra.mxu0 0.0
      %1217 = vmatprep.subr.mxu0 0.0
      %1218 = vmatpush1.msra.mxu0 0.0
      %1219 = vmatprep.subr.mxu0 0.0
      %1220 = vmatpush1.msra.mxu0 0.0
      %1221 = vmatprep.subr.mxu0 0.0
      %1222 = vmatpush1.msra.mxu0 0.0
      %1223 = vmatprep.subr.mxu0 0.0
      %1224 = vmatpush1.msra.mxu0 0.0
      %1225 = vmatprep.subr.mxu0 0.0
      %1226 = vmatpush1.msra.mxu0 0.0
      %1227 = vmatprep.subr.mxu0 0.0
      %1228 = vmatpush1.msra.mxu0 0.0
      %1229 = vmatprep.subr.mxu0 0.0
      %1230 = vmatpush1.msra.mxu0 0.0
      %1231 = vmatprep.subr.mxu0 0.0
      %1232 = vmatpush1.msra.mxu0 0.0
      %1233 = vmatprep.subr.mxu0 0.0
      %1234 = vmatpush1.msra.mxu0 0.0
      %1235 = vmatprep.subr.mxu0 0.0
      %1236 = vmatpush1.msra.mxu0 0.0
      %1237 = vmatprep.subr.mxu0 0.0
      %1238 = vmatpush1.msra.mxu0 0.0
      %1239 = vmatprep.subr.mxu0 0.0
      %1240 = vmatpush1.msra.mxu0 0.0
      %1241 = vmatprep.subr.mxu0 0.0
      %1242 = vmatpush1.msra.mxu0 0.0
      %1243 = vmatprep.subr.mxu0 0.0
      %1244 = vmatpush1.msra.mxu0 0.0
      %1245 = vmatprep.subr.mxu0 0.0
      %1246 = vmatpush1.msra.mxu0 0.0
      %1247 = vmatprep.subr.mxu0 0.0
      %1248 = vmatpush1.msra.mxu0 0.0
      %1249 = vmatprep.subr.mxu0 0.0
      %1250 = vmatpush1.msra.mxu0 0.0
      %1251 = vmatprep.subr.mxu0 0.0
      %1252 = vmatpush1.msra.mxu0 0.0
      %1253 = vmatprep.subr.mxu0 0.0
      %1254 = vmatpush1.msra.mxu0 0.0
      %1255 = vmatprep.mubr.f32.mxu0 0.0
      %1256 = vmatmul.mubr.f32.gmra.mrb[0].mxu0 %v1186
      %v1257 = vpop.f32.mrb[0].mxu0
      %v1258 = vadd.f32 0.0, %v1257
      %v1259 = vpop.f32.mrb[0].mxu0
      %1260 = vdwg.mxu0
      %s1261 = scalar_lea.vmem %s170, 96
      %1262 = vst.msk [vmem:[%s1261] sm:$0xff] %vm176, %v1258
      %s1263 = smul.u32 13, %s13
      %p1264 = scmp.lt.s32.totalorder %s1263, 25
      %s1265 = scalar_select %p1264, %s1263, 25
      %s1266 = smul.addr %s1265, 8
      %s1267 = scalar_lea.vmem %s2, %s1266
      // Predicated region
      $region29: #{mwt_cz2d_forward.51} parent=27 // pred_check
        %p1268 = pneg %p83
      $region30: #{mwt_cz2d_forward.51} parent=27 // pred_check_branch
        %1270 = sbr.rel (%p1268) target = $region32
      $region31: #{mwt_cz2d_forward.51} parent=27 // pred_region
        %s1271 = smul.u32 13, %s13
      $region32: #{mwt_cz2d_forward.51} parent=27 // pred_fallthru
        _
    $region28: #{mwt_cz2d_forward.51} parent=5 // pred_fallthru
      _
    %p1272 = scmp.le.s32.totalorder 2, %s8
    // Predicated region
    $region33: #{mwt_cz2d_forward.51} parent=5 // pred_check
      %p1273 = pneg %p1272
    $region34: #{mwt_cz2d_forward.51} parent=5 // pred_check_branch
      %1275 = sbr.rel (%p1273) target = $region36
    $region35: #{mwt_cz2d_forward.51} parent=5 // pred_region
      %s1276 = ssub.s32 %s8, 2
      // Predicated region
      $region37: #{mwt_cz2d_forward.51} parent=35 // pred_check
        %p1277 = pneg %p89
      $region38: #{mwt_cz2d_forward.51} parent=35 // pred_check_branch
        %1279 = sbr.rel (%p1277) target = $region40
      $region39: #{mwt_cz2d_forward.51} parent=35 // pred_region
        %s1280 = smul.u32 13, %s14
        %p1281 = scmp.lt.s32.totalorder %s1280, 25
        %s1282 = scalar_select %p1281, %s1280, 25
        %s1283 = smul.addr %s1282, 8
        %s1284 = scalar_lea.vmem %s2, %s1283
      $region40: #{mwt_cz2d_forward.51} parent=35 // pred_fallthru
        _
    $region36: #{mwt_cz2d_forward.51} parent=5 // pred_fallthru
      _
  $region6: #{mwt_cz2d_forward.51} parent=0 // loop_footer
    %s12 = sadd.s32 1, %s8
  $region7: #{mwt_cz2d_forward.51} parent=0 // loop_footer_branch
    %7 = sbr.rel target = $region3
  $region8: #{mwt_cz2d_forward.51} parent=0 // loop_exit
    _

// kernel: mwt_cz2d_forward.53
$region0: #{mwt_cz2d_forward.53}
  #allocation0 [shape = 'u32[]', space=smem, size = 0x4, offset = 0x4, fixed_abs, tag = 'smem constant byte address 0x4 - core index']
  #allocation1 [shape = 'u32[144,128]{1,0:T(1,128)}', space=vmem, size = 0x12000, scoped, tag = 'internal scratch']
  %s0 = inlined_call_operand.vmem [shape: f32[128,9], index: 0, kind: input, shape index: {}]
  %s1 = inlined_call_operand.vmem [shape: f32[9,9], index: 1, kind: input, shape index: {}]
  %s2 = inlined_call_operand.vmem [shape: f32[1,9], index: 2, kind: input, shape index: {}]
  %s3 = inlined_call_operand.vmem [shape: f32[128,9], index: 3, kind: output, shape index: {}]
  %s4 = sld [smem:[#allocation0]]
  $region45: #{mwt_cz2d_forward.53} parent=0
    _
  %s6 = ssub.s32 1, %s4
  %s7 = scalar_select 0, %s6, %s4
  loop: start=0, step=1, limit=4
  $region2: #{mwt_cz2d_forward.53} parent=0 // loop_pre_header
    _
  $region3: #{mwt_cz2d_forward.53} parent=0 // loop_header
    %s9 = sphi 0, %s13
    %p10 = scmp.ge.s32.totalorder %s9, 4
    %s19 = sphi 0, %s21
    %s22 = sphi 0, %s19
    %s23 = sphi 0, %s22
    %s39 = sphi 0, %s23
    %s43 = sphi 0, %s43
    %s45 = sphi 0, %s43
    %s46 = sphi 0, %s45
    %s60 = sphi 0, %s46
    %s64 = sphi 0, %s64
    %s66 = sphi 0, %s64
    %s67 = sphi 0, %s66
    %s81 = sphi 0, %s67
    %s87 = sphi 0, %s89
    %s90 = sphi 0, %s87
    %s91 = sphi 0, %s90
    %s107 = sphi 0, %s91
  $region4: #{mwt_cz2d_forward.53} parent=0 // loop_header_branch
    %12 = sbr.rel (%p10) target = $region8
  $region5: #{mwt_cz2d_forward.53} parent=0 // loop_body
    %s14 = ssub.s32 %s9, 1
    %s15 = ssub.s32 %s9, 2
    %s16 = sadd.s32 %s9, 1
    %s17 = ssub.s32 %s9, %s16
    %p18 = scmp.eq.s32.totalorder %s17, 0
    %s20 = sadd.s32 %s19, 1
    %s21 = scalar_select %p18, %s19, %s20
    %p24 = pneg %p18
    %p25 = scmp.eq.s32.totalorder %s9, 1
    %p26 = por %p24, %p25
    %p27 = scmp.ne.s32.totalorder %s19, %s22
    %p28 = scmp.eq.s32.totalorder %s9, 0
    %p29 = por %p27, %p28
    %p30 = scmp.ne.s32.totalorder %s19, %s22
    %p31 = scmp.eq.s32.totalorder %s14, 1
    %p32 = por %p30, %p31
    %p33 = scmp.ne.s32.totalorder %s22, %s23
    %p34 = scmp.eq.s32.totalorder %s14, 0
    %p35 = por %p33, %p34
    %p36 = scmp.ne.s32.totalorder %s22, %s23
    %p37 = scmp.eq.s32.totalorder %s15, 1
    %p38 = por %p36, %p37
    %p40 = scmp.ne.s32.totalorder %s23, %s39
    %p41 = scmp.eq.s32.totalorder %s15, 0
    %p42 = por %p40, %p41
    %s44 = sadd.s32 %s43, 1
    %p47 = scmp.eq.s32.totalorder %s9, 1
    %p48 = scmp.ne.s32.totalorder %s43, %s45
    %p49 = scmp.eq.s32.totalorder %s9, 0
    %p50 = por %p48, %p49
    %p51 = scmp.ne.s32.totalorder %s43, %s45
    %p52 = scmp.eq.s32.totalorder %s14, 1
    %p53 = por %p51, %p52
    %p54 = scmp.ne.s32.totalorder %s45, %s46
    %p55 = scmp.eq.s32.totalorder %s14, 0
    %p56 = por %p54, %p55
    %p57 = scmp.ne.s32.totalorder %s45, %s46
    %p58 = scmp.eq.s32.totalorder %s15, 1
    %p59 = por %p57, %p58
    %p61 = scmp.ne.s32.totalorder %s46, %s60
    %p62 = scmp.eq.s32.totalorder %s15, 0
    %p63 = por %p61, %p62
    %s65 = sadd.s32 %s64, 1
    %p68 = scmp.eq.s32.totalorder %s9, 1
    %p69 = scmp.ne.s32.totalorder %s64, %s66
    %p70 = scmp.eq.s32.totalorder %s9, 0
    %p71 = por %p69, %p70
    %p72 = scmp.ne.s32.totalorder %s64, %s66
    %p73 = scmp.eq.s32.totalorder %s14, 1
    %p74 = por %p72, %p73
    %p75 = scmp.ne.s32.totalorder %s66, %s67
    %p76 = scmp.eq.s32.totalorder %s14, 0
    %p77 = por %p75, %p76
    %p78 = scmp.ne.s32.totalorder %s66, %s67
    %p79 = scmp.eq.s32.totalorder %s15, 1
    %p80 = por %p78, %p79
    %p82 = scmp.ne.s32.totalorder %s67, %s81
    %p83 = scmp.eq.s32.totalorder %s15, 0
    %p84 = por %p82, %p83
    %s85 = ssub.s32 %s9, %s16
    %p86 = scmp.eq.s32.totalorder %s85, 0
    %s88 = sadd.s32 %s87, 1
    %s89 = scalar_select %p86, %s87, %s88
    %p92 = pneg %p86
    %p93 = scmp.eq.s32.totalorder %s9, 1
    %p94 = por %p92, %p93
    %p95 = scmp.ne.s32.totalorder %s87, %s90
    %p96 = scmp.eq.s32.totalorder %s9, 0
    %p97 = por %p95, %p96
    %p98 = scmp.ne.s32.totalorder %s87, %s90
    %p99 = scmp.eq.s32.totalorder %s14, 1
    %p100 = por %p98, %p99
    %p101 = scmp.ne.s32.totalorder %s90, %s91
    %p102 = scmp.eq.s32.totalorder %s14, 0
    %p103 = por %p101, %p102
    %p104 = scmp.ne.s32.totalorder %s90, %s91
    %p105 = scmp.eq.s32.totalorder %s15, 1
    %p106 = por %p104, %p105
    %p108 = scmp.ne.s32.totalorder %s91, %s107
    %p109 = scmp.eq.s32.totalorder %s15, 0
    %p110 = por %p108, %p109
    %p111 = scmp.le.s32.totalorder 1, %s9
    %p112 = scmp.lt.s32.totalorder %s9, 3
    %p113 = pnand %p111, %p112
    %p114 = pneg %p113
    // Predicated region
    $region9: #{mwt_cz2d_forward.53} parent=5 // pred_check
      _
    $region10: #{mwt_cz2d_forward.53} parent=5 // pred_check_branch
      %116 = sbr.rel (%p113) target = $region12
    $region11: #{mwt_cz2d_forward.53} parent=5 // pred_region
      %s117 = ssub.s32 %s9, 1
      // Predicated region
      $region13: #{mwt_cz2d_forward.53} parent=11 // pred_check
        %p118 = pneg %p56
      $region14: #{mwt_cz2d_forward.53} parent=11 // pred_check_branch
        %120 = sbr.rel (%p118) target = $region16
      $region15: #{mwt_cz2d_forward.53} parent=11 // pred_region
        _
      $region16: #{mwt_cz2d_forward.53} parent=11 // pred_fallthru
        _
      // Predicated region
      $region17: #{mwt_cz2d_forward.53} parent=11 // pred_check
        %p121 = pneg %p77
      $region18: #{mwt_cz2d_forward.53} parent=11 // pred_check_branch
        %123 = sbr.rel (%p121) target = $region20
      $region19: #{mwt_cz2d_forward.53} parent=11 // pred_region
        _
      $region20: #{mwt_cz2d_forward.53} parent=11 // pred_fallthru
        _
    $region12: #{mwt_cz2d_forward.53} parent=5 // pred_fallthru
      _
    %p124 = scmp.lt.s32.totalorder %s9, 2
    // Predicated region
    $region21: #{mwt_cz2d_forward.53} parent=5 // pred_check
      %p125 = pneg %p124
    $region22: #{mwt_cz2d_forward.53} parent=5 // pred_check_branch
      %127 = sbr.rel (%p125) target = $region24
    $region23: #{mwt_cz2d_forward.53} parent=5 // pred_region
      // Predicated region
      $region25: #{mwt_cz2d_forward.53} parent=23 // pred_check
        %p128 = pneg %p29
      $region26: #{mwt_cz2d_forward.53} parent=23 // pred_check_branch
        %130 = sbr.rel (%p128) target = $region28
      $region27: #{mwt_cz2d_forward.53} parent=23 // pred_region
        %s131 = smul.u32 8, %s9
        %p132 = scmp.lt.s32.totalorder %s131, 15
        %s133 = scalar_select %p132, %s131, 15
        %s134 = smul.addr %s133, 8
        %s135 = scalar_lea.vmem %s0, %s134
        %s136 = smul.u32 8, %s9
      $region28: #{mwt_cz2d_forward.53} parent=23 // pred_fallthru
        _
    $region24: #{mwt_cz2d_forward.53} parent=5 // pred_fallthru
      _
    %p137 = scmp.le.s32.totalorder 1, %s9
    %p138 = scmp.lt.s32.totalorder %s9, 3
    %p139 = pnand %p137, %p138
    %p140 = pneg %p139
    // Predicated region
    $region29: #{mwt_cz2d_forward.53} parent=5 // pred_check
      _
    $region30: #{mwt_cz2d_forward.53} parent=5 // pred_check_branch
      %142 = sbr.rel (%p139) target = $region32
    $region31: #{mwt_cz2d_forward.53} parent=5 // pred_region
      %s143 = ssub.s32 %s9, 1
      %s144 = smul.u32 8, %s14
      %p145 = scmp.lt.s32.totalorder %s144, 15
      %s146 = scalar_select %p145, %s144, 15
      %s147 = smul.addr %s146, 8
      %s148 = scalar_lea.vmem %s0, %s147
      %p149 = pneg %p35
      %p150 = pneg %p32
      %p151 = pneg %p56
      %p152 = pneg %p53
      %p153 = pneg %p77
      %p154 = pneg %p74
      %p155 = pneg %p103
      %p156 = pneg %p100
      %s157 = smul.u32 8, %s14
      %p158 = scmp.lt.s32.totalorder %s157, 15
      %s159 = scalar_select %p158, %s157, 15
      %s160 = smul.addr %s159, 8
      %s161 = scalar_lea.vmem %s3, %s160
      %s162 = smul.u32 8, %s14
      %p163 = scmp.lt.s32.totalorder %s162, 15
      %s164 = scalar_select %p163, %s162, 15
      %s165 = smul.addr %s164, 8
      %s166 = scalar_lea.vmem %s0, %s165
      %s167 = smul.u32 8, %s14
      %s168 = smul.u32 8, %s14
      %p169 = scmp.lt.s32.totalorder %s168, 15
      %s170 = scalar_select %p169, %s168, 15
      %s171 = smul.addr %s170, 8
      %s172 = scalar_lea.vmem %s3, %s171
      %s173 = smul.u32 8, %s14
      %v174 = vld [vmem:[%s166] sm:$0xff]
      %v175 = vld [vmem:[%s166 + $0x8] sm:$0xff]
      %v176 = vld [vmem:[%s166 + $0x10] sm:$0xff]
      %v177 = vld [vmem:[%s166 + $0x18] sm:$0xff]
      %v178 = vld [vmem:[%s166 + $0x20] sm:$0xff]
      %v179 = vld [vmem:[%s166 + $0x28] sm:$0xff]
      %v180 = vld [vmem:[%s166 + $0x30] sm:$0xff]
      %v181 = vld [vmem:[%s166 + $0x38] sm:$0xff]
      %v182 = vmax.f32 %v174, 0.0
      %v183 = vmax.f32 %v175, 0.0
      %v184 = vmax.f32 %v176, 0.0
      %v185 = vmax.f32 %v177, 0.0
      %v186 = vmax.f32 %v178, 0.0
      %v187 = vmax.f32 %v179, 0.0
      %v188 = vmax.f32 %v180, 0.0
      %v189 = vmax.f32 %v181, 0.0
      %v190 = vld [vmem:[%s1] sm:$0xff]
      %v191 = vld [vmem:[%s1 + $0x8] sm:$0x1]
      %v192 = vld [vmem:[%s2] sm:$0x1]
      %v194 = vlaneseq
      %v195 = vshrl.u32 %v194, 7
      %v196 = vsub.s32 0, %v195
      %v197 = vrot.slane %v192, %v196
      %vm199 = vcmask 72704
      %v201 = vsel %vm199, %v182, 0
      %v204 = vsel %vm199, %v183, 0
      %v207 = vsel %vm199, %v184, 0
      %v210 = vsel %vm199, %v185, 0
      %v213 = vsel %vm199, %v186, 0
      %v216 = vsel %vm199, %v187, 0
      %v219 = vsel %vm199, %v188, 0
      %v222 = vsel %vm199, %v189, 0
      %vm224 = vcmask 1040384
      %v226 = vsel %vm224, %v191, 0
      %228 = vmatprep.subr.mxu0 0.0
      %229 = vmatpush1.msra.mxu0 %v190
      %230 = vmatprep.subr.mxu0 0.0
      %231 = vmatpush1.msra.mxu0 %v226
      %232 = vmatprep.subr.mxu0 0.0
      %233 = vmatpush1.msra.mxu0 0.0
      %234 = vmatprep.subr.mxu0 0.0
      %235 = vmatpush1.msra.mxu0 0.0
      %236 = vmatprep.subr.mxu0 0.0
      %237 = vmatpush1.msra.mxu0 0.0
      %238 = vmatprep.subr.mxu0 0.0
      %239 = vmatpush1.msra.mxu0 0.0
      %240 = vmatprep.subr.mxu0 0.0
      %241 = vmatpush1.msra.mxu0 0.0
      %242 = vmatprep.subr.mxu0 0.0
      %243 = vmatpush1.msra.mxu0 0.0
      %244 = vmatprep.subr.mxu0 0.0
      %245 = vmatpush1.msra.mxu0 0.0
      %246 = vmatprep.subr.mxu0 0.0
      %247 = vmatpush1.msra.mxu0 0.0
      %248 = vmatprep.subr.mxu0 0.0
      %249 = vmatpush1.msra.mxu0 0.0
      %250 = vmatprep.subr.mxu0 0.0
      %251 = vmatpush1.msra.mxu0 0.0
      %252 = vmatprep.subr.mxu0 0.0
      %253 = vmatpush1.msra.mxu0 0.0
      %254 = vmatprep.subr.mxu0 0.0
      %255 = vmatpush1.msra.mxu0 0.0
      %256 = vmatprep.subr.mxu0 0.0
      %257 = vmatpush1.msra.mxu0 0.0
      %258 = vmatprep.subr.mxu0 0.0
      %259 = vmatpush1.msra.mxu0 0.0
      %260 = vmatprep.subr.mxu0 0.0
      %261 = vmatpush1.msra.mxu0 0.0
      %262 = vmatprep.subr.mxu0 0.0
      %263 = vmatpush1.msra.mxu0 0.0
      %264 = vmatprep.subr.mxu0 0.0
      %265 = vmatpush1.msra.mxu0 0.0
      %266 = vmatprep.subr.mxu0 0.0
      %267 = vmatpush1.msra.mxu0 0.0
      %268 = vmatprep.subr.mxu0 0.0
      %269 = vmatpush1.msra.mxu0 0.0
      %270 = vmatprep.subr.mxu0 0.0
      %271 = vmatpush1.msra.mxu0 0.0
      %272 = vmatprep.subr.mxu0 0.0
      %273 = vmatpush1.msra.mxu0 0.0
      %274 = vmatprep.subr.mxu0 0.0
      %275 = vmatpush1.msra.mxu0 0.0
      %276 = vmatprep.subr.mxu0 0.0
      %277 = vmatpush1.msra.mxu0 0.0
      %278 = vmatprep.subr.mxu0 0.0
      %279 = vmatpush1.msra.mxu0 0.0
      %280 = vmatprep.subr.mxu0 0.0
      %281 = vmatpush1.msra.mxu0 0.0
      %282 = vmatprep.subr.mxu0 0.0
      %283 = vmatpush1.msra.mxu0 0.0
      %284 = vmatprep.subr.mxu0 0.0
      %285 = vmatpush1.msra.mxu0 0.0
      %286 = vmatprep.subr.mxu0 0.0
      %287 = vmatpush1.msra.mxu0 0.0
      %288 = vmatprep.subr.mxu0 0.0
      %289 = vmatpush1.msra.mxu0 0.0
      %290 = vmatprep.subr.mxu0 0.0
      %291 = vmatpush1.msra.mxu0 0.0
      %292 = vmatprep.mubr.f32.mxu0 0.0
      %293 = vmatmul.mubr.f32.gmra.mrb[0].mxu0 %v201
      %v294 = vpop.f32.mrb[0].mxu0
      %v295 = vadd.f32 %v197, %v294
      %v296 = vpop.f32.mrb[0].mxu0
      %297 = vmatprep.mubr.f32.mxu0 0.0
      %298 = vmatmul.mubr.f32.gmra.mrb[0].mxu0 %v204
      %v299 = vpop.f32.mrb[0].mxu0
      %v300 = vadd.f32 %v197, %v299
      %v301 = vpop.f32.mrb[0].mxu0
      %302 = vmatprep.mubr.f32.mxu0 0.0
      %303 = vmatmul.mubr.f32.gmra.mrb[0].mxu0 %v207
      %v304 = vpop.f32.mrb[0].mxu0
      %v305 = vadd.f32 %v197, %v304
      %v306 = vpop.f32.mrb[0].mxu0
      %307 = vmatprep.mubr.f32.mxu0 0.0
      %308 = vmatmul.mubr.f32.gmra.mrb[0].mxu0 %v210
      %v309 = vpop.f32.mrb[0].mxu0
      %v310 = vadd.f32 %v197, %v309
      %v311 = vpop.f32.mrb[0].mxu0
      %312 = vmatprep.mubr.f32.mxu0 0.0
      %313 = vmatmul.mubr.f32.gmra.mrb[0].mxu0 %v213
      %v314 = vpop.f32.mrb[0].mxu0
      %v315 = vadd.f32 %v197, %v314
      %v316 = vpop.f32.mrb[0].mxu0
      %317 = vmatprep.mubr.f32.mxu0 0.0
      %318 = vmatmul.mubr.f32.gmra.mrb[0].mxu0 %v216
      %v319 = vpop.f32.mrb[0].mxu0
      %v320 = vadd.f32 %v197, %v319
      %v321 = vpop.f32.mrb[0].mxu0
      %322 = vmatprep.mubr.f32.mxu0 0.0
      %323 = vmatmul.mubr.f32.gmra.mrb[0].mxu0 %v219
      %v324 = vpop.f32.mrb[0].mxu0
      %v325 = vadd.f32 %v197, %v324
      %v326 = vpop.f32.mrb[0].mxu0
      %327 = vmatprep.mubr.f32.mxu0 0.0
      %328 = vmatmul.mubr.f32.gmra.mrb[0].mxu0 %v222
      %v329 = vpop.f32.mrb[0].mxu0
      %v330 = vadd.f32 %v197, %v329
      %v331 = vpop.f32.mrb[0].mxu0
      %332 = vdwg.mxu0
      %333 = vst.msk [vmem:[%s172] sm:$0xff] %vm199, %v295
      %334 = vst.msk [vmem:[%s172 + $0x8] sm:$0xff] %vm199, %v300
      %335 = vst.msk [vmem:[%s172 + $0x10] sm:$0xff] %vm199, %v305
      %336 = vst.msk [vmem:[%s172 + $0x18] sm:$0xff] %vm199, %v310
      %337 = vst.msk [vmem:[%s172 + $0x20] sm:$0xff] %vm199, %v315
      %338 = vst.msk [vmem:[%s172 + $0x28] sm:$0xff] %vm199, %v320
      %339 = vst.msk [vmem:[%s172 + $0x30] sm:$0xff] %vm199, %v325
      %340 = vst.msk [vmem:[%s172 + $0x38] sm:$0xff] %vm199, %v330
      %s341 = smul.u32 8, %s14
      %p342 = scmp.lt.s32.totalorder %s341, 15
      %s343 = scalar_select %p342, %s341, 15
      %s344 = smul.addr %s343, 8
      %s345 = scalar_lea.vmem %s3, %s344
      // Predicated region
      $region33: #{mwt_cz2d_forward.53} parent=31 // pred_check
        %p346 = pneg %p100
      $region34: #{mwt_cz2d_forward.53} parent=31 // pred_check_branch
        %348 = sbr.rel (%p346) target = $region36
      $region35: #{mwt_cz2d_forward.53} parent=31 // pred_region
        %s349 = smul.u32 8, %s14
      $region36: #{mwt_cz2d_forward.53} parent=31 // pred_fallthru
        _
    $region32: #{mwt_cz2d_forward.53} parent=5 // pred_fallthru
      _
    %p350 = scmp.le.s32.totalorder 2, %s9
    // Predicated region
    $region37: #{mwt_cz2d_forward.53} parent=5 // pred_check
      %p351 = pneg %p350
    $region38: #{mwt_cz2d_forward.53} parent=5 // pred_check_branch
      %353 = sbr.rel (%p351) target = $region40
    $region39: #{mwt_cz2d_forward.53} parent=5 // pred_region
      %s354 = ssub.s32 %s9, 2
      // Predicated region
      $region41: #{mwt_cz2d_forward.53} parent=39 // pred_check
        %p355 = pneg %p106
      $region42: #{mwt_cz2d_forward.53} parent=39 // pred_check_branch
        %357 = sbr.rel (%p355) target = $region44
      $region43: #{mwt_cz2d_forward.53} parent=39 // pred_region
        %s358 = smul.u32 8, %s15
        %p359 = scmp.lt.s32.totalorder %s358, 15
        %s360 = scalar_select %p359, %s358, 15
        %s361 = smul.addr %s360, 8
        %s362 = scalar_lea.vmem %s3, %s361
      $region44: #{mwt_cz2d_forward.53} parent=39 // pred_fallthru
        _
    $region40: #{mwt_cz2d_forward.53} parent=5 // pred_fallthru
      _
  $region6: #{mwt_cz2d_forward.53} parent=0 // loop_footer
    %s13 = sadd.s32 1, %s9
  $region7: #{mwt_cz2d_forward.53} parent=0 // loop_footer_branch
    %8 = sbr.rel target = $region3
  $region8: #{mwt_cz2d_forward.53} parent=0 // loop_exit
    _

// kernel: mwt_cz2d_forward.54
$region0: #{mwt_cz2d_forward.54}
  #allocation0 [shape = 'u32[]', space=smem, size = 0x4, offset = 0x4, fixed_abs, tag = 'smem constant byte address 0x4 - core index']
  #allocation1 [shape = 'u32[144,128]{1,0:T(1,128)}', space=vmem, size = 0x12000, scoped, tag = 'internal scratch']
  %s0 = inlined_call_operand.vmem [shape: f32[128,81], index: 0, kind: input, shape index: {}]
  %s1 = inlined_call_operand.vmem [shape: f32[81,9], index: 1, kind: input, shape index: {}]
  %s2 = inlined_call_operand.vmem [shape: f32[1,9], index: 2, kind: input, shape index: {}]
  %s3 = inlined_call_operand.vmem [shape: f32[9,9], index: 3, kind: input, shape index: {}]
  %s4 = inlined_call_operand.vmem [shape: f32[1,9], index: 4, kind: input, shape index: {}]
  %s5 = inlined_call_operand.vmem [shape: f32[128,9], index: 5, kind: output, shape index: {}]
  %s6 = sld [smem:[#allocation0]]
  $region53: #{mwt_cz2d_forward.54} parent=0
    _
  %s8 = ssub.s32 1, %s6
  %s9 = scalar_select 0, %s8, %s6
  loop: start=0, step=1, limit=4
  $region2: #{mwt_cz2d_forward.54} parent=0 // loop_pre_header
    _
  $region3: #{mwt_cz2d_forward.54} parent=0 // loop_header
    %s11 = sphi 0, %s15
    %p12 = scmp.ge.s32.totalorder %s11, 4
    %s21 = sphi 0, %s23
    %s24 = sphi 0, %s21
    %s25 = sphi 0, %s24
    %s41 = sphi 0, %s25
    %s45 = sphi 0, %s45
    %s47 = sphi 0, %s45
    %s48 = sphi 0, %s47
    %s62 = sphi 0, %s48
    %s66 = sphi 0, %s66
    %s68 = sphi 0, %s66
    %s69 = sphi 0, %s68
    %s83 = sphi 0, %s69
    %s87 = sphi 0, %s87
    %s89 = sphi 0, %s87
    %s90 = sphi 0, %s89
    %s104 = sphi 0, %s90
    %s108 = sphi 0, %s108
    %s110 = sphi 0, %s108
    %s111 = sphi 0, %s110
    %s125 = sphi 0, %s111
    %s131 = sphi 0, %s133
    %s134 = sphi 0, %s131
    %s135 = sphi 0, %s134
    %s151 = sphi 0, %s135
  $region4: #{mwt_cz2d_forward.54} parent=0 // loop_header_branch
    %14 = sbr.rel (%p12) target = $region8
  $region5: #{mwt_cz2d_forward.54} parent=0 // loop_body
    %s16 = ssub.s32 %s11, 1
    %s17 = ssub.s32 %s11, 2
    %s18 = sadd.s32 %s11, 1
    %s19 = ssub.s32 %s11, %s18
    %p20 = scmp.eq.s32.totalorder %s19, 0
    %s22 = sadd.s32 %s21, 1
    %s23 = scalar_select %p20, %s21, %s22
    %p26 = pneg %p20
    %p27 = scmp.eq.s32.totalorder %s11, 1
    %p28 = por %p26, %p27
    %p29 = scmp.ne.s32.totalorder %s21, %s24
    %p30 = scmp.eq.s32.totalorder %s11, 0
    %p31 = por %p29, %p30
    %p32 = scmp.ne.s32.totalorder %s21, %s24
    %p33 = scmp.eq.s32.totalorder %s16, 1
    %p34 = por %p32, %p33
    %p35 = scmp.ne.s32.totalorder %s24, %s25
    %p36 = scmp.eq.s32.totalorder %s16, 0
    %p37 = por %p35, %p36
    %p38 = scmp.ne.s32.totalorder %s24, %s25
    %p39 = scmp.eq.s32.totalorder %s17, 1
    %p40 = por %p38, %p39
    %p42 = scmp.ne.s32.totalorder %s25, %s41
    %p43 = scmp.eq.s32.totalorder %s17, 0
    %p44 = por %p42, %p43
    %s46 = sadd.s32 %s45, 1
    %p49 = scmp.eq.s32.totalorder %s11, 1
    %p50 = scmp.ne.s32.totalorder %s45, %s47
    %p51 = scmp.eq.s32.totalorder %s11, 0
    %p52 = por %p50, %p51
    %p53 = scmp.ne.s32.totalorder %s45, %s47
    %p54 = scmp.eq.s32.totalorder %s16, 1
    %p55 = por %p53, %p54
    %p56 = scmp.ne.s32.totalorder %s47, %s48
    %p57 = scmp.eq.s32.totalorder %s16, 0
    %p58 = por %p56, %p57
    %p59 = scmp.ne.s32.totalorder %s47, %s48
    %p60 = scmp.eq.s32.totalorder %s17, 1
    %p61 = por %p59, %p60
    %p63 = scmp.ne.s32.totalorder %s48, %s62
    %p64 = scmp.eq.s32.totalorder %s17, 0
    %p65 = por %p63, %p64
    %s67 = sadd.s32 %s66, 1
    %p70 = scmp.eq.s32.totalorder %s11, 1
    %p71 = scmp.ne.s32.totalorder %s66, %s68
    %p72 = scmp.eq.s32.totalorder %s11, 0
    %p73 = por %p71, %p72
    %p74 = scmp.ne.s32.totalorder %s66, %s68
    %p75 = scmp.eq.s32.totalorder %s16, 1
    %p76 = por %p74, %p75
    %p77 = scmp.ne.s32.totalorder %s68, %s69
    %p78 = scmp.eq.s32.totalorder %s16, 0
    %p79 = por %p77, %p78
    %p80 = scmp.ne.s32.totalorder %s68, %s69
    %p81 = scmp.eq.s32.totalorder %s17, 1
    %p82 = por %p80, %p81
    %p84 = scmp.ne.s32.totalorder %s69, %s83
    %p85 = scmp.eq.s32.totalorder %s17, 0
    %p86 = por %p84, %p85
    %s88 = sadd.s32 %s87, 1
    %p91 = scmp.eq.s32.totalorder %s11, 1
    %p92 = scmp.ne.s32.totalorder %s87, %s89
    %p93 = scmp.eq.s32.totalorder %s11, 0
    %p94 = por %p92, %p93
    %p95 = scmp.ne.s32.totalorder %s87, %s89
    %p96 = scmp.eq.s32.totalorder %s16, 1
    %p97 = por %p95, %p96
    %p98 = scmp.ne.s32.totalorder %s89, %s90
    %p99 = scmp.eq.s32.totalorder %s16, 0
    %p100 = por %p98, %p99
    %p101 = scmp.ne.s32.totalorder %s89, %s90
    %p102 = scmp.eq.s32.totalorder %s17, 1
    %p103 = por %p101, %p102
    %p105 = scmp.ne.s32.totalorder %s90, %s104
    %p106 = scmp.eq.s32.totalorder %s17, 0
    %p107 = por %p105, %p106
    %s109 = sadd.s32 %s108, 1
    %p112 = scmp.eq.s32.totalorder %s11, 1
    %p113 = scmp.ne.s32.totalorder %s108, %s110
    %p114 = scmp.eq.s32.totalorder %s11, 0
    %p115 = por %p113, %p114
    %p116 = scmp.ne.s32.totalorder %s108, %s110
    %p117 = scmp.eq.s32.totalorder %s16, 1
    %p118 = por %p116, %p117
    %p119 = scmp.ne.s32.totalorder %s110, %s111
    %p120 = scmp.eq.s32.totalorder %s16, 0
    %p121 = por %p119, %p120
    %p122 = scmp.ne.s32.totalorder %s110, %s111
    %p123 = scmp.eq.s32.totalorder %s17, 1
    %p124 = por %p122, %p123
    %p126 = scmp.ne.s32.totalorder %s111, %s125
    %p127 = scmp.eq.s32.totalorder %s17, 0
    %p128 = por %p126, %p127
    %s129 = ssub.s32 %s11, %s18
    %p130 = scmp.eq.s32.totalorder %s129, 0
    %s132 = sadd.s32 %s131, 1
    %s133 = scalar_select %p130, %s131, %s132
    %p136 = pneg %p130
    %p137 = scmp.eq.s32.totalorder %s11, 1
    %p138 = por %p136, %p137
    %p139 = scmp.ne.s32.totalorder %s131, %s134
    %p140 = scmp.eq.s32.totalorder %s11, 0
    %p141 = por %p139, %p140
    %p142 = scmp.ne.s32.totalorder %s131, %s134
    %p143 = scmp.eq.s32.totalorder %s16, 1
    %p144 = por %p142, %p143
    %p145 = scmp.ne.s32.totalorder %s134, %s135
    %p146 = scmp.eq.s32.totalorder %s16, 0
    %p147 = por %p145, %p146
    %p148 = scmp.ne.s32.totalorder %s134, %s135
    %p149 = scmp.eq.s32.totalorder %s17, 1
    %p150 = por %p148, %p149
    %p152 = scmp.ne.s32.totalorder %s135, %s151
    %p153 = scmp.eq.s32.totalorder %s17, 0
    %p154 = por %p152, %p153
    %p155 = scmp.le.s32.totalorder 1, %s11
    %p156 = scmp.lt.s32.totalorder %s11, 3
    %p157 = pnand %p155, %p156
    %p158 = pneg %p157
    // Predicated region
    $region9: #{mwt_cz2d_forward.54} parent=5 // pred_check
      _
    $region10: #{mwt_cz2d_forward.54} parent=5 // pred_check_branch
      %160 = sbr.rel (%p157) target = $region12
    $region11: #{mwt_cz2d_forward.54} parent=5 // pred_region
      %s161 = ssub.s32 %s11, 1
      // Predicated region
      $region13: #{mwt_cz2d_forward.54} parent=11 // pred_check
        %p162 = pneg %p58
      $region14: #{mwt_cz2d_forward.54} parent=11 // pred_check_branch
        %164 = sbr.rel (%p162) target = $region16
      $region15: #{mwt_cz2d_forward.54} parent=11 // pred_region
        _
      $region16: #{mwt_cz2d_forward.54} parent=11 // pred_fallthru
        _
      // Predicated region
      $region17: #{mwt_cz2d_forward.54} parent=11 // pred_check
        %p165 = pneg %p79
      $region18: #{mwt_cz2d_forward.54} parent=11 // pred_check_branch
        %167 = sbr.rel (%p165) target = $region20
      $region19: #{mwt_cz2d_forward.54} parent=11 // pred_region
        _
      $region20: #{mwt_cz2d_forward.54} parent=11 // pred_fallthru
        _
      // Predicated region
      $region21: #{mwt_cz2d_forward.54} parent=11 // pred_check
        %p168 = pneg %p100
      $region22: #{mwt_cz2d_forward.54} parent=11 // pred_check_branch
        %170 = sbr.rel (%p168) target = $region24
      $region23: #{mwt_cz2d_forward.54} parent=11 // pred_region
        _
      $region24: #{mwt_cz2d_forward.54} parent=11 // pred_fallthru
        _
      // Predicated region
      $region25: #{mwt_cz2d_forward.54} parent=11 // pred_check
        %p171 = pneg %p121
      $region26: #{mwt_cz2d_forward.54} parent=11 // pred_check_branch
        %173 = sbr.rel (%p171) target = $region28
      $region27: #{mwt_cz2d_forward.54} parent=11 // pred_region
        _
      $region28: #{mwt_cz2d_forward.54} parent=11 // pred_fallthru
        _
    $region12: #{mwt_cz2d_forward.54} parent=5 // pred_fallthru
      _
    %p174 = scmp.lt.s32.totalorder %s11, 2
    // Predicated region
    $region29: #{mwt_cz2d_forward.54} parent=5 // pred_check
      %p175 = pneg %p174
    $region30: #{mwt_cz2d_forward.54} parent=5 // pred_check_branch
      %177 = sbr.rel (%p175) target = $region32
    $region31: #{mwt_cz2d_forward.54} parent=5 // pred_region
      // Predicated region
      $region33: #{mwt_cz2d_forward.54} parent=31 // pred_check
        %p178 = pneg %p31
      $region34: #{mwt_cz2d_forward.54} parent=31 // pred_check_branch
        %180 = sbr.rel (%p178) target = $region36
      $region35: #{mwt_cz2d_forward.54} parent=31 // pred_region
        %s181 = smul.u32 8, %s11
        %p182 = scmp.lt.s32.totalorder %s181, 15
        %s183 = scalar_select %p182, %s181, 15
        %s184 = smul.addr %s183, 8
        %s185 = scalar_lea.vmem %s0, %s184
        %s186 = smul.u32 8, %s11
      $region36: #{mwt_cz2d_forward.54} parent=31 // pred_fallthru
        _
    $region32: #{mwt_cz2d_forward.54} parent=5 // pred_fallthru
      _
    %p187 = scmp.le.s32.totalorder 1, %s11
    %p188 = scmp.lt.s32.totalorder %s11, 3
    %p189 = pnand %p187, %p188
    %p190 = pneg %p189
    // Predicated region
    $region37: #{mwt_cz2d_forward.54} parent=5 // pred_check
      _
    $region38: #{mwt_cz2d_forward.54} parent=5 // pred_check_branch
      %192 = sbr.rel (%p189) target = $region40
    $region39: #{mwt_cz2d_forward.54} parent=5 // pred_region
      %s193 = ssub.s32 %s11, 1
      %s194 = smul.u32 8, %s16
      %p195 = scmp.lt.s32.totalorder %s194, 15
      %s196 = scalar_select %p195, %s194, 15
      %s197 = smul.addr %s196, 8
      %s198 = scalar_lea.vmem %s0, %s197
      %p199 = pneg %p37
      %p200 = pneg %p34
      %p201 = pneg %p58
      %p202 = pneg %p55
      %p203 = pneg %p79
      %p204 = pneg %p76
      %p205 = pneg %p100
      %p206 = pneg %p97
      %p207 = pneg %p121
      %p208 = pneg %p118
      %p209 = pneg %p147
      %p210 = pneg %p144
      %s211 = smul.u32 8, %s16
      %p212 = scmp.lt.s32.totalorder %s211, 15
      %s213 = scalar_select %p212, %s211, 15
      %s214 = smul.addr %s213, 8
      %s215 = scalar_lea.vmem %s5, %s214
      %s216 = smul.u32 8, %s16
      %p217 = scmp.lt.s32.totalorder %s216, 15
      %s218 = scalar_select %p217, %s216, 15
      %s219 = smul.addr %s218, 8
      %s220 = scalar_lea.vmem %s0, %s219
      %s221 = smul.u32 8, %s16
      %s222 = smul.u32 8, %s16
      %p223 = scmp.lt.s32.totalorder %s222, 15
      %s224 = scalar_select %p223, %s222, 15
      %s225 = smul.addr %s224, 8
      %s226 = scalar_lea.vmem %s5, %s225
      %s227 = smul.u32 8, %s16
      %v228 = vld [vmem:[%s220] sm:$0xff]
      %v229 = vld [vmem:[%s220 + $0x8] sm:$0xff]
      %v230 = vld [vmem:[%s220 + $0x10] sm:$0xff]
      %v231 = vld [vmem:[%s220 + $0x18] sm:$0xff]
      %v232 = vld [vmem:[%s220 + $0x20] sm:$0xff]
      %v233 = vld [vmem:[%s220 + $0x28] sm:$0xff]
      %v234 = vld [vmem:[%s220 + $0x30] sm:$0xff]
      %v235 = vld [vmem:[%s220 + $0x38] sm:$0xff]
      %v236 = vld [vmem:[%s1] sm:$0xff]
      %v237 = vld [vmem:[%s1 + $0x8] sm:$0xff]
      %v238 = vld [vmem:[%s1 + $0x10] sm:$0xff]
      %v239 = vld [vmem:[%s1 + $0x18] sm:$0xff]
      %v240 = vld [vmem:[%s1 + $0x20] sm:$0xff]
      %v241 = vld [vmem:[%s1 + $0x28] sm:$0xff]
      %v242 = vld [vmem:[%s1 + $0x30] sm:$0xff]
      %v243 = vld [vmem:[%s1 + $0x38] sm:$0xff]
      %v244 = vld [vmem:[%s1 + $0x40] sm:$0xff]
      %v245 = vld [vmem:[%s1 + $0x48] sm:$0xff]
      %v246 = vld [vmem:[%s1 + $0x50] sm:$0x1]
      %v247 = vld [vmem:[%s2] sm:$0x1]
      %v249 = vlaneseq
      %v250 = vshrl.u32 %v249, 7
      %v251 = vsub.s32 0, %v250
      %v252 = vrot.slane %v247, %v251
      %vm254 = vcmask 662528
      %v256 = vsel %vm254, %v228, 0
      %v259 = vsel %vm254, %v229, 0
      %v262 = vsel %vm254, %v230, 0
      %v265 = vsel %vm254, %v231, 0
      %v268 = vsel %vm254, %v232, 0
      %v271 = vsel %vm254, %v233, 0
      %v274 = vsel %vm254, %v234, 0
      %v277 = vsel %vm254, %v235, 0
      %vm279 = vcmask 1040384
      %v281 = vsel %vm279, %v246, 0
      %283 = vmatprep.subr.mxu0 0.0
      %284 = vmatpush1.msra.mxu0 %v236
      %285 = vmatprep.subr.mxu0 0.0
      %286 = vmatpush1.msra.mxu0 %v237
      %287 = vmatprep.subr.mxu0 0.0
      %288 = vmatpush1.msra.mxu0 %v238
      %289 = vmatprep.subr.mxu0 0.0
      %290 = vmatpush1.msra.mxu0 %v239
      %291 = vmatprep.subr.mxu0 0.0
      %292 = vmatpush1.msra.mxu0 %v240
      %293 = vmatprep.subr.mxu0 0.0
      %294 = vmatpush1.msra.mxu0 %v241
      %295 = vmatprep.subr.mxu0 0.0
      %296 = vmatpush1.msra.mxu0 %v242
      %297 = vmatprep.subr.mxu0 0.0
      %298 = vmatpush1.msra.mxu0 %v243
      %299 = vmatprep.subr.mxu0 0.0
      %300 = vmatpush1.msra.mxu0 %v244
      %301 = vmatprep.subr.mxu0 0.0
      %302 = vmatpush1.msra.mxu0 %v245
      %303 = vmatprep.subr.mxu0 0.0
      %304 = vmatpush1.msra.mxu0 %v281
      %305 = vmatprep.subr.mxu0 0.0
      %306 = vmatpush1.msra.mxu0 0.0
      %307 = vmatprep.subr.mxu0 0.0
      %308 = vmatpush1.msra.mxu0 0.0
      %309 = vmatprep.subr.mxu0 0.0
      %310 = vmatpush1.msra.mxu0 0.0
      %311 = vmatprep.subr.mxu0 0.0
      %312 = vmatpush1.msra.mxu0 0.0
      %313 = vmatprep.subr.mxu0 0.0
      %314 = vmatpush1.msra.mxu0 0.0
      %315 = vmatprep.subr.mxu0 0.0
      %316 = vmatpush1.msra.mxu0 0.0
      %317 = vmatprep.subr.mxu0 0.0
      %318 = vmatpush1.msra.mxu0 0.0
      %319 = vmatprep.subr.mxu0 0.0
      %320 = vmatpush1.msra.mxu0 0.0
      %321 = vmatprep.subr.mxu0 0.0
      %322 = vmatpush1.msra.mxu0 0.0
      %323 = vmatprep.subr.mxu0 0.0
      %324 = vmatpush1.msra.mxu0 0.0
      %325 = vmatprep.subr.mxu0 0.0
      %326 = vmatpush1.msra.mxu0 0.0
      %327 = vmatprep.subr.mxu0 0.0
      %328 = vmatpush1.msra.mxu0 0.0
      %329 = vmatprep.subr.mxu0 0.0
      %330 = vmatpush1.msra.mxu0 0.0
      %331 = vmatprep.subr.mxu0 0.0
      %332 = vmatpush1.msra.mxu0 0.0
      %333 = vmatprep.subr.mxu0 0.0
      %334 = vmatpush1.msra.mxu0 0.0
      %335 = vmatprep.subr.mxu0 0.0
      %336 = vmatpush1.msra.mxu0 0.0
      %337 = vmatprep.subr.mxu0 0.0
      %338 = vmatpush1.msra.mxu0 0.0
      %339 = vmatprep.subr.mxu0 0.0
      %340 = vmatpush1.msra.mxu0 0.0
      %341 = vmatprep.subr.mxu0 0.0
      %342 = vmatpush1.msra.mxu0 0.0
      %343 = vmatprep.subr.mxu0 0.0
      %344 = vmatpush1.msra.mxu0 0.0
      %345 = vmatprep.subr.mxu0 0.0
      %346 = vmatpush1.msra.mxu0 0.0
      %347 = vmatprep.mubr.f32.mxu0 0.0
      %348 = vmatmul.mubr.f32.gmra.mrb[0].mxu0 %v256
      %v349 = vpop.f32.mrb[0].mxu0
      %v350 = vadd.f32 %v252, %v349
      %v351 = vpop.f32.mrb[0].mxu0
      %352 = vmatprep.mubr.f32.mxu0 0.0
      %353 = vmatmul.mubr.f32.gmra.mrb[0].mxu0 %v259
      %v354 = vpop.f32.mrb[0].mxu0
      %v355 = vadd.f32 %v252, %v354
      %v356 = vpop.f32.mrb[0].mxu0
      %357 = vmatprep.mubr.f32.mxu0 0.0
      %358 = vmatmul.mubr.f32.gmra.mrb[0].mxu0 %v262
      %v359 = vpop.f32.mrb[0].mxu0
      %v360 = vadd.f32 %v252, %v359
      %v361 = vpop.f32.mrb[0].mxu0
      %362 = vmatprep.mubr.f32.mxu0 0.0
      %363 = vmatmul.mubr.f32.gmra.mrb[0].mxu0 %v265
      %v364 = vpop.f32.mrb[0].mxu0
      %v365 = vadd.f32 %v252, %v364
      %v366 = vpop.f32.mrb[0].mxu0
      %367 = vmatprep.mubr.f32.mxu0 0.0
      %368 = vmatmul.mubr.f32.gmra.mrb[0].mxu0 %v268
      %v369 = vpop.f32.mrb[0].mxu0
      %v370 = vadd.f32 %v252, %v369
      %v371 = vpop.f32.mrb[0].mxu0
      %372 = vmatprep.mubr.f32.mxu0 0.0
      %373 = vmatmul.mubr.f32.gmra.mrb[0].mxu0 %v271
      %v374 = vpop.f32.mrb[0].mxu0
      %v375 = vadd.f32 %v252, %v374
      %v376 = vpop.f32.mrb[0].mxu0
      %377 = vmatprep.mubr.f32.mxu0 0.0
      %378 = vmatmul.mubr.f32.gmra.mrb[0].mxu0 %v274
      %v379 = vpop.f32.mrb[0].mxu0
      %v380 = vadd.f32 %v252, %v379
      %v381 = vpop.f32.mrb[0].mxu0
      %382 = vmatprep.mubr.f32.mxu0 0.0
      %383 = vmatmul.mubr.f32.gmra.mrb[0].mxu0 %v277
      %v384 = vpop.f32.mrb[0].mxu0
      %v385 = vadd.f32 %v252, %v384
      %v386 = vpop.f32.mrb[0].mxu0
      %387 = vdwg.mxu0
      %v388 = vmax.f32 %v350, 0.0
      %v389 = vmax.f32 %v355, 0.0
      %v390 = vmax.f32 %v360, 0.0
      %v391 = vmax.f32 %v365, 0.0
      %v392 = vmax.f32 %v370, 0.0
      %v393 = vmax.f32 %v375, 0.0
      %v394 = vmax.f32 %v380, 0.0
      %v395 = vmax.f32 %v385, 0.0
      %v396 = vld [vmem:[%s3] sm:$0xff]
      %v397 = vld [vmem:[%s3 + $0x8] sm:$0x1]
      %v398 = vld [vmem:[%s4] sm:$0x1]
      %v400 = vlaneseq
      %v401 = vshrl.u32 %v400, 7
      %v402 = vsub.s32 0, %v401
      %v403 = vrot.slane %v398, %v402
      %vm405 = vcmask 72704
      %v407 = vsel %vm405, %v388, 0
      %v410 = vsel %vm405, %v389, 0
      %v413 = vsel %vm405, %v390, 0
      %v416 = vsel %vm405, %v391, 0
      %v419 = vsel %vm405, %v392, 0
      %v422 = vsel %vm405, %v393, 0
      %v425 = vsel %vm405, %v394, 0
      %v428 = vsel %vm405, %v395, 0
      %v431 = vsel %vm279, %v397, 0
      %433 = vmatprep.subr.mxu0 0.0
      %434 = vmatpush1.msra.mxu0 %v396
      %435 = vmatprep.subr.mxu0 0.0
      %436 = vmatpush1.msra.mxu0 %v431
      %437 = vmatprep.subr.mxu0 0.0
      %438 = vmatpush1.msra.mxu0 0.0
      %439 = vmatprep.subr.mxu0 0.0
      %440 = vmatpush1.msra.mxu0 0.0
      %441 = vmatprep.subr.mxu0 0.0
      %442 = vmatpush1.msra.mxu0 0.0
      %443 = vmatprep.subr.mxu0 0.0
      %444 = vmatpush1.msra.mxu0 0.0
      %445 = vmatprep.subr.mxu0 0.0
      %446 = vmatpush1.msra.mxu0 0.0
      %447 = vmatprep.subr.mxu0 0.0
      %448 = vmatpush1.msra.mxu0 0.0
      %449 = vmatprep.subr.mxu0 0.0
      %450 = vmatpush1.msra.mxu0 0.0
      %451 = vmatprep.subr.mxu0 0.0
      %452 = vmatpush1.msra.mxu0 0.0
      %453 = vmatprep.subr.mxu0 0.0
      %454 = vmatpush1.msra.mxu0 0.0
      %455 = vmatprep.subr.mxu0 0.0
      %456 = vmatpush1.msra.mxu0 0.0
      %457 = vmatprep.subr.mxu0 0.0
      %458 = vmatpush1.msra.mxu0 0.0
      %459 = vmatprep.subr.mxu0 0.0
      %460 = vmatpush1.msra.mxu0 0.0
      %461 = vmatprep.subr.mxu0 0.0
      %462 = vmatpush1.msra.mxu0 0.0
      %463 = vmatprep.subr.mxu0 0.0
      %464 = vmatpush1.msra.mxu0 0.0
      %465 = vmatprep.subr.mxu0 0.0
      %466 = vmatpush1.msra.mxu0 0.0
      %467 = vmatprep.subr.mxu0 0.0
      %468 = vmatpush1.msra.mxu0 0.0
      %469 = vmatprep.subr.mxu0 0.0
      %470 = vmatpush1.msra.mxu0 0.0
      %471 = vmatprep.subr.mxu0 0.0
      %472 = vmatpush1.msra.mxu0 0.0
      %473 = vmatprep.subr.mxu0 0.0
      %474 = vmatpush1.msra.mxu0 0.0
      %475 = vmatprep.subr.mxu0 0.0
      %476 = vmatpush1.msra.mxu0 0.0
      %477 = vmatprep.subr.mxu0 0.0
      %478 = vmatpush1.msra.mxu0 0.0
      %479 = vmatprep.subr.mxu0 0.0
      %480 = vmatpush1.msra.mxu0 0.0
      %481 = vmatprep.subr.mxu0 0.0
      %482 = vmatpush1.msra.mxu0 0.0
      %483 = vmatprep.subr.mxu0 0.0
      %484 = vmatpush1.msra.mxu0 0.0
      %485 = vmatprep.subr.mxu0 0.0
      %486 = vmatpush1.msra.mxu0 0.0
      %487 = vmatprep.subr.mxu0 0.0
      %488 = vmatpush1.msra.mxu0 0.0
      %489 = vmatprep.subr.mxu0 0.0
      %490 = vmatpush1.msra.mxu0 0.0
      %491 = vmatprep.subr.mxu0 0.0
      %492 = vmatpush1.msra.mxu0 0.0
      %493 = vmatprep.subr.mxu0 0.0
      %494 = vmatpush1.msra.mxu0 0.0
      %495 = vmatprep.subr.mxu0 0.0
      %496 = vmatpush1.msra.mxu0 0.0
      %497 = vmatprep.mubr.f32.mxu0 0.0
      %498 = vmatmul.mubr.f32.gmra.mrb[0].mxu0 %v407
      %v499 = vpop.f32.mrb[0].mxu0
      %v500 = vadd.f32 %v403, %v499
      %v501 = vpop.f32.mrb[0].mxu0
      %502 = vmatprep.mubr.f32.mxu0 0.0
      %503 = vmatmul.mubr.f32.gmra.mrb[0].mxu0 %v410
      %v504 = vpop.f32.mrb[0].mxu0
      %v505 = vadd.f32 %v403, %v504
      %v506 = vpop.f32.mrb[0].mxu0
      %507 = vmatprep.mubr.f32.mxu0 0.0
      %508 = vmatmul.mubr.f32.gmra.mrb[0].mxu0 %v413
      %v509 = vpop.f32.mrb[0].mxu0
      %v510 = vadd.f32 %v403, %v509
      %v511 = vpop.f32.mrb[0].mxu0
      %512 = vmatprep.mubr.f32.mxu0 0.0
      %513 = vmatmul.mubr.f32.gmra.mrb[0].mxu0 %v416
      %v514 = vpop.f32.mrb[0].mxu0
      %v515 = vadd.f32 %v403, %v514
      %v516 = vpop.f32.mrb[0].mxu0
      %517 = vmatprep.mubr.f32.mxu0 0.0
      %518 = vmatmul.mubr.f32.gmra.mrb[0].mxu0 %v419
      %v519 = vpop.f32.mrb[0].mxu0
      %v520 = vadd.f32 %v403, %v519
      %v521 = vpop.f32.mrb[0].mxu0
      %522 = vmatprep.mubr.f32.mxu0 0.0
      %523 = vmatmul.mubr.f32.gmra.mrb[0].mxu0 %v422
      %v524 = vpop.f32.mrb[0].mxu0
      %v525 = vadd.f32 %v403, %v524
      %v526 = vpop.f32.mrb[0].mxu0
      %527 = vmatprep.mubr.f32.mxu0 0.0
      %528 = vmatmul.mubr.f32.gmra.mrb[0].mxu0 %v425
      %v529 = vpop.f32.mrb[0].mxu0
      %v530 = vadd.f32 %v403, %v529
      %v531 = vpop.f32.mrb[0].mxu0
      %532 = vmatprep.mubr.f32.mxu0 0.0
      %533 = vmatmul.mubr.f32.gmra.mrb[0].mxu0 %v428
      %v534 = vpop.f32.mrb[0].mxu0
      %v535 = vadd.f32 %v403, %v534
      %v536 = vpop.f32.mrb[0].mxu0
      %537 = vdwg.mxu0
      %538 = vst.msk [vmem:[%s226] sm:$0xff] %vm405, %v500
      %539 = vst.msk [vmem:[%s226 + $0x8] sm:$0xff] %vm405, %v505
      %540 = vst.msk [vmem:[%s226 + $0x10] sm:$0xff] %vm405, %v510
      %541 = vst.msk [vmem:[%s226 + $0x18] sm:$0xff] %vm405, %v515
      %542 = vst.msk [vmem:[%s226 + $0x20] sm:$0xff] %vm405, %v520
      %543 = vst.msk [vmem:[%s226 + $0x28] sm:$0xff] %vm405, %v525
      %544 = vst.msk [vmem:[%s226 + $0x30] sm:$0xff] %vm405, %v530
      %545 = vst.msk [vmem:[%s226 + $0x38] sm:$0xff] %vm405, %v535
      %s546 = smul.u32 8, %s16
      %p547 = scmp.lt.s32.totalorder %s546, 15
      %s548 = scalar_select %p547, %s546, 15
      %s549 = smul.addr %s548, 8
      %s550 = scalar_lea.vmem %s5, %s549
      // Predicated region
      $region41: #{mwt_cz2d_forward.54} parent=39 // pred_check
        %p551 = pneg %p144
      $region42: #{mwt_cz2d_forward.54} parent=39 // pred_check_branch
        %553 = sbr.rel (%p551) target = $region44
      $region43: #{mwt_cz2d_forward.54} parent=39 // pred_region
        %s554 = smul.u32 8, %s16
      $region44: #{mwt_cz2d_forward.54} parent=39 // pred_fallthru
        _
    $region40: #{mwt_cz2d_forward.54} parent=5 // pred_fallthru
      _
    %p555 = scmp.le.s32.totalorder 2, %s11
    // Predicated region
    $region45: #{mwt_cz2d_forward.54} parent=5 // pred_check
      %p556 = pneg %p555
    $region46: #{mwt_cz2d_forward.54} parent=5 // pred_check_branch
      %558 = sbr.rel (%p556) target = $region48
    $region47: #{mwt_cz2d_forward.54} parent=5 // pred_region
      %s559 = ssub.s32 %s11, 2
      // Predicated region
      $region49: #{mwt_cz2d_forward.54} parent=47 // pred_check
        %p560 = pneg %p150
      $region50: #{mwt_cz2d_forward.54} parent=47 // pred_check_branch
        %562 = sbr.rel (%p560) target = $region52
      $region51: #{mwt_cz2d_forward.54} parent=47 // pred_region
        %s563 = smul.u32 8, %s17
        %p564 = scmp.lt.s32.totalorder %s563, 15
        %s565 = scalar_select %p564, %s563, 15
        %s566 = smul.addr %s565, 8
        %s567 = scalar_lea.vmem %s5, %s566
      $region52: #{mwt_cz2d_forward.54} parent=47 // pred_fallthru
        _
    $region48: #{mwt_cz2d_forward.54} parent=5 // pred_fallthru
      _
  $region6: #{mwt_cz2d_forward.54} parent=0 // loop_footer
    %s15 = sadd.s32 1, %s11
  $region7: #{mwt_cz2d_forward.54} parent=0 // loop_footer_branch
    %10 = sbr.rel target = $region3
  $region8: #{mwt_cz2d_forward.54} parent=0 // loop_exit
    _

// kernel: mwt_cz2d_forward.30
$region0: #{mwt_cz2d_forward.30}
  #allocation0 [shape = 'u32[]', space=smem, size = 0x4, offset = 0x4, fixed_abs, tag = 'smem constant byte address 0x4 - core index']
  #allocation1 [shape = 'u32[144,128]{1,0:T(1,128)}', space=vmem, size = 0x12000, scoped, tag = 'internal scratch']
  %s0 = inlined_call_operand.vmem [shape: f32[32,36], index: 0, kind: input, shape index: {}]
  %s1 = inlined_call_operand.vmem [shape: f32[36,18], index: 1, kind: input, shape index: {}]
  %s2 = inlined_call_operand.vmem [shape: f32[1,18], index: 2, kind: input, shape index: {}]
  %s3 = inlined_call_operand.vmem [shape: f32[32,18], index: 3, kind: output, shape index: {}]
  %s4 = sld [smem:[#allocation0]]
  $region45: #{mwt_cz2d_forward.30} parent=0
    _
  %s6 = ssub.s32 1, %s4
  %s7 = scalar_select 0, %s6, %s4
  loop: start=0, step=1, limit=4
  $region2: #{mwt_cz2d_forward.30} parent=0 // loop_pre_header
    _
  $region3: #{mwt_cz2d_forward.30} parent=0 // loop_header
    %s9 = sphi 0, %s13
    %p10 = scmp.ge.s32.totalorder %s9, 4
    %s19 = sphi 0, %s21
    %s22 = sphi 0, %s19
    %s23 = sphi 0, %s22
    %s39 = sphi 0, %s23
    %s43 = sphi 0, %s43
    %s45 = sphi 0, %s43
    %s46 = sphi 0, %s45
    %s60 = sphi 0, %s46
    %s64 = sphi 0, %s64
    %s66 = sphi 0, %s64
    %s67 = sphi 0, %s66
    %s81 = sphi 0, %s67
    %s87 = sphi 0, %s89
    %s90 = sphi 0, %s87
    %s91 = sphi 0, %s90
    %s107 = sphi 0, %s91
  $region4: #{mwt_cz2d_forward.30} parent=0 // loop_header_branch
    %12 = sbr.rel (%p10) target = $region8
  $region5: #{mwt_cz2d_forward.30} parent=0 // loop_body
    %s14 = ssub.s32 %s9, 1
    %s15 = ssub.s32 %s9, 2
    %s16 = sadd.s32 %s9, 1
    %s17 = ssub.s32 %s9, %s16
    %p18 = scmp.eq.s32.totalorder %s17, 0
    %s20 = sadd.s32 %s19, 1
    %s21 = scalar_select %p18, %s19, %s20
    %p24 = pneg %p18
    %p25 = scmp.eq.s32.totalorder %s9, 1
    %p26 = por %p24, %p25
    %p27 = scmp.ne.s32.totalorder %s19, %s22
    %p28 = scmp.eq.s32.totalorder %s9, 0
    %p29 = por %p27, %p28
    %p30 = scmp.ne.s32.totalorder %s19, %s22
    %p31 = scmp.eq.s32.totalorder %s14, 1
    %p32 = por %p30, %p31
    %p33 = scmp.ne.s32.totalorder %s22, %s23
    %p34 = scmp.eq.s32.totalorder %s14, 0
    %p35 = por %p33, %p34
    %p36 = scmp.ne.s32.totalorder %s22, %s23
    %p37 = scmp.eq.s32.totalorder %s15, 1
    %p38 = por %p36, %p37
    %p40 = scmp.ne.s32.totalorder %s23, %s39
    %p41 = scmp.eq.s32.totalorder %s15, 0
    %p42 = por %p40, %p41
    %s44 = sadd.s32 %s43, 1
    %p47 = scmp.eq.s32.totalorder %s9, 1
    %p48 = scmp.ne.s32.totalorder %s43, %s45
    %p49 = scmp.eq.s32.totalorder %s9, 0
    %p50 = por %p48, %p49
    %p51 = scmp.ne.s32.totalorder %s43, %s45
    %p52 = scmp.eq.s32.totalorder %s14, 1
    %p53 = por %p51, %p52
    %p54 = scmp.ne.s32.totalorder %s45, %s46
    %p55 = scmp.eq.s32.totalorder %s14, 0
    %p56 = por %p54, %p55
    %p57 = scmp.ne.s32.totalorder %s45, %s46
    %p58 = scmp.eq.s32.totalorder %s15, 1
    %p59 = por %p57, %p58
    %p61 = scmp.ne.s32.totalorder %s46, %s60
    %p62 = scmp.eq.s32.totalorder %s15, 0
    %p63 = por %p61, %p62
    %s65 = sadd.s32 %s64, 1
    %p68 = scmp.eq.s32.totalorder %s9, 1
    %p69 = scmp.ne.s32.totalorder %s64, %s66
    %p70 = scmp.eq.s32.totalorder %s9, 0
    %p71 = por %p69, %p70
    %p72 = scmp.ne.s32.totalorder %s64, %s66
    %p73 = scmp.eq.s32.totalorder %s14, 1
    %p74 = por %p72, %p73
    %p75 = scmp.ne.s32.totalorder %s66, %s67
    %p76 = scmp.eq.s32.totalorder %s14, 0
    %p77 = por %p75, %p76
    %p78 = scmp.ne.s32.totalorder %s66, %s67
    %p79 = scmp.eq.s32.totalorder %s15, 1
    %p80 = por %p78, %p79
    %p82 = scmp.ne.s32.totalorder %s67, %s81
    %p83 = scmp.eq.s32.totalorder %s15, 0
    %p84 = por %p82, %p83
    %s85 = ssub.s32 %s9, %s16
    %p86 = scmp.eq.s32.totalorder %s85, 0
    %s88 = sadd.s32 %s87, 1
    %s89 = scalar_select %p86, %s87, %s88
    %p92 = pneg %p86
    %p93 = scmp.eq.s32.totalorder %s9, 1
    %p94 = por %p92, %p93
    %p95 = scmp.ne.s32.totalorder %s87, %s90
    %p96 = scmp.eq.s32.totalorder %s9, 0
    %p97 = por %p95, %p96
    %p98 = scmp.ne.s32.totalorder %s87, %s90
    %p99 = scmp.eq.s32.totalorder %s14, 1
    %p100 = por %p98, %p99
    %p101 = scmp.ne.s32.totalorder %s90, %s91
    %p102 = scmp.eq.s32.totalorder %s14, 0
    %p103 = por %p101, %p102
    %p104 = scmp.ne.s32.totalorder %s90, %s91
    %p105 = scmp.eq.s32.totalorder %s15, 1
    %p106 = por %p104, %p105
    %p108 = scmp.ne.s32.totalorder %s91, %s107
    %p109 = scmp.eq.s32.totalorder %s15, 0
    %p110 = por %p108, %p109
    %p111 = scmp.le.s32.totalorder 1, %s9
    %p112 = scmp.lt.s32.totalorder %s9, 3
    %p113 = pnand %p111, %p112
    %p114 = pneg %p113
    // Predicated region
    $region9: #{mwt_cz2d_forward.30} parent=5 // pred_check
      _
    $region10: #{mwt_cz2d_forward.30} parent=5 // pred_check_branch
      %116 = sbr.rel (%p113) target = $region12
    $region11: #{mwt_cz2d_forward.30} parent=5 // pred_region
      %s117 = ssub.s32 %s9, 1
      // Predicated region
      $region13: #{mwt_cz2d_forward.30} parent=11 // pred_check
        %p118 = pneg %p56
      $region14: #{mwt_cz2d_forward.30} parent=11 // pred_check_branch
        %120 = sbr.rel (%p118) target = $region16
      $region15: #{mwt_cz2d_forward.30} parent=11 // pred_region
        _
      $region16: #{mwt_cz2d_forward.30} parent=11 // pred_fallthru
        _
      // Predicated region
      $region17: #{mwt_cz2d_forward.30} parent=11 // pred_check
        %p121 = pneg %p77
      $region18: #{mwt_cz2d_forward.30} parent=11 // pred_check_branch
        %123 = sbr.rel (%p121) target = $region20
      $region19: #{mwt_cz2d_forward.30} parent=11 // pred_region
        _
      $region20: #{mwt_cz2d_forward.30} parent=11 // pred_fallthru
        _
    $region12: #{mwt_cz2d_forward.30} parent=5 // pred_fallthru
      _
    %p124 = scmp.lt.s32.totalorder %s9, 2
    // Predicated region
    $region21: #{mwt_cz2d_forward.30} parent=5 // pred_check
      %p125 = pneg %p124
    $region22: #{mwt_cz2d_forward.30} parent=5 // pred_check_branch
      %127 = sbr.rel (%p125) target = $region24
    $region23: #{mwt_cz2d_forward.30} parent=5 // pred_region
      // Predicated region
      $region25: #{mwt_cz2d_forward.30} parent=23 // pred_check
        %p128 = pneg %p29
      $region26: #{mwt_cz2d_forward.30} parent=23 // pred_check_branch
        %130 = sbr.rel (%p128) target = $region28
      $region27: #{mwt_cz2d_forward.30} parent=23 // pred_region
        %s131 = smul.u32 2, %s9
        %p132 = scmp.lt.s32.totalorder %s131, 3
        %s133 = scalar_select %p132, %s131, 3
        %s134 = smul.addr %s133, 8
        %s135 = scalar_lea.vmem %s0, %s134
        %s136 = smul.u32 2, %s9
      $region28: #{mwt_cz2d_forward.30} parent=23 // pred_fallthru
        _
    $region24: #{mwt_cz2d_forward.30} parent=5 // pred_fallthru
      _
    %p137 = scmp.le.s32.totalorder 1, %s9
    %p138 = scmp.lt.s32.totalorder %s9, 3
    %p139 = pnand %p137, %p138
    %p140 = pneg %p139
    // Predicated region
    $region29: #{mwt_cz2d_forward.30} parent=5 // pred_check
      _
    $region30: #{mwt_cz2d_forward.30} parent=5 // pred_check_branch
      %142 = sbr.rel (%p139) target = $region32
    $region31: #{mwt_cz2d_forward.30} parent=5 // pred_region
      %s143 = ssub.s32 %s9, 1
      %s144 = smul.u32 2, %s14
      %p145 = scmp.lt.s32.totalorder %s144, 3
      %s146 = scalar_select %p145, %s144, 3
      %s147 = smul.addr %s146, 8
      %s148 = scalar_lea.vmem %s0, %s147
      %p149 = pneg %p35
      %p150 = pneg %p32
      %p151 = pneg %p56
      %p152 = pneg %p53
      %p153 = pneg %p77
      %p154 = pneg %p74
      %p155 = pneg %p103
      %p156 = pneg %p100
      %s157 = smul.u32 2, %s14
      %p158 = scmp.lt.s32.totalorder %s157, 3
      %s159 = scalar_select %p158, %s157, 3
      %s160 = smul.addr %s159, 8
      %s161 = scalar_lea.vmem %s3, %s160
      %s162 = smul.u32 2, %s14
      %p163 = scmp.lt.s32.totalorder %s162, 3
      %s164 = scalar_select %p163, %s162, 3
      %s165 = smul.addr %s164, 8
      %s166 = scalar_lea.vmem %s0, %s165
      %s167 = smul.u32 2, %s14
      %s168 = smul.u32 2, %s14
      %p169 = scmp.lt.s32.totalorder %s168, 3
      %s170 = scalar_select %p169, %s168, 3
      %s171 = smul.addr %s170, 8
      %s172 = scalar_lea.vmem %s3, %s171
      %s173 = smul.u32 2, %s14
      %v174 = vld [vmem:[%s166] sm:$0xff]
      %v175 = vld [vmem:[%s166 + $0x8] sm:$0xff]
      %v176 = vld [vmem:[%s1] sm:$0xff]
      %v177 = vld [vmem:[%s1 + $0x8] sm:$0xff]
      %v178 = vld [vmem:[%s1 + $0x10] sm:$0xff]
      %v179 = vld [vmem:[%s1 + $0x18] sm:$0xff]
      %v180 = vld [vmem:[%s1 + $0x20] sm:$0xf]
      %v181 = vld [vmem:[%s2] sm:$0x1]
      %v183 = vlaneseq
      %v184 = vshrl.u32 %v183, 7
      %v185 = vsub.s32 0, %v184
      %v186 = vrot.slane %v181, %v185
      %vm188 = vcmask 293888
      %v190 = vsel %vm188, %v174, 0
      %v193 = vsel %vm188, %v175, 0
      %vm195 = vcmask 1043456
      %v197 = vsel %vm195, %v180, 0
      %199 = vmatprep.subr.mxu0 0.0
      %200 = vmatpush1.msra.mxu0 %v176
      %201 = vmatprep.subr.mxu0 0.0
      %202 = vmatpush1.msra.mxu0 %v177
      %203 = vmatprep.subr.mxu0 0.0
      %204 = vmatpush1.msra.mxu0 %v178
      %205 = vmatprep.subr.mxu0 0.0
      %206 = vmatpush1.msra.mxu0 %v179
      %207 = vmatprep.subr.mxu0 0.0
      %208 = vmatpush1.msra.mxu0 %v197
      %209 = vmatprep.subr.mxu0 0.0
      %210 = vmatpush1.msra.mxu0 0.0
      %211 = vmatprep.subr.mxu0 0.0
      %212 = vmatpush1.msra.mxu0 0.0
      %213 = vmatprep.subr.mxu0 0.0
      %214 = vmatpush1.msra.mxu0 0.0
      %215 = vmatprep.subr.mxu0 0.0
      %216 = vmatpush1.msra.mxu0 0.0
      %217 = vmatprep.subr.mxu0 0.0
      %218 = vmatpush1.msra.mxu0 0.0
      %219 = vmatprep.subr.mxu0 0.0
      %220 = vmatpush1.msra.mxu0 0.0
      %221 = vmatprep.subr.mxu0 0.0
      %222 = vmatpush1.msra.mxu0 0.0
      %223 = vmatprep.subr.mxu0 0.0
      %224 = vmatpush1.msra.mxu0 0.0
      %225 = vmatprep.subr.mxu0 0.0
      %226 = vmatpush1.msra.mxu0 0.0
      %227 = vmatprep.subr.mxu0 0.0
      %228 = vmatpush1.msra.mxu0 0.0
      %229 = vmatprep.subr.mxu0 0.0
      %230 = vmatpush1.msra.mxu0 0.0
      %231 = vmatprep.subr.mxu0 0.0
      %232 = vmatpush1.msra.mxu0 0.0
      %233 = vmatprep.subr.mxu0 0.0
      %234 = vmatpush1.msra.mxu0 0.0
      %235 = vmatprep.subr.mxu0 0.0
      %236 = vmatpush1.msra.mxu0 0.0
      %237 = vmatprep.subr.mxu0 0.0
      %238 = vmatpush1.msra.mxu0 0.0
      %239 = vmatprep.subr.mxu0 0.0
      %240 = vmatpush1.msra.mxu0 0.0
      %241 = vmatprep.subr.mxu0 0.0
      %242 = vmatpush1.msra.mxu0 0.0
      %243 = vmatprep.subr.mxu0 0.0
      %244 = vmatpush1.msra.mxu0 0.0
      %245 = vmatprep.subr.mxu0 0.0
      %246 = vmatpush1.msra.mxu0 0.0
      %247 = vmatprep.subr.mxu0 0.0
      %248 = vmatpush1.msra.mxu0 0.0
      %249 = vmatprep.subr.mxu0 0.0
      %250 = vmatpush1.msra.mxu0 0.0
      %251 = vmatprep.subr.mxu0 0.0
      %252 = vmatpush1.msra.mxu0 0.0
      %253 = vmatprep.subr.mxu0 0.0
      %254 = vmatpush1.msra.mxu0 0.0
      %255 = vmatprep.subr.mxu0 0.0
      %256 = vmatpush1.msra.mxu0 0.0
      %257 = vmatprep.subr.mxu0 0.0
      %258 = vmatpush1.msra.mxu0 0.0
      %259 = vmatprep.subr.mxu0 0.0
      %260 = vmatpush1.msra.mxu0 0.0
      %261 = vmatprep.subr.mxu0 0.0
      %262 = vmatpush1.msra.mxu0 0.0
      %263 = vmatprep.mubr.f32.mxu0 0.0
      %264 = vmatmul.mubr.f32.gmra.mrb[0].mxu0 %v190
      %v265 = vpop.f32.mrb[0].mxu0
      %v266 = vadd.f32 %v186, %v265
      %v267 = vpop.f32.mrb[0].mxu0
      %268 = vmatprep.mubr.f32.mxu0 0.0
      %269 = vmatmul.mubr.f32.gmra.mrb[0].mxu0 %v193
      %v270 = vpop.f32.mrb[0].mxu0
      %v271 = vadd.f32 %v186, %v270
      %v272 = vpop.f32.mrb[0].mxu0
      %273 = vdwg.mxu0
      %vm274 = vcmask 146432
      %275 = vst.msk [vmem:[%s172] sm:$0xff] %vm274, %v266
      %276 = vst.msk [vmem:[%s172 + $0x8] sm:$0xff] %vm274, %v271
      %s277 = smul.u32 2, %s14
      %p278 = scmp.lt.s32.totalorder %s277, 3
      %s279 = scalar_select %p278, %s277, 3
      %s280 = smul.addr %s279, 8
      %s281 = scalar_lea.vmem %s3, %s280
      // Predicated region
      $region33: #{mwt_cz2d_forward.30} parent=31 // pred_check
        %p282 = pneg %p100
      $region34: #{mwt_cz2d_forward.30} parent=31 // pred_check_branch
        %284 = sbr.rel (%p282) target = $region36
      $region35: #{mwt_cz2d_forward.30} parent=31 // pred_region
        %s285 = smul.u32 2, %s14
      $region36: #{mwt_cz2d_forward.30} parent=31 // pred_fallthru
        _
    $region32: #{mwt_cz2d_forward.30} parent=5 // pred_fallthru
      _
    %p286 = scmp.le.s32.totalorder 2, %s9
    // Predicated region
    $region37: #{mwt_cz2d_forward.30} parent=5 // pred_check
      %p287 = pneg %p286
    $region38: #{mwt_cz2d_forward.30} parent=5 // pred_check_branch
      %289 = sbr.rel (%p287) target = $region40
    $region39: #{mwt_cz2d_forward.30} parent=5 // pred_region
      %s290 = ssub.s32 %s9, 2
      // Predicated region
      $region41: #{mwt_cz2d_forward.30} parent=39 // pred_check
        %p291 = pneg %p106
      $region42: #{mwt_cz2d_forward.30} parent=39 // pred_check_branch
        %293 = sbr.rel (%p291) target = $region44
      $region43: #{mwt_cz2d_forward.30} parent=39 // pred_region
        %s294 = smul.u32 2, %s15
        %p295 = scmp.lt.s32.totalorder %s294, 3
        %s296 = scalar_select %p295, %s294, 3
        %s297 = smul.addr %s296, 8
        %s298 = scalar_lea.vmem %s3, %s297
      $region44: #{mwt_cz2d_forward.30} parent=39 // pred_fallthru
        _
    $region40: #{mwt_cz2d_forward.30} parent=5 // pred_fallthru
      _
  $region6: #{mwt_cz2d_forward.30} parent=0 // loop_footer
    %s13 = sadd.s32 1, %s9
  $region7: #{mwt_cz2d_forward.30} parent=0 // loop_footer_branch
    %8 = sbr.rel target = $region3
  $region8: #{mwt_cz2d_forward.30} parent=0 // loop_exit
    _

// kernel: mwt_cz2d_forward.45
$region0: #{mwt_cz2d_forward.45}
  #allocation0 [shape = 'u32[]', space=smem, size = 0x4, offset = 0x4, fixed_abs, tag = 'smem constant byte address 0x4 - core index']
  #allocation1 [shape = 'u32[144,128]{1,0:T(1,128)}', space=vmem, size = 0x12000, scoped, tag = 'internal scratch']
  %s0 = inlined_call_operand.vmem [shape: f32[10,8,18], index: 0, kind: input, shape index: {}]
  %s1 = inlined_call_operand.vmem [shape: f32[10,18,18], index: 1, kind: input, shape index: {}]
  %s2 = inlined_call_operand.vmem [shape: f32[10,8,18], index: 2, kind: output, shape index: {}]
  %s3 = sld [smem:[#allocation0]]
  $region41: #{mwt_cz2d_forward.45} parent=0
    _
  %s5 = ssub.s32 1, %s3
  %s6 = scalar_select 0, %s5, %s3
  loop: start=0, step=1, limit=4
  $region2: #{mwt_cz2d_forward.45} parent=0 // loop_pre_header
    _
  $region3: #{mwt_cz2d_forward.45} parent=0 // loop_header
    %s8 = sphi 0, %s12
    %p9 = scmp.ge.s32.totalorder %s8, 4
    %s18 = sphi 0, %s20
    %s21 = sphi 0, %s18
    %s22 = sphi 0, %s21
    %s38 = sphi 0, %s22
    %s44 = sphi 0, %s46
    %s47 = sphi 0, %s44
    %s48 = sphi 0, %s47
    %s64 = sphi 0, %s48
    %s70 = sphi 0, %s72
    %s73 = sphi 0, %s70
    %s74 = sphi 0, %s73
    %s90 = sphi 0, %s74
  $region4: #{mwt_cz2d_forward.45} parent=0 // loop_header_branch
    %11 = sbr.rel (%p9) target = $region8
  $region5: #{mwt_cz2d_forward.45} parent=0 // loop_body
    %s13 = ssub.s32 %s8, 1
    %s14 = ssub.s32 %s8, 2
    %s15 = sadd.s32 %s8, 1
    %s16 = ssub.s32 %s8, %s15
    %p17 = scmp.eq.s32.totalorder %s16, 0
    %s19 = sadd.s32 %s18, 1
    %s20 = scalar_select %p17, %s18, %s19
    %p23 = pneg %p17
    %p24 = scmp.eq.s32.totalorder %s8, 1
    %p25 = por %p23, %p24
    %p26 = scmp.ne.s32.totalorder %s18, %s21
    %p27 = scmp.eq.s32.totalorder %s8, 0
    %p28 = por %p26, %p27
    %p29 = scmp.ne.s32.totalorder %s18, %s21
    %p30 = scmp.eq.s32.totalorder %s13, 1
    %p31 = por %p29, %p30
    %p32 = scmp.ne.s32.totalorder %s21, %s22
    %p33 = scmp.eq.s32.totalorder %s13, 0
    %p34 = por %p32, %p33
    %p35 = scmp.ne.s32.totalorder %s21, %s22
    %p36 = scmp.eq.s32.totalorder %s14, 1
    %p37 = por %p35, %p36
    %p39 = scmp.ne.s32.totalorder %s22, %s38
    %p40 = scmp.eq.s32.totalorder %s14, 0
    %p41 = por %p39, %p40
    %s42 = ssub.s32 %s8, %s15
    %p43 = scmp.eq.s32.totalorder %s42, 0
    %s45 = sadd.s32 %s44, 1
    %s46 = scalar_select %p43, %s44, %s45
    %p49 = pneg %p43
    %p50 = scmp.eq.s32.totalorder %s8, 1
    %p51 = por %p49, %p50
    %p52 = scmp.ne.s32.totalorder %s44, %s47
    %p53 = scmp.eq.s32.totalorder %s8, 0
    %p54 = por %p52, %p53
    %p55 = scmp.ne.s32.totalorder %s44, %s47
    %p56 = scmp.eq.s32.totalorder %s13, 1
    %p57 = por %p55, %p56
    %p58 = scmp.ne.s32.totalorder %s47, %s48
    %p59 = scmp.eq.s32.totalorder %s13, 0
    %p60 = por %p58, %p59
    %p61 = scmp.ne.s32.totalorder %s47, %s48
    %p62 = scmp.eq.s32.totalorder %s14, 1
    %p63 = por %p61, %p62
    %p65 = scmp.ne.s32.totalorder %s48, %s64
    %p66 = scmp.eq.s32.totalorder %s14, 0
    %p67 = por %p65, %p66
    %s68 = ssub.s32 %s8, %s15
    %p69 = scmp.eq.s32.totalorder %s68, 0
    %s71 = sadd.s32 %s70, 1
    %s72 = scalar_select %p69, %s70, %s71
    %p75 = pneg %p69
    %p76 = scmp.eq.s32.totalorder %s8, 1
    %p77 = por %p75, %p76
    %p78 = scmp.ne.s32.totalorder %s70, %s73
    %p79 = scmp.eq.s32.totalorder %s8, 0
    %p80 = por %p78, %p79
    %p81 = scmp.ne.s32.totalorder %s70, %s73
    %p82 = scmp.eq.s32.totalorder %s13, 1
    %p83 = por %p81, %p82
    %p84 = scmp.ne.s32.totalorder %s73, %s74
    %p85 = scmp.eq.s32.totalorder %s13, 0
    %p86 = por %p84, %p85
    %p87 = scmp.ne.s32.totalorder %s73, %s74
    %p88 = scmp.eq.s32.totalorder %s14, 1
    %p89 = por %p87, %p88
    %p91 = scmp.ne.s32.totalorder %s74, %s90
    %p92 = scmp.eq.s32.totalorder %s14, 0
    %p93 = por %p91, %p92
    %p94 = scmp.le.s32.totalorder 1, %s8
    %p95 = scmp.lt.s32.totalorder %s8, 3
    %p96 = pnand %p94, %p95
    %p97 = pneg %p96
    // Predicated region
    $region9: #{mwt_cz2d_forward.45} parent=5 // pred_check
      _
    $region10: #{mwt_cz2d_forward.45} parent=5 // pred_check_branch
      %99 = sbr.rel (%p96) target = $region12
    $region11: #{mwt_cz2d_forward.45} parent=5 // pred_region
      %s100 = ssub.s32 %s8, 1
    $region12: #{mwt_cz2d_forward.45} parent=5 // pred_fallthru
      _
    %p101 = scmp.lt.s32.totalorder %s8, 2
    // Predicated region
    $region13: #{mwt_cz2d_forward.45} parent=5 // pred_check
      %p102 = pneg %p101
    $region14: #{mwt_cz2d_forward.45} parent=5 // pred_check_branch
      %104 = sbr.rel (%p102) target = $region16
    $region15: #{mwt_cz2d_forward.45} parent=5 // pred_region
      // Predicated region
      $region17: #{mwt_cz2d_forward.45} parent=15 // pred_check
        %p105 = pneg %p28
      $region18: #{mwt_cz2d_forward.45} parent=15 // pred_check_branch
        %107 = sbr.rel (%p105) target = $region20
      $region19: #{mwt_cz2d_forward.45} parent=15 // pred_region
        %s108 = smul.u32 5, %s8
        %p109 = scmp.lt.s32.totalorder %s108, 9
        %s110 = scalar_select %p109, %s108, 9
        %s111 = smul.addr %s110, 8
        %s112 = scalar_lea.vmem %s0, %s111
        %s113 = smul.u32 5, %s8
      $region20: #{mwt_cz2d_forward.45} parent=15 // pred_fallthru
        _
      // Predicated region
      $region21: #{mwt_cz2d_forward.45} parent=15 // pred_check
        %p114 = pneg %p54
      $region22: #{mwt_cz2d_forward.45} parent=15 // pred_check_branch
        %116 = sbr.rel (%p114) target = $region24
      $region23: #{mwt_cz2d_forward.45} parent=15 // pred_region
        %s117 = smul.u32 5, %s8
        %p118 = scmp.lt.s32.totalorder %s117, 9
        %s119 = scalar_select %p118, %s117, 9
        %s120 = smul.addr %s119, 3
        %s121 = smul.addr %s120, 8
        %s122 = scalar_lea.vmem %s1, %s121
        %s123 = smul.u32 5, %s8
      $region24: #{mwt_cz2d_forward.45} parent=15 // pred_fallthru
        _
    $region16: #{mwt_cz2d_forward.45} parent=5 // pred_fallthru
      _
    %p124 = scmp.le.s32.totalorder 1, %s8
    %p125 = scmp.lt.s32.totalorder %s8, 3
    %p126 = pnand %p124, %p125
    %p127 = pneg %p126
    // Predicated region
    $region25: #{mwt_cz2d_forward.45} parent=5 // pred_check
      _
    $region26: #{mwt_cz2d_forward.45} parent=5 // pred_check_branch
      %129 = sbr.rel (%p126) target = $region28
    $region27: #{mwt_cz2d_forward.45} parent=5 // pred_region
      %s130 = ssub.s32 %s8, 1
      %s131 = smul.u32 5, %s13
      %p132 = scmp.lt.s32.totalorder %s131, 9
      %s133 = scalar_select %p132, %s131, 9
      %s134 = smul.addr %s133, 8
      %s135 = scalar_lea.vmem %s0, %s134
      %p136 = pneg %p34
      %p137 = pneg %p31
      %s138 = smul.u32 5, %s13
      %p139 = scmp.lt.s32.totalorder %s138, 9
      %s140 = scalar_select %p139, %s138, 9
      %s141 = smul.addr %s140, 3
      %s142 = smul.addr %s141, 8
      %s143 = scalar_lea.vmem %s1, %s142
      %p144 = pneg %p60
      %p145 = pneg %p57
      %p146 = pneg %p86
      %p147 = pneg %p83
      %s148 = smul.u32 5, %s13
      %p149 = scmp.lt.s32.totalorder %s148, 9
      %s150 = scalar_select %p149, %s148, 9
      %s151 = smul.addr %s150, 8
      %s152 = scalar_lea.vmem %s2, %s151
      %s153 = smul.u32 5, %s13
      %p154 = scmp.lt.s32.totalorder %s153, 9
      %s155 = scalar_select %p154, %s153, 9
      %s156 = smul.addr %s155, 8
      %s157 = scalar_lea.vmem %s0, %s156
      %s158 = smul.u32 5, %s13
      %s159 = smul.u32 5, %s13
      %p160 = scmp.lt.s32.totalorder %s159, 9
      %s161 = scalar_select %p160, %s159, 9
      %s162 = smul.addr %s161, 3
      %s163 = smul.addr %s162, 8
      %s164 = scalar_lea.vmem %s1, %s163
      %s165 = smul.u32 5, %s13
      %s166 = smul.u32 5, %s13
      %p167 = scmp.lt.s32.totalorder %s166, 9
      %s168 = scalar_select %p167, %s166, 9
      %s169 = smul.addr %s168, 8
      %s170 = scalar_lea.vmem %s2, %s169
      %s171 = smul.u32 5, %s13
      %v172 = vld [vmem:[%s157] sm:$0xff]
      %v173 = vld [vmem:[%s164] sm:$0xff]
      %v174 = vld [vmem:[%s164 + $0x8] sm:$0xff]
      %v175 = vld [vmem:[%s164 + $0x10] sm:$0x3]
      %vm176 = vcmask 146432
      %v178 = vsel %vm176, %v172, 0
      %vm180 = vcmask 1041408
      %v182 = vsel %vm180, %v175, 0
      %184 = vmatprep.subr.mxu0 0.0
      %185 = vmatpush1.msra.mxu0 %v173
      %186 = vmatprep.subr.mxu0 0.0
      %187 = vmatpush1.msra.mxu0 %v174
      %188 = vmatprep.subr.mxu0 0.0
      %189 = vmatpush1.msra.mxu0 %v182
      %190 = vmatprep.subr.mxu0 0.0
      %191 = vmatpush1.msra.mxu0 0.0
      %192 = vmatprep.subr.mxu0 0.0
      %193 = vmatpush1.msra.mxu0 0.0
      %194 = vmatprep.subr.mxu0 0.0
      %195 = vmatpush1.msra.mxu0 0.0
      %196 = vmatprep.subr.mxu0 0.0
      %197 = vmatpush1.msra.mxu0 0.0
      %198 = vmatprep.subr.mxu0 0.0
      %199 = vmatpush1.msra.mxu0 0.0
      %200 = vmatprep.subr.mxu0 0.0
      %201 = vmatpush1.msra.mxu0 0.0
      %202 = vmatprep.subr.mxu0 0.0
      %203 = vmatpush1.msra.mxu0 0.0
      %204 = vmatprep.subr.mxu0 0.0
      %205 = vmatpush1.msra.mxu0 0.0
      %206 = vmatprep.subr.mxu0 0.0
      %207 = vmatpush1.msra.mxu0 0.0
      %208 = vmatprep.subr.mxu0 0.0
      %209 = vmatpush1.msra.mxu0 0.0
      %210 = vmatprep.subr.mxu0 0.0
      %211 = vmatpush1.msra.mxu0 0.0
      %212 = vmatprep.subr.mxu0 0.0
      %213 = vmatpush1.msra.mxu0 0.0
      %214 = vmatprep.subr.mxu0 0.0
      %215 = vmatpush1.msra.mxu0 0.0
      %216 = vmatprep.subr.mxu0 0.0
      %217 = vmatpush1.msra.mxu0 0.0
      %218 = vmatprep.subr.mxu0 0.0
      %219 = vmatpush1.msra.mxu0 0.0
      %220 = vmatprep.subr.mxu0 0.0
      %221 = vmatpush1.msra.mxu0 0.0
      %222 = vmatprep.subr.mxu0 0.0
      %223 = vmatpush1.msra.mxu0 0.0
      %224 = vmatprep.subr.mxu0 0.0
      %225 = vmatpush1.msra.mxu0 0.0
      %226 = vmatprep.subr.mxu0 0.0
      %227 = vmatpush1.msra.mxu0 0.0
      %228 = vmatprep.subr.mxu0 0.0
      %229 = vmatpush1.msra.mxu0 0.0
      %230 = vmatprep.subr.mxu0 0.0
      %231 = vmatpush1.msra.mxu0 0.0
      %232 = vmatprep.subr.mxu0 0.0
      %233 = vmatpush1.msra.mxu0 0.0
      %234 = vmatprep.subr.mxu0 0.0
      %235 = vmatpush1.msra.mxu0 0.0
      %236 = vmatprep.subr.mxu0 0.0
      %237 = vmatpush1.msra.mxu0 0.0
      %238 = vmatprep.subr.mxu0 0.0
      %239 = vmatpush1.msra.mxu0 0.0
      %240 = vmatprep.subr.mxu0 0.0
      %241 = vmatpush1.msra.mxu0 0.0
      %242 = vmatprep.subr.mxu0 0.0
      %243 = vmatpush1.msra.mxu0 0.0
      %244 = vmatprep.subr.mxu0 0.0
      %245 = vmatpush1.msra.mxu0 0.0
      %246 = vmatprep.subr.mxu0 0.0
      %247 = vmatpush1.msra.mxu0 0.0
      %248 = vmatprep.mubr.f32.mxu0 0.0
      %249 = vmatmul.mubr.f32.gmra.mrb[0].mxu0 %v178
      %v250 = vpop.f32.mrb[0].mxu0
      %v251 = vadd.f32 0.0, %v250
      %v252 = vpop.f32.mrb[0].mxu0
      %253 = vdwg.mxu0
      %254 = vst.msk [vmem:[%s170] sm:$0xff] %vm176, %v251
      %s255 = scalar_lea.vmem %s157, 8
      %v256 = vld [vmem:[%s255] sm:$0xff]
      %s257 = scalar_lea.vmem %s164, 24
      %v258 = vld [vmem:[%s257] sm:$0xff]
      %v259 = vld [vmem:[%s257 + $0x8] sm:$0xff]
      %v260 = vld [vmem:[%s257 + $0x10] sm:$0x3]
      %v262 = vsel %vm176, %v256, 0
      %v265 = vsel %vm180, %v260, 0
      %267 = vmatprep.subr.mxu0 0.0
      %268 = vmatpush1.msra.mxu0 %v258
      %269 = vmatprep.subr.mxu0 0.0
      %270 = vmatpush1.msra.mxu0 %v259
      %271 = vmatprep.subr.mxu0 0.0
      %272 = vmatpush1.msra.mxu0 %v265
      %273 = vmatprep.subr.mxu0 0.0
      %274 = vmatpush1.msra.mxu0 0.0
      %275 = vmatprep.subr.mxu0 0.0
      %276 = vmatpush1.msra.mxu0 0.0
      %277 = vmatprep.subr.mxu0 0.0
      %278 = vmatpush1.msra.mxu0 0.0
      %279 = vmatprep.subr.mxu0 0.0
      %280 = vmatpush1.msra.mxu0 0.0
      %281 = vmatprep.subr.mxu0 0.0
      %282 = vmatpush1.msra.mxu0 0.0
      %283 = vmatprep.subr.mxu0 0.0
      %284 = vmatpush1.msra.mxu0 0.0
      %285 = vmatprep.subr.mxu0 0.0
      %286 = vmatpush1.msra.mxu0 0.0
      %287 = vmatprep.subr.mxu0 0.0
      %288 = vmatpush1.msra.mxu0 0.0
      %289 = vmatprep.subr.mxu0 0.0
      %290 = vmatpush1.msra.mxu0 0.0
      %291 = vmatprep.subr.mxu0 0.0
      %292 = vmatpush1.msra.mxu0 0.0
      %293 = vmatprep.subr.mxu0 0.0
      %294 = vmatpush1.msra.mxu0 0.0
      %295 = vmatprep.subr.mxu0 0.0
      %296 = vmatpush1.msra.mxu0 0.0
      %297 = vmatprep.subr.mxu0 0.0
      %298 = vmatpush1.msra.mxu0 0.0
      %299 = vmatprep.subr.mxu0 0.0
      %300 = vmatpush1.msra.mxu0 0.0
      %301 = vmatprep.subr.mxu0 0.0
      %302 = vmatpush1.msra.mxu0 0.0
      %303 = vmatprep.subr.mxu0 0.0
      %304 = vmatpush1.msra.mxu0 0.0
      %305 = vmatprep.subr.mxu0 0.0
      %306 = vmatpush1.msra.mxu0 0.0
      %307 = vmatprep.subr.mxu0 0.0
      %308 = vmatpush1.msra.mxu0 0.0
      %309 = vmatprep.subr.mxu0 0.0
      %310 = vmatpush1.msra.mxu0 0.0
      %311 = vmatprep.subr.mxu0 0.0
      %312 = vmatpush1.msra.mxu0 0.0
      %313 = vmatprep.subr.mxu0 0.0
      %314 = vmatpush1.msra.mxu0 0.0
      %315 = vmatprep.subr.mxu0 0.0
      %316 = vmatpush1.msra.mxu0 0.0
      %317 = vmatprep.subr.mxu0 0.0
      %318 = vmatpush1.msra.mxu0 0.0
      %319 = vmatprep.subr.mxu0 0.0
      %320 = vmatpush1.msra.mxu0 0.0
      %321 = vmatprep.subr.mxu0 0.0
      %322 = vmatpush1.msra.mxu0 0.0
      %323 = vmatprep.subr.mxu0 0.0
      %324 = vmatpush1.msra.mxu0 0.0
      %325 = vmatprep.subr.mxu0 0.0
      %326 = vmatpush1.msra.mxu0 0.0
      %327 = vmatprep.subr.mxu0 0.0
      %328 = vmatpush1.msra.mxu0 0.0
      %329 = vmatprep.subr.mxu0 0.0
      %330 = vmatpush1.msra.mxu0 0.0
      %331 = vmatprep.mubr.f32.mxu0 0.0
      %332 = vmatmul.mubr.f32.gmra.mrb[0].mxu0 %v262
      %v333 = vpop.f32.mrb[0].mxu0
      %v334 = vadd.f32 0.0, %v333
      %v335 = vpop.f32.mrb[0].mxu0
      %336 = vdwg.mxu0
      %s337 = scalar_lea.vmem %s170, 8
      %338 = vst.msk [vmem:[%s337] sm:$0xff] %vm176, %v334
      %s339 = scalar_lea.vmem %s157, 16
      %v340 = vld [vmem:[%s339] sm:$0xff]
      %s341 = scalar_lea.vmem %s164, 48
      %v342 = vld [vmem:[%s341] sm:$0xff]
      %v343 = vld [vmem:[%s341 + $0x8] sm:$0xff]
      %v344 = vld [vmem:[%s341 + $0x10] sm:$0x3]
      %v346 = vsel %vm176, %v340, 0
      %v349 = vsel %vm180, %v344, 0
      %351 = vmatprep.subr.mxu0 0.0
      %352 = vmatpush1.msra.mxu0 %v342
      %353 = vmatprep.subr.mxu0 0.0
      %354 = vmatpush1.msra.mxu0 %v343
      %355 = vmatprep.subr.mxu0 0.0
      %356 = vmatpush1.msra.mxu0 %v349
      %357 = vmatprep.subr.mxu0 0.0
      %358 = vmatpush1.msra.mxu0 0.0
      %359 = vmatprep.subr.mxu0 0.0
      %360 = vmatpush1.msra.mxu0 0.0
      %361 = vmatprep.subr.mxu0 0.0
      %362 = vmatpush1.msra.mxu0 0.0
      %363 = vmatprep.subr.mxu0 0.0
      %364 = vmatpush1.msra.mxu0 0.0
      %365 = vmatprep.subr.mxu0 0.0
      %366 = vmatpush1.msra.mxu0 0.0
      %367 = vmatprep.subr.mxu0 0.0
      %368 = vmatpush1.msra.mxu0 0.0
      %369 = vmatprep.subr.mxu0 0.0
      %370 = vmatpush1.msra.mxu0 0.0
      %371 = vmatprep.subr.mxu0 0.0
      %372 = vmatpush1.msra.mxu0 0.0
      %373 = vmatprep.subr.mxu0 0.0
      %374 = vmatpush1.msra.mxu0 0.0
      %375 = vmatprep.subr.mxu0 0.0
      %376 = vmatpush1.msra.mxu0 0.0
      %377 = vmatprep.subr.mxu0 0.0
      %378 = vmatpush1.msra.mxu0 0.0
      %379 = vmatprep.subr.mxu0 0.0
      %380 = vmatpush1.msra.mxu0 0.0
      %381 = vmatprep.subr.mxu0 0.0
      %382 = vmatpush1.msra.mxu0 0.0
      %383 = vmatprep.subr.mxu0 0.0
      %384 = vmatpush1.msra.mxu0 0.0
      %385 = vmatprep.subr.mxu0 0.0
      %386 = vmatpush1.msra.mxu0 0.0
      %387 = vmatprep.subr.mxu0 0.0
      %388 = vmatpush1.msra.mxu0 0.0
      %389 = vmatprep.subr.mxu0 0.0
      %390 = vmatpush1.msra.mxu0 0.0
      %391 = vmatprep.subr.mxu0 0.0
      %392 = vmatpush1.msra.mxu0 0.0
      %393 = vmatprep.subr.mxu0 0.0
      %394 = vmatpush1.msra.mxu0 0.0
      %395 = vmatprep.subr.mxu0 0.0
      %396 = vmatpush1.msra.mxu0 0.0
      %397 = vmatprep.subr.mxu0 0.0
      %398 = vmatpush1.msra.mxu0 0.0
      %399 = vmatprep.subr.mxu0 0.0
      %400 = vmatpush1.msra.mxu0 0.0
      %401 = vmatprep.subr.mxu0 0.0
      %402 = vmatpush1.msra.mxu0 0.0
      %403 = vmatprep.subr.mxu0 0.0
      %404 = vmatpush1.msra.mxu0 0.0
      %405 = vmatprep.subr.mxu0 0.0
      %406 = vmatpush1.msra.mxu0 0.0
      %407 = vmatprep.subr.mxu0 0.0
      %408 = vmatpush1.msra.mxu0 0.0
      %409 = vmatprep.subr.mxu0 0.0
      %410 = vmatpush1.msra.mxu0 0.0
      %411 = vmatprep.subr.mxu0 0.0
      %412 = vmatpush1.msra.mxu0 0.0
      %413 = vmatprep.subr.mxu0 0.0
      %414 = vmatpush1.msra.mxu0 0.0
      %415 = vmatprep.mubr.f32.mxu0 0.0
      %416 = vmatmul.mubr.f32.gmra.mrb[0].mxu0 %v346
      %v417 = vpop.f32.mrb[0].mxu0
      %v418 = vadd.f32 0.0, %v417
      %v419 = vpop.f32.mrb[0].mxu0
      %420 = vdwg.mxu0
      %s421 = scalar_lea.vmem %s170, 16
      %422 = vst.msk [vmem:[%s421] sm:$0xff] %vm176, %v418
      %s423 = scalar_lea.vmem %s157, 24
      %v424 = vld [vmem:[%s423] sm:$0xff]
      %s425 = scalar_lea.vmem %s164, 72
      %v426 = vld [vmem:[%s425] sm:$0xff]
      %v427 = vld [vmem:[%s425 + $0x8] sm:$0xff]
      %v428 = vld [vmem:[%s425 + $0x10] sm:$0x3]
      %v430 = vsel %vm176, %v424, 0
      %v433 = vsel %vm180, %v428, 0
      %435 = vmatprep.subr.mxu0 0.0
      %436 = vmatpush1.msra.mxu0 %v426
      %437 = vmatprep.subr.mxu0 0.0
      %438 = vmatpush1.msra.mxu0 %v427
      %439 = vmatprep.subr.mxu0 0.0
      %440 = vmatpush1.msra.mxu0 %v433
      %441 = vmatprep.subr.mxu0 0.0
      %442 = vmatpush1.msra.mxu0 0.0
      %443 = vmatprep.subr.mxu0 0.0
      %444 = vmatpush1.msra.mxu0 0.0
      %445 = vmatprep.subr.mxu0 0.0
      %446 = vmatpush1.msra.mxu0 0.0
      %447 = vmatprep.subr.mxu0 0.0
      %448 = vmatpush1.msra.mxu0 0.0
      %449 = vmatprep.subr.mxu0 0.0
      %450 = vmatpush1.msra.mxu0 0.0
      %451 = vmatprep.subr.mxu0 0.0
      %452 = vmatpush1.msra.mxu0 0.0
      %453 = vmatprep.subr.mxu0 0.0
      %454 = vmatpush1.msra.mxu0 0.0
      %455 = vmatprep.subr.mxu0 0.0
      %456 = vmatpush1.msra.mxu0 0.0
      %457 = vmatprep.subr.mxu0 0.0
      %458 = vmatpush1.msra.mxu0 0.0
      %459 = vmatprep.subr.mxu0 0.0
      %460 = vmatpush1.msra.mxu0 0.0
      %461 = vmatprep.subr.mxu0 0.0
      %462 = vmatpush1.msra.mxu0 0.0
      %463 = vmatprep.subr.mxu0 0.0
      %464 = vmatpush1.msra.mxu0 0.0
      %465 = vmatprep.subr.mxu0 0.0
      %466 = vmatpush1.msra.mxu0 0.0
      %467 = vmatprep.subr.mxu0 0.0
      %468 = vmatpush1.msra.mxu0 0.0
      %469 = vmatprep.subr.mxu0 0.0
      %470 = vmatpush1.msra.mxu0 0.0
      %471 = vmatprep.subr.mxu0 0.0
      %472 = vmatpush1.msra.mxu0 0.0
      %473 = vmatprep.subr.mxu0 0.0
      %474 = vmatpush1.msra.mxu0 0.0
      %475 = vmatprep.subr.mxu0 0.0
      %476 = vmatpush1.msra.mxu0 0.0
      %477 = vmatprep.subr.mxu0 0.0
      %478 = vmatpush1.msra.mxu0 0.0
      %479 = vmatprep.subr.mxu0 0.0
      %480 = vmatpush1.msra.mxu0 0.0
      %481 = vmatprep.subr.mxu0 0.0
      %482 = vmatpush1.msra.mxu0 0.0
      %483 = vmatprep.subr.mxu0 0.0
      %484 = vmatpush1.msra.mxu0 0.0
      %485 = vmatprep.subr.mxu0 0.0
      %486 = vmatpush1.msra.mxu0 0.0
      %487 = vmatprep.subr.mxu0 0.0
      %488 = vmatpush1.msra.mxu0 0.0
      %489 = vmatprep.subr.mxu0 0.0
      %490 = vmatpush1.msra.mxu0 0.0
      %491 = vmatprep.subr.mxu0 0.0
      %492 = vmatpush1.msra.mxu0 0.0
      %493 = vmatprep.subr.mxu0 0.0
      %494 = vmatpush1.msra.mxu0 0.0
      %495 = vmatprep.subr.mxu0 0.0
      %496 = vmatpush1.msra.mxu0 0.0
      %497 = vmatprep.subr.mxu0 0.0
      %498 = vmatpush1.msra.mxu0 0.0
      %499 = vmatprep.mubr.f32.mxu0 0.0
      %500 = vmatmul.mubr.f32.gmra.mrb[0].mxu0 %v430
      %v501 = vpop.f32.mrb[0].mxu0
      %v502 = vadd.f32 0.0, %v501
      %v503 = vpop.f32.mrb[0].mxu0
      %504 = vdwg.mxu0
      %s505 = scalar_lea.vmem %s170, 24
      %506 = vst.msk [vmem:[%s505] sm:$0xff] %vm176, %v502
      %s507 = scalar_lea.vmem %s157, 32
      %v508 = vld [vmem:[%s507] sm:$0xff]
      %s509 = scalar_lea.vmem %s164, 96
      %v510 = vld [vmem:[%s509] sm:$0xff]
      %v511 = vld [vmem:[%s509 + $0x8] sm:$0xff]
      %v512 = vld [vmem:[%s509 + $0x10] sm:$0x3]
      %v514 = vsel %vm176, %v508, 0
      %v517 = vsel %vm180, %v512, 0
      %519 = vmatprep.subr.mxu0 0.0
      %520 = vmatpush1.msra.mxu0 %v510
      %521 = vmatprep.subr.mxu0 0.0
      %522 = vmatpush1.msra.mxu0 %v511
      %523 = vmatprep.subr.mxu0 0.0
      %524 = vmatpush1.msra.mxu0 %v517
      %525 = vmatprep.subr.mxu0 0.0
      %526 = vmatpush1.msra.mxu0 0.0
      %527 = vmatprep.subr.mxu0 0.0
      %528 = vmatpush1.msra.mxu0 0.0
      %529 = vmatprep.subr.mxu0 0.0
      %530 = vmatpush1.msra.mxu0 0.0
      %531 = vmatprep.subr.mxu0 0.0
      %532 = vmatpush1.msra.mxu0 0.0
      %533 = vmatprep.subr.mxu0 0.0
      %534 = vmatpush1.msra.mxu0 0.0
      %535 = vmatprep.subr.mxu0 0.0
      %536 = vmatpush1.msra.mxu0 0.0
      %537 = vmatprep.subr.mxu0 0.0
      %538 = vmatpush1.msra.mxu0 0.0
      %539 = vmatprep.subr.mxu0 0.0
      %540 = vmatpush1.msra.mxu0 0.0
      %541 = vmatprep.subr.mxu0 0.0
      %542 = vmatpush1.msra.mxu0 0.0
      %543 = vmatprep.subr.mxu0 0.0
      %544 = vmatpush1.msra.mxu0 0.0
      %545 = vmatprep.subr.mxu0 0.0
      %546 = vmatpush1.msra.mxu0 0.0
      %547 = vmatprep.subr.mxu0 0.0
      %548 = vmatpush1.msra.mxu0 0.0
      %549 = vmatprep.subr.mxu0 0.0
      %550 = vmatpush1.msra.mxu0 0.0
      %551 = vmatprep.subr.mxu0 0.0
      %552 = vmatpush1.msra.mxu0 0.0
      %553 = vmatprep.subr.mxu0 0.0
      %554 = vmatpush1.msra.mxu0 0.0
      %555 = vmatprep.subr.mxu0 0.0
      %556 = vmatpush1.msra.mxu0 0.0
      %557 = vmatprep.subr.mxu0 0.0
      %558 = vmatpush1.msra.mxu0 0.0
      %559 = vmatprep.subr.mxu0 0.0
      %560 = vmatpush1.msra.mxu0 0.0
      %561 = vmatprep.subr.mxu0 0.0
      %562 = vmatpush1.msra.mxu0 0.0
      %563 = vmatprep.subr.mxu0 0.0
      %564 = vmatpush1.msra.mxu0 0.0
      %565 = vmatprep.subr.mxu0 0.0
      %566 = vmatpush1.msra.mxu0 0.0
      %567 = vmatprep.subr.mxu0 0.0
      %568 = vmatpush1.msra.mxu0 0.0
      %569 = vmatprep.subr.mxu0 0.0
      %570 = vmatpush1.msra.mxu0 0.0
      %571 = vmatprep.subr.mxu0 0.0
      %572 = vmatpush1.msra.mxu0 0.0
      %573 = vmatprep.subr.mxu0 0.0
      %574 = vmatpush1.msra.mxu0 0.0
      %575 = vmatprep.subr.mxu0 0.0
      %576 = vmatpush1.msra.mxu0 0.0
      %577 = vmatprep.subr.mxu0 0.0
      %578 = vmatpush1.msra.mxu0 0.0
      %579 = vmatprep.subr.mxu0 0.0
      %580 = vmatpush1.msra.mxu0 0.0
      %581 = vmatprep.subr.mxu0 0.0
      %582 = vmatpush1.msra.mxu0 0.0
      %583 = vmatprep.mubr.f32.mxu0 0.0
      %584 = vmatmul.mubr.f32.gmra.mrb[0].mxu0 %v514
      %v585 = vpop.f32.mrb[0].mxu0
      %v586 = vadd.f32 0.0, %v585
      %v587 = vpop.f32.mrb[0].mxu0
      %588 = vdwg.mxu0
      %s589 = scalar_lea.vmem %s170, 32
      %590 = vst.msk [vmem:[%s589] sm:$0xff] %vm176, %v586
      %s591 = smul.u32 5, %s13
      %p592 = scmp.lt.s32.totalorder %s591, 9
      %s593 = scalar_select %p592, %s591, 9
      %s594 = smul.addr %s593, 8
      %s595 = scalar_lea.vmem %s2, %s594
      // Predicated region
      $region29: #{mwt_cz2d_forward.45} parent=27 // pred_check
        %p596 = pneg %p83
      $region30: #{mwt_cz2d_forward.45} parent=27 // pred_check_branch
        %598 = sbr.rel (%p596) target = $region32
      $region31: #{mwt_cz2d_forward.45} parent=27 // pred_region
        %s599 = smul.u32 5, %s13
      $region32: #{mwt_cz2d_forward.45} parent=27 // pred_fallthru
        _
    $region28: #{mwt_cz2d_forward.45} parent=5 // pred_fallthru
      _
    %p600 = scmp.le.s32.totalorder 2, %s8
    // Predicated region
    $region33: #{mwt_cz2d_forward.45} parent=5 // pred_check
      %p601 = pneg %p600
    $region34: #{mwt_cz2d_forward.45} parent=5 // pred_check_branch
      %603 = sbr.rel (%p601) target = $region36
    $region35: #{mwt_cz2d_forward.45} parent=5 // pred_region
      %s604 = ssub.s32 %s8, 2
      // Predicated region
      $region37: #{mwt_cz2d_forward.45} parent=35 // pred_check
        %p605 = pneg %p89
      $region38: #{mwt_cz2d_forward.45} parent=35 // pred_check_branch
        %607 = sbr.rel (%p605) target = $region40
      $region39: #{mwt_cz2d_forward.45} parent=35 // pred_region
        %s608 = smul.u32 5, %s14
        %p609 = scmp.lt.s32.totalorder %s608, 9
        %s610 = scalar_select %p609, %s608, 9
        %s611 = smul.addr %s610, 8
        %s612 = scalar_lea.vmem %s2, %s611
      $region40: #{mwt_cz2d_forward.45} parent=35 // pred_fallthru
        _
    $region36: #{mwt_cz2d_forward.45} parent=5 // pred_fallthru
      _
  $region6: #{mwt_cz2d_forward.45} parent=0 // loop_footer
    %s12 = sadd.s32 1, %s8
  $region7: #{mwt_cz2d_forward.45} parent=0 // loop_footer_branch
    %7 = sbr.rel target = $region3
  $region8: #{mwt_cz2d_forward.45} parent=0 // loop_exit
    _

// kernel: mwt_cz2d_forward.47
$region0: #{mwt_cz2d_forward.47}
  #allocation0 [shape = 'u32[]', space=smem, size = 0x4, offset = 0x4, fixed_abs, tag = 'smem constant byte address 0x4 - core index']
  #allocation1 [shape = 'u32[144,128]{1,0:T(1,128)}', space=vmem, size = 0x12000, scoped, tag = 'internal scratch']
  %s0 = inlined_call_operand.vmem [shape: f32[32,9], index: 0, kind: input, shape index: {}]
  %s1 = inlined_call_operand.vmem [shape: f32[9,9], index: 1, kind: input, shape index: {}]
  %s2 = inlined_call_operand.vmem [shape: f32[1,9], index: 2, kind: input, shape index: {}]
  %s3 = inlined_call_operand.vmem [shape: f32[32,9], index: 3, kind: output, shape index: {}]
  %s4 = sld [smem:[#allocation0]]
  $region45: #{mwt_cz2d_forward.47} parent=0
    _
  %s6 = ssub.s32 1, %s4
  %s7 = scalar_select 0, %s6, %s4
  loop: start=0, step=1, limit=4
  $region2: #{mwt_cz2d_forward.47} parent=0 // loop_pre_header
    _
  $region3: #{mwt_cz2d_forward.47} parent=0 // loop_header
    %s9 = sphi 0, %s13
    %p10 = scmp.ge.s32.totalorder %s9, 4
    %s19 = sphi 0, %s21
    %s22 = sphi 0, %s19
    %s23 = sphi 0, %s22
    %s39 = sphi 0, %s23
    %s43 = sphi 0, %s43
    %s45 = sphi 0, %s43
    %s46 = sphi 0, %s45
    %s60 = sphi 0, %s46
    %s64 = sphi 0, %s64
    %s66 = sphi 0, %s64
    %s67 = sphi 0, %s66
    %s81 = sphi 0, %s67
    %s87 = sphi 0, %s89
    %s90 = sphi 0, %s87
    %s91 = sphi 0, %s90
    %s107 = sphi 0, %s91
  $region4: #{mwt_cz2d_forward.47} parent=0 // loop_header_branch
    %12 = sbr.rel (%p10) target = $region8
  $region5: #{mwt_cz2d_forward.47} parent=0 // loop_body
    %s14 = ssub.s32 %s9, 1
    %s15 = ssub.s32 %s9, 2
    %s16 = sadd.s32 %s9, 1
    %s17 = ssub.s32 %s9, %s16
    %p18 = scmp.eq.s32.totalorder %s17, 0
    %s20 = sadd.s32 %s19, 1
    %s21 = scalar_select %p18, %s19, %s20
    %p24 = pneg %p18
    %p25 = scmp.eq.s32.totalorder %s9, 1
    %p26 = por %p24, %p25
    %p27 = scmp.ne.s32.totalorder %s19, %s22
    %p28 = scmp.eq.s32.totalorder %s9, 0
    %p29 = por %p27, %p28
    %p30 = scmp.ne.s32.totalorder %s19, %s22
    %p31 = scmp.eq.s32.totalorder %s14, 1
    %p32 = por %p30, %p31
    %p33 = scmp.ne.s32.totalorder %s22, %s23
    %p34 = scmp.eq.s32.totalorder %s14, 0
    %p35 = por %p33, %p34
    %p36 = scmp.ne.s32.totalorder %s22, %s23
    %p37 = scmp.eq.s32.totalorder %s15, 1
    %p38 = por %p36, %p37
    %p40 = scmp.ne.s32.totalorder %s23, %s39
    %p41 = scmp.eq.s32.totalorder %s15, 0
    %p42 = por %p40, %p41
    %s44 = sadd.s32 %s43, 1
    %p47 = scmp.eq.s32.totalorder %s9, 1
    %p48 = scmp.ne.s32.totalorder %s43, %s45
    %p49 = scmp.eq.s32.totalorder %s9, 0
    %p50 = por %p48, %p49
    %p51 = scmp.ne.s32.totalorder %s43, %s45
    %p52 = scmp.eq.s32.totalorder %s14, 1
    %p53 = por %p51, %p52
    %p54 = scmp.ne.s32.totalorder %s45, %s46
    %p55 = scmp.eq.s32.totalorder %s14, 0
    %p56 = por %p54, %p55
    %p57 = scmp.ne.s32.totalorder %s45, %s46
    %p58 = scmp.eq.s32.totalorder %s15, 1
    %p59 = por %p57, %p58
    %p61 = scmp.ne.s32.totalorder %s46, %s60
    %p62 = scmp.eq.s32.totalorder %s15, 0
    %p63 = por %p61, %p62
    %s65 = sadd.s32 %s64, 1
    %p68 = scmp.eq.s32.totalorder %s9, 1
    %p69 = scmp.ne.s32.totalorder %s64, %s66
    %p70 = scmp.eq.s32.totalorder %s9, 0
    %p71 = por %p69, %p70
    %p72 = scmp.ne.s32.totalorder %s64, %s66
    %p73 = scmp.eq.s32.totalorder %s14, 1
    %p74 = por %p72, %p73
    %p75 = scmp.ne.s32.totalorder %s66, %s67
    %p76 = scmp.eq.s32.totalorder %s14, 0
    %p77 = por %p75, %p76
    %p78 = scmp.ne.s32.totalorder %s66, %s67
    %p79 = scmp.eq.s32.totalorder %s15, 1
    %p80 = por %p78, %p79
    %p82 = scmp.ne.s32.totalorder %s67, %s81
    %p83 = scmp.eq.s32.totalorder %s15, 0
    %p84 = por %p82, %p83
    %s85 = ssub.s32 %s9, %s16
    %p86 = scmp.eq.s32.totalorder %s85, 0
    %s88 = sadd.s32 %s87, 1
    %s89 = scalar_select %p86, %s87, %s88
    %p92 = pneg %p86
    %p93 = scmp.eq.s32.totalorder %s9, 1
    %p94 = por %p92, %p93
    %p95 = scmp.ne.s32.totalorder %s87, %s90
    %p96 = scmp.eq.s32.totalorder %s9, 0
    %p97 = por %p95, %p96
    %p98 = scmp.ne.s32.totalorder %s87, %s90
    %p99 = scmp.eq.s32.totalorder %s14, 1
    %p100 = por %p98, %p99
    %p101 = scmp.ne.s32.totalorder %s90, %s91
    %p102 = scmp.eq.s32.totalorder %s14, 0
    %p103 = por %p101, %p102
    %p104 = scmp.ne.s32.totalorder %s90, %s91
    %p105 = scmp.eq.s32.totalorder %s15, 1
    %p106 = por %p104, %p105
    %p108 = scmp.ne.s32.totalorder %s91, %s107
    %p109 = scmp.eq.s32.totalorder %s15, 0
    %p110 = por %p108, %p109
    %p111 = scmp.le.s32.totalorder 1, %s9
    %p112 = scmp.lt.s32.totalorder %s9, 3
    %p113 = pnand %p111, %p112
    %p114 = pneg %p113
    // Predicated region
    $region9: #{mwt_cz2d_forward.47} parent=5 // pred_check
      _
    $region10: #{mwt_cz2d_forward.47} parent=5 // pred_check_branch
      %116 = sbr.rel (%p113) target = $region12
    $region11: #{mwt_cz2d_forward.47} parent=5 // pred_region
      %s117 = ssub.s32 %s9, 1
      // Predicated region
      $region13: #{mwt_cz2d_forward.47} parent=11 // pred_check
        %p118 = pneg %p56
      $region14: #{mwt_cz2d_forward.47} parent=11 // pred_check_branch
        %120 = sbr.rel (%p118) target = $region16
      $region15: #{mwt_cz2d_forward.47} parent=11 // pred_region
        _
      $region16: #{mwt_cz2d_forward.47} parent=11 // pred_fallthru
        _
      // Predicated region
      $region17: #{mwt_cz2d_forward.47} parent=11 // pred_check
        %p121 = pneg %p77
      $region18: #{mwt_cz2d_forward.47} parent=11 // pred_check_branch
        %123 = sbr.rel (%p121) target = $region20
      $region19: #{mwt_cz2d_forward.47} parent=11 // pred_region
        _
      $region20: #{mwt_cz2d_forward.47} parent=11 // pred_fallthru
        _
    $region12: #{mwt_cz2d_forward.47} parent=5 // pred_fallthru
      _
    %p124 = scmp.lt.s32.totalorder %s9, 2
    // Predicated region
    $region21: #{mwt_cz2d_forward.47} parent=5 // pred_check
      %p125 = pneg %p124
    $region22: #{mwt_cz2d_forward.47} parent=5 // pred_check_branch
      %127 = sbr.rel (%p125) target = $region24
    $region23: #{mwt_cz2d_forward.47} parent=5 // pred_region
      // Predicated region
      $region25: #{mwt_cz2d_forward.47} parent=23 // pred_check
        %p128 = pneg %p29
      $region26: #{mwt_cz2d_forward.47} parent=23 // pred_check_branch
        %130 = sbr.rel (%p128) target = $region28
      $region27: #{mwt_cz2d_forward.47} parent=23 // pred_region
        %s131 = smul.u32 2, %s9
        %p132 = scmp.lt.s32.totalorder %s131, 3
        %s133 = scalar_select %p132, %s131, 3
        %s134 = smul.addr %s133, 8
        %s135 = scalar_lea.vmem %s0, %s134
        %s136 = smul.u32 2, %s9
      $region28: #{mwt_cz2d_forward.47} parent=23 // pred_fallthru
        _
    $region24: #{mwt_cz2d_forward.47} parent=5 // pred_fallthru
      _
    %p137 = scmp.le.s32.totalorder 1, %s9
    %p138 = scmp.lt.s32.totalorder %s9, 3
    %p139 = pnand %p137, %p138
    %p140 = pneg %p139
    // Predicated region
    $region29: #{mwt_cz2d_forward.47} parent=5 // pred_check
      _
    $region30: #{mwt_cz2d_forward.47} parent=5 // pred_check_branch
      %142 = sbr.rel (%p139) target = $region32
    $region31: #{mwt_cz2d_forward.47} parent=5 // pred_region
      %s143 = ssub.s32 %s9, 1
      %s144 = smul.u32 2, %s14
      %p145 = scmp.lt.s32.totalorder %s144, 3
      %s146 = scalar_select %p145, %s144, 3
      %s147 = smul.addr %s146, 8
      %s148 = scalar_lea.vmem %s0, %s147
      %p149 = pneg %p35
      %p150 = pneg %p32
      %p151 = pneg %p56
      %p152 = pneg %p53
      %p153 = pneg %p77
      %p154 = pneg %p74
      %p155 = pneg %p103
      %p156 = pneg %p100
      %s157 = smul.u32 2, %s14
      %p158 = scmp.lt.s32.totalorder %s157, 3
      %s159 = scalar_select %p158, %s157, 3
      %s160 = smul.addr %s159, 8
      %s161 = scalar_lea.vmem %s3, %s160
      %s162 = smul.u32 2, %s14
      %p163 = scmp.lt.s32.totalorder %s162, 3
      %s164 = scalar_select %p163, %s162, 3
      %s165 = smul.addr %s164, 8
      %s166 = scalar_lea.vmem %s0, %s165
      %s167 = smul.u32 2, %s14
      %s168 = smul.u32 2, %s14
      %p169 = scmp.lt.s32.totalorder %s168, 3
      %s170 = scalar_select %p169, %s168, 3
      %s171 = smul.addr %s170, 8
      %s172 = scalar_lea.vmem %s3, %s171
      %s173 = smul.u32 2, %s14
      %v174 = vld [vmem:[%s166] sm:$0xff]
      %v175 = vld [vmem:[%s166 + $0x8] sm:$0xff]
      %v176 = vmax.f32 %v174, 0.0
      %v177 = vmax.f32 %v175, 0.0
      %v178 = vld [vmem:[%s1] sm:$0xff]
      %v179 = vld [vmem:[%s1 + $0x8] sm:$0x1]
      %v180 = vld [vmem:[%s2] sm:$0x1]
      %v182 = vlaneseq
      %v183 = vshrl.u32 %v182, 7
      %v184 = vsub.s32 0, %v183
      %v185 = vrot.slane %v180, %v184
      %vm187 = vcmask 72704
      %v189 = vsel %vm187, %v176, 0
      %v192 = vsel %vm187, %v177, 0
      %vm194 = vcmask 1040384
      %v196 = vsel %vm194, %v179, 0
      %198 = vmatprep.subr.mxu0 0.0
      %199 = vmatpush1.msra.mxu0 %v178
      %200 = vmatprep.subr.mxu0 0.0
      %201 = vmatpush1.msra.mxu0 %v196
      %202 = vmatprep.subr.mxu0 0.0
      %203 = vmatpush1.msra.mxu0 0.0
      %204 = vmatprep.subr.mxu0 0.0
      %205 = vmatpush1.msra.mxu0 0.0
      %206 = vmatprep.subr.mxu0 0.0
      %207 = vmatpush1.msra.mxu0 0.0
      %208 = vmatprep.subr.mxu0 0.0
      %209 = vmatpush1.msra.mxu0 0.0
      %210 = vmatprep.subr.mxu0 0.0
      %211 = vmatpush1.msra.mxu0 0.0
      %212 = vmatprep.subr.mxu0 0.0
      %213 = vmatpush1.msra.mxu0 0.0
      %214 = vmatprep.subr.mxu0 0.0
      %215 = vmatpush1.msra.mxu0 0.0
      %216 = vmatprep.subr.mxu0 0.0
      %217 = vmatpush1.msra.mxu0 0.0
      %218 = vmatprep.subr.mxu0 0.0
      %219 = vmatpush1.msra.mxu0 0.0
      %220 = vmatprep.subr.mxu0 0.0
      %221 = vmatpush1.msra.mxu0 0.0
      %222 = vmatprep.subr.mxu0 0.0
      %223 = vmatpush1.msra.mxu0 0.0
      %224 = vmatprep.subr.mxu0 0.0
      %225 = vmatpush1.msra.mxu0 0.0
      %226 = vmatprep.subr.mxu0 0.0
      %227 = vmatpush1.msra.mxu0 0.0
      %228 = vmatprep.subr.mxu0 0.0
      %229 = vmatpush1.msra.mxu0 0.0
      %230 = vmatprep.subr.mxu0 0.0
      %231 = vmatpush1.msra.mxu0 0.0
      %232 = vmatprep.subr.mxu0 0.0
      %233 = vmatpush1.msra.mxu0 0.0
      %234 = vmatprep.subr.mxu0 0.0
      %235 = vmatpush1.msra.mxu0 0.0
      %236 = vmatprep.subr.mxu0 0.0
      %237 = vmatpush1.msra.mxu0 0.0
      %238 = vmatprep.subr.mxu0 0.0
      %239 = vmatpush1.msra.mxu0 0.0
      %240 = vmatprep.subr.mxu0 0.0
      %241 = vmatpush1.msra.mxu0 0.0
      %242 = vmatprep.subr.mxu0 0.0
      %243 = vmatpush1.msra.mxu0 0.0
      %244 = vmatprep.subr.mxu0 0.0
      %245 = vmatpush1.msra.mxu0 0.0
      %246 = vmatprep.subr.mxu0 0.0
      %247 = vmatpush1.msra.mxu0 0.0
      %248 = vmatprep.subr.mxu0 0.0
      %249 = vmatpush1.msra.mxu0 0.0
      %250 = vmatprep.subr.mxu0 0.0
      %251 = vmatpush1.msra.mxu0 0.0
      %252 = vmatprep.subr.mxu0 0.0
      %253 = vmatpush1.msra.mxu0 0.0
      %254 = vmatprep.subr.mxu0 0.0
      %255 = vmatpush1.msra.mxu0 0.0
      %256 = vmatprep.subr.mxu0 0.0
      %257 = vmatpush1.msra.mxu0 0.0
      %258 = vmatprep.subr.mxu0 0.0
      %259 = vmatpush1.msra.mxu0 0.0
      %260 = vmatprep.subr.mxu0 0.0
      %261 = vmatpush1.msra.mxu0 0.0
      %262 = vmatprep.mubr.f32.mxu0 0.0
      %263 = vmatmul.mubr.f32.gmra.mrb[0].mxu0 %v189
      %v264 = vpop.f32.mrb[0].mxu0
      %v265 = vadd.f32 %v185, %v264
      %v266 = vpop.f32.mrb[0].mxu0
      %267 = vmatprep.mubr.f32.mxu0 0.0
      %268 = vmatmul.mubr.f32.gmra.mrb[0].mxu0 %v192
      %v269 = vpop.f32.mrb[0].mxu0
      %v270 = vadd.f32 %v185, %v269
      %v271 = vpop.f32.mrb[0].mxu0
      %272 = vdwg.mxu0
      %273 = vst.msk [vmem:[%s172] sm:$0xff] %vm187, %v265
      %274 = vst.msk [vmem:[%s172 + $0x8] sm:$0xff] %vm187, %v270
      %s275 = smul.u32 2, %s14
      %p276 = scmp.lt.s32.totalorder %s275, 3
      %s277 = scalar_select %p276, %s275, 3
      %s278 = smul.addr %s277, 8
      %s279 = scalar_lea.vmem %s3, %s278
      // Predicated region
      $region33: #{mwt_cz2d_forward.47} parent=31 // pred_check
        %p280 = pneg %p100
      $region34: #{mwt_cz2d_forward.47} parent=31 // pred_check_branch
        %282 = sbr.rel (%p280) target = $region36
      $region35: #{mwt_cz2d_forward.47} parent=31 // pred_region
        %s283 = smul.u32 2, %s14
      $region36: #{mwt_cz2d_forward.47} parent=31 // pred_fallthru
        _
    $region32: #{mwt_cz2d_forward.47} parent=5 // pred_fallthru
      _
    %p284 = scmp.le.s32.totalorder 2, %s9
    // Predicated region
    $region37: #{mwt_cz2d_forward.47} parent=5 // pred_check
      %p285 = pneg %p284
    $region38: #{mwt_cz2d_forward.47} parent=5 // pred_check_branch
      %287 = sbr.rel (%p285) target = $region40
    $region39: #{mwt_cz2d_forward.47} parent=5 // pred_region
      %s288 = ssub.s32 %s9, 2
      // Predicated region
      $region41: #{mwt_cz2d_forward.47} parent=39 // pred_check
        %p289 = pneg %p106
      $region42: #{mwt_cz2d_forward.47} parent=39 // pred_check_branch
        %291 = sbr.rel (%p289) target = $region44
      $region43: #{mwt_cz2d_forward.47} parent=39 // pred_region
        %s292 = smul.u32 2, %s15
        %p293 = scmp.lt.s32.totalorder %s292, 3
        %s294 = scalar_select %p293, %s292, 3
        %s295 = smul.addr %s294, 8
        %s296 = scalar_lea.vmem %s3, %s295
      $region44: #{mwt_cz2d_forward.47} parent=39 // pred_fallthru
        _
    $region40: #{mwt_cz2d_forward.47} parent=5 // pred_fallthru
      _
  $region6: #{mwt_cz2d_forward.47} parent=0 // loop_footer
    %s13 = sadd.s32 1, %s9
  $region7: #{mwt_cz2d_forward.47} parent=0 // loop_footer_branch
    %8 = sbr.rel target = $region3
  $region8: #{mwt_cz2d_forward.47} parent=0 // loop_exit
    _

// kernel: mwt_cz2d_forward.48
$region0: #{mwt_cz2d_forward.48}
  #allocation0 [shape = 'u32[]', space=smem, size = 0x4, offset = 0x4, fixed_abs, tag = 'smem constant byte address 0x4 - core index']
  #allocation1 [shape = 'u32[144,128]{1,0:T(1,128)}', space=vmem, size = 0x12000, scoped, tag = 'internal scratch']
  %s0 = inlined_call_operand.vmem [shape: f32[32,81], index: 0, kind: input, shape index: {}]
  %s1 = inlined_call_operand.vmem [shape: f32[81,9], index: 1, kind: input, shape index: {}]
  %s2 = inlined_call_operand.vmem [shape: f32[1,9], index: 2, kind: input, shape index: {}]
  %s3 = inlined_call_operand.vmem [shape: f32[9,9], index: 3, kind: input, shape index: {}]
  %s4 = inlined_call_operand.vmem [shape: f32[1,9], index: 4, kind: input, shape index: {}]
  %s5 = inlined_call_operand.vmem [shape: f32[32,9], index: 5, kind: output, shape index: {}]
  %s6 = sld [smem:[#allocation0]]
  $region53: #{mwt_cz2d_forward.48} parent=0
    _
  %s8 = ssub.s32 1, %s6
  %s9 = scalar_select 0, %s8, %s6
  loop: start=0, step=1, limit=4
  $region2: #{mwt_cz2d_forward.48} parent=0 // loop_pre_header
    _
  $region3: #{mwt_cz2d_forward.48} parent=0 // loop_header
    %s11 = sphi 0, %s15
    %p12 = scmp.ge.s32.totalorder %s11, 4
    %s21 = sphi 0, %s23
    %s24 = sphi 0, %s21
    %s25 = sphi 0, %s24
    %s41 = sphi 0, %s25
    %s45 = sphi 0, %s45
    %s47 = sphi 0, %s45
    %s48 = sphi 0, %s47
    %s62 = sphi 0, %s48
    %s66 = sphi 0, %s66
    %s68 = sphi 0, %s66
    %s69 = sphi 0, %s68
    %s83 = sphi 0, %s69
    %s87 = sphi 0, %s87
    %s89 = sphi 0, %s87
    %s90 = sphi 0, %s89
    %s104 = sphi 0, %s90
    %s108 = sphi 0, %s108
    %s110 = sphi 0, %s108
    %s111 = sphi 0, %s110
    %s125 = sphi 0, %s111
    %s131 = sphi 0, %s133
    %s134 = sphi 0, %s131
    %s135 = sphi 0, %s134
    %s151 = sphi 0, %s135
  $region4: #{mwt_cz2d_forward.48} parent=0 // loop_header_branch
    %14 = sbr.rel (%p12) target = $region8
  $region5: #{mwt_cz2d_forward.48} parent=0 // loop_body
    %s16 = ssub.s32 %s11, 1
    %s17 = ssub.s32 %s11, 2
    %s18 = sadd.s32 %s11, 1
    %s19 = ssub.s32 %s11, %s18
    %p20 = scmp.eq.s32.totalorder %s19, 0
    %s22 = sadd.s32 %s21, 1
    %s23 = scalar_select %p20, %s21, %s22
    %p26 = pneg %p20
    %p27 = scmp.eq.s32.totalorder %s11, 1
    %p28 = por %p26, %p27
    %p29 = scmp.ne.s32.totalorder %s21, %s24
    %p30 = scmp.eq.s32.totalorder %s11, 0
    %p31 = por %p29, %p30
    %p32 = scmp.ne.s32.totalorder %s21, %s24
    %p33 = scmp.eq.s32.totalorder %s16, 1
    %p34 = por %p32, %p33
    %p35 = scmp.ne.s32.totalorder %s24, %s25
    %p36 = scmp.eq.s32.totalorder %s16, 0
    %p37 = por %p35, %p36
    %p38 = scmp.ne.s32.totalorder %s24, %s25
    %p39 = scmp.eq.s32.totalorder %s17, 1
    %p40 = por %p38, %p39
    %p42 = scmp.ne.s32.totalorder %s25, %s41
    %p43 = scmp.eq.s32.totalorder %s17, 0
    %p44 = por %p42, %p43
    %s46 = sadd.s32 %s45, 1
    %p49 = scmp.eq.s32.totalorder %s11, 1
    %p50 = scmp.ne.s32.totalorder %s45, %s47
    %p51 = scmp.eq.s32.totalorder %s11, 0
    %p52 = por %p50, %p51
    %p53 = scmp.ne.s32.totalorder %s45, %s47
    %p54 = scmp.eq.s32.totalorder %s16, 1
    %p55 = por %p53, %p54
    %p56 = scmp.ne.s32.totalorder %s47, %s48
    %p57 = scmp.eq.s32.totalorder %s16, 0
    %p58 = por %p56, %p57
    %p59 = scmp.ne.s32.totalorder %s47, %s48
    %p60 = scmp.eq.s32.totalorder %s17, 1
    %p61 = por %p59, %p60
    %p63 = scmp.ne.s32.totalorder %s48, %s62
    %p64 = scmp.eq.s32.totalorder %s17, 0
    %p65 = por %p63, %p64
    %s67 = sadd.s32 %s66, 1
    %p70 = scmp.eq.s32.totalorder %s11, 1
    %p71 = scmp.ne.s32.totalorder %s66, %s68
    %p72 = scmp.eq.s32.totalorder %s11, 0
    %p73 = por %p71, %p72
    %p74 = scmp.ne.s32.totalorder %s66, %s68
    %p75 = scmp.eq.s32.totalorder %s16, 1
    %p76 = por %p74, %p75
    %p77 = scmp.ne.s32.totalorder %s68, %s69
    %p78 = scmp.eq.s32.totalorder %s16, 0
    %p79 = por %p77, %p78
    %p80 = scmp.ne.s32.totalorder %s68, %s69
    %p81 = scmp.eq.s32.totalorder %s17, 1
    %p82 = por %p80, %p81
    %p84 = scmp.ne.s32.totalorder %s69, %s83
    %p85 = scmp.eq.s32.totalorder %s17, 0
    %p86 = por %p84, %p85
    %s88 = sadd.s32 %s87, 1
    %p91 = scmp.eq.s32.totalorder %s11, 1
    %p92 = scmp.ne.s32.totalorder %s87, %s89
    %p93 = scmp.eq.s32.totalorder %s11, 0
    %p94 = por %p92, %p93
    %p95 = scmp.ne.s32.totalorder %s87, %s89
    %p96 = scmp.eq.s32.totalorder %s16, 1
    %p97 = por %p95, %p96
    %p98 = scmp.ne.s32.totalorder %s89, %s90
    %p99 = scmp.eq.s32.totalorder %s16, 0
    %p100 = por %p98, %p99
    %p101 = scmp.ne.s32.totalorder %s89, %s90
    %p102 = scmp.eq.s32.totalorder %s17, 1
    %p103 = por %p101, %p102
    %p105 = scmp.ne.s32.totalorder %s90, %s104
    %p106 = scmp.eq.s32.totalorder %s17, 0
    %p107 = por %p105, %p106
    %s109 = sadd.s32 %s108, 1
    %p112 = scmp.eq.s32.totalorder %s11, 1
    %p113 = scmp.ne.s32.totalorder %s108, %s110
    %p114 = scmp.eq.s32.totalorder %s11, 0
    %p115 = por %p113, %p114
    %p116 = scmp.ne.s32.totalorder %s108, %s110
    %p117 = scmp.eq.s32.totalorder %s16, 1
    %p118 = por %p116, %p117
    %p119 = scmp.ne.s32.totalorder %s110, %s111
    %p120 = scmp.eq.s32.totalorder %s16, 0
    %p121 = por %p119, %p120
    %p122 = scmp.ne.s32.totalorder %s110, %s111
    %p123 = scmp.eq.s32.totalorder %s17, 1
    %p124 = por %p122, %p123
    %p126 = scmp.ne.s32.totalorder %s111, %s125
    %p127 = scmp.eq.s32.totalorder %s17, 0
    %p128 = por %p126, %p127
    %s129 = ssub.s32 %s11, %s18
    %p130 = scmp.eq.s32.totalorder %s129, 0
    %s132 = sadd.s32 %s131, 1
    %s133 = scalar_select %p130, %s131, %s132
    %p136 = pneg %p130
    %p137 = scmp.eq.s32.totalorder %s11, 1
    %p138 = por %p136, %p137
    %p139 = scmp.ne.s32.totalorder %s131, %s134
    %p140 = scmp.eq.s32.totalorder %s11, 0
    %p141 = por %p139, %p140
    %p142 = scmp.ne.s32.totalorder %s131, %s134
    %p143 = scmp.eq.s32.totalorder %s16, 1
    %p144 = por %p142, %p143
    %p145 = scmp.ne.s32.totalorder %s134, %s135
    %p146 = scmp.eq.s32.totalorder %s16, 0
    %p147 = por %p145, %p146
    %p148 = scmp.ne.s32.totalorder %s134, %s135
    %p149 = scmp.eq.s32.totalorder %s17, 1
    %p150 = por %p148, %p149
    %p152 = scmp.ne.s32.totalorder %s135, %s151
    %p153 = scmp.eq.s32.totalorder %s17, 0
    %p154 = por %p152, %p153
    %p155 = scmp.le.s32.totalorder 1, %s11
    %p156 = scmp.lt.s32.totalorder %s11, 3
    %p157 = pnand %p155, %p156
    %p158 = pneg %p157
    // Predicated region
    $region9: #{mwt_cz2d_forward.48} parent=5 // pred_check
      _
    $region10: #{mwt_cz2d_forward.48} parent=5 // pred_check_branch
      %160 = sbr.rel (%p157) target = $region12
    $region11: #{mwt_cz2d_forward.48} parent=5 // pred_region
      %s161 = ssub.s32 %s11, 1
      // Predicated region
      $region13: #{mwt_cz2d_forward.48} parent=11 // pred_check
        %p162 = pneg %p58
      $region14: #{mwt_cz2d_forward.48} parent=11 // pred_check_branch
        %164 = sbr.rel (%p162) target = $region16
      $region15: #{mwt_cz2d_forward.48} parent=11 // pred_region
        _
      $region16: #{mwt_cz2d_forward.48} parent=11 // pred_fallthru
        _
      // Predicated region
      $region17: #{mwt_cz2d_forward.48} parent=11 // pred_check
        %p165 = pneg %p79
      $region18: #{mwt_cz2d_forward.48} parent=11 // pred_check_branch
        %167 = sbr.rel (%p165) target = $region20
      $region19: #{mwt_cz2d_forward.48} parent=11 // pred_region
        _
      $region20: #{mwt_cz2d_forward.48} parent=11 // pred_fallthru
        _
      // Predicated region
      $region21: #{mwt_cz2d_forward.48} parent=11 // pred_check
        %p168 = pneg %p100
      $region22: #{mwt_cz2d_forward.48} parent=11 // pred_check_branch
        %170 = sbr.rel (%p168) target = $region24
      $region23: #{mwt_cz2d_forward.48} parent=11 // pred_region
        _
      $region24: #{mwt_cz2d_forward.48} parent=11 // pred_fallthru
        _
      // Predicated region
      $region25: #{mwt_cz2d_forward.48} parent=11 // pred_check
        %p171 = pneg %p121
      $region26: #{mwt_cz2d_forward.48} parent=11 // pred_check_branch
        %173 = sbr.rel (%p171) target = $region28
      $region27: #{mwt_cz2d_forward.48} parent=11 // pred_region
        _
      $region28: #{mwt_cz2d_forward.48} parent=11 // pred_fallthru
        _
    $region12: #{mwt_cz2d_forward.48} parent=5 // pred_fallthru
      _
    %p174 = scmp.lt.s32.totalorder %s11, 2
    // Predicated region
    $region29: #{mwt_cz2d_forward.48} parent=5 // pred_check
      %p175 = pneg %p174
    $region30: #{mwt_cz2d_forward.48} parent=5 // pred_check_branch
      %177 = sbr.rel (%p175) target = $region32
    $region31: #{mwt_cz2d_forward.48} parent=5 // pred_region
      // Predicated region
      $region33: #{mwt_cz2d_forward.48} parent=31 // pred_check
        %p178 = pneg %p31
      $region34: #{mwt_cz2d_forward.48} parent=31 // pred_check_branch
        %180 = sbr.rel (%p178) target = $region36
      $region35: #{mwt_cz2d_forward.48} parent=31 // pred_region
        %s181 = smul.u32 2, %s11
        %p182 = scmp.lt.s32.totalorder %s181, 3
        %s183 = scalar_select %p182, %s181, 3
        %s184 = smul.addr %s183, 8
        %s185 = scalar_lea.vmem %s0, %s184
        %s186 = smul.u32 2, %s11
      $region36: #{mwt_cz2d_forward.48} parent=31 // pred_fallthru
        _
    $region32: #{mwt_cz2d_forward.48} parent=5 // pred_fallthru
      _
    %p187 = scmp.le.s32.totalorder 1, %s11
    %p188 = scmp.lt.s32.totalorder %s11, 3
    %p189 = pnand %p187, %p188
    %p190 = pneg %p189
    // Predicated region
    $region37: #{mwt_cz2d_forward.48} parent=5 // pred_check
      _
    $region38: #{mwt_cz2d_forward.48} parent=5 // pred_check_branch
      %192 = sbr.rel (%p189) target = $region40
    $region39: #{mwt_cz2d_forward.48} parent=5 // pred_region
      %s193 = ssub.s32 %s11, 1
      %s194 = smul.u32 2, %s16
      %p195 = scmp.lt.s32.totalorder %s194, 3
      %s196 = scalar_select %p195, %s194, 3
      %s197 = smul.addr %s196, 8
      %s198 = scalar_lea.vmem %s0, %s197
      %p199 = pneg %p37
      %p200 = pneg %p34
      %p201 = pneg %p58
      %p202 = pneg %p55
      %p203 = pneg %p79
      %p204 = pneg %p76
      %p205 = pneg %p100
      %p206 = pneg %p97
      %p207 = pneg %p121
      %p208 = pneg %p118
      %p209 = pneg %p147
      %p210 = pneg %p144
      %s211 = smul.u32 2, %s16
      %p212 = scmp.lt.s32.totalorder %s211, 3
      %s213 = scalar_select %p212, %s211, 3
      %s214 = smul.addr %s213, 8
      %s215 = scalar_lea.vmem %s5, %s214
      %s216 = smul.u32 2, %s16
      %p217 = scmp.lt.s32.totalorder %s216, 3
      %s218 = scalar_select %p217, %s216, 3
      %s219 = smul.addr %s218, 8
      %s220 = scalar_lea.vmem %s0, %s219
      %s221 = smul.u32 2, %s16
      %s222 = smul.u32 2, %s16
      %p223 = scmp.lt.s32.totalorder %s222, 3
      %s224 = scalar_select %p223, %s222, 3
      %s225 = smul.addr %s224, 8
      %s226 = scalar_lea.vmem %s5, %s225
      %s227 = smul.u32 2, %s16
      %v228 = vld [vmem:[%s220] sm:$0xff]
      %v229 = vld [vmem:[%s220 + $0x8] sm:$0xff]
      %v230 = vld [vmem:[%s1] sm:$0xff]
      %v231 = vld [vmem:[%s1 + $0x8] sm:$0xff]
      %v232 = vld [vmem:[%s1 + $0x10] sm:$0xff]
      %v233 = vld [vmem:[%s1 + $0x18] sm:$0xff]
      %v234 = vld [vmem:[%s1 + $0x20] sm:$0xff]
      %v235 = vld [vmem:[%s1 + $0x28] sm:$0xff]
      %v236 = vld [vmem:[%s1 + $0x30] sm:$0xff]
      %v237 = vld [vmem:[%s1 + $0x38] sm:$0xff]
      %v238 = vld [vmem:[%s1 + $0x40] sm:$0xff]
      %v239 = vld [vmem:[%s1 + $0x48] sm:$0xff]
      %v240 = vld [vmem:[%s1 + $0x50] sm:$0x1]
      %v241 = vld [vmem:[%s2] sm:$0x1]
      %v243 = vlaneseq
      %v244 = vshrl.u32 %v243, 7
      %v245 = vsub.s32 0, %v244
      %v246 = vrot.slane %v241, %v245
      %vm248 = vcmask 662528
      %v250 = vsel %vm248, %v228, 0
      %v253 = vsel %vm248, %v229, 0
      %vm255 = vcmask 1040384
      %v257 = vsel %vm255, %v240, 0
      %259 = vmatprep.subr.mxu0 0.0
      %260 = vmatpush1.msra.mxu0 %v230
      %261 = vmatprep.subr.mxu0 0.0
      %262 = vmatpush1.msra.mxu0 %v231
      %263 = vmatprep.subr.mxu0 0.0
      %264 = vmatpush1.msra.mxu0 %v232
      %265 = vmatprep.subr.mxu0 0.0
      %266 = vmatpush1.msra.mxu0 %v233
      %267 = vmatprep.subr.mxu0 0.0
      %268 = vmatpush1.msra.mxu0 %v234
      %269 = vmatprep.subr.mxu0 0.0
      %270 = vmatpush1.msra.mxu0 %v235
      %271 = vmatprep.subr.mxu0 0.0
      %272 = vmatpush1.msra.mxu0 %v236
      %273 = vmatprep.subr.mxu0 0.0
      %274 = vmatpush1.msra.mxu0 %v237
      %275 = vmatprep.subr.mxu0 0.0
      %276 = vmatpush1.msra.mxu0 %v238
      %277 = vmatprep.subr.mxu0 0.0
      %278 = vmatpush1.msra.mxu0 %v239
      %279 = vmatprep.subr.mxu0 0.0
      %280 = vmatpush1.msra.mxu0 %v257
      %281 = vmatprep.subr.mxu0 0.0
      %282 = vmatpush1.msra.mxu0 0.0
      %283 = vmatprep.subr.mxu0 0.0
      %284 = vmatpush1.msra.mxu0 0.0
      %285 = vmatprep.subr.mxu0 0.0
      %286 = vmatpush1.msra.mxu0 0.0
      %287 = vmatprep.subr.mxu0 0.0
      %288 = vmatpush1.msra.mxu0 0.0
      %289 = vmatprep.subr.mxu0 0.0
      %290 = vmatpush1.msra.mxu0 0.0
      %291 = vmatprep.subr.mxu0 0.0
      %292 = vmatpush1.msra.mxu0 0.0
      %293 = vmatprep.subr.mxu0 0.0
      %294 = vmatpush1.msra.mxu0 0.0
      %295 = vmatprep.subr.mxu0 0.0
      %296 = vmatpush1.msra.mxu0 0.0
      %297 = vmatprep.subr.mxu0 0.0
      %298 = vmatpush1.msra.mxu0 0.0
      %299 = vmatprep.subr.mxu0 0.0
      %300 = vmatpush1.msra.mxu0 0.0
      %301 = vmatprep.subr.mxu0 0.0
      %302 = vmatpush1.msra.mxu0 0.0
      %303 = vmatprep.subr.mxu0 0.0
      %304 = vmatpush1.msra.mxu0 0.0
      %305 = vmatprep.subr.mxu0 0.0
      %306 = vmatpush1.msra.mxu0 0.0
      %307 = vmatprep.subr.mxu0 0.0
      %308 = vmatpush1.msra.mxu0 0.0
      %309 = vmatprep.subr.mxu0 0.0
      %310 = vmatpush1.msra.mxu0 0.0
      %311 = vmatprep.subr.mxu0 0.0
      %312 = vmatpush1.msra.mxu0 0.0
      %313 = vmatprep.subr.mxu0 0.0
      %314 = vmatpush1.msra.mxu0 0.0
      %315 = vmatprep.subr.mxu0 0.0
      %316 = vmatpush1.msra.mxu0 0.0
      %317 = vmatprep.subr.mxu0 0.0
      %318 = vmatpush1.msra.mxu0 0.0
      %319 = vmatprep.subr.mxu0 0.0
      %320 = vmatpush1.msra.mxu0 0.0
      %321 = vmatprep.subr.mxu0 0.0
      %322 = vmatpush1.msra.mxu0 0.0
      %323 = vmatprep.mubr.f32.mxu0 0.0
      %324 = vmatmul.mubr.f32.gmra.mrb[0].mxu0 %v250
      %v325 = vpop.f32.mrb[0].mxu0
      %v326 = vadd.f32 %v246, %v325
      %v327 = vpop.f32.mrb[0].mxu0
      %328 = vmatprep.mubr.f32.mxu0 0.0
      %329 = vmatmul.mubr.f32.gmra.mrb[0].mxu0 %v253
      %v330 = vpop.f32.mrb[0].mxu0
      %v331 = vadd.f32 %v246, %v330
      %v332 = vpop.f32.mrb[0].mxu0
      %333 = vdwg.mxu0
      %v334 = vmax.f32 %v326, 0.0
      %v335 = vmax.f32 %v331, 0.0
      %v336 = vld [vmem:[%s3] sm:$0xff]
      %v337 = vld [vmem:[%s3 + $0x8] sm:$0x1]
      %v338 = vld [vmem:[%s4] sm:$0x1]
      %v340 = vlaneseq
      %v341 = vshrl.u32 %v340, 7
      %v342 = vsub.s32 0, %v341
      %v343 = vrot.slane %v338, %v342
      %vm345 = vcmask 72704
      %v347 = vsel %vm345, %v334, 0
      %v350 = vsel %vm345, %v335, 0
      %v353 = vsel %vm255, %v337, 0
      %355 = vmatprep.subr.mxu0 0.0
      %356 = vmatpush1.msra.mxu0 %v336
      %357 = vmatprep.subr.mxu0 0.0
      %358 = vmatpush1.msra.mxu0 %v353
      %359 = vmatprep.subr.mxu0 0.0
      %360 = vmatpush1.msra.mxu0 0.0
      %361 = vmatprep.subr.mxu0 0.0
      %362 = vmatpush1.msra.mxu0 0.0
      %363 = vmatprep.subr.mxu0 0.0
      %364 = vmatpush1.msra.mxu0 0.0
      %365 = vmatprep.subr.mxu0 0.0
      %366 = vmatpush1.msra.mxu0 0.0
      %367 = vmatprep.subr.mxu0 0.0
      %368 = vmatpush1.msra.mxu0 0.0
      %369 = vmatprep.subr.mxu0 0.0
      %370 = vmatpush1.msra.mxu0 0.0
      %371 = vmatprep.subr.mxu0 0.0
      %372 = vmatpush1.msra.mxu0 0.0
      %373 = vmatprep.subr.mxu0 0.0
      %374 = vmatpush1.msra.mxu0 0.0
      %375 = vmatprep.subr.mxu0 0.0
      %376 = vmatpush1.msra.mxu0 0.0
      %377 = vmatprep.subr.mxu0 0.0
      %378 = vmatpush1.msra.mxu0 0.0
      %379 = vmatprep.subr.mxu0 0.0
      %380 = vmatpush1.msra.mxu0 0.0
      %381 = vmatprep.subr.mxu0 0.0
      %382 = vmatpush1.msra.mxu0 0.0
      %383 = vmatprep.subr.mxu0 0.0
      %384 = vmatpush1.msra.mxu0 0.0
      %385 = vmatprep.subr.mxu0 0.0
      %386 = vmatpush1.msra.mxu0 0.0
      %387 = vmatprep.subr.mxu0 0.0
      %388 = vmatpush1.msra.mxu0 0.0
      %389 = vmatprep.subr.mxu0 0.0
      %390 = vmatpush1.msra.mxu0 0.0
      %391 = vmatprep.subr.mxu0 0.0
      %392 = vmatpush1.msra.mxu0 0.0
      %393 = vmatprep.subr.mxu0 0.0
      %394 = vmatpush1.msra.mxu0 0.0
      %395 = vmatprep.subr.mxu0 0.0
      %396 = vmatpush1.msra.mxu0 0.0
      %397 = vmatprep.subr.mxu0 0.0
      %398 = vmatpush1.msra.mxu0 0.0
      %399 = vmatprep.subr.mxu0 0.0
      %400 = vmatpush1.msra.mxu0 0.0
      %401 = vmatprep.subr.mxu0 0.0
      %402 = vmatpush1.msra.mxu0 0.0
      %403 = vmatprep.subr.mxu0 0.0
      %404 = vmatpush1.msra.mxu0 0.0
      %405 = vmatprep.subr.mxu0 0.0
      %406 = vmatpush1.msra.mxu0 0.0
      %407 = vmatprep.subr.mxu0 0.0
      %408 = vmatpush1.msra.mxu0 0.0
      %409 = vmatprep.subr.mxu0 0.0
      %410 = vmatpush1.msra.mxu0 0.0
      %411 = vmatprep.subr.mxu0 0.0
      %412 = vmatpush1.msra.mxu0 0.0
      %413 = vmatprep.subr.mxu0 0.0
      %414 = vmatpush1.msra.mxu0 0.0
      %415 = vmatprep.subr.mxu0 0.0
      %416 = vmatpush1.msra.mxu0 0.0
      %417 = vmatprep.subr.mxu0 0.0
      %418 = vmatpush1.msra.mxu0 0.0
      %419 = vmatprep.mubr.f32.mxu0 0.0
      %420 = vmatmul.mubr.f32.gmra.mrb[0].mxu0 %v347
      %v421 = vpop.f32.mrb[0].mxu0
      %v422 = vadd.f32 %v343, %v421
      %v423 = vpop.f32.mrb[0].mxu0
      %424 = vmatprep.mubr.f32.mxu0 0.0
      %425 = vmatmul.mubr.f32.gmra.mrb[0].mxu0 %v350
      %v426 = vpop.f32.mrb[0].mxu0
      %v427 = vadd.f32 %v343, %v426
      %v428 = vpop.f32.mrb[0].mxu0
      %429 = vdwg.mxu0
      %430 = vst.msk [vmem:[%s226] sm:$0xff] %vm345, %v422
      %431 = vst.msk [vmem:[%s226 + $0x8] sm:$0xff] %vm345, %v427
      %s432 = smul.u32 2, %s16
      %p433 = scmp.lt.s32.totalorder %s432, 3
      %s434 = scalar_select %p433, %s432, 3
      %s435 = smul.addr %s434, 8
      %s436 = scalar_lea.vmem %s5, %s435
      // Predicated region
      $region41: #{mwt_cz2d_forward.48} parent=39 // pred_check
        %p437 = pneg %p144
      $region42: #{mwt_cz2d_forward.48} parent=39 // pred_check_branch
        %439 = sbr.rel (%p437) target = $region44
      $region43: #{mwt_cz2d_forward.48} parent=39 // pred_region
        %s440 = smul.u32 2, %s16
      $region44: #{mwt_cz2d_forward.48} parent=39 // pred_fallthru
        _
    $region40: #{mwt_cz2d_forward.48} parent=5 // pred_fallthru
      _
    %p441 = scmp.le.s32.totalorder 2, %s11
    // Predicated region
    $region45: #{mwt_cz2d_forward.48} parent=5 // pred_check
      %p442 = pneg %p441
    $region46: #{mwt_cz2d_forward.48} parent=5 // pred_check_branch
      %444 = sbr.rel (%p442) target = $region48
    $region47: #{mwt_cz2d_forward.48} parent=5 // pred_region
      %s445 = ssub.s32 %s11, 2
      // Predicated region
      $region49: #{mwt_cz2d_forward.48} parent=47 // pred_check
        %p446 = pneg %p150
      $region50: #{mwt_cz2d_forward.48} parent=47 // pred_check_branch
        %448 = sbr.rel (%p446) target = $region52
      $region51: #{mwt_cz2d_forward.48} parent=47 // pred_region
        %s449 = smul.u32 2, %s17
        %p450 = scmp.lt.s32.totalorder %s449, 3
        %s451 = scalar_select %p450, %s449, 3
        %s452 = smul.addr %s451, 8
        %s453 = scalar_lea.vmem %s5, %s452
      $region52: #{mwt_cz2d_forward.48} parent=47 // pred_fallthru
        _
    $region48: #{mwt_cz2d_forward.48} parent=5 // pred_fallthru
      _
  $region6: #{mwt_cz2d_forward.48} parent=0 // loop_footer
    %s15 = sadd.s32 1, %s11
  $region7: #{mwt_cz2d_forward.48} parent=0 // loop_footer_branch
    %10 = sbr.rel target = $region3
  $region8: #{mwt_cz2d_forward.48} parent=0 // loop_exit
    _

// kernel: mwt_cz2d_forward.31
$region0: #{mwt_cz2d_forward.31}
  #allocation0 [shape = 'u32[]', space=smem, size = 0x4, offset = 0x4, fixed_abs, tag = 'smem constant byte address 0x4 - core index']
  #allocation1 [shape = 'u32[144,128]{1,0:T(1,128)}', space=vmem, size = 0x12000, scoped, tag = 'internal scratch']
  %s0 = inlined_call_operand.vmem [shape: f32[8,36], index: 0, kind: input, shape index: {}]
  %s1 = inlined_call_operand.vmem [shape: f32[36,18], index: 1, kind: input, shape index: {}]
  %s2 = inlined_call_operand.vmem [shape: f32[1,18], index: 2, kind: input, shape index: {}]
  %s3 = inlined_call_operand.vmem [shape: f32[8,18], index: 3, kind: output, shape index: {}]
  %s4 = sld [smem:[#allocation0]]
  $region22: #{mwt_cz2d_forward.31} parent=0
    _
  %s6 = ssub.s32 1, %s4
  %s7 = scalar_select 0, %s6, %s4
  // Predicated region
  $region2: #{mwt_cz2d_forward.31} parent=0 // pred_check
    _
  $region3: #{mwt_cz2d_forward.31} parent=0 // pred_check_branch
    %9 = sbr.rel (0) target = $region5
  $region4: #{mwt_cz2d_forward.31} parent=0 // pred_region
    _
  $region5: #{mwt_cz2d_forward.31} parent=0 // pred_fallthru
    _
  // Predicated region
  $region6: #{mwt_cz2d_forward.31} parent=0 // pred_check
    _
  $region7: #{mwt_cz2d_forward.31} parent=0 // pred_check_branch
    %11 = sbr.rel (0) target = $region9
  $region8: #{mwt_cz2d_forward.31} parent=0 // pred_region
    _
  $region9: #{mwt_cz2d_forward.31} parent=0 // pred_fallthru
    _
  // Predicated region
  $region10: #{mwt_cz2d_forward.31} parent=0 // pred_check
    _
  $region11: #{mwt_cz2d_forward.31} parent=0 // pred_check_branch
    %13 = sbr.rel (0) target = $region13
  $region12: #{mwt_cz2d_forward.31} parent=0 // pred_region
    _
  $region13: #{mwt_cz2d_forward.31} parent=0 // pred_fallthru
    _
  %v14 = vld [vmem:[%s0] sm:$0xff]
  %v15 = vld [vmem:[%s1] sm:$0xff]
  %v16 = vld [vmem:[%s1 + $0x8] sm:$0xff]
  %v17 = vld [vmem:[%s1 + $0x10] sm:$0xff]
  %v18 = vld [vmem:[%s1 + $0x18] sm:$0xff]
  %v19 = vld [vmem:[%s1 + $0x20] sm:$0xf]
  %v20 = vld [vmem:[%s2] sm:$0x1]
  %v22 = vlaneseq
  %v23 = vshrl.u32 %v22, 7
  %v24 = vsub.s32 0, %v23
  %v25 = vrot.slane %v20, %v24
  %vm27 = vcmask 293888
  %v29 = vsel %vm27, %v14, 0
  %vm31 = vcmask 1043456
  %v33 = vsel %vm31, %v19, 0
  %35 = vmatprep.subr.mxu0 0.0
  %36 = vmatpush1.msra.mxu0 %v15
  %37 = vmatprep.subr.mxu0 0.0
  %38 = vmatpush1.msra.mxu0 %v16
  %39 = vmatprep.subr.mxu0 0.0
  %40 = vmatpush1.msra.mxu0 %v17
  %41 = vmatprep.subr.mxu0 0.0
  %42 = vmatpush1.msra.mxu0 %v18
  %43 = vmatprep.subr.mxu0 0.0
  %44 = vmatpush1.msra.mxu0 %v33
  %45 = vmatprep.subr.mxu0 0.0
  %46 = vmatpush1.msra.mxu0 0.0
  %47 = vmatprep.subr.mxu0 0.0
  %48 = vmatpush1.msra.mxu0 0.0
  %49 = vmatprep.subr.mxu0 0.0
  %50 = vmatpush1.msra.mxu0 0.0
  %51 = vmatprep.subr.mxu0 0.0
  %52 = vmatpush1.msra.mxu0 0.0
  %53 = vmatprep.subr.mxu0 0.0
  %54 = vmatpush1.msra.mxu0 0.0
  %55 = vmatprep.subr.mxu0 0.0
  %56 = vmatpush1.msra.mxu0 0.0
  %57 = vmatprep.subr.mxu0 0.0
  %58 = vmatpush1.msra.mxu0 0.0
  %59 = vmatprep.subr.mxu0 0.0
  %60 = vmatpush1.msra.mxu0 0.0
  %61 = vmatprep.subr.mxu0 0.0
  %62 = vmatpush1.msra.mxu0 0.0
  %63 = vmatprep.subr.mxu0 0.0
  %64 = vmatpush1.msra.mxu0 0.0
  %65 = vmatprep.subr.mxu0 0.0
  %66 = vmatpush1.msra.mxu0 0.0
  %67 = vmatprep.subr.mxu0 0.0
  %68 = vmatpush1.msra.mxu0 0.0
  %69 = vmatprep.subr.mxu0 0.0
  %70 = vmatpush1.msra.mxu0 0.0
  %71 = vmatprep.subr.mxu0 0.0
  %72 = vmatpush1.msra.mxu0 0.0
  %73 = vmatprep.subr.mxu0 0.0
  %74 = vmatpush1.msra.mxu0 0.0
  %75 = vmatprep.subr.mxu0 0.0
  %76 = vmatpush1.msra.mxu0 0.0
  %77 = vmatprep.subr.mxu0 0.0
  %78 = vmatpush1.msra.mxu0 0.0
  %79 = vmatprep.subr.mxu0 0.0
  %80 = vmatpush1.msra.mxu0 0.0
  %81 = vmatprep.subr.mxu0 0.0
  %82 = vmatpush1.msra.mxu0 0.0
  %83 = vmatprep.subr.mxu0 0.0
  %84 = vmatpush1.msra.mxu0 0.0
  %85 = vmatprep.subr.mxu0 0.0
  %86 = vmatpush1.msra.mxu0 0.0
  %87 = vmatprep.subr.mxu0 0.0
  %88 = vmatpush1.msra.mxu0 0.0
  %89 = vmatprep.subr.mxu0 0.0
  %90 = vmatpush1.msra.mxu0 0.0
  %91 = vmatprep.subr.mxu0 0.0
  %92 = vmatpush1.msra.mxu0 0.0
  %93 = vmatprep.subr.mxu0 0.0
  %94 = vmatpush1.msra.mxu0 0.0
  %95 = vmatprep.subr.mxu0 0.0
  %96 = vmatpush1.msra.mxu0 0.0
  %97 = vmatprep.subr.mxu0 0.0
  %98 = vmatpush1.msra.mxu0 0.0
  %99 = vmatprep.mubr.f32.mxu0 0.0
  %100 = vmatmul.mubr.f32.gmra.mrb[0].mxu0 %v29
  %v101 = vpop.f32.mrb[0].mxu0
  %v102 = vadd.f32 %v25, %v101
  %v103 = vpop.f32.mrb[0].mxu0
  %104 = vdwg.mxu0
  %vm105 = vcmask 146432
  %106 = vst.msk [vmem:[%s3] sm:$0xff] %vm105, %v102
  // Predicated region
  $region14: #{mwt_cz2d_forward.31} parent=0 // pred_check
    _
  $region15: #{mwt_cz2d_forward.31} parent=0 // pred_check_branch
    %108 = sbr.rel (0) target = $region17
  $region16: #{mwt_cz2d_forward.31} parent=0 // pred_region
    _
  $region17: #{mwt_cz2d_forward.31} parent=0 // pred_fallthru
    _
  // Predicated region
  $region18: #{mwt_cz2d_forward.31} parent=0 // pred_check
    _
  $region19: #{mwt_cz2d_forward.31} parent=0 // pred_check_branch
    %110 = sbr.rel (0) target = $region21
  $region20: #{mwt_cz2d_forward.31} parent=0 // pred_region
    _
  $region21: #{mwt_cz2d_forward.31} parent=0 // pred_fallthru
    _

// kernel: mwt_cz2d_forward.40
$region0: #{mwt_cz2d_forward.40}
  #allocation0 [shape = 'u32[]', space=smem, size = 0x4, offset = 0x4, fixed_abs, tag = 'smem constant byte address 0x4 - core index']
  #allocation1 [shape = 'u32[144,128]{1,0:T(1,128)}', space=vmem, size = 0x12000, scoped, tag = 'internal scratch']
  %s0 = inlined_call_operand.vmem [shape: f32[4,8,18], index: 0, kind: input, shape index: {}]
  %s1 = inlined_call_operand.vmem [shape: f32[4,18,18], index: 1, kind: input, shape index: {}]
  %s2 = inlined_call_operand.vmem [shape: f32[4,8,18], index: 2, kind: output, shape index: {}]
  %s3 = sld [smem:[#allocation0]]
  $region41: #{mwt_cz2d_forward.40} parent=0
    _
  %s5 = ssub.s32 1, %s3
  %s6 = scalar_select 0, %s5, %s3
  loop: start=0, step=1, limit=4
  $region2: #{mwt_cz2d_forward.40} parent=0 // loop_pre_header
    _
  $region3: #{mwt_cz2d_forward.40} parent=0 // loop_header
    %s8 = sphi 0, %s12
    %p9 = scmp.ge.s32.totalorder %s8, 4
    %s18 = sphi 0, %s20
    %s21 = sphi 0, %s18
    %s22 = sphi 0, %s21
    %s38 = sphi 0, %s22
    %s44 = sphi 0, %s46
    %s47 = sphi 0, %s44
    %s48 = sphi 0, %s47
    %s64 = sphi 0, %s48
    %s70 = sphi 0, %s72
    %s73 = sphi 0, %s70
    %s74 = sphi 0, %s73
    %s90 = sphi 0, %s74
  $region4: #{mwt_cz2d_forward.40} parent=0 // loop_header_branch
    %11 = sbr.rel (%p9) target = $region8
  $region5: #{mwt_cz2d_forward.40} parent=0 // loop_body
    %s13 = ssub.s32 %s8, 1
    %s14 = ssub.s32 %s8, 2
    %s15 = sadd.s32 %s8, 1
    %s16 = ssub.s32 %s8, %s15
    %p17 = scmp.eq.s32.totalorder %s16, 0
    %s19 = sadd.s32 %s18, 1
    %s20 = scalar_select %p17, %s18, %s19
    %p23 = pneg %p17
    %p24 = scmp.eq.s32.totalorder %s8, 1
    %p25 = por %p23, %p24
    %p26 = scmp.ne.s32.totalorder %s18, %s21
    %p27 = scmp.eq.s32.totalorder %s8, 0
    %p28 = por %p26, %p27
    %p29 = scmp.ne.s32.totalorder %s18, %s21
    %p30 = scmp.eq.s32.totalorder %s13, 1
    %p31 = por %p29, %p30
    %p32 = scmp.ne.s32.totalorder %s21, %s22
    %p33 = scmp.eq.s32.totalorder %s13, 0
    %p34 = por %p32, %p33
    %p35 = scmp.ne.s32.totalorder %s21, %s22
    %p36 = scmp.eq.s32.totalorder %s14, 1
    %p37 = por %p35, %p36
    %p39 = scmp.ne.s32.totalorder %s22, %s38
    %p40 = scmp.eq.s32.totalorder %s14, 0
    %p41 = por %p39, %p40
    %s42 = ssub.s32 %s8, %s15
    %p43 = scmp.eq.s32.totalorder %s42, 0
    %s45 = sadd.s32 %s44, 1
    %s46 = scalar_select %p43, %s44, %s45
    %p49 = pneg %p43
    %p50 = scmp.eq.s32.totalorder %s8, 1
    %p51 = por %p49, %p50
    %p52 = scmp.ne.s32.totalorder %s44, %s47
    %p53 = scmp.eq.s32.totalorder %s8, 0
    %p54 = por %p52, %p53
    %p55 = scmp.ne.s32.totalorder %s44, %s47
    %p56 = scmp.eq.s32.totalorder %s13, 1
    %p57 = por %p55, %p56
    %p58 = scmp.ne.s32.totalorder %s47, %s48
    %p59 = scmp.eq.s32.totalorder %s13, 0
    %p60 = por %p58, %p59
    %p61 = scmp.ne.s32.totalorder %s47, %s48
    %p62 = scmp.eq.s32.totalorder %s14, 1
    %p63 = por %p61, %p62
    %p65 = scmp.ne.s32.totalorder %s48, %s64
    %p66 = scmp.eq.s32.totalorder %s14, 0
    %p67 = por %p65, %p66
    %s68 = ssub.s32 %s8, %s15
    %p69 = scmp.eq.s32.totalorder %s68, 0
    %s71 = sadd.s32 %s70, 1
    %s72 = scalar_select %p69, %s70, %s71
    %p75 = pneg %p69
    %p76 = scmp.eq.s32.totalorder %s8, 1
    %p77 = por %p75, %p76
    %p78 = scmp.ne.s32.totalorder %s70, %s73
    %p79 = scmp.eq.s32.totalorder %s8, 0
    %p80 = por %p78, %p79
    %p81 = scmp.ne.s32.totalorder %s70, %s73
    %p82 = scmp.eq.s32.totalorder %s13, 1
    %p83 = por %p81, %p82
    %p84 = scmp.ne.s32.totalorder %s73, %s74
    %p85 = scmp.eq.s32.totalorder %s13, 0
    %p86 = por %p84, %p85
    %p87 = scmp.ne.s32.totalorder %s73, %s74
    %p88 = scmp.eq.s32.totalorder %s14, 1
    %p89 = por %p87, %p88
    %p91 = scmp.ne.s32.totalorder %s74, %s90
    %p92 = scmp.eq.s32.totalorder %s14, 0
    %p93 = por %p91, %p92
    %p94 = scmp.le.s32.totalorder 1, %s8
    %p95 = scmp.lt.s32.totalorder %s8, 3
    %p96 = pnand %p94, %p95
    %p97 = pneg %p96
    // Predicated region
    $region9: #{mwt_cz2d_forward.40} parent=5 // pred_check
      _
    $region10: #{mwt_cz2d_forward.40} parent=5 // pred_check_branch
      %99 = sbr.rel (%p96) target = $region12
    $region11: #{mwt_cz2d_forward.40} parent=5 // pred_region
      %s100 = ssub.s32 %s8, 1
    $region12: #{mwt_cz2d_forward.40} parent=5 // pred_fallthru
      _
    %p101 = scmp.lt.s32.totalorder %s8, 2
    // Predicated region
    $region13: #{mwt_cz2d_forward.40} parent=5 // pred_check
      %p102 = pneg %p101
    $region14: #{mwt_cz2d_forward.40} parent=5 // pred_check_branch
      %104 = sbr.rel (%p102) target = $region16
    $region15: #{mwt_cz2d_forward.40} parent=5 // pred_region
      // Predicated region
      $region17: #{mwt_cz2d_forward.40} parent=15 // pred_check
        %p105 = pneg %p28
      $region18: #{mwt_cz2d_forward.40} parent=15 // pred_check_branch
        %107 = sbr.rel (%p105) target = $region20
      $region19: #{mwt_cz2d_forward.40} parent=15 // pred_region
        %s108 = smul.u32 2, %s8
        %p109 = scmp.lt.s32.totalorder %s108, 3
        %s110 = scalar_select %p109, %s108, 3
        %s111 = smul.addr %s110, 8
        %s112 = scalar_lea.vmem %s0, %s111
        %s113 = smul.u32 2, %s8
      $region20: #{mwt_cz2d_forward.40} parent=15 // pred_fallthru
        _
      // Predicated region
      $region21: #{mwt_cz2d_forward.40} parent=15 // pred_check
        %p114 = pneg %p54
      $region22: #{mwt_cz2d_forward.40} parent=15 // pred_check_branch
        %116 = sbr.rel (%p114) target = $region24
      $region23: #{mwt_cz2d_forward.40} parent=15 // pred_region
        %s117 = smul.u32 2, %s8
        %p118 = scmp.lt.s32.totalorder %s117, 3
        %s119 = scalar_select %p118, %s117, 3
        %s120 = smul.addr %s119, 3
        %s121 = smul.addr %s120, 8
        %s122 = scalar_lea.vmem %s1, %s121
        %s123 = smul.u32 2, %s8
      $region24: #{mwt_cz2d_forward.40} parent=15 // pred_fallthru
        _
    $region16: #{mwt_cz2d_forward.40} parent=5 // pred_fallthru
      _
    %p124 = scmp.le.s32.totalorder 1, %s8
    %p125 = scmp.lt.s32.totalorder %s8, 3
    %p126 = pnand %p124, %p125
    %p127 = pneg %p126
    // Predicated region
    $region25: #{mwt_cz2d_forward.40} parent=5 // pred_check
      _
    $region26: #{mwt_cz2d_forward.40} parent=5 // pred_check_branch
      %129 = sbr.rel (%p126) target = $region28
    $region27: #{mwt_cz2d_forward.40} parent=5 // pred_region
      %s130 = ssub.s32 %s8, 1
      %s131 = smul.u32 2, %s13
      %p132 = scmp.lt.s32.totalorder %s131, 3
      %s133 = scalar_select %p132, %s131, 3
      %s134 = smul.addr %s133, 8
      %s135 = scalar_lea.vmem %s0, %s134
      %p136 = pneg %p34
      %p137 = pneg %p31
      %s138 = smul.u32 2, %s13
      %p139 = scmp.lt.s32.totalorder %s138, 3
      %s140 = scalar_select %p139, %s138, 3
      %s141 = smul.addr %s140, 3
      %s142 = smul.addr %s141, 8
      %s143 = scalar_lea.vmem %s1, %s142
      %p144 = pneg %p60
      %p145 = pneg %p57
      %p146 = pneg %p86
      %p147 = pneg %p83
      %s148 = smul.u32 2, %s13
      %p149 = scmp.lt.s32.totalorder %s148, 3
      %s150 = scalar_select %p149, %s148, 3
      %s151 = smul.addr %s150, 8
      %s152 = scalar_lea.vmem %s2, %s151
      %s153 = smul.u32 2, %s13
      %p154 = scmp.lt.s32.totalorder %s153, 3
      %s155 = scalar_select %p154, %s153, 3
      %s156 = smul.addr %s155, 8
      %s157 = scalar_lea.vmem %s0, %s156
      %s158 = smul.u32 2, %s13
      %s159 = smul.u32 2, %s13
      %p160 = scmp.lt.s32.totalorder %s159, 3
      %s161 = scalar_select %p160, %s159, 3
      %s162 = smul.addr %s161, 3
      %s163 = smul.addr %s162, 8
      %s164 = scalar_lea.vmem %s1, %s163
      %s165 = smul.u32 2, %s13
      %s166 = smul.u32 2, %s13
      %p167 = scmp.lt.s32.totalorder %s166, 3
      %s168 = scalar_select %p167, %s166, 3
      %s169 = smul.addr %s168, 8
      %s170 = scalar_lea.vmem %s2, %s169
      %s171 = smul.u32 2, %s13
      %v172 = vld [vmem:[%s157] sm:$0xff]
      %v173 = vld [vmem:[%s164] sm:$0xff]
      %v174 = vld [vmem:[%s164 + $0x8] sm:$0xff]
      %v175 = vld [vmem:[%s164 + $0x10] sm:$0x3]
      %vm176 = vcmask 146432
      %v178 = vsel %vm176, %v172, 0
      %vm180 = vcmask 1041408
      %v182 = vsel %vm180, %v175, 0
      %184 = vmatprep.subr.mxu0 0.0
      %185 = vmatpush1.msra.mxu0 %v173
      %186 = vmatprep.subr.mxu0 0.0
      %187 = vmatpush1.msra.mxu0 %v174
      %188 = vmatprep.subr.mxu0 0.0
      %189 = vmatpush1.msra.mxu0 %v182
      %190 = vmatprep.subr.mxu0 0.0
      %191 = vmatpush1.msra.mxu0 0.0
      %192 = vmatprep.subr.mxu0 0.0
      %193 = vmatpush1.msra.mxu0 0.0
      %194 = vmatprep.subr.mxu0 0.0
      %195 = vmatpush1.msra.mxu0 0.0
      %196 = vmatprep.subr.mxu0 0.0
      %197 = vmatpush1.msra.mxu0 0.0
      %198 = vmatprep.subr.mxu0 0.0
      %199 = vmatpush1.msra.mxu0 0.0
      %200 = vmatprep.subr.mxu0 0.0
      %201 = vmatpush1.msra.mxu0 0.0
      %202 = vmatprep.subr.mxu0 0.0
      %203 = vmatpush1.msra.mxu0 0.0
      %204 = vmatprep.subr.mxu0 0.0
      %205 = vmatpush1.msra.mxu0 0.0
      %206 = vmatprep.subr.mxu0 0.0
      %207 = vmatpush1.msra.mxu0 0.0
      %208 = vmatprep.subr.mxu0 0.0
      %209 = vmatpush1.msra.mxu0 0.0
      %210 = vmatprep.subr.mxu0 0.0
      %211 = vmatpush1.msra.mxu0 0.0
      %212 = vmatprep.subr.mxu0 0.0
      %213 = vmatpush1.msra.mxu0 0.0
      %214 = vmatprep.subr.mxu0 0.0
      %215 = vmatpush1.msra.mxu0 0.0
      %216 = vmatprep.subr.mxu0 0.0
      %217 = vmatpush1.msra.mxu0 0.0
      %218 = vmatprep.subr.mxu0 0.0
      %219 = vmatpush1.msra.mxu0 0.0
      %220 = vmatprep.subr.mxu0 0.0
      %221 = vmatpush1.msra.mxu0 0.0
      %222 = vmatprep.subr.mxu0 0.0
      %223 = vmatpush1.msra.mxu0 0.0
      %224 = vmatprep.subr.mxu0 0.0
      %225 = vmatpush1.msra.mxu0 0.0
      %226 = vmatprep.subr.mxu0 0.0
      %227 = vmatpush1.msra.mxu0 0.0
      %228 = vmatprep.subr.mxu0 0.0
      %229 = vmatpush1.msra.mxu0 0.0
      %230 = vmatprep.subr.mxu0 0.0
      %231 = vmatpush1.msra.mxu0 0.0
      %232 = vmatprep.subr.mxu0 0.0
      %233 = vmatpush1.msra.mxu0 0.0
      %234 = vmatprep.subr.mxu0 0.0
      %235 = vmatpush1.msra.mxu0 0.0
      %236 = vmatprep.subr.mxu0 0.0
      %237 = vmatpush1.msra.mxu0 0.0
      %238 = vmatprep.subr.mxu0 0.0
      %239 = vmatpush1.msra.mxu0 0.0
      %240 = vmatprep.subr.mxu0 0.0
      %241 = vmatpush1.msra.mxu0 0.0
      %242 = vmatprep.subr.mxu0 0.0
      %243 = vmatpush1.msra.mxu0 0.0
      %244 = vmatprep.subr.mxu0 0.0
      %245 = vmatpush1.msra.mxu0 0.0
      %246 = vmatprep.subr.mxu0 0.0
      %247 = vmatpush1.msra.mxu0 0.0
      %248 = vmatprep.mubr.f32.mxu0 0.0
      %249 = vmatmul.mubr.f32.gmra.mrb[0].mxu0 %v178
      %v250 = vpop.f32.mrb[0].mxu0
      %v251 = vadd.f32 0.0, %v250
      %v252 = vpop.f32.mrb[0].mxu0
      %253 = vdwg.mxu0
      %254 = vst.msk [vmem:[%s170] sm:$0xff] %vm176, %v251
      %s255 = scalar_lea.vmem %s157, 8
      %v256 = vld [vmem:[%s255] sm:$0xff]
      %s257 = scalar_lea.vmem %s164, 24
      %v258 = vld [vmem:[%s257] sm:$0xff]
      %v259 = vld [vmem:[%s257 + $0x8] sm:$0xff]
      %v260 = vld [vmem:[%s257 + $0x10] sm:$0x3]
      %v262 = vsel %vm176, %v256, 0
      %v265 = vsel %vm180, %v260, 0
      %267 = vmatprep.subr.mxu0 0.0
      %268 = vmatpush1.msra.mxu0 %v258
      %269 = vmatprep.subr.mxu0 0.0
      %270 = vmatpush1.msra.mxu0 %v259
      %271 = vmatprep.subr.mxu0 0.0
      %272 = vmatpush1.msra.mxu0 %v265
      %273 = vmatprep.subr.mxu0 0.0
      %274 = vmatpush1.msra.mxu0 0.0
      %275 = vmatprep.subr.mxu0 0.0
      %276 = vmatpush1.msra.mxu0 0.0
      %277 = vmatprep.subr.mxu0 0.0
      %278 = vmatpush1.msra.mxu0 0.0
      %279 = vmatprep.subr.mxu0 0.0
      %280 = vmatpush1.msra.mxu0 0.0
      %281 = vmatprep.subr.mxu0 0.0
      %282 = vmatpush1.msra.mxu0 0.0
      %283 = vmatprep.subr.mxu0 0.0
      %284 = vmatpush1.msra.mxu0 0.0
      %285 = vmatprep.subr.mxu0 0.0
      %286 = vmatpush1.msra.mxu0 0.0
      %287 = vmatprep.subr.mxu0 0.0
      %288 = vmatpush1.msra.mxu0 0.0
      %289 = vmatprep.subr.mxu0 0.0
      %290 = vmatpush1.msra.mxu0 0.0
      %291 = vmatprep.subr.mxu0 0.0
      %292 = vmatpush1.msra.mxu0 0.0
      %293 = vmatprep.subr.mxu0 0.0
      %294 = vmatpush1.msra.mxu0 0.0
      %295 = vmatprep.subr.mxu0 0.0
      %296 = vmatpush1.msra.mxu0 0.0
      %297 = vmatprep.subr.mxu0 0.0
      %298 = vmatpush1.msra.mxu0 0.0
      %299 = vmatprep.subr.mxu0 0.0
      %300 = vmatpush1.msra.mxu0 0.0
      %301 = vmatprep.subr.mxu0 0.0
      %302 = vmatpush1.msra.mxu0 0.0
      %303 = vmatprep.subr.mxu0 0.0
      %304 = vmatpush1.msra.mxu0 0.0
      %305 = vmatprep.subr.mxu0 0.0
      %306 = vmatpush1.msra.mxu0 0.0
      %307 = vmatprep.subr.mxu0 0.0
      %308 = vmatpush1.msra.mxu0 0.0
      %309 = vmatprep.subr.mxu0 0.0
      %310 = vmatpush1.msra.mxu0 0.0
      %311 = vmatprep.subr.mxu0 0.0
      %312 = vmatpush1.msra.mxu0 0.0
      %313 = vmatprep.subr.mxu0 0.0
      %314 = vmatpush1.msra.mxu0 0.0
      %315 = vmatprep.subr.mxu0 0.0
      %316 = vmatpush1.msra.mxu0 0.0
      %317 = vmatprep.subr.mxu0 0.0
      %318 = vmatpush1.msra.mxu0 0.0
      %319 = vmatprep.subr.mxu0 0.0
      %320 = vmatpush1.msra.mxu0 0.0
      %321 = vmatprep.subr.mxu0 0.0
      %322 = vmatpush1.msra.mxu0 0.0
      %323 = vmatprep.subr.mxu0 0.0
      %324 = vmatpush1.msra.mxu0 0.0
      %325 = vmatprep.subr.mxu0 0.0
      %326 = vmatpush1.msra.mxu0 0.0
      %327 = vmatprep.subr.mxu0 0.0
      %328 = vmatpush1.msra.mxu0 0.0
      %329 = vmatprep.subr.mxu0 0.0
      %330 = vmatpush1.msra.mxu0 0.0
      %331 = vmatprep.mubr.f32.mxu0 0.0
      %332 = vmatmul.mubr.f32.gmra.mrb[0].mxu0 %v262
      %v333 = vpop.f32.mrb[0].mxu0
      %v334 = vadd.f32 0.0, %v333
      %v335 = vpop.f32.mrb[0].mxu0
      %336 = vdwg.mxu0
      %s337 = scalar_lea.vmem %s170, 8
      %338 = vst.msk [vmem:[%s337] sm:$0xff] %vm176, %v334
      %s339 = smul.u32 2, %s13
      %p340 = scmp.lt.s32.totalorder %s339, 3
      %s341 = scalar_select %p340, %s339, 3
      %s342 = smul.addr %s341, 8
      %s343 = scalar_lea.vmem %s2, %s342
      // Predicated region
      $region29: #{mwt_cz2d_forward.40} parent=27 // pred_check
        %p344 = pneg %p83
      $region30: #{mwt_cz2d_forward.40} parent=27 // pred_check_branch
        %346 = sbr.rel (%p344) target = $region32
      $region31: #{mwt_cz2d_forward.40} parent=27 // pred_region
        %s347 = smul.u32 2, %s13
      $region32: #{mwt_cz2d_forward.40} parent=27 // pred_fallthru
        _
    $region28: #{mwt_cz2d_forward.40} parent=5 // pred_fallthru
      _
    %p348 = scmp.le.s32.totalorder 2, %s8
    // Predicated region
    $region33: #{mwt_cz2d_forward.40} parent=5 // pred_check
      %p349 = pneg %p348
    $region34: #{mwt_cz2d_forward.40} parent=5 // pred_check_branch
      %351 = sbr.rel (%p349) target = $region36
    $region35: #{mwt_cz2d_forward.40} parent=5 // pred_region
      %s352 = ssub.s32 %s8, 2
      // Predicated region
      $region37: #{mwt_cz2d_forward.40} parent=35 // pred_check
        %p353 = pneg %p89
      $region38: #{mwt_cz2d_forward.40} parent=35 // pred_check_branch
        %355 = sbr.rel (%p353) target = $region40
      $region39: #{mwt_cz2d_forward.40} parent=35 // pred_region
        %s356 = smul.u32 2, %s14
        %p357 = scmp.lt.s32.totalorder %s356, 3
        %s358 = scalar_select %p357, %s356, 3
        %s359 = smul.addr %s358, 8
        %s360 = scalar_lea.vmem %s2, %s359
      $region40: #{mwt_cz2d_forward.40} parent=35 // pred_fallthru
        _
    $region36: #{mwt_cz2d_forward.40} parent=5 // pred_fallthru
      _
  $region6: #{mwt_cz2d_forward.40} parent=0 // loop_footer
    %s12 = sadd.s32 1, %s8
  $region7: #{mwt_cz2d_forward.40} parent=0 // loop_footer_branch
    %7 = sbr.rel target = $region3
  $region8: #{mwt_cz2d_forward.40} parent=0 // loop_exit
    _

// kernel: mwt_cz2d_forward.41
$region0: #{mwt_cz2d_forward.41}
  #allocation0 [shape = 'u32[]', space=smem, size = 0x4, offset = 0x4, fixed_abs, tag = 'smem constant byte address 0x4 - core index']
  #allocation1 [shape = 'u32[144,128]{1,0:T(1,128)}', space=vmem, size = 0x12000, scoped, tag = 'internal scratch']
  %s0 = inlined_call_operand.vmem [shape: f32[8,9], index: 0, kind: input, shape index: {}]
  %s1 = inlined_call_operand.vmem [shape: f32[9,9], index: 1, kind: input, shape index: {}]
  %s2 = inlined_call_operand.vmem [shape: f32[1,9], index: 2, kind: input, shape index: {}]
  %s3 = inlined_call_operand.vmem [shape: f32[8,9], index: 3, kind: output, shape index: {}]
  %s4 = sld [smem:[#allocation0]]
  $region22: #{mwt_cz2d_forward.41} parent=0
    _
  %s6 = ssub.s32 1, %s4
  %s7 = scalar_select 0, %s6, %s4
  // Predicated region
  $region2: #{mwt_cz2d_forward.41} parent=0 // pred_check
    _
  $region3: #{mwt_cz2d_forward.41} parent=0 // pred_check_branch
    %9 = sbr.rel (0) target = $region5
  $region4: #{mwt_cz2d_forward.41} parent=0 // pred_region
    _
  $region5: #{mwt_cz2d_forward.41} parent=0 // pred_fallthru
    _
  // Predicated region
  $region6: #{mwt_cz2d_forward.41} parent=0 // pred_check
    _
  $region7: #{mwt_cz2d_forward.41} parent=0 // pred_check_branch
    %11 = sbr.rel (0) target = $region9
  $region8: #{mwt_cz2d_forward.41} parent=0 // pred_region
    _
  $region9: #{mwt_cz2d_forward.41} parent=0 // pred_fallthru
    _
  // Predicated region
  $region10: #{mwt_cz2d_forward.41} parent=0 // pred_check
    _
  $region11: #{mwt_cz2d_forward.41} parent=0 // pred_check_branch
    %13 = sbr.rel (0) target = $region13
  $region12: #{mwt_cz2d_forward.41} parent=0 // pred_region
    _
  $region13: #{mwt_cz2d_forward.41} parent=0 // pred_fallthru
    _
  %v14 = vld [vmem:[%s0] sm:$0xff]
  %v15 = vmax.f32 %v14, 0.0
  %v16 = vld [vmem:[%s1] sm:$0xff]
  %v17 = vld [vmem:[%s1 + $0x8] sm:$0x1]
  %v18 = vld [vmem:[%s2] sm:$0x1]
  %v20 = vlaneseq
  %v21 = vshrl.u32 %v20, 7
  %v22 = vsub.s32 0, %v21
  %v23 = vrot.slane %v18, %v22
  %vm25 = vcmask 72704
  %v27 = vsel %vm25, %v15, 0
  %vm29 = vcmask 1040384
  %v31 = vsel %vm29, %v17, 0
  %33 = vmatprep.subr.mxu0 0.0
  %34 = vmatpush1.msra.mxu0 %v16
  %35 = vmatprep.subr.mxu0 0.0
  %36 = vmatpush1.msra.mxu0 %v31
  %37 = vmatprep.subr.mxu0 0.0
  %38 = vmatpush1.msra.mxu0 0.0
  %39 = vmatprep.subr.mxu0 0.0
  %40 = vmatpush1.msra.mxu0 0.0
  %41 = vmatprep.subr.mxu0 0.0
  %42 = vmatpush1.msra.mxu0 0.0
  %43 = vmatprep.subr.mxu0 0.0
  %44 = vmatpush1.msra.mxu0 0.0
  %45 = vmatprep.subr.mxu0 0.0
  %46 = vmatpush1.msra.mxu0 0.0
  %47 = vmatprep.subr.mxu0 0.0
  %48 = vmatpush1.msra.mxu0 0.0
  %49 = vmatprep.subr.mxu0 0.0
  %50 = vmatpush1.msra.mxu0 0.0
  %51 = vmatprep.subr.mxu0 0.0
  %52 = vmatpush1.msra.mxu0 0.0
  %53 = vmatprep.subr.mxu0 0.0
  %54 = vmatpush1.msra.mxu0 0.0
  %55 = vmatprep.subr.mxu0 0.0
  %56 = vmatpush1.msra.mxu0 0.0
  %57 = vmatprep.subr.mxu0 0.0
  %58 = vmatpush1.msra.mxu0 0.0
  %59 = vmatprep.subr.mxu0 0.0
  %60 = vmatpush1.msra.mxu0 0.0
  %61 = vmatprep.subr.mxu0 0.0
  %62 = vmatpush1.msra.mxu0 0.0
  %63 = vmatprep.subr.mxu0 0.0
  %64 = vmatpush1.msra.mxu0 0.0
  %65 = vmatprep.subr.mxu0 0.0
  %66 = vmatpush1.msra.mxu0 0.0
  %67 = vmatprep.subr.mxu0 0.0
  %68 = vmatpush1.msra.mxu0 0.0
  %69 = vmatprep.subr.mxu0 0.0
  %70 = vmatpush1.msra.mxu0 0.0
  %71 = vmatprep.subr.mxu0 0.0
  %72 = vmatpush1.msra.mxu0 0.0
  %73 = vmatprep.subr.mxu0 0.0
  %74 = vmatpush1.msra.mxu0 0.0
  %75 = vmatprep.subr.mxu0 0.0
  %76 = vmatpush1.msra.mxu0 0.0
  %77 = vmatprep.subr.mxu0 0.0
  %78 = vmatpush1.msra.mxu0 0.0
  %79 = vmatprep.subr.mxu0 0.0
  %80 = vmatpush1.msra.mxu0 0.0
  %81 = vmatprep.subr.mxu0 0.0
  %82 = vmatpush1.msra.mxu0 0.0
  %83 = vmatprep.subr.mxu0 0.0
  %84 = vmatpush1.msra.mxu0 0.0
  %85 = vmatprep.subr.mxu0 0.0
  %86 = vmatpush1.msra.mxu0 0.0
  %87 = vmatprep.subr.mxu0 0.0
  %88 = vmatpush1.msra.mxu0 0.0
  %89 = vmatprep.subr.mxu0 0.0
  %90 = vmatpush1.msra.mxu0 0.0
  %91 = vmatprep.subr.mxu0 0.0
  %92 = vmatpush1.msra.mxu0 0.0
  %93 = vmatprep.subr.mxu0 0.0
  %94 = vmatpush1.msra.mxu0 0.0
  %95 = vmatprep.subr.mxu0 0.0
  %96 = vmatpush1.msra.mxu0 0.0
  %97 = vmatprep.mubr.f32.mxu0 0.0
  %98 = vmatmul.mubr.f32.gmra.mrb[0].mxu0 %v27
  %v99 = vpop.f32.mrb[0].mxu0
  %v100 = vadd.f32 %v23, %v99
  %v101 = vpop.f32.mrb[0].mxu0
  %102 = vdwg.mxu0
  %103 = vst.msk [vmem:[%s3] sm:$0xff] %vm25, %v100
  // Predicated region
  $region14: #{mwt_cz2d_forward.41} parent=0 // pred_check
    _
  $region15: #{mwt_cz2d_forward.41} parent=0 // pred_check_branch
    %105 = sbr.rel (0) target = $region17
  $region16: #{mwt_cz2d_forward.41} parent=0 // pred_region
    _
  $region17: #{mwt_cz2d_forward.41} parent=0 // pred_fallthru
    _
  // Predicated region
  $region18: #{mwt_cz2d_forward.41} parent=0 // pred_check
    _
  $region19: #{mwt_cz2d_forward.41} parent=0 // pred_check_branch
    %107 = sbr.rel (0) target = $region21
  $region20: #{mwt_cz2d_forward.41} parent=0 // pred_region
    _
  $region21: #{mwt_cz2d_forward.41} parent=0 // pred_fallthru
    _

// kernel: mwt_cz2d_forward.42
$region0: #{mwt_cz2d_forward.42}
  #allocation0 [shape = 'u32[]', space=smem, size = 0x4, offset = 0x4, fixed_abs, tag = 'smem constant byte address 0x4 - core index']
  #allocation1 [shape = 'u32[144,128]{1,0:T(1,128)}', space=vmem, size = 0x12000, scoped, tag = 'internal scratch']
  %s0 = inlined_call_operand.vmem [shape: f32[8,81], index: 0, kind: input, shape index: {}]
  %s1 = inlined_call_operand.vmem [shape: f32[81,9], index: 1, kind: input, shape index: {}]
  %s2 = inlined_call_operand.vmem [shape: f32[1,9], index: 2, kind: input, shape index: {}]
  %s3 = inlined_call_operand.vmem [shape: f32[9,9], index: 3, kind: input, shape index: {}]
  %s4 = inlined_call_operand.vmem [shape: f32[1,9], index: 4, kind: input, shape index: {}]
  %s5 = inlined_call_operand.vmem [shape: f32[8,9], index: 5, kind: output, shape index: {}]
  %s6 = sld [smem:[#allocation0]]
  $region30: #{mwt_cz2d_forward.42} parent=0
    _
  %s8 = ssub.s32 1, %s6
  %s9 = scalar_select 0, %s8, %s6
  // Predicated region
  $region2: #{mwt_cz2d_forward.42} parent=0 // pred_check
    _
  $region3: #{mwt_cz2d_forward.42} parent=0 // pred_check_branch
    %11 = sbr.rel (0) target = $region5
  $region4: #{mwt_cz2d_forward.42} parent=0 // pred_region
    _
  $region5: #{mwt_cz2d_forward.42} parent=0 // pred_fallthru
    _
  // Predicated region
  $region6: #{mwt_cz2d_forward.42} parent=0 // pred_check
    _
  $region7: #{mwt_cz2d_forward.42} parent=0 // pred_check_branch
    %13 = sbr.rel (0) target = $region9
  $region8: #{mwt_cz2d_forward.42} parent=0 // pred_region
    _
  $region9: #{mwt_cz2d_forward.42} parent=0 // pred_fallthru
    _
  // Predicated region
  $region10: #{mwt_cz2d_forward.42} parent=0 // pred_check
    _
  $region11: #{mwt_cz2d_forward.42} parent=0 // pred_check_branch
    %15 = sbr.rel (0) target = $region13
  $region12: #{mwt_cz2d_forward.42} parent=0 // pred_region
    _
  $region13: #{mwt_cz2d_forward.42} parent=0 // pred_fallthru
    _
  // Predicated region
  $region14: #{mwt_cz2d_forward.42} parent=0 // pred_check
    _
  $region15: #{mwt_cz2d_forward.42} parent=0 // pred_check_branch
    %17 = sbr.rel (0) target = $region17
  $region16: #{mwt_cz2d_forward.42} parent=0 // pred_region
    _
  $region17: #{mwt_cz2d_forward.42} parent=0 // pred_fallthru
    _
  // Predicated region
  $region18: #{mwt_cz2d_forward.42} parent=0 // pred_check
    _
  $region19: #{mwt_cz2d_forward.42} parent=0 // pred_check_branch
    %19 = sbr.rel (0) target = $region21
  $region20: #{mwt_cz2d_forward.42} parent=0 // pred_region
    _
  $region21: #{mwt_cz2d_forward.42} parent=0 // pred_fallthru
    _
  %v20 = vld [vmem:[%s0] sm:$0xff]
  %v21 = vld [vmem:[%s1] sm:$0xff]
  %v22 = vld [vmem:[%s1 + $0x8] sm:$0xff]
  %v23 = vld [vmem:[%s1 + $0x10] sm:$0xff]
  %v24 = vld [vmem:[%s1 + $0x18] sm:$0xff]
  %v25 = vld [vmem:[%s1 + $0x20] sm:$0xff]
  %v26 = vld [vmem:[%s1 + $0x28] sm:$0xff]
  %v27 = vld [vmem:[%s1 + $0x30] sm:$0xff]
  %v28 = vld [vmem:[%s1 + $0x38] sm:$0xff]
  %v29 = vld [vmem:[%s1 + $0x40] sm:$0xff]
  %v30 = vld [vmem:[%s1 + $0x48] sm:$0xff]
  %v31 = vld [vmem:[%s1 + $0x50] sm:$0x1]
  %v32 = vld [vmem:[%s2] sm:$0x1]
  %v34 = vlaneseq
  %v35 = vshrl.u32 %v34, 7
  %v36 = vsub.s32 0, %v35
  %v37 = vrot.slane %v32, %v36
  %vm39 = vcmask 662528
  %v41 = vsel %vm39, %v20, 0
  %vm43 = vcmask 1040384
  %v45 = vsel %vm43, %v31, 0
  %47 = vmatprep.subr.mxu0 0.0
  %48 = vmatpush1.msra.mxu0 %v21
  %49 = vmatprep.subr.mxu0 0.0
  %50 = vmatpush1.msra.mxu0 %v22
  %51 = vmatprep.subr.mxu0 0.0
  %52 = vmatpush1.msra.mxu0 %v23
  %53 = vmatprep.subr.mxu0 0.0
  %54 = vmatpush1.msra.mxu0 %v24
  %55 = vmatprep.subr.mxu0 0.0
  %56 = vmatpush1.msra.mxu0 %v25
  %57 = vmatprep.subr.mxu0 0.0
  %58 = vmatpush1.msra.mxu0 %v26
  %59 = vmatprep.subr.mxu0 0.0
  %60 = vmatpush1.msra.mxu0 %v27
  %61 = vmatprep.subr.mxu0 0.0
  %62 = vmatpush1.msra.mxu0 %v28
  %63 = vmatprep.subr.mxu0 0.0
  %64 = vmatpush1.msra.mxu0 %v29
  %65 = vmatprep.subr.mxu0 0.0
  %66 = vmatpush1.msra.mxu0 %v30
  %67 = vmatprep.subr.mxu0 0.0
  %68 = vmatpush1.msra.mxu0 %v45
  %69 = vmatprep.subr.mxu0 0.0
  %70 = vmatpush1.msra.mxu0 0.0
  %71 = vmatprep.subr.mxu0 0.0
  %72 = vmatpush1.msra.mxu0 0.0
  %73 = vmatprep.subr.mxu0 0.0
  %74 = vmatpush1.msra.mxu0 0.0
  %75 = vmatprep.subr.mxu0 0.0
  %76 = vmatpush1.msra.mxu0 0.0
  %77 = vmatprep.subr.mxu0 0.0
  %78 = vmatpush1.msra.mxu0 0.0
  %79 = vmatprep.subr.mxu0 0.0
  %80 = vmatpush1.msra.mxu0 0.0
  %81 = vmatprep.subr.mxu0 0.0
  %82 = vmatpush1.msra.mxu0 0.0
  %83 = vmatprep.subr.mxu0 0.0
  %84 = vmatpush1.msra.mxu0 0.0
  %85 = vmatprep.subr.mxu0 0.0
  %86 = vmatpush1.msra.mxu0 0.0
  %87 = vmatprep.subr.mxu0 0.0
  %88 = vmatpush1.msra.mxu0 0.0
  %89 = vmatprep.subr.mxu0 0.0
  %90 = vmatpush1.msra.mxu0 0.0
  %91 = vmatprep.subr.mxu0 0.0
  %92 = vmatpush1.msra.mxu0 0.0
  %93 = vmatprep.subr.mxu0 0.0
  %94 = vmatpush1.msra.mxu0 0.0
  %95 = vmatprep.subr.mxu0 0.0
  %96 = vmatpush1.msra.mxu0 0.0
  %97 = vmatprep.subr.mxu0 0.0
  %98 = vmatpush1.msra.mxu0 0.0
  %99 = vmatprep.subr.mxu0 0.0
  %100 = vmatpush1.msra.mxu0 0.0
  %101 = vmatprep.subr.mxu0 0.0
  %102 = vmatpush1.msra.mxu0 0.0
  %103 = vmatprep.subr.mxu0 0.0
  %104 = vmatpush1.msra.mxu0 0.0
  %105 = vmatprep.subr.mxu0 0.0
  %106 = vmatpush1.msra.mxu0 0.0
  %107 = vmatprep.subr.mxu0 0.0
  %108 = vmatpush1.msra.mxu0 0.0
  %109 = vmatprep.subr.mxu0 0.0
  %110 = vmatpush1.msra.mxu0 0.0
  %111 = vmatprep.mubr.f32.mxu0 0.0
  %112 = vmatmul.mubr.f32.gmra.mrb[0].mxu0 %v41
  %v113 = vpop.f32.mrb[0].mxu0
  %v114 = vadd.f32 %v37, %v113
  %v115 = vpop.f32.mrb[0].mxu0
  %116 = vdwg.mxu0
  %v117 = vmax.f32 %v114, 0.0
  %v118 = vld [vmem:[%s3] sm:$0xff]
  %v119 = vld [vmem:[%s3 + $0x8] sm:$0x1]
  %v120 = vld [vmem:[%s4] sm:$0x1]
  %v122 = vlaneseq
  %v123 = vshrl.u32 %v122, 7
  %v124 = vsub.s32 0, %v123
  %v125 = vrot.slane %v120, %v124
  %vm127 = vcmask 72704
  %v129 = vsel %vm127, %v117, 0
  %v132 = vsel %vm43, %v119, 0
  %134 = vmatprep.subr.mxu0 0.0
  %135 = vmatpush1.msra.mxu0 %v118
  %136 = vmatprep.subr.mxu0 0.0
  %137 = vmatpush1.msra.mxu0 %v132
  %138 = vmatprep.subr.mxu0 0.0
  %139 = vmatpush1.msra.mxu0 0.0
  %140 = vmatprep.subr.mxu0 0.0
  %141 = vmatpush1.msra.mxu0 0.0
  %142 = vmatprep.subr.mxu0 0.0
  %143 = vmatpush1.msra.mxu0 0.0
  %144 = vmatprep.subr.mxu0 0.0
  %145 = vmatpush1.msra.mxu0 0.0
  %146 = vmatprep.subr.mxu0 0.0
  %147 = vmatpush1.msra.mxu0 0.0
  %148 = vmatprep.subr.mxu0 0.0
  %149 = vmatpush1.msra.mxu0 0.0
  %150 = vmatprep.subr.mxu0 0.0
  %151 = vmatpush1.msra.mxu0 0.0
  %152 = vmatprep.subr.mxu0 0.0
  %153 = vmatpush1.msra.mxu0 0.0
  %154 = vmatprep.subr.mxu0 0.0
  %155 = vmatpush1.msra.mxu0 0.0
  %156 = vmatprep.subr.mxu0 0.0
  %157 = vmatpush1.msra.mxu0 0.0
  %158 = vmatprep.subr.mxu0 0.0
  %159 = vmatpush1.msra.mxu0 0.0
  %160 = vmatprep.subr.mxu0 0.0
  %161 = vmatpush1.msra.mxu0 0.0
  %162 = vmatprep.subr.mxu0 0.0
  %163 = vmatpush1.msra.mxu0 0.0
  %164 = vmatprep.subr.mxu0 0.0
  %165 = vmatpush1.msra.mxu0 0.0
  %166 = vmatprep.subr.mxu0 0.0
  %167 = vmatpush1.msra.mxu0 0.0
  %168 = vmatprep.subr.mxu0 0.0
  %169 = vmatpush1.msra.mxu0 0.0
  %170 = vmatprep.subr.mxu0 0.0
  %171 = vmatpush1.msra.mxu0 0.0
  %172 = vmatprep.subr.mxu0 0.0
  %173 = vmatpush1.msra.mxu0 0.0
  %174 = vmatprep.subr.mxu0 0.0
  %175 = vmatpush1.msra.mxu0 0.0
  %176 = vmatprep.subr.mxu0 0.0
  %177 = vmatpush1.msra.mxu0 0.0
  %178 = vmatprep.subr.mxu0 0.0
  %179 = vmatpush1.msra.mxu0 0.0
  %180 = vmatprep.subr.mxu0 0.0
  %181 = vmatpush1.msra.mxu0 0.0
  %182 = vmatprep.subr.mxu0 0.0
  %183 = vmatpush1.msra.mxu0 0.0
  %184 = vmatprep.subr.mxu0 0.0
  %185 = vmatpush1.msra.mxu0 0.0
  %186 = vmatprep.subr.mxu0 0.0
  %187 = vmatpush1.msra.mxu0 0.0
  %188 = vmatprep.subr.mxu0 0.0
  %189 = vmatpush1.msra.mxu0 0.0
  %190 = vmatprep.subr.mxu0 0.0
  %191 = vmatpush1.msra.mxu0 0.0
  %192 = vmatprep.subr.mxu0 0.0
  %193 = vmatpush1.msra.mxu0 0.0
  %194 = vmatprep.subr.mxu0 0.0
  %195 = vmatpush1.msra.mxu0 0.0
  %196 = vmatprep.subr.mxu0 0.0
  %197 = vmatpush1.msra.mxu0 0.0
  %198 = vmatprep.mubr.f32.mxu0 0.0
  %199 = vmatmul.mubr.f32.gmra.mrb[0].mxu0 %v129
  %v200 = vpop.f32.mrb[0].mxu0
  %v201 = vadd.f32 %v125, %v200
  %v202 = vpop.f32.mrb[0].mxu0
  %203 = vdwg.mxu0
  %204 = vst.msk [vmem:[%s5] sm:$0xff] %vm127, %v201
  // Predicated region
  $region22: #{mwt_cz2d_forward.42} parent=0 // pred_check
    _
  $region23: #{mwt_cz2d_forward.42} parent=0 // pred_check_branch
    %206 = sbr.rel (0) target = $region25
  $region24: #{mwt_cz2d_forward.42} parent=0 // pred_region
    _
  $region25: #{mwt_cz2d_forward.42} parent=0 // pred_fallthru
    _
  // Predicated region
  $region26: #{mwt_cz2d_forward.42} parent=0 // pred_check
    _
  $region27: #{mwt_cz2d_forward.42} parent=0 // pred_check_branch
    %208 = sbr.rel (0) target = $region29
  $region28: #{mwt_cz2d_forward.42} parent=0 // pred_region
    _
  $region29: #{mwt_cz2d_forward.42} parent=0 // pred_fallthru
    _

// kernel: mwt_cz2d_forward.35
$region0: #{mwt_cz2d_forward.35}
  #allocation0 [shape = 'u32[]', space=smem, size = 0x4, offset = 0x4, fixed_abs, tag = 'smem constant byte address 0x4 - core index']
  #allocation1 [shape = 'u32[144,128]{1,0:T(1,128)}', space=vmem, size = 0x12000, scoped, tag = 'internal scratch']
  %s0 = inlined_call_operand.vmem [shape: f32[2,8,18], index: 0, kind: input, shape index: {}]
  %s1 = inlined_call_operand.vmem [shape: f32[2,18,18], index: 1, kind: input, shape index: {}]
  %s2 = inlined_call_operand.vmem [shape: f32[2,8,18], index: 2, kind: output, shape index: {}]
  %s3 = sld [smem:[#allocation0]]
  $region41: #{mwt_cz2d_forward.35} parent=0
    _
  %s5 = ssub.s32 1, %s3
  %s6 = scalar_select 0, %s5, %s3
  loop: start=0, step=1, limit=4
  $region2: #{mwt_cz2d_forward.35} parent=0 // loop_pre_header
    _
  $region3: #{mwt_cz2d_forward.35} parent=0 // loop_header
    %s8 = sphi 0, %s12
    %p9 = scmp.ge.s32.totalorder %s8, 4
    %s18 = sphi 0, %s20
    %s21 = sphi 0, %s18
    %s22 = sphi 0, %s21
    %s38 = sphi 0, %s22
    %s44 = sphi 0, %s46
    %s47 = sphi 0, %s44
    %s48 = sphi 0, %s47
    %s64 = sphi 0, %s48
    %s70 = sphi 0, %s72
    %s73 = sphi 0, %s70
    %s74 = sphi 0, %s73
    %s90 = sphi 0, %s74
  $region4: #{mwt_cz2d_forward.35} parent=0 // loop_header_branch
    %11 = sbr.rel (%p9) target = $region8
  $region5: #{mwt_cz2d_forward.35} parent=0 // loop_body
    %s13 = ssub.s32 %s8, 1
    %s14 = ssub.s32 %s8, 2
    %s15 = sadd.s32 %s8, 1
    %s16 = ssub.s32 %s8, %s15
    %p17 = scmp.eq.s32.totalorder %s16, 0
    %s19 = sadd.s32 %s18, 1
    %s20 = scalar_select %p17, %s18, %s19
    %p23 = pneg %p17
    %p24 = scmp.eq.s32.totalorder %s8, 1
    %p25 = por %p23, %p24
    %p26 = scmp.ne.s32.totalorder %s18, %s21
    %p27 = scmp.eq.s32.totalorder %s8, 0
    %p28 = por %p26, %p27
    %p29 = scmp.ne.s32.totalorder %s18, %s21
    %p30 = scmp.eq.s32.totalorder %s13, 1
    %p31 = por %p29, %p30
    %p32 = scmp.ne.s32.totalorder %s21, %s22
    %p33 = scmp.eq.s32.totalorder %s13, 0
    %p34 = por %p32, %p33
    %p35 = scmp.ne.s32.totalorder %s21, %s22
    %p36 = scmp.eq.s32.totalorder %s14, 1
    %p37 = por %p35, %p36
    %p39 = scmp.ne.s32.totalorder %s22, %s38
    %p40 = scmp.eq.s32.totalorder %s14, 0
    %p41 = por %p39, %p40
    %s42 = ssub.s32 %s8, %s15
    %p43 = scmp.eq.s32.totalorder %s42, 0
    %s45 = sadd.s32 %s44, 1
    %s46 = scalar_select %p43, %s44, %s45
    %p49 = pneg %p43
    %p50 = scmp.eq.s32.totalorder %s8, 1
    %p51 = por %p49, %p50
    %p52 = scmp.ne.s32.totalorder %s44, %s47
    %p53 = scmp.eq.s32.totalorder %s8, 0
    %p54 = por %p52, %p53
    %p55 = scmp.ne.s32.totalorder %s44, %s47
    %p56 = scmp.eq.s32.totalorder %s13, 1
    %p57 = por %p55, %p56
    %p58 = scmp.ne.s32.totalorder %s47, %s48
    %p59 = scmp.eq.s32.totalorder %s13, 0
    %p60 = por %p58, %p59
    %p61 = scmp.ne.s32.totalorder %s47, %s48
    %p62 = scmp.eq.s32.totalorder %s14, 1
    %p63 = por %p61, %p62
    %p65 = scmp.ne.s32.totalorder %s48, %s64
    %p66 = scmp.eq.s32.totalorder %s14, 0
    %p67 = por %p65, %p66
    %s68 = ssub.s32 %s8, %s15
    %p69 = scmp.eq.s32.totalorder %s68, 0
    %s71 = sadd.s32 %s70, 1
    %s72 = scalar_select %p69, %s70, %s71
    %p75 = pneg %p69
    %p76 = scmp.eq.s32.totalorder %s8, 1
    %p77 = por %p75, %p76
    %p78 = scmp.ne.s32.totalorder %s70, %s73
    %p79 = scmp.eq.s32.totalorder %s8, 0
    %p80 = por %p78, %p79
    %p81 = scmp.ne.s32.totalorder %s70, %s73
    %p82 = scmp.eq.s32.totalorder %s13, 1
    %p83 = por %p81, %p82
    %p84 = scmp.ne.s32.totalorder %s73, %s74
    %p85 = scmp.eq.s32.totalorder %s13, 0
    %p86 = por %p84, %p85
    %p87 = scmp.ne.s32.totalorder %s73, %s74
    %p88 = scmp.eq.s32.totalorder %s14, 1
    %p89 = por %p87, %p88
    %p91 = scmp.ne.s32.totalorder %s74, %s90
    %p92 = scmp.eq.s32.totalorder %s14, 0
    %p93 = por %p91, %p92
    %p94 = scmp.le.s32.totalorder 1, %s8
    %p95 = scmp.lt.s32.totalorder %s8, 3
    %p96 = pnand %p94, %p95
    %p97 = pneg %p96
    // Predicated region
    $region9: #{mwt_cz2d_forward.35} parent=5 // pred_check
      _
    $region10: #{mwt_cz2d_forward.35} parent=5 // pred_check_branch
      %99 = sbr.rel (%p96) target = $region12
    $region11: #{mwt_cz2d_forward.35} parent=5 // pred_region
      %s100 = ssub.s32 %s8, 1
    $region12: #{mwt_cz2d_forward.35} parent=5 // pred_fallthru
      _
    %p101 = scmp.lt.s32.totalorder %s8, 2
    // Predicated region
    $region13: #{mwt_cz2d_forward.35} parent=5 // pred_check
      %p102 = pneg %p101
    $region14: #{mwt_cz2d_forward.35} parent=5 // pred_check_branch
      %104 = sbr.rel (%p102) target = $region16
    $region15: #{mwt_cz2d_forward.35} parent=5 // pred_region
      // Predicated region
      $region17: #{mwt_cz2d_forward.35} parent=15 // pred_check
        %p105 = pneg %p28
      $region18: #{mwt_cz2d_forward.35} parent=15 // pred_check_branch
        %107 = sbr.rel (%p105) target = $region20
      $region19: #{mwt_cz2d_forward.35} parent=15 // pred_region
        %p108 = scmp.lt.s32.totalorder %s8, 1
        %s109 = scalar_select %p108, %s8, 1
        %s110 = smul.addr %s109, 8
        %s111 = scalar_lea.vmem %s0, %s110
      $region20: #{mwt_cz2d_forward.35} parent=15 // pred_fallthru
        _
      // Predicated region
      $region21: #{mwt_cz2d_forward.35} parent=15 // pred_check
        %p112 = pneg %p54
      $region22: #{mwt_cz2d_forward.35} parent=15 // pred_check_branch
        %114 = sbr.rel (%p112) target = $region24
      $region23: #{mwt_cz2d_forward.35} parent=15 // pred_region
        %p115 = scmp.lt.s32.totalorder %s8, 1
        %s116 = scalar_select %p115, %s8, 1
        %s117 = smul.addr %s116, 3
        %s118 = smul.addr %s117, 8
        %s119 = scalar_lea.vmem %s1, %s118
      $region24: #{mwt_cz2d_forward.35} parent=15 // pred_fallthru
        _
    $region16: #{mwt_cz2d_forward.35} parent=5 // pred_fallthru
      _
    %p120 = scmp.le.s32.totalorder 1, %s8
    %p121 = scmp.lt.s32.totalorder %s8, 3
    %p122 = pnand %p120, %p121
    %p123 = pneg %p122
    // Predicated region
    $region25: #{mwt_cz2d_forward.35} parent=5 // pred_check
      _
    $region26: #{mwt_cz2d_forward.35} parent=5 // pred_check_branch
      %125 = sbr.rel (%p122) target = $region28
    $region27: #{mwt_cz2d_forward.35} parent=5 // pred_region
      %s126 = ssub.s32 %s8, 1
      %p127 = scmp.lt.s32.totalorder %s13, 1
      %s128 = scalar_select %p127, %s13, 1
      %s129 = smul.addr %s128, 8
      %s130 = scalar_lea.vmem %s0, %s129
      %p131 = pneg %p34
      %p132 = pneg %p31
      %p133 = scmp.lt.s32.totalorder %s13, 1
      %s134 = scalar_select %p133, %s13, 1
      %s135 = smul.addr %s134, 3
      %s136 = smul.addr %s135, 8
      %s137 = scalar_lea.vmem %s1, %s136
      %p138 = pneg %p60
      %p139 = pneg %p57
      %p140 = pneg %p86
      %p141 = pneg %p83
      %p142 = scmp.lt.s32.totalorder %s13, 1
      %s143 = scalar_select %p142, %s13, 1
      %s144 = smul.addr %s143, 8
      %s145 = scalar_lea.vmem %s2, %s144
      %p146 = scmp.lt.s32.totalorder %s13, 1
      %s147 = scalar_select %p146, %s13, 1
      %s148 = smul.addr %s147, 8
      %s149 = scalar_lea.vmem %s0, %s148
      %p150 = scmp.lt.s32.totalorder %s13, 1
      %s151 = scalar_select %p150, %s13, 1
      %s152 = smul.addr %s151, 3
      %s153 = smul.addr %s152, 8
      %s154 = scalar_lea.vmem %s1, %s153
      %p155 = scmp.lt.s32.totalorder %s13, 1
      %s156 = scalar_select %p155, %s13, 1
      %s157 = smul.addr %s156, 8
      %s158 = scalar_lea.vmem %s2, %s157
      %v159 = vld [vmem:[%s149] sm:$0xff]
      %v160 = vld [vmem:[%s154] sm:$0xff]
      %v161 = vld [vmem:[%s154 + $0x8] sm:$0xff]
      %v162 = vld [vmem:[%s154 + $0x10] sm:$0x3]
      %vm163 = vcmask 146432
      %v165 = vsel %vm163, %v159, 0
      %vm167 = vcmask 1041408
      %v169 = vsel %vm167, %v162, 0
      %171 = vmatprep.subr.mxu0 0.0
      %172 = vmatpush1.msra.mxu0 %v160
      %173 = vmatprep.subr.mxu0 0.0
      %174 = vmatpush1.msra.mxu0 %v161
      %175 = vmatprep.subr.mxu0 0.0
      %176 = vmatpush1.msra.mxu0 %v169
      %177 = vmatprep.subr.mxu0 0.0
      %178 = vmatpush1.msra.mxu0 0.0
      %179 = vmatprep.subr.mxu0 0.0
      %180 = vmatpush1.msra.mxu0 0.0
      %181 = vmatprep.subr.mxu0 0.0
      %182 = vmatpush1.msra.mxu0 0.0
      %183 = vmatprep.subr.mxu0 0.0
      %184 = vmatpush1.msra.mxu0 0.0
      %185 = vmatprep.subr.mxu0 0.0
      %186 = vmatpush1.msra.mxu0 0.0
      %187 = vmatprep.subr.mxu0 0.0
      %188 = vmatpush1.msra.mxu0 0.0
      %189 = vmatprep.subr.mxu0 0.0
      %190 = vmatpush1.msra.mxu0 0.0
      %191 = vmatprep.subr.mxu0 0.0
      %192 = vmatpush1.msra.mxu0 0.0
      %193 = vmatprep.subr.mxu0 0.0
      %194 = vmatpush1.msra.mxu0 0.0
      %195 = vmatprep.subr.mxu0 0.0
      %196 = vmatpush1.msra.mxu0 0.0
      %197 = vmatprep.subr.mxu0 0.0
      %198 = vmatpush1.msra.mxu0 0.0
      %199 = vmatprep.subr.mxu0 0.0
      %200 = vmatpush1.msra.mxu0 0.0
      %201 = vmatprep.subr.mxu0 0.0
      %202 = vmatpush1.msra.mxu0 0.0
      %203 = vmatprep.subr.mxu0 0.0
      %204 = vmatpush1.msra.mxu0 0.0
      %205 = vmatprep.subr.mxu0 0.0
      %206 = vmatpush1.msra.mxu0 0.0
      %207 = vmatprep.subr.mxu0 0.0
      %208 = vmatpush1.msra.mxu0 0.0
      %209 = vmatprep.subr.mxu0 0.0
      %210 = vmatpush1.msra.mxu0 0.0
      %211 = vmatprep.subr.mxu0 0.0
      %212 = vmatpush1.msra.mxu0 0.0
      %213 = vmatprep.subr.mxu0 0.0
      %214 = vmatpush1.msra.mxu0 0.0
      %215 = vmatprep.subr.mxu0 0.0
      %216 = vmatpush1.msra.mxu0 0.0
      %217 = vmatprep.subr.mxu0 0.0
      %218 = vmatpush1.msra.mxu0 0.0
      %219 = vmatprep.subr.mxu0 0.0
      %220 = vmatpush1.msra.mxu0 0.0
      %221 = vmatprep.subr.mxu0 0.0
      %222 = vmatpush1.msra.mxu0 0.0
      %223 = vmatprep.subr.mxu0 0.0
      %224 = vmatpush1.msra.mxu0 0.0
      %225 = vmatprep.subr.mxu0 0.0
      %226 = vmatpush1.msra.mxu0 0.0
      %227 = vmatprep.subr.mxu0 0.0
      %228 = vmatpush1.msra.mxu0 0.0
      %229 = vmatprep.subr.mxu0 0.0
      %230 = vmatpush1.msra.mxu0 0.0
      %231 = vmatprep.subr.mxu0 0.0
      %232 = vmatpush1.msra.mxu0 0.0
      %233 = vmatprep.subr.mxu0 0.0
      %234 = vmatpush1.msra.mxu0 0.0
      %235 = vmatprep.mubr.f32.mxu0 0.0
      %236 = vmatmul.mubr.f32.gmra.mrb[0].mxu0 %v165
      %v237 = vpop.f32.mrb[0].mxu0
      %v238 = vadd.f32 0.0, %v237
      %v239 = vpop.f32.mrb[0].mxu0
      %240 = vdwg.mxu0
      %241 = vst.msk [vmem:[%s158] sm:$0xff] %vm163, %v238
      %p242 = scmp.lt.s32.totalorder %s13, 1
      %s243 = scalar_select %p242, %s13, 1
      %s244 = smul.addr %s243, 8
      %s245 = scalar_lea.vmem %s2, %s244
      // Predicated region
      $region29: #{mwt_cz2d_forward.35} parent=27 // pred_check
        %p246 = pneg %p83
      $region30: #{mwt_cz2d_forward.35} parent=27 // pred_check_branch
        %248 = sbr.rel (%p246) target = $region32
      $region31: #{mwt_cz2d_forward.35} parent=27 // pred_region
        _
      $region32: #{mwt_cz2d_forward.35} parent=27 // pred_fallthru
        _
    $region28: #{mwt_cz2d_forward.35} parent=5 // pred_fallthru
      _
    %p249 = scmp.le.s32.totalorder 2, %s8
    // Predicated region
    $region33: #{mwt_cz2d_forward.35} parent=5 // pred_check
      %p250 = pneg %p249
    $region34: #{mwt_cz2d_forward.35} parent=5 // pred_check_branch
      %252 = sbr.rel (%p250) target = $region36
    $region35: #{mwt_cz2d_forward.35} parent=5 // pred_region
      %s253 = ssub.s32 %s8, 2
      // Predicated region
      $region37: #{mwt_cz2d_forward.35} parent=35 // pred_check
        %p254 = pneg %p89
      $region38: #{mwt_cz2d_forward.35} parent=35 // pred_check_branch
        %256 = sbr.rel (%p254) target = $region40
      $region39: #{mwt_cz2d_forward.35} parent=35 // pred_region
        %p257 = scmp.lt.s32.totalorder %s14, 1
        %s258 = scalar_select %p257, %s14, 1
        %s259 = smul.addr %s258, 8
        %s260 = scalar_lea.vmem %s2, %s259
      $region40: #{mwt_cz2d_forward.35} parent=35 // pred_fallthru
        _
    $region36: #{mwt_cz2d_forward.35} parent=5 // pred_fallthru
      _
  $region6: #{mwt_cz2d_forward.35} parent=0 // loop_footer
    %s12 = sadd.s32 1, %s8
  $region7: #{mwt_cz2d_forward.35} parent=0 // loop_footer_branch
    %7 = sbr.rel target = $region3
  $region8: #{mwt_cz2d_forward.35} parent=0 // loop_exit
    _

// kernel: mwt_cz2d_forward.33
$region0: #{mwt_cz2d_forward.33}
  #allocation0 [shape = 'u32[]', space=smem, size = 0x4, offset = 0x4, fixed_abs, tag = 'smem constant byte address 0x4 - core index']
  #allocation1 [shape = 'u32[144,128]{1,0:T(1,128)}', space=vmem, size = 0x12000, scoped, tag = 'internal scratch']
  %s0 = inlined_call_operand.vmem [shape: f32[8,9], index: 0, kind: input, shape index: {}]
  %s1 = inlined_call_operand.vmem [shape: f32[9,9], index: 1, kind: input, shape index: {}]
  %s2 = inlined_call_operand.vmem [shape: f32[1,9], index: 2, kind: input, shape index: {}]
  %s3 = inlined_call_operand.vmem [shape: f32[8,9], index: 3, kind: output, shape index: {}]
  %s4 = sld [smem:[#allocation0]]
  $region22: #{mwt_cz2d_forward.33} parent=0
    _
  %s6 = ssub.s32 1, %s4
  %s7 = scalar_select 0, %s6, %s4
  // Predicated region
  $region2: #{mwt_cz2d_forward.33} parent=0 // pred_check
    _
  $region3: #{mwt_cz2d_forward.33} parent=0 // pred_check_branch
    %9 = sbr.rel (0) target = $region5
  $region4: #{mwt_cz2d_forward.33} parent=0 // pred_region
    _
  $region5: #{mwt_cz2d_forward.33} parent=0 // pred_fallthru
    _
  // Predicated region
  $region6: #{mwt_cz2d_forward.33} parent=0 // pred_check
    _
  $region7: #{mwt_cz2d_forward.33} parent=0 // pred_check_branch
    %11 = sbr.rel (0) target = $region9
  $region8: #{mwt_cz2d_forward.33} parent=0 // pred_region
    _
  $region9: #{mwt_cz2d_forward.33} parent=0 // pred_fallthru
    _
  // Predicated region
  $region10: #{mwt_cz2d_forward.33} parent=0 // pred_check
    _
  $region11: #{mwt_cz2d_forward.33} parent=0 // pred_check_branch
    %13 = sbr.rel (0) target = $region13
  $region12: #{mwt_cz2d_forward.33} parent=0 // pred_region
    _
  $region13: #{mwt_cz2d_forward.33} parent=0 // pred_fallthru
    _
  %v14 = vld [vmem:[%s0] sm:$0xff]
  %v15 = vld [vmem:[%s1] sm:$0xff]
  %v16 = vld [vmem:[%s1 + $0x8] sm:$0x1]
  %v17 = vld [vmem:[%s2] sm:$0x1]
  %v19 = vlaneseq
  %v20 = vshrl.u32 %v19, 7
  %v21 = vsub.s32 0, %v20
  %v22 = vrot.slane %v17, %v21
  %vm24 = vcmask 72704
  %v26 = vsel %vm24, %v14, 0
  %vm28 = vcmask 1040384
  %v30 = vsel %vm28, %v16, 0
  %32 = vmatprep.subr.mxu0 0.0
  %33 = vmatpush1.msra.mxu0 %v15
  %34 = vmatprep.subr.mxu0 0.0
  %35 = vmatpush1.msra.mxu0 %v30
  %36 = vmatprep.subr.mxu0 0.0
  %37 = vmatpush1.msra.mxu0 0.0
  %38 = vmatprep.subr.mxu0 0.0
  %39 = vmatpush1.msra.mxu0 0.0
  %40 = vmatprep.subr.mxu0 0.0
  %41 = vmatpush1.msra.mxu0 0.0
  %42 = vmatprep.subr.mxu0 0.0
  %43 = vmatpush1.msra.mxu0 0.0
  %44 = vmatprep.subr.mxu0 0.0
  %45 = vmatpush1.msra.mxu0 0.0
  %46 = vmatprep.subr.mxu0 0.0
  %47 = vmatpush1.msra.mxu0 0.0
  %48 = vmatprep.subr.mxu0 0.0
  %49 = vmatpush1.msra.mxu0 0.0
  %50 = vmatprep.subr.mxu0 0.0
  %51 = vmatpush1.msra.mxu0 0.0
  %52 = vmatprep.subr.mxu0 0.0
  %53 = vmatpush1.msra.mxu0 0.0
  %54 = vmatprep.subr.mxu0 0.0
  %55 = vmatpush1.msra.mxu0 0.0
  %56 = vmatprep.subr.mxu0 0.0
  %57 = vmatpush1.msra.mxu0 0.0
  %58 = vmatprep.subr.mxu0 0.0
  %59 = vmatpush1.msra.mxu0 0.0
  %60 = vmatprep.subr.mxu0 0.0
  %61 = vmatpush1.msra.mxu0 0.0
  %62 = vmatprep.subr.mxu0 0.0
  %63 = vmatpush1.msra.mxu0 0.0
  %64 = vmatprep.subr.mxu0 0.0
  %65 = vmatpush1.msra.mxu0 0.0
  %66 = vmatprep.subr.mxu0 0.0
  %67 = vmatpush1.msra.mxu0 0.0
  %68 = vmatprep.subr.mxu0 0.0
  %69 = vmatpush1.msra.mxu0 0.0
  %70 = vmatprep.subr.mxu0 0.0
  %71 = vmatpush1.msra.mxu0 0.0
  %72 = vmatprep.subr.mxu0 0.0
  %73 = vmatpush1.msra.mxu0 0.0
  %74 = vmatprep.subr.mxu0 0.0
  %75 = vmatpush1.msra.mxu0 0.0
  %76 = vmatprep.subr.mxu0 0.0
  %77 = vmatpush1.msra.mxu0 0.0
  %78 = vmatprep.subr.mxu0 0.0
  %79 = vmatpush1.msra.mxu0 0.0
  %80 = vmatprep.subr.mxu0 0.0
  %81 = vmatpush1.msra.mxu0 0.0
  %82 = vmatprep.subr.mxu0 0.0
  %83 = vmatpush1.msra.mxu0 0.0
  %84 = vmatprep.subr.mxu0 0.0
  %85 = vmatpush1.msra.mxu0 0.0
  %86 = vmatprep.subr.mxu0 0.0
  %87 = vmatpush1.msra.mxu0 0.0
  %88 = vmatprep.subr.mxu0 0.0
  %89 = vmatpush1.msra.mxu0 0.0
  %90 = vmatprep.subr.mxu0 0.0
  %91 = vmatpush1.msra.mxu0 0.0
  %92 = vmatprep.subr.mxu0 0.0
  %93 = vmatpush1.msra.mxu0 0.0
  %94 = vmatprep.subr.mxu0 0.0
  %95 = vmatpush1.msra.mxu0 0.0
  %96 = vmatprep.mubr.f32.mxu0 0.0
  %97 = vmatmul.mubr.f32.gmra.mrb[0].mxu0 %v26
  %v98 = vpop.f32.mrb[0].mxu0
  %v99 = vadd.f32 %v22, %v98
  %v100 = vpop.f32.mrb[0].mxu0
  %101 = vdwg.mxu0
  %102 = vst.msk [vmem:[%s3] sm:$0xff] %vm24, %v99
  // Predicated region
  $region14: #{mwt_cz2d_forward.33} parent=0 // pred_check
    _
  $region15: #{mwt_cz2d_forward.33} parent=0 // pred_check_branch
    %104 = sbr.rel (0) target = $region17
  $region16: #{mwt_cz2d_forward.33} parent=0 // pred_region
    _
  $region17: #{mwt_cz2d_forward.33} parent=0 // pred_fallthru
    _
  // Predicated region
  $region18: #{mwt_cz2d_forward.33} parent=0 // pred_check
    _
  $region19: #{mwt_cz2d_forward.33} parent=0 // pred_check_branch
    %106 = sbr.rel (0) target = $region21
  $region20: #{mwt_cz2d_forward.33} parent=0 // pred_region
    _
  $region21: #{mwt_cz2d_forward.33} parent=0 // pred_fallthru
    _

// kernel: mwt_cz2d_forward.49
$region0: #{mwt_cz2d_forward.49}
  #allocation0 [shape = 'u32[]', space=smem, size = 0x4, offset = 0x4, fixed_abs, tag = 'smem constant byte address 0x4 - core index']
  #allocation1 [shape = 'u32[144,128]{1,0:T(1,128)}', space=vmem, size = 0x12000, scoped, tag = 'internal scratch']
  %s0 = inlined_call_operand.vmem [shape: f32[32,18], index: 0, kind: input, shape index: {}]
  %s1 = inlined_call_operand.vmem [shape: f32[18,36], index: 1, kind: input, shape index: {}]
  %s2 = inlined_call_operand.vmem [shape: f32[1,36], index: 2, kind: input, shape index: {}]
  %s3 = inlined_call_operand.vmem [shape: f32[32,36], index: 3, kind: output, shape index: {}]
  %s4 = sld [smem:[#allocation0]]
  $region45: #{mwt_cz2d_forward.49} parent=0
    _
  %s6 = ssub.s32 1, %s4
  %s7 = scalar_select 0, %s6, %s4
  loop: start=0, step=1, limit=4
  $region2: #{mwt_cz2d_forward.49} parent=0 // loop_pre_header
    _
  $region3: #{mwt_cz2d_forward.49} parent=0 // loop_header
    %s9 = sphi 0, %s13
    %p10 = scmp.ge.s32.totalorder %s9, 4
    %s19 = sphi 0, %s21
    %s22 = sphi 0, %s19
    %s23 = sphi 0, %s22
    %s39 = sphi 0, %s23
    %s43 = sphi 0, %s43
    %s45 = sphi 0, %s43
    %s46 = sphi 0, %s45
    %s60 = sphi 0, %s46
    %s64 = sphi 0, %s64
    %s66 = sphi 0, %s64
    %s67 = sphi 0, %s66
    %s81 = sphi 0, %s67
    %s87 = sphi 0, %s89
    %s90 = sphi 0, %s87
    %s91 = sphi 0, %s90
    %s107 = sphi 0, %s91
  $region4: #{mwt_cz2d_forward.49} parent=0 // loop_header_branch
    %12 = sbr.rel (%p10) target = $region8
  $region5: #{mwt_cz2d_forward.49} parent=0 // loop_body
    %s14 = ssub.s32 %s9, 1
    %s15 = ssub.s32 %s9, 2
    %s16 = sadd.s32 %s9, 1
    %s17 = ssub.s32 %s9, %s16
    %p18 = scmp.eq.s32.totalorder %s17, 0
    %s20 = sadd.s32 %s19, 1
    %s21 = scalar_select %p18, %s19, %s20
    %p24 = pneg %p18
    %p25 = scmp.eq.s32.totalorder %s9, 1
    %p26 = por %p24, %p25
    %p27 = scmp.ne.s32.totalorder %s19, %s22
    %p28 = scmp.eq.s32.totalorder %s9, 0
    %p29 = por %p27, %p28
    %p30 = scmp.ne.s32.totalorder %s19, %s22
    %p31 = scmp.eq.s32.totalorder %s14, 1
    %p32 = por %p30, %p31
    %p33 = scmp.ne.s32.totalorder %s22, %s23
    %p34 = scmp.eq.s32.totalorder %s14, 0
    %p35 = por %p33, %p34
    %p36 = scmp.ne.s32.totalorder %s22, %s23
    %p37 = scmp.eq.s32.totalorder %s15, 1
    %p38 = por %p36, %p37
    %p40 = scmp.ne.s32.totalorder %s23, %s39
    %p41 = scmp.eq.s32.totalorder %s15, 0
    %p42 = por %p40, %p41
    %s44 = sadd.s32 %s43, 1
    %p47 = scmp.eq.s32.totalorder %s9, 1
    %p48 = scmp.ne.s32.totalorder %s43, %s45
    %p49 = scmp.eq.s32.totalorder %s9, 0
    %p50 = por %p48, %p49
    %p51 = scmp.ne.s32.totalorder %s43, %s45
    %p52 = scmp.eq.s32.totalorder %s14, 1
    %p53 = por %p51, %p52
    %p54 = scmp.ne.s32.totalorder %s45, %s46
    %p55 = scmp.eq.s32.totalorder %s14, 0
    %p56 = por %p54, %p55
    %p57 = scmp.ne.s32.totalorder %s45, %s46
    %p58 = scmp.eq.s32.totalorder %s15, 1
    %p59 = por %p57, %p58
    %p61 = scmp.ne.s32.totalorder %s46, %s60
    %p62 = scmp.eq.s32.totalorder %s15, 0
    %p63 = por %p61, %p62
    %s65 = sadd.s32 %s64, 1
    %p68 = scmp.eq.s32.totalorder %s9, 1
    %p69 = scmp.ne.s32.totalorder %s64, %s66
    %p70 = scmp.eq.s32.totalorder %s9, 0
    %p71 = por %p69, %p70
    %p72 = scmp.ne.s32.totalorder %s64, %s66
    %p73 = scmp.eq.s32.totalorder %s14, 1
    %p74 = por %p72, %p73
    %p75 = scmp.ne.s32.totalorder %s66, %s67
    %p76 = scmp.eq.s32.totalorder %s14, 0
    %p77 = por %p75, %p76
    %p78 = scmp.ne.s32.totalorder %s66, %s67
    %p79 = scmp.eq.s32.totalorder %s15, 1
    %p80 = por %p78, %p79
    %p82 = scmp.ne.s32.totalorder %s67, %s81
    %p83 = scmp.eq.s32.totalorder %s15, 0
    %p84 = por %p82, %p83
    %s85 = ssub.s32 %s9, %s16
    %p86 = scmp.eq.s32.totalorder %s85, 0
    %s88 = sadd.s32 %s87, 1
    %s89 = scalar_select %p86, %s87, %s88
    %p92 = pneg %p86
    %p93 = scmp.eq.s32.totalorder %s9, 1
    %p94 = por %p92, %p93
    %p95 = scmp.ne.s32.totalorder %s87, %s90
    %p96 = scmp.eq.s32.totalorder %s9, 0
    %p97 = por %p95, %p96
    %p98 = scmp.ne.s32.totalorder %s87, %s90
    %p99 = scmp.eq.s32.totalorder %s14, 1
    %p100 = por %p98, %p99
    %p101 = scmp.ne.s32.totalorder %s90, %s91
    %p102 = scmp.eq.s32.totalorder %s14, 0
    %p103 = por %p101, %p102
    %p104 = scmp.ne.s32.totalorder %s90, %s91
    %p105 = scmp.eq.s32.totalorder %s15, 1
    %p106 = por %p104, %p105
    %p108 = scmp.ne.s32.totalorder %s91, %s107
    %p109 = scmp.eq.s32.totalorder %s15, 0
    %p110 = por %p108, %p109
    %p111 = scmp.le.s32.totalorder 1, %s9
    %p112 = scmp.lt.s32.totalorder %s9, 3
    %p113 = pnand %p111, %p112
    %p114 = pneg %p113
    // Predicated region
    $region9: #{mwt_cz2d_forward.49} parent=5 // pred_check
      _
    $region10: #{mwt_cz2d_forward.49} parent=5 // pred_check_branch
      %116 = sbr.rel (%p113) target = $region12
    $region11: #{mwt_cz2d_forward.49} parent=5 // pred_region
      %s117 = ssub.s32 %s9, 1
      // Predicated region
      $region13: #{mwt_cz2d_forward.49} parent=11 // pred_check
        %p118 = pneg %p56
      $region14: #{mwt_cz2d_forward.49} parent=11 // pred_check_branch
        %120 = sbr.rel (%p118) target = $region16
      $region15: #{mwt_cz2d_forward.49} parent=11 // pred_region
        _
      $region16: #{mwt_cz2d_forward.49} parent=11 // pred_fallthru
        _
      // Predicated region
      $region17: #{mwt_cz2d_forward.49} parent=11 // pred_check
        %p121 = pneg %p77
      $region18: #{mwt_cz2d_forward.49} parent=11 // pred_check_branch
        %123 = sbr.rel (%p121) target = $region20
      $region19: #{mwt_cz2d_forward.49} parent=11 // pred_region
        _
      $region20: #{mwt_cz2d_forward.49} parent=11 // pred_fallthru
        _
    $region12: #{mwt_cz2d_forward.49} parent=5 // pred_fallthru
      _
    %p124 = scmp.lt.s32.totalorder %s9, 2
    // Predicated region
    $region21: #{mwt_cz2d_forward.49} parent=5 // pred_check
      %p125 = pneg %p124
    $region22: #{mwt_cz2d_forward.49} parent=5 // pred_check_branch
      %127 = sbr.rel (%p125) target = $region24
    $region23: #{mwt_cz2d_forward.49} parent=5 // pred_region
      // Predicated region
      $region25: #{mwt_cz2d_forward.49} parent=23 // pred_check
        %p128 = pneg %p29
      $region26: #{mwt_cz2d_forward.49} parent=23 // pred_check_branch
        %130 = sbr.rel (%p128) target = $region28
      $region27: #{mwt_cz2d_forward.49} parent=23 // pred_region
        %s131 = smul.u32 2, %s9
        %p132 = scmp.lt.s32.totalorder %s131, 3
        %s133 = scalar_select %p132, %s131, 3
        %s134 = smul.addr %s133, 8
        %s135 = scalar_lea.vmem %s0, %s134
        %s136 = smul.u32 2, %s9
      $region28: #{mwt_cz2d_forward.49} parent=23 // pred_fallthru
        _
    $region24: #{mwt_cz2d_forward.49} parent=5 // pred_fallthru
      _
    %p137 = scmp.le.s32.totalorder 1, %s9
    %p138 = scmp.lt.s32.totalorder %s9, 3
    %p139 = pnand %p137, %p138
    %p140 = pneg %p139
    // Predicated region
    $region29: #{mwt_cz2d_forward.49} parent=5 // pred_check
      _
    $region30: #{mwt_cz2d_forward.49} parent=5 // pred_check_branch
      %142 = sbr.rel (%p139) target = $region32
    $region31: #{mwt_cz2d_forward.49} parent=5 // pred_region
      %s143 = ssub.s32 %s9, 1
      %s144 = smul.u32 2, %s14
      %p145 = scmp.lt.s32.totalorder %s144, 3
      %s146 = scalar_select %p145, %s144, 3
      %s147 = smul.addr %s146, 8
      %s148 = scalar_lea.vmem %s0, %s147
      %p149 = pneg %p35
      %p150 = pneg %p32
      %p151 = pneg %p56
      %p152 = pneg %p53
      %p153 = pneg %p77
      %p154 = pneg %p74
      %p155 = pneg %p103
      %p156 = pneg %p100
      %s157 = smul.u32 2, %s14
      %p158 = scmp.lt.s32.totalorder %s157, 3
      %s159 = scalar_select %p158, %s157, 3
      %s160 = smul.addr %s159, 8
      %s161 = scalar_lea.vmem %s3, %s160
      %s162 = smul.u32 2, %s14
      %p163 = scmp.lt.s32.totalorder %s162, 3
      %s164 = scalar_select %p163, %s162, 3
      %s165 = smul.addr %s164, 8
      %s166 = scalar_lea.vmem %s0, %s165
      %s167 = smul.u32 2, %s14
      %s168 = smul.u32 2, %s14
      %p169 = scmp.lt.s32.totalorder %s168, 3
      %s170 = scalar_select %p169, %s168, 3
      %s171 = smul.addr %s170, 8
      %s172 = scalar_lea.vmem %s3, %s171
      %s173 = smul.u32 2, %s14
      %v174 = vld [vmem:[%s166] sm:$0xff]
      %v175 = vld [vmem:[%s166 + $0x8] sm:$0xff]
      %v176 = vld [vmem:[%s1] sm:$0xff]
      %v177 = vld [vmem:[%s1 + $0x8] sm:$0xff]
      %v178 = vld [vmem:[%s1 + $0x10] sm:$0x3]
      %v179 = vld [vmem:[%s2] sm:$0x1]
      %v181 = vlaneseq
      %v182 = vshrl.u32 %v181, 7
      %v183 = vsub.s32 0, %v182
      %v184 = vrot.slane %v179, %v183
      %vm186 = vcmask 146432
      %v188 = vsel %vm186, %v174, 0
      %v191 = vsel %vm186, %v175, 0
      %vm193 = vcmask 1041408
      %v195 = vsel %vm193, %v178, 0
      %197 = vmatprep.subr.mxu0 0.0
      %198 = vmatpush1.msra.mxu0 %v176
      %199 = vmatprep.subr.mxu0 0.0
      %200 = vmatpush1.msra.mxu0 %v177
      %201 = vmatprep.subr.mxu0 0.0
      %202 = vmatpush1.msra.mxu0 %v195
      %203 = vmatprep.subr.mxu0 0.0
      %204 = vmatpush1.msra.mxu0 0.0
      %205 = vmatprep.subr.mxu0 0.0
      %206 = vmatpush1.msra.mxu0 0.0
      %207 = vmatprep.subr.mxu0 0.0
      %208 = vmatpush1.msra.mxu0 0.0
      %209 = vmatprep.subr.mxu0 0.0
      %210 = vmatpush1.msra.mxu0 0.0
      %211 = vmatprep.subr.mxu0 0.0
      %212 = vmatpush1.msra.mxu0 0.0
      %213 = vmatprep.subr.mxu0 0.0
      %214 = vmatpush1.msra.mxu0 0.0
      %215 = vmatprep.subr.mxu0 0.0
      %216 = vmatpush1.msra.mxu0 0.0
      %217 = vmatprep.subr.mxu0 0.0
      %218 = vmatpush1.msra.mxu0 0.0
      %219 = vmatprep.subr.mxu0 0.0
      %220 = vmatpush1.msra.mxu0 0.0
      %221 = vmatprep.subr.mxu0 0.0
      %222 = vmatpush1.msra.mxu0 0.0
      %223 = vmatprep.subr.mxu0 0.0
      %224 = vmatpush1.msra.mxu0 0.0
      %225 = vmatprep.subr.mxu0 0.0
      %226 = vmatpush1.msra.mxu0 0.0
      %227 = vmatprep.subr.mxu0 0.0
      %228 = vmatpush1.msra.mxu0 0.0
      %229 = vmatprep.subr.mxu0 0.0
      %230 = vmatpush1.msra.mxu0 0.0
      %231 = vmatprep.subr.mxu0 0.0
      %232 = vmatpush1.msra.mxu0 0.0
      %233 = vmatprep.subr.mxu0 0.0
      %234 = vmatpush1.msra.mxu0 0.0
      %235 = vmatprep.subr.mxu0 0.0
      %236 = vmatpush1.msra.mxu0 0.0
      %237 = vmatprep.subr.mxu0 0.0
      %238 = vmatpush1.msra.mxu0 0.0
      %239 = vmatprep.subr.mxu0 0.0
      %240 = vmatpush1.msra.mxu0 0.0
      %241 = vmatprep.subr.mxu0 0.0
      %242 = vmatpush1.msra.mxu0 0.0
      %243 = vmatprep.subr.mxu0 0.0
      %244 = vmatpush1.msra.mxu0 0.0
      %245 = vmatprep.subr.mxu0 0.0
      %246 = vmatpush1.msra.mxu0 0.0
      %247 = vmatprep.subr.mxu0 0.0
      %248 = vmatpush1.msra.mxu0 0.0
      %249 = vmatprep.subr.mxu0 0.0
      %250 = vmatpush1.msra.mxu0 0.0
      %251 = vmatprep.subr.mxu0 0.0
      %252 = vmatpush1.msra.mxu0 0.0
      %253 = vmatprep.subr.mxu0 0.0
      %254 = vmatpush1.msra.mxu0 0.0
      %255 = vmatprep.subr.mxu0 0.0
      %256 = vmatpush1.msra.mxu0 0.0
      %257 = vmatprep.subr.mxu0 0.0
      %258 = vmatpush1.msra.mxu0 0.0
      %259 = vmatprep.subr.mxu0 0.0
      %260 = vmatpush1.msra.mxu0 0.0
      %261 = vmatprep.mubr.f32.mxu0 0.0
      %262 = vmatmul.mubr.f32.gmra.mrb[0].mxu0 %v188
      %v263 = vpop.f32.mrb[0].mxu0
      %v264 = vadd.f32 %v184, %v263
      %v265 = vpop.f32.mrb[0].mxu0
      %266 = vmatprep.mubr.f32.mxu0 0.0
      %267 = vmatmul.mubr.f32.gmra.mrb[0].mxu0 %v191
      %v268 = vpop.f32.mrb[0].mxu0
      %v269 = vadd.f32 %v184, %v268
      %v270 = vpop.f32.mrb[0].mxu0
      %271 = vdwg.mxu0
      %vm272 = vcmask 293888
      %273 = vst.msk [vmem:[%s172] sm:$0xff] %vm272, %v264
      %274 = vst.msk [vmem:[%s172 + $0x8] sm:$0xff] %vm272, %v269
      %s275 = smul.u32 2, %s14
      %p276 = scmp.lt.s32.totalorder %s275, 3
      %s277 = scalar_select %p276, %s275, 3
      %s278 = smul.addr %s277, 8
      %s279 = scalar_lea.vmem %s3, %s278
      // Predicated region
      $region33: #{mwt_cz2d_forward.49} parent=31 // pred_check
        %p280 = pneg %p100
      $region34: #{mwt_cz2d_forward.49} parent=31 // pred_check_branch
        %282 = sbr.rel (%p280) target = $region36
      $region35: #{mwt_cz2d_forward.49} parent=31 // pred_region
        %s283 = smul.u32 2, %s14
      $region36: #{mwt_cz2d_forward.49} parent=31 // pred_fallthru
        _
    $region32: #{mwt_cz2d_forward.49} parent=5 // pred_fallthru
      _
    %p284 = scmp.le.s32.totalorder 2, %s9
    // Predicated region
    $region37: #{mwt_cz2d_forward.49} parent=5 // pred_check
      %p285 = pneg %p284
    $region38: #{mwt_cz2d_forward.49} parent=5 // pred_check_branch
      %287 = sbr.rel (%p285) target = $region40
    $region39: #{mwt_cz2d_forward.49} parent=5 // pred_region
      %s288 = ssub.s32 %s9, 2
      // Predicated region
      $region41: #{mwt_cz2d_forward.49} parent=39 // pred_check
        %p289 = pneg %p106
      $region42: #{mwt_cz2d_forward.49} parent=39 // pred_check_branch
        %291 = sbr.rel (%p289) target = $region44
      $region43: #{mwt_cz2d_forward.49} parent=39 // pred_region
        %s292 = smul.u32 2, %s15
        %p293 = scmp.lt.s32.totalorder %s292, 3
        %s294 = scalar_select %p293, %s292, 3
        %s295 = smul.addr %s294, 8
        %s296 = scalar_lea.vmem %s3, %s295
      $region44: #{mwt_cz2d_forward.49} parent=39 // pred_fallthru
        _
    $region40: #{mwt_cz2d_forward.49} parent=5 // pred_fallthru
      _
  $region6: #{mwt_cz2d_forward.49} parent=0 // loop_footer
    %s13 = sadd.s32 1, %s9
  $region7: #{mwt_cz2d_forward.49} parent=0 // loop_footer_branch
    %8 = sbr.rel target = $region3
  $region8: #{mwt_cz2d_forward.49} parent=0 // loop_exit
    _

// kernel: mwt_cz2d_forward.38
$region0: #{mwt_cz2d_forward.38}
  #allocation0 [shape = 'u32[]', space=smem, size = 0x4, offset = 0x4, fixed_abs, tag = 'smem constant byte address 0x4 - core index']
  #allocation1 [shape = 'u32[144,128]{1,0:T(1,128)}', space=vmem, size = 0x12000, scoped, tag = 'internal scratch']
  %s0 = inlined_call_operand.vmem [shape: f32[8,18], index: 0, kind: input, shape index: {}]
  %s1 = inlined_call_operand.vmem [shape: f32[18,36], index: 1, kind: input, shape index: {}]
  %s2 = inlined_call_operand.vmem [shape: f32[1,36], index: 2, kind: input, shape index: {}]
  %s3 = inlined_call_operand.vmem [shape: f32[8,36], index: 3, kind: output, shape index: {}]
  %s4 = sld [smem:[#allocation0]]
  $region22: #{mwt_cz2d_forward.38} parent=0
    _
  %s6 = ssub.s32 1, %s4
  %s7 = scalar_select 0, %s6, %s4
  // Predicated region
  $region2: #{mwt_cz2d_forward.38} parent=0 // pred_check
    _
  $region3: #{mwt_cz2d_forward.38} parent=0 // pred_check_branch
    %9 = sbr.rel (0) target = $region5
  $region4: #{mwt_cz2d_forward.38} parent=0 // pred_region
    _
  $region5: #{mwt_cz2d_forward.38} parent=0 // pred_fallthru
    _
  // Predicated region
  $region6: #{mwt_cz2d_forward.38} parent=0 // pred_check
    _
  $region7: #{mwt_cz2d_forward.38} parent=0 // pred_check_branch
    %11 = sbr.rel (0) target = $region9
  $region8: #{mwt_cz2d_forward.38} parent=0 // pred_region
    _
  $region9: #{mwt_cz2d_forward.38} parent=0 // pred_fallthru
    _
  // Predicated region
  $region10: #{mwt_cz2d_forward.38} parent=0 // pred_check
    _
  $region11: #{mwt_cz2d_forward.38} parent=0 // pred_check_branch
    %13 = sbr.rel (0) target = $region13
  $region12: #{mwt_cz2d_forward.38} parent=0 // pred_region
    _
  $region13: #{mwt_cz2d_forward.38} parent=0 // pred_fallthru
    _
  %v14 = vld [vmem:[%s0] sm:$0xff]
  %v15 = vld [vmem:[%s1] sm:$0xff]
  %v16 = vld [vmem:[%s1 + $0x8] sm:$0xff]
  %v17 = vld [vmem:[%s1 + $0x10] sm:$0x3]
  %v18 = vld [vmem:[%s2] sm:$0x1]
  %v20 = vlaneseq
  %v21 = vshrl.u32 %v20, 7
  %v22 = vsub.s32 0, %v21
  %v23 = vrot.slane %v18, %v22
  %vm25 = vcmask 146432
  %v27 = vsel %vm25, %v14, 0
  %vm29 = vcmask 1041408
  %v31 = vsel %vm29, %v17, 0
  %33 = vmatprep.subr.mxu0 0.0
  %34 = vmatpush1.msra.mxu0 %v15
  %35 = vmatprep.subr.mxu0 0.0
  %36 = vmatpush1.msra.mxu0 %v16
  %37 = vmatprep.subr.mxu0 0.0
  %38 = vmatpush1.msra.mxu0 %v31
  %39 = vmatprep.subr.mxu0 0.0
  %40 = vmatpush1.msra.mxu0 0.0
  %41 = vmatprep.subr.mxu0 0.0
  %42 = vmatpush1.msra.mxu0 0.0
  %43 = vmatprep.subr.mxu0 0.0
  %44 = vmatpush1.msra.mxu0 0.0
  %45 = vmatprep.subr.mxu0 0.0
  %46 = vmatpush1.msra.mxu0 0.0
  %47 = vmatprep.subr.mxu0 0.0
  %48 = vmatpush1.msra.mxu0 0.0
  %49 = vmatprep.subr.mxu0 0.0
  %50 = vmatpush1.msra.mxu0 0.0
  %51 = vmatprep.subr.mxu0 0.0
  %52 = vmatpush1.msra.mxu0 0.0
  %53 = vmatprep.subr.mxu0 0.0
  %54 = vmatpush1.msra.mxu0 0.0
  %55 = vmatprep.subr.mxu0 0.0
  %56 = vmatpush1.msra.mxu0 0.0
  %57 = vmatprep.subr.mxu0 0.0
  %58 = vmatpush1.msra.mxu0 0.0
  %59 = vmatprep.subr.mxu0 0.0
  %60 = vmatpush1.msra.mxu0 0.0
  %61 = vmatprep.subr.mxu0 0.0
  %62 = vmatpush1.msra.mxu0 0.0
  %63 = vmatprep.subr.mxu0 0.0
  %64 = vmatpush1.msra.mxu0 0.0
  %65 = vmatprep.subr.mxu0 0.0
  %66 = vmatpush1.msra.mxu0 0.0
  %67 = vmatprep.subr.mxu0 0.0
  %68 = vmatpush1.msra.mxu0 0.0
  %69 = vmatprep.subr.mxu0 0.0
  %70 = vmatpush1.msra.mxu0 0.0
  %71 = vmatprep.subr.mxu0 0.0
  %72 = vmatpush1.msra.mxu0 0.0
  %73 = vmatprep.subr.mxu0 0.0
  %74 = vmatpush1.msra.mxu0 0.0
  %75 = vmatprep.subr.mxu0 0.0
  %76 = vmatpush1.msra.mxu0 0.0
  %77 = vmatprep.subr.mxu0 0.0
  %78 = vmatpush1.msra.mxu0 0.0
  %79 = vmatprep.subr.mxu0 0.0
  %80 = vmatpush1.msra.mxu0 0.0
  %81 = vmatprep.subr.mxu0 0.0
  %82 = vmatpush1.msra.mxu0 0.0
  %83 = vmatprep.subr.mxu0 0.0
  %84 = vmatpush1.msra.mxu0 0.0
  %85 = vmatprep.subr.mxu0 0.0
  %86 = vmatpush1.msra.mxu0 0.0
  %87 = vmatprep.subr.mxu0 0.0
  %88 = vmatpush1.msra.mxu0 0.0
  %89 = vmatprep.subr.mxu0 0.0
  %90 = vmatpush1.msra.mxu0 0.0
  %91 = vmatprep.subr.mxu0 0.0
  %92 = vmatpush1.msra.mxu0 0.0
  %93 = vmatprep.subr.mxu0 0.0
  %94 = vmatpush1.msra.mxu0 0.0
  %95 = vmatprep.subr.mxu0 0.0
  %96 = vmatpush1.msra.mxu0 0.0
  %97 = vmatprep.mubr.f32.mxu0 0.0
  %98 = vmatmul.mubr.f32.gmra.mrb[0].mxu0 %v27
  %v99 = vpop.f32.mrb[0].mxu0
  %v100 = vadd.f32 %v23, %v99
  %v101 = vpop.f32.mrb[0].mxu0
  %102 = vdwg.mxu0
  %vm103 = vcmask 293888
  %104 = vst.msk [vmem:[%s3] sm:$0xff] %vm103, %v100
  // Predicated region
  $region14: #{mwt_cz2d_forward.38} parent=0 // pred_check
    _
  $region15: #{mwt_cz2d_forward.38} parent=0 // pred_check_branch
    %106 = sbr.rel (0) target = $region17
  $region16: #{mwt_cz2d_forward.38} parent=0 // pred_region
    _
  $region17: #{mwt_cz2d_forward.38} parent=0 // pred_fallthru
    _
  // Predicated region
  $region18: #{mwt_cz2d_forward.38} parent=0 // pred_check
    _
  $region19: #{mwt_cz2d_forward.38} parent=0 // pred_check_branch
    %108 = sbr.rel (0) target = $region21
  $region20: #{mwt_cz2d_forward.38} parent=0 // pred_region
    _
  $region21: #{mwt_cz2d_forward.38} parent=0 // pred_fallthru
    _

// kernel: mwt_cz2d_forward.55
$region0: #{mwt_cz2d_forward.55}
  #allocation0 [shape = 'u32[]', space=smem, size = 0x4, offset = 0x4, fixed_abs, tag = 'smem constant byte address 0x4 - core index']
  #allocation1 [shape = 'u32[144,128]{1,0:T(1,128)}', space=vmem, size = 0x12000, scoped, tag = 'internal scratch']
  %s0 = inlined_call_operand.vmem [shape: f32[128,18], index: 0, kind: input, shape index: {}]
  %s1 = inlined_call_operand.vmem [shape: f32[18,36], index: 1, kind: input, shape index: {}]
  %s2 = inlined_call_operand.vmem [shape: f32[1,36], index: 2, kind: input, shape index: {}]
  %s3 = inlined_call_operand.vmem [shape: f32[128,36], index: 3, kind: output, shape index: {}]
  %s4 = sld [smem:[#allocation0]]
  $region45: #{mwt_cz2d_forward.55} parent=0
    _
  %s6 = ssub.s32 1, %s4
  %s7 = scalar_select 0, %s6, %s4
  loop: start=0, step=1, limit=4
  $region2: #{mwt_cz2d_forward.55} parent=0 // loop_pre_header
    _
  $region3: #{mwt_cz2d_forward.55} parent=0 // loop_header
    %s9 = sphi 0, %s13
    %p10 = scmp.ge.s32.totalorder %s9, 4
    %s19 = sphi 0, %s21
    %s22 = sphi 0, %s19
    %s23 = sphi 0, %s22
    %s39 = sphi 0, %s23
    %s43 = sphi 0, %s43
    %s45 = sphi 0, %s43
    %s46 = sphi 0, %s45
    %s60 = sphi 0, %s46
    %s64 = sphi 0, %s64
    %s66 = sphi 0, %s64
    %s67 = sphi 0, %s66
    %s81 = sphi 0, %s67
    %s87 = sphi 0, %s89
    %s90 = sphi 0, %s87
    %s91 = sphi 0, %s90
    %s107 = sphi 0, %s91
  $region4: #{mwt_cz2d_forward.55} parent=0 // loop_header_branch
    %12 = sbr.rel (%p10) target = $region8
  $region5: #{mwt_cz2d_forward.55} parent=0 // loop_body
    %s14 = ssub.s32 %s9, 1
    %s15 = ssub.s32 %s9, 2
    %s16 = sadd.s32 %s9, 1
    %s17 = ssub.s32 %s9, %s16
    %p18 = scmp.eq.s32.totalorder %s17, 0
    %s20 = sadd.s32 %s19, 1
    %s21 = scalar_select %p18, %s19, %s20
    %p24 = pneg %p18
    %p25 = scmp.eq.s32.totalorder %s9, 1
    %p26 = por %p24, %p25
    %p27 = scmp.ne.s32.totalorder %s19, %s22
    %p28 = scmp.eq.s32.totalorder %s9, 0
    %p29 = por %p27, %p28
    %p30 = scmp.ne.s32.totalorder %s19, %s22
    %p31 = scmp.eq.s32.totalorder %s14, 1
    %p32 = por %p30, %p31
    %p33 = scmp.ne.s32.totalorder %s22, %s23
    %p34 = scmp.eq.s32.totalorder %s14, 0
    %p35 = por %p33, %p34
    %p36 = scmp.ne.s32.totalorder %s22, %s23
    %p37 = scmp.eq.s32.totalorder %s15, 1
    %p38 = por %p36, %p37
    %p40 = scmp.ne.s32.totalorder %s23, %s39
    %p41 = scmp.eq.s32.totalorder %s15, 0
    %p42 = por %p40, %p41
    %s44 = sadd.s32 %s43, 1
    %p47 = scmp.eq.s32.totalorder %s9, 1
    %p48 = scmp.ne.s32.totalorder %s43, %s45
    %p49 = scmp.eq.s32.totalorder %s9, 0
    %p50 = por %p48, %p49
    %p51 = scmp.ne.s32.totalorder %s43, %s45
    %p52 = scmp.eq.s32.totalorder %s14, 1
    %p53 = por %p51, %p52
    %p54 = scmp.ne.s32.totalorder %s45, %s46
    %p55 = scmp.eq.s32.totalorder %s14, 0
    %p56 = por %p54, %p55
    %p57 = scmp.ne.s32.totalorder %s45, %s46
    %p58 = scmp.eq.s32.totalorder %s15, 1
    %p59 = por %p57, %p58
    %p61 = scmp.ne.s32.totalorder %s46, %s60
    %p62 = scmp.eq.s32.totalorder %s15, 0
    %p63 = por %p61, %p62
    %s65 = sadd.s32 %s64, 1
    %p68 = scmp.eq.s32.totalorder %s9, 1
    %p69 = scmp.ne.s32.totalorder %s64, %s66
    %p70 = scmp.eq.s32.totalorder %s9, 0
    %p71 = por %p69, %p70
    %p72 = scmp.ne.s32.totalorder %s64, %s66
    %p73 = scmp.eq.s32.totalorder %s14, 1
    %p74 = por %p72, %p73
    %p75 = scmp.ne.s32.totalorder %s66, %s67
    %p76 = scmp.eq.s32.totalorder %s14, 0
    %p77 = por %p75, %p76
    %p78 = scmp.ne.s32.totalorder %s66, %s67
    %p79 = scmp.eq.s32.totalorder %s15, 1
    %p80 = por %p78, %p79
    %p82 = scmp.ne.s32.totalorder %s67, %s81
    %p83 = scmp.eq.s32.totalorder %s15, 0
    %p84 = por %p82, %p83
    %s85 = ssub.s32 %s9, %s16
    %p86 = scmp.eq.s32.totalorder %s85, 0
    %s88 = sadd.s32 %s87, 1
    %s89 = scalar_select %p86, %s87, %s88
    %p92 = pneg %p86
    %p93 = scmp.eq.s32.totalorder %s9, 1
    %p94 = por %p92, %p93
    %p95 = scmp.ne.s32.totalorder %s87, %s90
    %p96 = scmp.eq.s32.totalorder %s9, 0
    %p97 = por %p95, %p96
    %p98 = scmp.ne.s32.totalorder %s87, %s90
    %p99 = scmp.eq.s32.totalorder %s14, 1
    %p100 = por %p98, %p99
    %p101 = scmp.ne.s32.totalorder %s90, %s91
    %p102 = scmp.eq.s32.totalorder %s14, 0
    %p103 = por %p101, %p102
    %p104 = scmp.ne.s32.totalorder %s90, %s91
    %p105 = scmp.eq.s32.totalorder %s15, 1
    %p106 = por %p104, %p105
    %p108 = scmp.ne.s32.totalorder %s91, %s107
    %p109 = scmp.eq.s32.totalorder %s15, 0
    %p110 = por %p108, %p109
    %p111 = scmp.le.s32.totalorder 1, %s9
    %p112 = scmp.lt.s32.totalorder %s9, 3
    %p113 = pnand %p111, %p112
    %p114 = pneg %p113
    // Predicated region
    $region9: #{mwt_cz2d_forward.55} parent=5 // pred_check
      _
    $region10: #{mwt_cz2d_forward.55} parent=5 // pred_check_branch
      %116 = sbr.rel (%p113) target = $region12
    $region11: #{mwt_cz2d_forward.55} parent=5 // pred_region
      %s117 = ssub.s32 %s9, 1
      // Predicated region
      $region13: #{mwt_cz2d_forward.55} parent=11 // pred_check
        %p118 = pneg %p56
      $region14: #{mwt_cz2d_forward.55} parent=11 // pred_check_branch
        %120 = sbr.rel (%p118) target = $region16
      $region15: #{mwt_cz2d_forward.55} parent=11 // pred_region
        _
      $region16: #{mwt_cz2d_forward.55} parent=11 // pred_fallthru
        _
      // Predicated region
      $region17: #{mwt_cz2d_forward.55} parent=11 // pred_check
        %p121 = pneg %p77
      $region18: #{mwt_cz2d_forward.55} parent=11 // pred_check_branch
        %123 = sbr.rel (%p121) target = $region20
      $region19: #{mwt_cz2d_forward.55} parent=11 // pred_region
        _
      $region20: #{mwt_cz2d_forward.55} parent=11 // pred_fallthru
        _
    $region12: #{mwt_cz2d_forward.55} parent=5 // pred_fallthru
      _
    %p124 = scmp.lt.s32.totalorder %s9, 2
    // Predicated region
    $region21: #{mwt_cz2d_forward.55} parent=5 // pred_check
      %p125 = pneg %p124
    $region22: #{mwt_cz2d_forward.55} parent=5 // pred_check_branch
      %127 = sbr.rel (%p125) target = $region24
    $region23: #{mwt_cz2d_forward.55} parent=5 // pred_region
      // Predicated region
      $region25: #{mwt_cz2d_forward.55} parent=23 // pred_check
        %p128 = pneg %p29
      $region26: #{mwt_cz2d_forward.55} parent=23 // pred_check_branch
        %130 = sbr.rel (%p128) target = $region28
      $region27: #{mwt_cz2d_forward.55} parent=23 // pred_region
        %s131 = smul.u32 8, %s9
        %p132 = scmp.lt.s32.totalorder %s131, 15
        %s133 = scalar_select %p132, %s131, 15
        %s134 = smul.addr %s133, 8
        %s135 = scalar_lea.vmem %s0, %s134
        %s136 = smul.u32 8, %s9
      $region28: #{mwt_cz2d_forward.55} parent=23 // pred_fallthru
        _
    $region24: #{mwt_cz2d_forward.55} parent=5 // pred_fallthru
      _
    %p137 = scmp.le.s32.totalorder 1, %s9
    %p138 = scmp.lt.s32.totalorder %s9, 3
    %p139 = pnand %p137, %p138
    %p140 = pneg %p139
    // Predicated region
    $region29: #{mwt_cz2d_forward.55} parent=5 // pred_check
      _
    $region30: #{mwt_cz2d_forward.55} parent=5 // pred_check_branch
      %142 = sbr.rel (%p139) target = $region32
    $region31: #{mwt_cz2d_forward.55} parent=5 // pred_region
      %s143 = ssub.s32 %s9, 1
      %s144 = smul.u32 8, %s14
      %p145 = scmp.lt.s32.totalorder %s144, 15
      %s146 = scalar_select %p145, %s144, 15
      %s147 = smul.addr %s146, 8
      %s148 = scalar_lea.vmem %s0, %s147
      %p149 = pneg %p35
      %p150 = pneg %p32
      %p151 = pneg %p56
      %p152 = pneg %p53
      %p153 = pneg %p77
      %p154 = pneg %p74
      %p155 = pneg %p103
      %p156 = pneg %p100
      %s157 = smul.u32 8, %s14
      %p158 = scmp.lt.s32.totalorder %s157, 15
      %s159 = scalar_select %p158, %s157, 15
      %s160 = smul.addr %s159, 8
      %s161 = scalar_lea.vmem %s3, %s160
      %s162 = smul.u32 8, %s14
      %p163 = scmp.lt.s32.totalorder %s162, 15
      %s164 = scalar_select %p163, %s162, 15
      %s165 = smul.addr %s164, 8
      %s166 = scalar_lea.vmem %s0, %s165
      %s167 = smul.u32 8, %s14
      %s168 = smul.u32 8, %s14
      %p169 = scmp.lt.s32.totalorder %s168, 15
      %s170 = scalar_select %p169, %s168, 15
      %s171 = smul.addr %s170, 8
      %s172 = scalar_lea.vmem %s3, %s171
      %s173 = smul.u32 8, %s14
      %v174 = vld [vmem:[%s166] sm:$0xff]
      %v175 = vld [vmem:[%s166 + $0x8] sm:$0xff]
      %v176 = vld [vmem:[%s166 + $0x10] sm:$0xff]
      %v177 = vld [vmem:[%s166 + $0x18] sm:$0xff]
      %v178 = vld [vmem:[%s166 + $0x20] sm:$0xff]
      %v179 = vld [vmem:[%s166 + $0x28] sm:$0xff]
      %v180 = vld [vmem:[%s166 + $0x30] sm:$0xff]
      %v181 = vld [vmem:[%s166 + $0x38] sm:$0xff]
      %v182 = vld [vmem:[%s1] sm:$0xff]
      %v183 = vld [vmem:[%s1 + $0x8] sm:$0xff]
      %v184 = vld [vmem:[%s1 + $0x10] sm:$0x3]
      %v185 = vld [vmem:[%s2] sm:$0x1]
      %v187 = vlaneseq
      %v188 = vshrl.u32 %v187, 7
      %v189 = vsub.s32 0, %v188
      %v190 = vrot.slane %v185, %v189
      %vm192 = vcmask 146432
      %v194 = vsel %vm192, %v174, 0
      %v197 = vsel %vm192, %v175, 0
      %v200 = vsel %vm192, %v176, 0
      %v203 = vsel %vm192, %v177, 0
      %v206 = vsel %vm192, %v178, 0
      %v209 = vsel %vm192, %v179, 0
      %v212 = vsel %vm192, %v180, 0
      %v215 = vsel %vm192, %v181, 0
      %vm217 = vcmask 1041408
      %v219 = vsel %vm217, %v184, 0
      %221 = vmatprep.subr.mxu0 0.0
      %222 = vmatpush1.msra.mxu0 %v182
      %223 = vmatprep.subr.mxu0 0.0
      %224 = vmatpush1.msra.mxu0 %v183
      %225 = vmatprep.subr.mxu0 0.0
      %226 = vmatpush1.msra.mxu0 %v219
      %227 = vmatprep.subr.mxu0 0.0
      %228 = vmatpush1.msra.mxu0 0.0
      %229 = vmatprep.subr.mxu0 0.0
      %230 = vmatpush1.msra.mxu0 0.0
      %231 = vmatprep.subr.mxu0 0.0
      %232 = vmatpush1.msra.mxu0 0.0
      %233 = vmatprep.subr.mxu0 0.0
      %234 = vmatpush1.msra.mxu0 0.0
      %235 = vmatprep.subr.mxu0 0.0
      %236 = vmatpush1.msra.mxu0 0.0
      %237 = vmatprep.subr.mxu0 0.0
      %238 = vmatpush1.msra.mxu0 0.0
      %239 = vmatprep.subr.mxu0 0.0
      %240 = vmatpush1.msra.mxu0 0.0
      %241 = vmatprep.subr.mxu0 0.0
      %242 = vmatpush1.msra.mxu0 0.0
      %243 = vmatprep.subr.mxu0 0.0
      %244 = vmatpush1.msra.mxu0 0.0
      %245 = vmatprep.subr.mxu0 0.0
      %246 = vmatpush1.msra.mxu0 0.0
      %247 = vmatprep.subr.mxu0 0.0
      %248 = vmatpush1.msra.mxu0 0.0
      %249 = vmatprep.subr.mxu0 0.0
      %250 = vmatpush1.msra.mxu0 0.0
      %251 = vmatprep.subr.mxu0 0.0
      %252 = vmatpush1.msra.mxu0 0.0
      %253 = vmatprep.subr.mxu0 0.0
      %254 = vmatpush1.msra.mxu0 0.0
      %255 = vmatprep.subr.mxu0 0.0
      %256 = vmatpush1.msra.mxu0 0.0
      %257 = vmatprep.subr.mxu0 0.0
      %258 = vmatpush1.msra.mxu0 0.0
      %259 = vmatprep.subr.mxu0 0.0
      %260 = vmatpush1.msra.mxu0 0.0
      %261 = vmatprep.subr.mxu0 0.0
      %262 = vmatpush1.msra.mxu0 0.0
      %263 = vmatprep.subr.mxu0 0.0
      %264 = vmatpush1.msra.mxu0 0.0
      %265 = vmatprep.subr.mxu0 0.0
      %266 = vmatpush1.msra.mxu0 0.0
      %267 = vmatprep.subr.mxu0 0.0
      %268 = vmatpush1.msra.mxu0 0.0
      %269 = vmatprep.subr.mxu0 0.0
      %270 = vmatpush1.msra.mxu0 0.0
      %271 = vmatprep.subr.mxu0 0.0
      %272 = vmatpush1.msra.mxu0 0.0
      %273 = vmatprep.subr.mxu0 0.0
      %274 = vmatpush1.msra.mxu0 0.0
      %275 = vmatprep.subr.mxu0 0.0
      %276 = vmatpush1.msra.mxu0 0.0
      %277 = vmatprep.subr.mxu0 0.0
      %278 = vmatpush1.msra.mxu0 0.0
      %279 = vmatprep.subr.mxu0 0.0
      %280 = vmatpush1.msra.mxu0 0.0
      %281 = vmatprep.subr.mxu0 0.0
      %282 = vmatpush1.msra.mxu0 0.0
      %283 = vmatprep.subr.mxu0 0.0
      %284 = vmatpush1.msra.mxu0 0.0
      %285 = vmatprep.mubr.f32.mxu0 0.0
      %286 = vmatmul.mubr.f32.gmra.mrb[0].mxu0 %v194
      %v287 = vpop.f32.mrb[0].mxu0
      %v288 = vadd.f32 %v190, %v287
      %v289 = vpop.f32.mrb[0].mxu0
      %290 = vmatprep.mubr.f32.mxu0 0.0
      %291 = vmatmul.mubr.f32.gmra.mrb[0].mxu0 %v197
      %v292 = vpop.f32.mrb[0].mxu0
      %v293 = vadd.f32 %v190, %v292
      %v294 = vpop.f32.mrb[0].mxu0
      %295 = vmatprep.mubr.f32.mxu0 0.0
      %296 = vmatmul.mubr.f32.gmra.mrb[0].mxu0 %v200
      %v297 = vpop.f32.mrb[0].mxu0
      %v298 = vadd.f32 %v190, %v297
      %v299 = vpop.f32.mrb[0].mxu0
      %300 = vmatprep.mubr.f32.mxu0 0.0
      %301 = vmatmul.mubr.f32.gmra.mrb[0].mxu0 %v203
      %v302 = vpop.f32.mrb[0].mxu0
      %v303 = vadd.f32 %v190, %v302
      %v304 = vpop.f32.mrb[0].mxu0
      %305 = vmatprep.mubr.f32.mxu0 0.0
      %306 = vmatmul.mubr.f32.gmra.mrb[0].mxu0 %v206
      %v307 = vpop.f32.mrb[0].mxu0
      %v308 = vadd.f32 %v190, %v307
      %v309 = vpop.f32.mrb[0].mxu0
      %310 = vmatprep.mubr.f32.mxu0 0.0
      %311 = vmatmul.mubr.f32.gmra.mrb[0].mxu0 %v209
      %v312 = vpop.f32.mrb[0].mxu0
      %v313 = vadd.f32 %v190, %v312
      %v314 = vpop.f32.mrb[0].mxu0
      %315 = vmatprep.mubr.f32.mxu0 0.0
      %316 = vmatmul.mubr.f32.gmra.mrb[0].mxu0 %v212
      %v317 = vpop.f32.mrb[0].mxu0
      %v318 = vadd.f32 %v190, %v317
      %v319 = vpop.f32.mrb[0].mxu0
      %320 = vmatprep.mubr.f32.mxu0 0.0
      %321 = vmatmul.mubr.f32.gmra.mrb[0].mxu0 %v215
      %v322 = vpop.f32.mrb[0].mxu0
      %v323 = vadd.f32 %v190, %v322
      %v324 = vpop.f32.mrb[0].mxu0
      %325 = vdwg.mxu0
      %vm326 = vcmask 293888
      %327 = vst.msk [vmem:[%s172] sm:$0xff] %vm326, %v288
      %328 = vst.msk [vmem:[%s172 + $0x8] sm:$0xff] %vm326, %v293
      %329 = vst.msk [vmem:[%s172 + $0x10] sm:$0xff] %vm326, %v298
      %330 = vst.msk [vmem:[%s172 + $0x18] sm:$0xff] %vm326, %v303
      %331 = vst.msk [vmem:[%s172 + $0x20] sm:$0xff] %vm326, %v308
      %332 = vst.msk [vmem:[%s172 + $0x28] sm:$0xff] %vm326, %v313
      %333 = vst.msk [vmem:[%s172 + $0x30] sm:$0xff] %vm326, %v318
      %334 = vst.msk [vmem:[%s172 + $0x38] sm:$0xff] %vm326, %v323
      %s335 = smul.u32 8, %s14
      %p336 = scmp.lt.s32.totalorder %s335, 15
      %s337 = scalar_select %p336, %s335, 15
      %s338 = smul.addr %s337, 8
      %s339 = scalar_lea.vmem %s3, %s338
      // Predicated region
      $region33: #{mwt_cz2d_forward.55} parent=31 // pred_check
        %p340 = pneg %p100
      $region34: #{mwt_cz2d_forward.55} parent=31 // pred_check_branch
        %342 = sbr.rel (%p340) target = $region36
      $region35: #{mwt_cz2d_forward.55} parent=31 // pred_region
        %s343 = smul.u32 8, %s14
      $region36: #{mwt_cz2d_forward.55} parent=31 // pred_fallthru
        _
    $region32: #{mwt_cz2d_forward.55} parent=5 // pred_fallthru
      _
    %p344 = scmp.le.s32.totalorder 2, %s9
    // Predicated region
    $region37: #{mwt_cz2d_forward.55} parent=5 // pred_check
      %p345 = pneg %p344
    $region38: #{mwt_cz2d_forward.55} parent=5 // pred_check_branch
      %347 = sbr.rel (%p345) target = $region40
    $region39: #{mwt_cz2d_forward.55} parent=5 // pred_region
      %s348 = ssub.s32 %s9, 2
      // Predicated region
      $region41: #{mwt_cz2d_forward.55} parent=39 // pred_check
        %p349 = pneg %p106
      $region42: #{mwt_cz2d_forward.55} parent=39 // pred_check_branch
        %351 = sbr.rel (%p349) target = $region44
      $region43: #{mwt_cz2d_forward.55} parent=39 // pred_region
        %s352 = smul.u32 8, %s15
        %p353 = scmp.lt.s32.totalorder %s352, 15
        %s354 = scalar_select %p353, %s352, 15
        %s355 = smul.addr %s354, 8
        %s356 = scalar_lea.vmem %s3, %s355
      $region44: #{mwt_cz2d_forward.55} parent=39 // pred_fallthru
        _
    $region40: #{mwt_cz2d_forward.55} parent=5 // pred_fallthru
      _
  $region6: #{mwt_cz2d_forward.55} parent=0 // loop_footer
    %s13 = sadd.s32 1, %s9
  $region7: #{mwt_cz2d_forward.55} parent=0 // loop_footer_branch
    %8 = sbr.rel target = $region3
  $region8: #{mwt_cz2d_forward.55} parent=0 // loop_exit
    _

</llo_original>
